<compile_context>
chip_gen: v7x
topology: tpu7x:2x2x1
jax: 0.10.0
libtpu: 0.0.40
codegen_flags: <defaults>
</compile_context>

<pallas_src>
import math
from functools import partial

import jax
import jax.numpy as jnp
from jax.experimental import pallas as pl
from jax.experimental.pallas import tpu as pltpu


# -----------------------------------------------------------------------------
# Tiling helpers
# -----------------------------------------------------------------------------

_VMEM_LIMIT = 48 * 1024 * 1024          # explicit scoped-VMEM limit; safe on v5e/v6e/v7x

_TM = (512, 256, 128, 64, 32, 16, 8)    # row tiles (sublane axis)
_TN = (1024, 512, 256, 128)             # output-column tiles (lane axis)
_TK = (512, 256, 128)                   # reduction tiles


def _tile(dim, cands):
    """Largest candidate that evenly divides `dim`, else the full dim."""
    for c in cands:
        if dim >= c and dim % c == 0:
            return c
    return dim


def _matmul_tiles(M, N, K):
    tm, tn, tk = _tile(M, _TM), _tile(N, _TN), _tile(K, _TK)
    # v7x shards "parallel" grid axes across 2 TensorCores: keep >= 2 blocks over the
    # (M, N) parallel axes whenever the shape allows it.
    if M // tm == 1 and N // tn == 1:
        if tn % 256 == 0:
            tn //= 2
        elif tm % 16 == 0:
            tm //= 2
    return tm, tn, tk


# -----------------------------------------------------------------------------
# In-kernel exact GELU (Eigen/XLA f32 erf rational approximation: mul/add/clip/div only)
# -----------------------------------------------------------------------------

def _erf_f32(x):
    x = jnp.clip(x, -4.0, 4.0)
    x2 = x * x
    a = jnp.float32(-2.72614225801306e-10)
    a = a * x2 + jnp.float32(2.77068142495902e-08)
    a = a * x2 + jnp.float32(-2.10102402082508e-06)
    a = a * x2 + jnp.float32(-5.69250639462346e-05)
    a = a * x2 + jnp.float32(-7.34990630326855e-04)
    a = a * x2 + jnp.float32(-2.95459980854025e-03)
    a = a * x2 + jnp.float32(-1.60960333262415e-02)
    p = a * x
    b = jnp.float32(-1.45660718464996e-05)
    b = b * x2 + jnp.float32(-2.13374055278905e-04)
    b = b * x2 + jnp.float32(-1.68282697438203e-03)
    b = b * x2 + jnp.float32(-7.37332916720468e-03)
    b = b * x2 + jnp.float32(-1.42647390514189e-02)
    return p / b


def _gelu_exact(x):
    return 0.5 * x * (1.0 + _erf_f32(x * 0.7071067811865476))


# -----------------------------------------------------------------------------
# Matmul kernels (bf16 MXU inputs, f32 VMEM accumulator, K-tiled reduction)
# -----------------------------------------------------------------------------

def _matmul_kernel(x_ref, w_ref, o_ref, acc_ref):
    @pl.when(pl.program_id(2) == 0)
    def _():
        acc_ref[...] = jnp.zeros_like(acc_ref)

    acc_ref[...] += jnp.dot(x_ref[...], w_ref[...],
                            preferred_element_type=jnp.float32)

    @pl.when(pl.program_id(2) == pl.num_programs(2) - 1)
    def _():
        o_ref[...] = acc_ref[...].astype(o_ref.dtype)


def _matmul_resid_kernel(x_ref, w_ref, r_ref, o_ref, acc_ref):
    @pl.when(pl.program_id(2) == 0)
    def _():
        acc_ref[...] = jnp.zeros_like(acc_ref)

    acc_ref[...] += jnp.dot(x_ref[...], w_ref[...],
                            preferred_element_type=jnp.float32)

    @pl.when(pl.program_id(2) == pl.num_programs(2) - 1)
    def _():
        o_ref[...] = (acc_ref[...]
                      + r_ref[...].astype(jnp.float32)).astype(o_ref.dtype)


def _gate_up_gelu_kernel(x_ref, wg_ref, wu_ref, o_ref, accg_ref, accu_ref):
    @pl.when(pl.program_id(2) == 0)
    def _():
        accg_ref[...] = jnp.zeros_like(accg_ref)
        accu_ref[...] = jnp.zeros_like(accu_ref)

    x = x_ref[...]
    accg_ref[...] += jnp.dot(x, wg_ref[...], preferred_element_type=jnp.float32)
    accu_ref[...] += jnp.dot(x, wu_ref[...], preferred_element_type=jnp.float32)

    @pl.when(pl.program_id(2) == pl.num_programs(2) - 1)
    def _():
        o_ref[...] = (_gelu_exact(accg_ref[...]) * accu_ref[...]).astype(o_ref.dtype)


def pallas_matmul(x, w, residual=None):
    """y = x @ w (+ residual).  w is (in_features, out_features), bf16."""
    orig = x.shape
    K = orig[-1]
    M = int(math.prod(orig[:-1]))
    N = w.shape[1]
    x2 = x.reshape(M, K)
    tm, tn, tk = _matmul_tiles(M, N, K)
    grid = (M // tm, N // tn, K // tk)

    x_spec = pl.BlockSpec((tm, tk), lambda i, j, k: (i, k))
    w_spec = pl.BlockSpec((tk, tn), lambda i, j, k: (k, j))
    common = dict(
        out_shape=jax.ShapeDtypeStruct((M, N), jnp.bfloat16),
        grid=grid,
        out_specs=pl.BlockSpec((tm, tn), lambda i, j, k: (i, j)),
        scratch_shapes=[pltpu.VMEM((tm, tn), jnp.float32)],
        compiler_params=pltpu.CompilerParams(
            dimension_semantics=("parallel", "parallel", "arbitrary"),
            vmem_limit_bytes=_VMEM_LIMIT),
    )
    if residual is None:
        out = pl.pallas_call(_matmul_kernel, in_specs=[x_spec, w_spec],
                             **common)(x2, w)
    else:
        r_spec = pl.BlockSpec((tm, tn), lambda i, j, k: (i, j))
        out = pl.pallas_call(_matmul_resid_kernel,
                             in_specs=[x_spec, w_spec, r_spec],
                             **common)(x2, w, residual.reshape(M, N))
    return out.reshape(*orig[:-1], N)


def pallas_gate_up_gelu(x, wg, wu):
    """gelu(x @ wg) * (x @ wu), fully fused: x streams from HBM once, one bf16 output."""
    orig = x.shape
    K = orig[-1]
    M = int(math.prod(orig[:-1]))
    N = wg.shape[1]
    x2 = x.reshape(M, K)
    tm, tn, tk = _matmul_tiles(M, N, K)
    grid = (M // tm, N // tn, K // tk)

    out = pl.pallas_call(
        _gate_up_gelu_kernel,
        out_shape=jax.ShapeDtypeStruct((M, N), jnp.bfloat16),
        grid=grid,
        in_specs=[pl.BlockSpec((tm, tk), lambda i, j, k: (i, k)),
                  pl.BlockSpec((tk, tn), lambda i, j, k: (k, j)),
                  pl.BlockSpec((tk, tn), lambda i, j, k: (k, j))],
        out_specs=pl.BlockSpec((tm, tn), lambda i, j, k: (i, j)),
        scratch_shapes=[pltpu.VMEM((tm, tn), jnp.float32),
                        pltpu.VMEM((tm, tn), jnp.float32)],
        compiler_params=pltpu.CompilerParams(
            dimension_semantics=("parallel", "parallel", "arbitrary"),
            vmem_limit_bytes=_VMEM_LIMIT),
    )(x2, wg, wu)
    return out.reshape(*orig[:-1], N)


# -----------------------------------------------------------------------------
# RMSNorm kernels (row-tiled) — reproduce GemmaRMSNorm exactly as written
# -----------------------------------------------------------------------------

_NORM_TM = (256, 128, 64, 32, 16, 8)    # capped at 256 rows (v7x has only 64 MiB VMEM)


def _rmsnorm_kernel(eps, x_ref, w_ref, o_ref):
    x = x_ref[...].astype(jnp.float32)
    ms = jnp.mean(x * x, axis=-1, keepdims=True)
    y = x * jnp.sqrt(ms + eps)            # multiply (as written in the reference)
    o_ref[...] = (y * (1.0 + w_ref[...].astype(jnp.float32))).astype(o_ref.dtype)


def _add_rmsnorm_kernel(eps, x_ref, y_ref, w_ref, xo_ref, h_ref):
    # fused: xo = x + y (residual add) ; h = RMSNorm(y) * (1 + w)
    x = x_ref[...].astype(jnp.float32)
    y = y_ref[...].astype(jnp.float32)
    xo_ref[...] = (x + y).astype(xo_ref.dtype)
    ms = jnp.mean(y * y, axis=-1, keepdims=True)
    yn = y * jnp.sqrt(ms + eps)
    h_ref[...] = (yn * (1.0 + w_ref[...].astype(jnp.float32))).astype(h_ref.dtype)


def pallas_rmsnorm(x, w, eps):
    shape = x.shape
    D = shape[-1]
    M = int(math.prod(shape[:-1]))
    tm = _tile(M, _NORM_TM)
    out = pl.pallas_call(
        partial(_rmsnorm_kernel, eps),
        out_shape=jax.ShapeDtypeStruct((M, D), x.dtype),
        grid=(M // tm,),
        in_specs=[pl.BlockSpec((tm, D), lambda i: (i, 0)),
                  pl.BlockSpec((1, D), lambda i: (0, 0))],
        out_specs=pl.BlockSpec((tm, D), lambda i: (i, 0)),
        compiler_params=pltpu.CompilerParams(
            dimension_semantics=("parallel",), vmem_limit_bytes=_VMEM_LIMIT),
    )(x.reshape(M, D), w.reshape(1, D))
    return out.reshape(shape)


def pallas_add_rmsnorm(x, y, w, eps):
    shape = x.shape
    D = shape[-1]
    M = int(math.prod(shape[:-1]))
    tm = _tile(M, _NORM_TM)
    row_spec = pl.BlockSpec((tm, D), lambda i: (i, 0))
    xo, h = pl.pallas_call(
        partial(_add_rmsnorm_kernel, eps),
        out_shape=(jax.ShapeDtypeStruct((M, D), x.dtype),
                   jax.ShapeDtypeStruct((M, D), x.dtype)),
        grid=(M // tm,),
        in_specs=[row_spec, row_spec, pl.BlockSpec((1, D), lambda i: (0, 0))],
        out_specs=(row_spec, row_spec),
        compiler_params=pltpu.CompilerParams(
            dimension_semantics=("parallel",), vmem_limit_bytes=_VMEM_LIMIT),
    )(x.reshape(M, D), y.reshape(M, D), w.reshape(1, D))
    return xo.reshape(shape), h.reshape(shape)


# -----------------------------------------------------------------------------
# Flash-style GQA attention: reads the fused qkv projection output directly
# (no head transposes), applies RoPE in-kernel, online softmax over a tiled KV axis,
# writes a lane-dense (B, T, Hq*Dh) output.
# -----------------------------------------------------------------------------

def _rope(x, cos, sin, dh):
    """x*cos + rotate_half(x)*sin; rotate_half via XLU lane roll + sign flip."""
    rolled = pltpu.roll(x, shift=dh // 2, axis=1)                   # [x2 | x1]
    col = jax.lax.broadcasted_iota(jnp.int32, x.shape, 1)
    rot = jnp.where(col < dh // 2, -rolled, rolled)                 # [-x2 | x1]
    return x * cos + rot * sin


def _flash_attn_kernel(scale, grp, dh, has_mask, *refs):
    if has_mask:
        (q_ref, k_ref, v_ref, cq_ref, sq_ref, ck_ref, sk_ref,
         msk_ref, o_ref, m_sc, l_sc, acc_sc) = refs
    else:
        (q_ref, k_ref, v_ref, cq_ref, sq_ref, ck_ref, sk_ref,
         o_ref, m_sc, l_sc, acc_sc) = refs
        msk_ref = None

    ki = pl.program_id(3)

    @pl.when(ki == 0)
    def _():
        m_sc[...] = jnp.full_like(m_sc, -jnp.inf)
        l_sc[...] = jnp.zeros_like(l_sc)
        acc_sc[...] = jnp.zeros_like(acc_sc)

    # K tile (single KV head of this GQA group) with RoPE applied in-VMEM.
    k = _rope(k_ref[0].astype(jnp.float32), ck_ref[0], sk_ref[0], dh).astype(jnp.bfloat16)
    v = v_ref[0]                                     # (tkv, dh) bf16
    q_all = q_ref[0]                                 # (tq, grp*dh) bf16 (heads along lanes)
    cos_q, sin_q = cq_ref[0], sq_ref[0]
    mask = msk_ref[0, 0].astype(jnp.float32) if has_mask else None

    for h in range(grp):
        lo, hi = h * dh, (h + 1) * dh
        qh = _rope(q_all[:, lo:hi].astype(jnp.float32), cos_q, sin_q, dh)
        qh = qh.astype(jnp.bfloat16)
        # q @ k.T over the head dim (full-width MXU contraction when dh >= 128)
        s = jax.lax.dot_general(qh, k, (((1,), (1,)), ((), ())),
                                preferred_element_type=jnp.float32) * scale  # (tq, tkv)
        if mask is not None:
            s = s + mask
        m_prev = m_sc[h]                             # (tq, 1)
        m_new = jnp.maximum(m_prev, jnp.max(s, axis=-1, keepdims=True))
        m_new = jnp.maximum(m_new, -1e30)            # guard fully-masked tiles (no NaN)
        alpha = jnp.exp(m_prev - m_new)
        p = jnp.exp(s - m_new)
        l_sc[h] = alpha * l_sc[h] + jnp.sum(p, axis=-1, keepdims=True)
        acc_sc[:, lo:hi] = (alpha * acc_sc[:, lo:hi]
                            + jnp.dot(p.astype(jnp.bfloat16), v,
                                      preferred_element_type=jnp.float32))
        m_sc[h] = m_new

    @pl.when(ki == pl.num_programs(3) - 1)
    def _():
        for h in range(grp):
            lo, hi = h * dh, (h + 1) * dh
            inv = pl.reciprocal(l_sc[h], approx=True)
            o_ref[0, :, lo:hi] = (acc_sc[:, lo:hi] * inv).astype(o_ref.dtype)


def flash_attention(qkv, cos, sin, mask, *, num_heads, num_kv_heads, head_dim):
    """SDPA(enable_gqa=True, is_causal=False) reading the fused qkv layout directly."""
    B, T, _ = qkv.shape
    Hq, Hkv, Dh = num_heads, num_kv_heads, head_dim
    grp = Hq // Hkv
    assert Dh % 128 == 0, "head_dim must be lane-aligned (multiple of 128) for fused-QKV layout"
    scale = 1.0 / math.sqrt(Dh)
    tq = _tile(T, (256, 128, 64, 32, 16, 8))
    tkv = _tile(T, (512, 256, 128, 64, 32, 16, 8))
    grid = (B, Hkv, T // tq, T // tkv)

    # Column-offset BlockSpecs into the fused qkv array (passed 3x, read-only).
    q_spec = pl.BlockSpec((1, tq, grp * Dh), lambda b, g, qi, ki: (b, qi, g))
    k_spec = pl.BlockSpec((1, tkv, Dh), lambda b, g, qi, ki: (b, ki, Hq + g))
    v_spec = pl.BlockSpec((1, tkv, Dh), lambda b, g, qi, ki: (b, ki, Hq + Hkv + g))
    cq_spec = pl.BlockSpec((1, tq, Dh), lambda b, g, qi, ki: (b, qi, 0))
    ck_spec = pl.BlockSpec((1, tkv, Dh), lambda b, g, qi, ki: (b, ki, 0))
    out_spec = pl.BlockSpec((1, tq, grp * Dh), lambda b, g, qi, ki: (b, qi, g))

    in_specs = [q_spec, k_spec, v_spec, cq_spec, cq_spec, ck_spec, ck_spec]
    args = [qkv, qkv, qkv, cos, sin, cos, sin]
    has_mask = mask is not None
    if has_mask:
        in_specs.append(pl.BlockSpec((1, 1, tq, tkv),
                                     lambda b, g, qi, ki: (b, 0, qi, ki)))
        args.append(mask)

    return pl.pallas_call(
        partial(_flash_attn_kernel, scale, grp, Dh, has_mask),
        out_shape=jax.ShapeDtypeStruct((B, T, Hq * Dh), jnp.bfloat16),
        grid=grid,
        in_specs=in_specs,
        out_specs=out_spec,
        scratch_shapes=[pltpu.VMEM((grp, tq, 1), jnp.float32),   # running max (per head)
                        pltpu.VMEM((grp, tq, 1), jnp.float32),   # running sum (per head)
                        pltpu.VMEM((tq, grp * Dh), jnp.float32)],
        compiler_params=pltpu.CompilerParams(
            dimension_semantics=("parallel", "parallel", "parallel", "arbitrary"),
            vmem_limit_bytes=_VMEM_LIMIT),
    )(*args)


# -----------------------------------------------------------------------------
# XLA glue: rotary cos/sin tables (tiny; matches GemmaRotaryEmbedding)
# -----------------------------------------------------------------------------

def rotary_cos_sin(position_ids, head_dim, theta):
    inv_freq = 1.0 / (theta ** (jnp.arange(0, head_dim, 2, dtype=jnp.float32) / head_dim))
    freqs = position_ids.astype(jnp.float32)[:, :, None] * inv_freq[None, None, :]
    emb = jnp.concatenate([freqs, freqs], axis=-1)            # (B, T, Dh)
    return jnp.cos(emb), jnp.sin(emb)


# -----------------------------------------------------------------------------
# GemmaModel forward
# -----------------------------------------------------------------------------

def gemma_forward(params, x, attention_mask, position_ids, cfg, kv_cache=None):
    # x: (B, T, H) hidden states (reference GemmaModel.forward consumes x directly).
    del kv_cache  # TODO(synk): only the kv_cache=None prefill path is implemented.
    B, T, H = x.shape
    Hq, Hkv, Dh = cfg["num_heads"], cfg["num_kv_heads"], cfg["head_dim"]

    # Reference: x = x * self.norm (== hidden_size ** 0.5 before being shadowed).
    x = (x.astype(jnp.float32) * (H ** 0.5)).astype(jnp.bfloat16)
    cos, sin = rotary_cos_sin(position_ids, Dh, cfg["rope_theta"])     # (B, T, Dh) f32

    for lyr in params["layers"]:
        # NOTE: the reference computes input_layernorm(x) and immediately discards it;
        # attention consumes x directly — reproduced as written.
        qkv = pallas_matmul(x, lyr["qkv_w"])                          # fused q|k|v
        attn = flash_attention(qkv, cos, sin, attention_mask,
                               num_heads=Hq, num_kv_heads=Hkv, head_dim=Dh)  # (B,T,Hq*Dh)
        attn_out = pallas_matmul(attn, lyr["o_w"])

        # fused: x = x + attn_out  and  h = post_attention_layernorm(attn_out)
        x, h = pallas_add_rmsnorm(x, attn_out, lyr["post_ln_w"], cfg["rms_eps"])

        act = pallas_gate_up_gelu(h, lyr["gate_w"], lyr["up_w"])      # fused gelu(gate)*up
        x = pallas_matmul(act, lyr["down_w"], residual=x)             # fused x + mlp

    return pallas_rmsnorm(x, params["final_norm_w"], cfg["rms_eps"])


# -----------------------------------------------------------------------------
# Deterministic parameter initialization (bf16 weights, f32 norm scales)
# -----------------------------------------------------------------------------

def init_params(key, cfg):
    H, I = cfg["hidden_size"], cfg["intermediate_size"]
    Hq, Hkv, Dh = cfg["num_heads"], cfg["num_kv_heads"], cfg["head_dim"]
    keys = iter(jax.random.split(key, cfg["num_layers"] * 8))

    def dense(shape, scale=0.02):
        return (scale * jax.random.normal(next(keys), shape, jnp.float32)).astype(jnp.bfloat16)

    layers = []
    for _ in range(cfg["num_layers"]):
        q_w = dense((H, Hq * Dh))
        k_w = dense((H, Hkv * Dh))
        v_w = dense((H, Hkv * Dh))
        layers.append(dict(
            qkv_w=jnp.concatenate([q_w, k_w, v_w], axis=1),   # fused QKV projection weight
            o_w=dense((Hq * Dh, H)),
            gate_w=dense((H, I)),
            up_w=dense((H, I)),
            down_w=dense((I, H)),
            post_ln_w=jnp.zeros((H,), jnp.float32),            # GemmaRMSNorm inits to zeros
        ))
    return dict(layers=layers, final_norm_w=jnp.zeros((H,), jnp.float32))


# -----------------------------------------------------------------------------
# Main
# -----------------------------------------------------------------------------

if __name__ == "__main__":
    # Small config; head_dim=128 keeps the fused-QKV column blocks lane-aligned, and
    # num_kv_heads is chosen so the reference's view(B,T,num_key_value_grp,Dh) is
    # shape-consistent as written (num_key_value_grp == num_key_value_head).
    cfg = dict(
        hidden_size=256, intermediate_size=512, num_layers=2,
        num_heads=4, num_kv_heads=2, head_dim=128,
        rms_eps=1e-6, rope_theta=10000.0,
    )
    B, T = 2, 16

    params = init_params(jax.random.PRNGKey(0), cfg)
    x = jax.random.normal(jax.random.PRNGKey(0), (B, T, cfg["hidden_size"]), jnp.float32)
    position_ids = jnp.broadcast_to(jnp.arange(T, dtype=jnp.int32)[None, :], (B, T))

    # attn_mask=None (SDPA no-mask path, kv_cache=None prefill) — avoids a (B,1,T,T) DMA.
    fwd = jax.jit(lambda p, xx, pos: gemma_forward(p, xx, None, pos, cfg))
    out = fwd(params, x, position_ids)
    jax.block_until_ready(out)

    assert out.shape == (B, T, cfg["hidden_size"])
    assert bool(jnp.all(jnp.isfinite(out.astype(jnp.float32))))
    print("KERNEL_OK")
</pallas_src>

<mosaic_0001>
module attributes {stable_mosaic.version = 11 : i64} {
  func.func @_matmul_kernel(%arg0: i32, %arg1: i32, %arg2: i32, %arg3: memref<32x512xbf16, #tpu.memory_space<vmem>>, %arg4: memref<512x128xbf16, #tpu.memory_space<vmem>>, %arg5: memref<32x128xbf16, #tpu.memory_space<vmem>>, %arg6: memref<32x128xf32, #tpu.memory_space<vmem>>) attributes {dimension_semantics = [#tpu.dimension_semantics<parallel>, #tpu.dimension_semantics<parallel>, #tpu.dimension_semantics<arbitrary>], iteration_bounds = array<i64: 1, 2, 1>, scalar_prefetch = 0 : i64, scratch_operands = 1 : i64, tpu.core_type = #tpu.core_type<tc>, window_params = [{transform_indices = @transform_0, window_bounds = array<i64: 32, 512>}, {transform_indices = @transform_1, window_bounds = array<i64: 512, 128>}, {transform_indices = @transform_2, window_bounds = array<i64: 32, 128>}]} {
    %c0_i32 = arith.constant 0 : i32
    %0 = arith.cmpi eq, %arg2, %c0_i32 : i32
    %1 = arith.extui %0 : i1 to i32
    %c0_i32_0 = arith.constant 0 : i32
    %2 = arith.cmpi ne, %1, %c0_i32_0 : i32
    scf.if %2 {
      %cst_10 = arith.constant 0.000000e+00 : f32
      %12 = vector.broadcast %cst_10 : f32 to vector<32x128xf32>
      %c0_11 = arith.constant 0 : index
      %c0_12 = arith.constant 0 : index
      %13 = vector.load %arg6[%c0_11, %c0_12] : memref<32x128xf32, #tpu.memory_space<vmem>>, vector<32x128xf32>
      tpu.vector_store %arg6[%c0_11, %c0_12], %12 {strides = array<i32>} : memref<32x128xf32, #tpu.memory_space<vmem>>, vector<32x128xf32>,
    } else {
    }
    %c0 = arith.constant 0 : index
    %c0_1 = arith.constant 0 : index
    %3 = vector.load %arg6[%c0, %c0_1] : memref<32x128xf32, #tpu.memory_space<vmem>>, vector<32x128xf32>
    %c0_2 = arith.constant 0 : index
    %c0_3 = arith.constant 0 : index
    %4 = vector.load %arg3[%c0_2, %c0_3] : memref<32x512xbf16, #tpu.memory_space<vmem>>, vector<32x512xbf16>
    %c0_4 = arith.constant 0 : index
    %c0_5 = arith.constant 0 : index
    %5 = vector.load %arg4[%c0_4, %c0_5] : memref<512x128xbf16, #tpu.memory_space<vmem>>, vector<512x128xbf16>
    %cst = arith.constant dense<0.000000e+00> : vector<32x128xf32>
    %6 = tpu.matmul %4, %5, %cst {dimension_numbers = #tpu.dot_dimension_numbers<[1], [0], [0], [1], [0, 0, 1, 1], [], []>} : vector<32x512xbf16>, vector<512x128xbf16>, vector<32x128xf32> -> vector<32x128xf32>
    %7 = arith.addf %3, %6 : vector<32x128xf32>
    %c0_6 = arith.constant 0 : index
    %c0_7 = arith.constant 0 : index
    %8 = vector.load %arg6[%c0_6, %c0_7] : memref<32x128xf32, #tpu.memory_space<vmem>>, vector<32x128xf32>
    tpu.vector_store %arg6[%c0_6, %c0_7], %7 {strides = array<i32>} : memref<32x128xf32, #tpu.memory_space<vmem>>, vector<32x128xf32>,
    %c0_i32_8 = arith.constant 0 : i32
    %9 = arith.cmpi eq, %arg2, %c0_i32_8 : i32
    %10 = arith.extui %9 : i1 to i32
    %c0_i32_9 = arith.constant 0 : i32
    %11 = arith.cmpi ne, %10, %c0_i32_9 : i32
    scf.if %11 {
      %c0_10 = arith.constant 0 : index
      %c0_11 = arith.constant 0 : index
      %12 = vector.load %arg6[%c0_10, %c0_11] : memref<32x128xf32, #tpu.memory_space<vmem>>, vector<32x128xf32>
      %13 = arith.truncf %12 : vector<32x128xf32> to vector<32x128xbf16>
      %c0_12 = arith.constant 0 : index
      %c0_13 = arith.constant 0 : index
      %14 = vector.load %arg5[%c0_12, %c0_13] : memref<32x128xbf16, #tpu.memory_space<vmem>>, vector<32x128xbf16>
      tpu.vector_store %arg5[%c0_12, %c0_13], %13 {strides = array<i32>} : memref<32x128xbf16, #tpu.memory_space<vmem>>, vector<32x128xbf16>,
    } else {
    }
    return
  }
  func.func @transform_0(%arg0: i32, %arg1: i32, %arg2: i32) -> (i32, i32) {
    %c0_i32 = arith.constant 0 : i32
    return %arg0, %arg2 : i32, i32
  }
  func.func @transform_1(%arg0: i32, %arg1: i32, %arg2: i32) -> (i32, i32) {
    %c0_i32 = arith.constant 0 : i32
    return %arg2, %arg1 : i32, i32
  }
  func.func @transform_2(%arg0: i32, %arg1: i32, %arg2: i32) -> (i32, i32) {
    %c0_i32 = arith.constant 0 : i32
    return %arg0, %arg1 : i32, i32
  }
}

module attributes {stable_mosaic.version = 11 : i64} {
  func.func @_flash_attn_kernel(%arg0: i32, %arg1: i32, %arg2: i32, %arg3: i32, %arg4: memref<1x16x256xbf16, #tpu.memory_space<vmem>>, %arg5: memref<1x16x128xbf16, #tpu.memory_space<vmem>>, %arg6: memref<1x16x128xbf16, #tpu.memory_space<vmem>>, %arg7: memref<1x16x128xf32, #tpu.memory_space<vmem>>, %arg8: memref<1x16x128xf32, #tpu.memory_space<vmem>>, %arg9: memref<1x16x128xf32, #tpu.memory_space<vmem>>, %arg10: memref<1x16x128xf32, #tpu.memory_space<vmem>>, %arg11: memref<1x16x256xbf16, #tpu.memory_space<vmem>>, %arg12: memref<2x16x1xf32, #tpu.memory_space<vmem>>, %arg13: memref<2x16x1xf32, #tpu.memory_space<vmem>>, %arg14: memref<16x256xf32, #tpu.memory_space<vmem>>) attributes {dimension_semantics = [#tpu.dimension_semantics<parallel>, #tpu.dimension_semantics<parallel>, #tpu.dimension_semantics<parallel>, #tpu.dimension_semantics<arbitrary>], iteration_bounds = array<i64: 2, 2, 1, 1>, scalar_prefetch = 0 : i64, scratch_operands = 3 : i64, tpu.core_type = #tpu.core_type<tc>, window_params = [{transform_indices = @transform_0, window_bounds = array<i64: 1, 16, 256>}, {transform_indices = @transform_1, window_bounds = array<i64: 1, 16, 128>}, {transform_indices = @transform_2, window_bounds = array<i64: 1, 16, 128>}, {transform_indices = @transform_3, window_bounds = array<i64: 1, 16, 128>}, {transform_indices = @transform_4, window_bounds = array<i64: 1, 16, 128>}, {transform_indices = @transform_5, window_bounds = array<i64: 1, 16, 128>}, {transform_indices = @transform_6, window_bounds = array<i64: 1, 16, 128>}, {transform_indices = @transform_7, window_bounds = array<i64: 1, 16, 256>}]} {
    %c0_i32 = arith.constant 0 : i32
    %0 = arith.cmpi eq, %arg3, %c0_i32 : i32
    %1 = arith.extui %0 : i1 to i32
    %c0_i32_0 = arith.constant 0 : i32
    %2 = arith.cmpi ne, %1, %c0_i32_0 : i32
    scf.if %2 {
      %cst_72 = arith.constant 0xFF800000 : f32
      %126 = vector.broadcast %cst_72 : f32 to vector<2x16x1xf32>
      %c0_73 = arith.constant 0 : index
      %c0_74 = arith.constant 0 : index
      %c0_75 = arith.constant 0 : index
      %127 = vector.load %arg12[%c0_73, %c0_74, %c0_75] : memref<2x16x1xf32, #tpu.memory_space<vmem>>, vector<2x16x1xf32>
      tpu.vector_store %arg12[%c0_73, %c0_74, %c0_75], %126 {strides = array<i32>} : memref<2x16x1xf32, #tpu.memory_space<vmem>>, vector<2x16x1xf32>,
      %cst_76 = arith.constant 0.000000e+00 : f32
      %128 = vector.broadcast %cst_76 : f32 to vector<2x16x1xf32>
      %c0_77 = arith.constant 0 : index
      %c0_78 = arith.constant 0 : index
      %c0_79 = arith.constant 0 : index
      %129 = vector.load %arg13[%c0_77, %c0_78, %c0_79] : memref<2x16x1xf32, #tpu.memory_space<vmem>>, vector<2x16x1xf32>
      tpu.vector_store %arg13[%c0_77, %c0_78, %c0_79], %128 {strides = array<i32>} : memref<2x16x1xf32, #tpu.memory_space<vmem>>, vector<2x16x1xf32>,
      %cst_80 = arith.constant 0.000000e+00 : f32
      %130 = vector.broadcast %cst_80 : f32 to vector<16x256xf32>
      %c0_81 = arith.constant 0 : index
      %c0_82 = arith.constant 0 : index
      %131 = vector.load %arg14[%c0_81, %c0_82] : memref<16x256xf32, #tpu.memory_space<vmem>>, vector<16x256xf32>
      tpu.vector_store %arg14[%c0_81, %c0_82], %130 {strides = array<i32>} : memref<16x256xf32, #tpu.memory_space<vmem>>, vector<16x256xf32>,
    } else {
    }
    %c0 = arith.constant 0 : index
    %c0_1 = arith.constant 0 : index
    %c0_2 = arith.constant 0 : index
    %3 = vector.load %arg5[%c0, %c0_1, %c0_2] : memref<1x16x128xbf16, #tpu.memory_space<vmem>>, vector<1x16x128xbf16>
    %4 = vector.shape_cast %3 : vector<1x16x128xbf16> to vector<16x128xbf16>
    %5 = arith.extf %4 : vector<16x128xbf16> to vector<16x128xf32>
    %c0_3 = arith.constant 0 : index
    %c0_4 = arith.constant 0 : index
    %c0_5 = arith.constant 0 : index
    %6 = vector.load %arg9[%c0_3, %c0_4, %c0_5] : memref<1x16x128xf32, #tpu.memory_space<vmem>>, vector<1x16x128xf32>
    %7 = vector.shape_cast %6 : vector<1x16x128xf32> to vector<16x128xf32>
    %c0_6 = arith.constant 0 : index
    %c0_7 = arith.constant 0 : index
    %c0_8 = arith.constant 0 : index
    %8 = vector.load %arg10[%c0_6, %c0_7, %c0_8] : memref<1x16x128xf32, #tpu.memory_space<vmem>>, vector<1x16x128xf32>
    %9 = vector.shape_cast %8 : vector<1x16x128xf32> to vector<16x128xf32>
    %c64_i32 = arith.constant 64 : i32
    %10 = tpu.dynamic_rotate %5 by %c64_i32 dim 1 : vector<16x128xf32>, i32 -> vector<16x128xf32>
    %11 = tpu.iota {dimensions = array<i32: 1>} : vector<16x128xi32>
    %c64_i32_9 = arith.constant 64 : i32
    %12 = vector.broadcast %c64_i32_9 : i32 to vector<16x128xi32>
    %13 = arith.cmpi slt, %11, %12 : vector<16x128xi32>
    %cst = arith.constant 0.000000e+00 : f32
    %14 = vector.broadcast %cst : f32 to vector<16x128xf32>
    %15 = arith.subf %14, %10 : vector<16x128xf32>
    %16 = arith.select %13, %15, %10 : vector<16x128xi1>, vector<16x128xf32>
    %17 = arith.mulf %5, %7 : vector<16x128xf32>
    %18 = arith.mulf %16, %9 : vector<16x128xf32>
    %19 = arith.addf %17, %18 : vector<16x128xf32>
    %20 = arith.truncf %19 : vector<16x128xf32> to vector<16x128xbf16>
    %c0_10 = arith.constant 0 : index
    %c0_11 = arith.constant 0 : index
    %c0_12 = arith.constant 0 : index
    %21 = vector.load %arg6[%c0_10, %c0_11, %c0_12] : memref<1x16x128xbf16, #tpu.memory_space<vmem>>, vector<1x16x128xbf16>
    %22 = vector.shape_cast %21 : vector<1x16x128xbf16> to vector<16x128xbf16>
    %c0_13 = arith.constant 0 : index
    %c0_14 = arith.constant 0 : index
    %c0_15 = arith.constant 0 : index
    %23 = vector.load %arg4[%c0_13, %c0_14, %c0_15] : memref<1x16x256xbf16, #tpu.memory_space<vmem>>, vector<1x16x256xbf16>
    %24 = vector.shape_cast %23 : vector<1x16x256xbf16> to vector<16x256xbf16>
    %c0_16 = arith.constant 0 : index
    %c0_17 = arith.constant 0 : index
    %c0_18 = arith.constant 0 : index
    %25 = vector.load %arg7[%c0_16, %c0_17, %c0_18] : memref<1x16x128xf32, #tpu.memory_space<vmem>>, vector<1x16x128xf32>
    %26 = vector.shape_cast %25 : vector<1x16x128xf32> to vector<16x128xf32>
    %c0_19 = arith.constant 0 : index
    %c0_20 = arith.constant 0 : index
    %c0_21 = arith.constant 0 : index
    %27 = vector.load %arg8[%c0_19, %c0_20, %c0_21] : memref<1x16x128xf32, #tpu.memory_space<vmem>>, vector<1x16x128xf32>
    %28 = vector.shape_cast %27 : vector<1x16x128xf32> to vector<16x128xf32>
    %29 = vector.extract_strided_slice %24 {offsets = [0, 0], sizes = [16, 128], strides = [1, 1]} : vector<16x256xbf16> to vector<16x128xbf16>
    %30 = arith.extf %29 : vector<16x128xbf16> to vector<16x128xf32>
    %c64_i32_22 = arith.constant 64 : i32
    %31 = tpu.dynamic_rotate %30 by %c64_i32_22 dim 1 : vector<16x128xf32>, i32 -> vector<16x128xf32>
    %32 = tpu.iota {dimensions = array<i32: 1>} : vector<16x128xi32>
    %c64_i32_23 = arith.constant 64 : i32
    %33 = vector.broadcast %c64_i32_23 : i32 to vector<16x128xi32>
    %34 = arith.cmpi slt, %32, %33 : vector<16x128xi32>
    %cst_24 = arith.constant 0.000000e+00 : f32
    %35 = vector.broadcast %cst_24 : f32 to vector<16x128xf32>
    %36 = arith.subf %35, %31 : vector<16x128xf32>
    %37 = arith.select %34, %36, %31 : vector<16x128xi1>, vector<16x128xf32>
    %38 = arith.mulf %30, %26 : vector<16x128xf32>
    %39 = arith.mulf %37, %28 : vector<16x128xf32>
    %40 = arith.addf %38, %39 : vector<16x128xf32>
    %41 = arith.truncf %40 : vector<16x128xf32> to vector<16x128xbf16>
    %cst_25 = arith.constant dense<0.000000e+00> : vector<16x16xf32>
    %42 = tpu.matmul %41, %20, %cst_25 {dimension_numbers = #tpu.dot_dimension_numbers<[1], [1], [0], [0], [0, 0, 1, 0], [], []>} : vector<16x128xbf16>, vector<16x128xbf16>, vector<16x16xf32> -> vector<16x16xf32>
    %cst_26 = arith.constant 0.0883883461 : f32
    %43 = vector.broadcast %cst_26 : f32 to vector<16x16xf32>
    %44 = arith.mulf %42, %43 : vector<16x16xf32>
    %c0_27 = arith.constant 0 : index
    %c0_28 = arith.constant 0 : index
    %c0_29 = arith.constant 0 : index
    %45 = vector.load %arg12[%c0_27, %c0_28, %c0_29] : memref<2x16x1xf32, #tpu.memory_space<vmem>>, vector<1x16x1xf32>
    %46 = vector.shape_cast %45 : vector<1x16x1xf32> to vector<16x1xf32>
    %cst_30 = arith.constant dense<0xFF800000> : vector<16xf32>
    %47 = vector.multi_reduction <maximumf>, %44, %cst_30 [1] : vector<16x16xf32> to vector<16xf32>
    %48 = vector.shape_cast %47 : vector<16xf32> to vector<16x1xf32>
    %49 = arith.maximumf %46, %48 : vector<16x1xf32>
    %cst_31 = arith.constant -1.000000e+30 : f32
    %50 = vector.broadcast %cst_31 : f32 to vector<16x1xf32>
    %51 = arith.maximumf %49, %50 : vector<16x1xf32>
    %52 = arith.subf %46, %51 : vector<16x1xf32>
    %53 = math.exp %52 : vector<16x1xf32>
    %54 = vector.broadcast %51 : vector<16x1xf32> to vector<16x16xf32>
    %55 = arith.subf %44, %54 : vector<16x16xf32>
    %56 = math.exp %55 : vector<16x16xf32>
    %c0_32 = arith.constant 0 : index
    %c0_33 = arith.constant 0 : index
    %c0_34 = arith.constant 0 : index
    %57 = vector.load %arg13[%c0_32, %c0_33, %c0_34] : memref<2x16x1xf32, #tpu.memory_space<vmem>>, vector<1x16x1xf32>
    %58 = vector.shape_cast %57 : vector<1x16x1xf32> to vector<16x1xf32>
    %59 = arith.mulf %53, %58 : vector<16x1xf32>
    %cst_35 = arith.constant dense<0.000000e+00> : vector<16xf32>
    %60 = vector.multi_reduction <add>, %56, %cst_35 [1] : vector<16x16xf32> to vector<16xf32>
    %61 = vector.shape_cast %60 : vector<16xf32> to vector<16x1xf32>
    %62 = arith.addf %59, %61 : vector<16x1xf32>
    %c0_36 = arith.constant 0 : index
    %c0_37 = arith.constant 0 : index
    %c0_38 = arith.constant 0 : index
    %63 = vector.load %arg13[%c0_36, %c0_37, %c0_38] : memref<2x16x1xf32, #tpu.memory_space<vmem>>, vector<1x16x1xf32>
    %64 = vector.shape_cast %63 : vector<1x16x1xf32> to vector<16x1xf32>
    %65 = vector.shape_cast %62 : vector<16x1xf32> to vector<1x16x1xf32>
    tpu.vector_store %arg13[%c0_36, %c0_37, %c0_38], %65 {strides = array<i32>} : memref<2x16x1xf32, #tpu.memory_space<vmem>>, vector<1x16x1xf32>,
    %c0_39 = arith.constant 0 : index
    %c0_40 = arith.constant 0 : index
    %66 = vector.load %arg14[%c0_39, %c0_40] : memref<16x256xf32, #tpu.memory_space<vmem>>, vector<16x128xf32>
    %67 = vector.broadcast %53 : vector<16x1xf32> to vector<16x128xf32>
    %68 = arith.mulf %67, %66 : vector<16x128xf32>
    %69 = arith.truncf %56 : vector<16x16xf32> to vector<16x16xbf16>
    %cst_41 = arith.constant dense<0.000000e+00> : vector<16x128xf32>
    %70 = tpu.matmul %69, %22, %cst_41 {dimension_numbers = #tpu.dot_dimension_numbers<[1], [0], [0], [1], [0, 0, 1, 1], [], []>} : vector<16x16xbf16>, vector<16x128xbf16>, vector<16x128xf32> -> vector<16x128xf32>
    %71 = arith.addf %68, %70 : vector<16x128xf32>
    %c0_42 = arith.constant 0 : index
    %c0_43 = arith.constant 0 : index
    %72 = vector.load %arg14[%c0_42, %c0_43] : memref<16x256xf32, #tpu.memory_space<vmem>>, vector<16x128xf32>
    tpu.vector_store %arg14[%c0_42, %c0_43], %71 {strides = array<i32>} : memref<16x256xf32, #tpu.memory_space<vmem>>, vector<16x128xf32>,
    %c0_44 = arith.constant 0 : index
    %c0_45 = arith.constant 0 : index
    %c0_46 = arith.constant 0 : index
    %73 = vector.load %arg12[%c0_44, %c0_45, %c0_46] : memref<2x16x1xf32, #tpu.memory_space<vmem>>, vector<1x16x1xf32>
    %74 = vector.shape_cast %73 : vector<1x16x1xf32> to vector<16x1xf32>
    %75 = vector.shape_cast %51 : vector<16x1xf32> to vector<1x16x1xf32>
    tpu.vector_store %arg12[%c0_44, %c0_45, %c0_46], %75 {strides = array<i32>} : memref<2x16x1xf32, #tpu.memory_space<vmem>>, vector<1x16x1xf32>,
    %76 = vector.extract_strided_slice %24 {offsets = [0, 128], sizes = [16, 128], strides = [1, 1]} : vector<16x256xbf16> to vector<16x128xbf16>
    %77 = arith.extf %76 : vector<16x128xbf16> to vector<16x128xf32>
    %c64_i32_47 = arith.constant 64 : i32
    %78 = tpu.dynamic_rotate %77 by %c64_i32_47 dim 1 : vector<16x128xf32>, i32 -> vector<16x128xf32>
    %79 = tpu.iota {dimensions = array<i32: 1>} : vector<16x128xi32>
    %c64_i32_48 = arith.constant 64 : i32
    %80 = vector.broadcast %c64_i32_48 : i32 to vector<16x128xi32>
    %81 = arith.cmpi slt, %79, %80 : vector<16x128xi32>
    %cst_49 = arith.constant 0.000000e+00 : f32
    %82 = vector.broadcast %cst_49 : f32 to vector<16x128xf32>
    %83 = arith.subf %82, %78 : vector<16x128xf32>
    %84 = arith.select %81, %83, %78 : vector<16x128xi1>, vector<16x128xf32>
    %85 = arith.mulf %77, %26 : vector<16x128xf32>
    %86 = arith.mulf %84, %28 : vector<16x128xf32>
    %87 = arith.addf %85, %86 : vector<16x128xf32>
    %88 = arith.truncf %87 : vector<16x128xf32> to vector<16x128xbf16>
    %cst_50 = arith.constant dense<0.000000e+00> : vector<16x16xf32>
    %89 = tpu.matmul %88, %20, %cst_50 {dimension_numbers = #tpu.dot_dimension_numbers<[1], [1], [0], [0], [0, 0, 1, 0], [], []>} : vector<16x128xbf16>, vector<16x128xbf16>, vector<16x16xf32> -> vector<16x16xf32>
    %cst_51 = arith.constant 0.0883883461 : f32
    %90 = vector.broadcast %cst_51 : f32 to vector<16x16xf32>
    %91 = arith.mulf %89, %90 : vector<16x16xf32>
    %c1 = arith.constant 1 : index
    %c0_52 = arith.constant 0 : index
    %c0_53 = arith.constant 0 : index
    %92 = vector.load %arg12[%c1, %c0_52, %c0_53] : memref<2x16x1xf32, #tpu.memory_space<vmem>>, vector<1x16x1xf32>
    %93 = vector.shape_cast %92 : vector<1x16x1xf32> to vector<16x1xf32>
    %cst_54 = arith.constant dense<0xFF800000> : vector<16xf32>
    %94 = vector.multi_reduction <maximumf>, %91, %cst_54 [1] : vector<16x16xf32> to vector<16xf32>
    %95 = vector.shape_cast %94 : vector<16xf32> to vector<16x1xf32>
    %96 = arith.maximumf %93, %95 : vector<16x1xf32>
    %cst_55 = arith.constant -1.000000e+30 : f32
    %97 = vector.broadcast %cst_55 : f32 to vector<16x1xf32>
    %98 = arith.maximumf %96, %97 : vector<16x1xf32>
    %99 = arith.subf %93, %98 : vector<16x1xf32>
    %100 = math.exp %99 : vector<16x1xf32>
    %101 = vector.broadcast %98 : vector<16x1xf32> to vector<16x16xf32>
    %102 = arith.subf %91, %101 : vector<16x16xf32>
    %103 = math.exp %102 : vector<16x16xf32>
    %c1_56 = arith.constant 1 : index
    %c0_57 = arith.constant 0 : index
    %c0_58 = arith.constant 0 : index
    %104 = vector.load %arg13[%c1_56, %c0_57, %c0_58] : memref<2x16x1xf32, #tpu.memory_space<vmem>>, vector<1x16x1xf32>
    %105 = vector.shape_cast %104 : vector<1x16x1xf32> to vector<16x1xf32>
    %106 = arith.mulf %100, %105 : vector<16x1xf32>
    %cst_59 = arith.constant dense<0.000000e+00> : vector<16xf32>
    %107 = vector.multi_reduction <add>, %103, %cst_59 [1] : vector<16x16xf32> to vector<16xf32>
    %108 = vector.shape_cast %107 : vector<16xf32> to vector<16x1xf32>
    %109 = arith.addf %106, %108 : vector<16x1xf32>
    %c1_60 = arith.constant 1 : index
    %c0_61 = arith.constant 0 : index
    %c0_62 = arith.constant 0 : index
    %110 = vector.load %arg13[%c1_60, %c0_61, %c0_62] : memref<2x16x1xf32, #tpu.memory_space<vmem>>, vector<1x16x1xf32>
    %111 = vector.shape_cast %110 : vector<1x16x1xf32> to vector<16x1xf32>
    %112 = vector.shape_cast %109 : vector<16x1xf32> to vector<1x16x1xf32>
    tpu.vector_store %arg13[%c1_60, %c0_61, %c0_62], %112 {strides = array<i32>} : memref<2x16x1xf32, #tpu.memory_space<vmem>>, vector<1x16x1xf32>,
    %c0_63 = arith.constant 0 : index
    %c128 = arith.constant 128 : index
    %113 = vector.load %arg14[%c0_63, %c128] : memref<16x256xf32, #tpu.memory_space<vmem>>, vector<16x128xf32>
    %114 = vector.broadcast %100 : vector<16x1xf32> to vector<16x128xf32>
    %115 = arith.mulf %114, %113 : vector<16x128xf32>
    %116 = arith.truncf %103 : vector<16x16xf32> to vector<16x16xbf16>
    %cst_64 = arith.constant dense<0.000000e+00> : vector<16x128xf32>
    %117 = tpu.matmul %116, %22, %cst_64 {dimension_numbers = #tpu.dot_dimension_numbers<[1], [0], [0], [1], [0, 0, 1, 1], [], []>} : vector<16x16xbf16>, vector<16x128xbf16>, vector<16x128xf32> -> vector<16x128xf32>
    %118 = arith.addf %115, %117 : vector<16x128xf32>
    %c0_65 = arith.constant 0 : index
    %c128_66 = arith.constant 128 : index
    %119 = vector.load %arg14[%c0_65, %c128_66] : memref<16x256xf32, #tpu.memory_space<vmem>>, vector<16x128xf32>
    tpu.vector_store %arg14[%c0_65, %c128_66], %118 {strides = array<i32>} : memref<16x256xf32, #tpu.memory_space<vmem>>, vector<16x128xf32>,
    %c1_67 = arith.constant 1 : index
    %c0_68 = arith.constant 0 : index
    %c0_69 = arith.constant 0 : index
    %120 = vector.load %arg12[%c1_67, %c0_68, %c0_69] : memref<2x16x1xf32, #tpu.memory_space<vmem>>, vector<1x16x1xf32>
    %121 = vector.shape_cast %120 : vector<1x16x1xf32> to vector<16x1xf32>
    %122 = vector.shape_cast %98 : vector<16x1xf32> to vector<1x16x1xf32>
    tpu.vector_store %arg12[%c1_67, %c0_68, %c0_69], %122 {strides = array<i32>} : memref<2x16x1xf32, #tpu.memory_space<vmem>>, vector<1x16x1xf32>,
    %c0_i32_70 = arith.constant 0 : i32
    %123 = arith.cmpi eq, %arg3, %c0_i32_70 : i32
    %124 = arith.extui %123 : i1 to i32
    %c0_i32_71 = arith.constant 0 : i32
    %125 = arith.cmpi ne, %124, %c0_i32_71 : i32
    scf.if %125 {
      %c0_72 = arith.constant 0 : index
      %c0_73 = arith.constant 0 : index
      %c0_74 = arith.constant 0 : index
      %126 = vector.load %arg13[%c0_72, %c0_73, %c0_74] : memref<2x16x1xf32, #tpu.memory_space<vmem>>, vector<1x16x1xf32>
      %127 = vector.shape_cast %126 : vector<1x16x1xf32> to vector<16x1xf32>
      %128 = tpu.reciprocal %127 {approx = true} : vector<16x1xf32> -> vector<16x1xf32>
      %c0_75 = arith.constant 0 : index
      %c0_76 = arith.constant 0 : index
      %129 = vector.load %arg14[%c0_75, %c0_76] : memref<16x256xf32, #tpu.memory_space<vmem>>, vector<16x128xf32>
      %130 = vector.broadcast %128 : vector<16x1xf32> to vector<16x128xf32>
      %131 = arith.mulf %129, %130 : vector<16x128xf32>
      %132 = arith.truncf %131 : vector<16x128xf32> to vector<16x128xbf16>
      %c0_77 = arith.constant 0 : index
      %c0_78 = arith.constant 0 : index
      %c0_79 = arith.constant 0 : index
      %133 = vector.load %arg11[%c0_77, %c0_78, %c0_79] : memref<1x16x256xbf16, #tpu.memory_space<vmem>>, vector<1x16x128xbf16>
      %134 = vector.shape_cast %133 : vector<1x16x128xbf16> to vector<16x128xbf16>
      %135 = vector.shape_cast %132 : vector<16x128xbf16> to vector<1x16x128xbf16>
      tpu.vector_store %arg11[%c0_77, %c0_78, %c0_79], %135 {strides = array<i32>} : memref<1x16x256xbf16, #tpu.memory_space<vmem>>, vector<1x16x128xbf16>,
      %c1_80 = arith.constant 1 : index
      %c0_81 = arith.constant 0 : index
      %c0_82 = arith.constant 0 : index
      %136 = vector.load %arg13[%c1_80, %c0_81, %c0_82] : memref<2x16x1xf32, #tpu.memory_space<vmem>>, vector<1x16x1xf32>
      %137 = vector.shape_cast %136 : vector<1x16x1xf32> to vector<16x1xf32>
      %138 = tpu.reciprocal %137 {approx = true} : vector<16x1xf32> -> vector<16x1xf32>
      %c0_83 = arith.constant 0 : index
      %c128_84 = arith.constant 128 : index
      %139 = vector.load %arg14[%c0_83, %c128_84] : memref<16x256xf32, #tpu.memory_space<vmem>>, vector<16x128xf32>
      %140 = vector.broadcast %138 : vector<16x1xf32> to vector<16x128xf32>
      %141 = arith.mulf %139, %140 : vector<16x128xf32>
      %142 = arith.truncf %141 : vector<16x128xf32> to vector<16x128xbf16>
      %c0_85 = arith.constant 0 : index
      %c0_86 = arith.constant 0 : index
      %c128_87 = arith.constant 128 : index
      %143 = vector.load %arg11[%c0_85, %c0_86, %c128_87] : memref<1x16x256xbf16, #tpu.memory_space<vmem>>, vector<1x16x128xbf16>
      %144 = vector.shape_cast %143 : vector<1x16x128xbf16> to vector<16x128xbf16>
      %145 = vector.shape_cast %142 : vector<16x128xbf16> to vector<1x16x128xbf16>
      tpu.vector_store %arg11[%c0_85, %c0_86, %c128_87], %145 {strides = array<i32>} : memref<1x16x256xbf16, #tpu.memory_space<vmem>>, vector<1x16x128xbf16>,
    } else {
    }
    return
  }
  func.func @transform_0(%arg0: i32, %arg1: i32, %arg2: i32, %arg3: i32) -> (i32, i32, i32) {
    %c0_i32 = arith.constant 0 : i32
    return %arg0, %arg2, %arg1 : i32, i32, i32
  }
  func.func @transform_1(%arg0: i32, %arg1: i32, %arg2: i32, %arg3: i32) -> (i32, i32, i32) {
    %c4_i32 = arith.constant 4 : i32
    %0 = arith.addi %c4_i32, %arg1 : i32
    %c0_i32 = arith.constant 0 : i32
    return %arg0, %arg3, %0 : i32, i32, i32
  }
  func.func @transform_2(%arg0: i32, %arg1: i32, %arg2: i32, %arg3: i32) -> (i32, i32, i32) {
    %c6_i32 = arith.constant 6 : i32
    %0 = arith.addi %c6_i32, %arg1 : i32
    %c0_i32 = arith.constant 0 : i32
    return %arg0, %arg3, %0 : i32, i32, i32
  }
  func.func @transform_3(%arg0: i32, %arg1: i32, %arg2: i32, %arg3: i32) -> (i32, i32, i32) {
    %c0_i32 = arith.constant 0 : i32
    %c0_i32_0 = arith.constant 0 : i32
    return %arg0, %arg2, %c0_i32 : i32, i32, i32
  }
  func.func @transform_4(%arg0: i32, %arg1: i32, %arg2: i32, %arg3: i32) -> (i32, i32, i32) {
    %c0_i32 = arith.constant 0 : i32
    %c0_i32_0 = arith.constant 0 : i32
    return %arg0, %arg2, %c0_i32 : i32, i32, i32
  }
  func.func @transform_5(%arg0: i32, %arg1: i32, %arg2: i32, %arg3: i32) -> (i32, i32, i32) {
    %c0_i32 = arith.constant 0 : i32
    %c0_i32_0 = arith.constant 0 : i32
    return %arg0, %arg3, %c0_i32 : i32, i32, i32
  }
  func.func @transform_6(%arg0: i32, %arg1: i32, %arg2: i32, %arg3: i32) -> (i32, i32, i32) {
    %c0_i32 = arith.constant 0 : i32
    %c0_i32_0 = arith.constant 0 : i32
    return %arg0, %arg3, %c0_i32 : i32, i32, i32
  }
  func.func @transform_7(%arg0: i32, %arg1: i32, %arg2: i32, %arg3: i32) -> (i32, i32, i32) {
    %c0_i32 = arith.constant 0 : i32
    return %arg0, %arg2, %arg1 : i32, i32, i32
  }
}

module attributes {stable_mosaic.version = 11 : i64} {
  func.func @_matmul_kernel(%arg0: i32, %arg1: i32, %arg2: i32, %arg3: memref<32x256xbf16, #tpu.memory_space<vmem>>, %arg4: memref<256x512xbf16, #tpu.memory_space<vmem>>, %arg5: memref<32x512xbf16, #tpu.memory_space<vmem>>, %arg6: memref<32x512xf32, #tpu.memory_space<vmem>>) attributes {dimension_semantics = [#tpu.dimension_semantics<parallel>, #tpu.dimension_semantics<parallel>, #tpu.dimension_semantics<arbitrary>], iteration_bounds = array<i64: 1, 2, 1>, scalar_prefetch = 0 : i64, scratch_operands = 1 : i64, tpu.core_type = #tpu.core_type<tc>, window_params = [{transform_indices = @transform_0, window_bounds = array<i64: 32, 256>}, {transform_indices = @transform_1, window_bounds = array<i64: 256, 512>}, {transform_indices = @transform_2, window_bounds = array<i64: 32, 512>}]} {
    %c0_i32 = arith.constant 0 : i32
    %0 = arith.cmpi eq, %arg2, %c0_i32 : i32
    %1 = arith.extui %0 : i1 to i32
    %c0_i32_0 = arith.constant 0 : i32
    %2 = arith.cmpi ne, %1, %c0_i32_0 : i32
    scf.if %2 {
      %cst_10 = arith.constant 0.000000e+00 : f32
      %12 = vector.broadcast %cst_10 : f32 to vector<32x512xf32>
      %c0_11 = arith.constant 0 : index
      %c0_12 = arith.constant 0 : index
      %13 = vector.load %arg6[%c0_11, %c0_12] : memref<32x512xf32, #tpu.memory_space<vmem>>, vector<32x512xf32>
      tpu.vector_store %arg6[%c0_11, %c0_12], %12 {strides = array<i32>} : memref<32x512xf32, #tpu.memory_space<vmem>>, vector<32x512xf32>,
    } else {
    }
    %c0 = arith.constant 0 : index
    %c0_1 = arith.constant 0 : index
    %3 = vector.load %arg6[%c0, %c0_1] : memref<32x512xf32, #tpu.memory_space<vmem>>, vector<32x512xf32>
    %c0_2 = arith.constant 0 : index
    %c0_3 = arith.constant 0 : index
    %4 = vector.load %arg3[%c0_2, %c0_3] : memref<32x256xbf16, #tpu.memory_space<vmem>>, vector<32x256xbf16>
    %c0_4 = arith.constant 0 : index
    %c0_5 = arith.constant 0 : index
    %5 = vector.load %arg4[%c0_4, %c0_5] : memref<256x512xbf16, #tpu.memory_space<vmem>>, vector<256x512xbf16>
    %cst = arith.constant dense<0.000000e+00> : vector<32x512xf32>
    %6 = tpu.matmul %4, %5, %cst {dimension_numbers = #tpu.dot_dimension_numbers<[1], [0], [0], [1], [0, 0, 1, 1], [], []>} : vector<32x256xbf16>, vector<256x512xbf16>, vector<32x512xf32> -> vector<32x512xf32>
    %7 = arith.addf %3, %6 : vector<32x512xf32>
    %c0_6 = arith.constant 0 : index
    %c0_7 = arith.constant 0 : index
    %8 = vector.load %arg6[%c0_6, %c0_7] : memref<32x512xf32, #tpu.memory_space<vmem>>, vector<32x512xf32>
    tpu.vector_store %arg6[%c0_6, %c0_7], %7 {strides = array<i32>} : memref<32x512xf32, #tpu.memory_space<vmem>>, vector<32x512xf32>,
    %c0_i32_8 = arith.constant 0 : i32
    %9 = arith.cmpi eq, %arg2, %c0_i32_8 : i32
    %10 = arith.extui %9 : i1 to i32
    %c0_i32_9 = arith.constant 0 : i32
    %11 = arith.cmpi ne, %10, %c0_i32_9 : i32
    scf.if %11 {
      %c0_10 = arith.constant 0 : index
      %c0_11 = arith.constant 0 : index
      %12 = vector.load %arg6[%c0_10, %c0_11] : memref<32x512xf32, #tpu.memory_space<vmem>>, vector<32x512xf32>
      %13 = arith.truncf %12 : vector<32x512xf32> to vector<32x512xbf16>
      %c0_12 = arith.constant 0 : index
      %c0_13 = arith.constant 0 : index
      %14 = vector.load %arg5[%c0_12, %c0_13] : memref<32x512xbf16, #tpu.memory_space<vmem>>, vector<32x512xbf16>
      tpu.vector_store %arg5[%c0_12, %c0_13], %13 {strides = array<i32>} : memref<32x512xbf16, #tpu.memory_space<vmem>>, vector<32x512xbf16>,
    } else {
    }
    return
  }
  func.func @transform_0(%arg0: i32, %arg1: i32, %arg2: i32) -> (i32, i32) {
    %c0_i32 = arith.constant 0 : i32
    return %arg0, %arg2 : i32, i32
  }
  func.func @transform_1(%arg0: i32, %arg1: i32, %arg2: i32) -> (i32, i32) {
    %c0_i32 = arith.constant 0 : i32
    return %arg2, %arg1 : i32, i32
  }
  func.func @transform_2(%arg0: i32, %arg1: i32, %arg2: i32) -> (i32, i32) {
    %c0_i32 = arith.constant 0 : i32
    return %arg0, %arg1 : i32, i32
  }
}

module attributes {stable_mosaic.version = 11 : i64} {
  func.func @_add_rmsnorm_kernel(%arg0: i32, %arg1: memref<32x256xbf16, #tpu.memory_space<vmem>>, %arg2: memref<32x256xbf16, #tpu.memory_space<vmem>>, %arg3: memref<1x256xf32, #tpu.memory_space<vmem>>, %arg4: memref<32x256xbf16, #tpu.memory_space<vmem>>, %arg5: memref<32x256xbf16, #tpu.memory_space<vmem>>) attributes {dimension_semantics = [#tpu.dimension_semantics<parallel>], iteration_bounds = array<i64: 1>, scalar_prefetch = 0 : i64, scratch_operands = 0 : i64, tpu.core_type = #tpu.core_type<tc>, window_params = [{transform_indices = @transform_0, window_bounds = array<i64: 32, 256>}, {transform_indices = @transform_1, window_bounds = array<i64: 32, 256>}, {pipeline_mode = #tpu.pipeline_mode<synchronous>, transform_indices = @transform_2, window_bounds = array<i64: 1, 256>}, {transform_indices = @transform_3, window_bounds = array<i64: 32, 256>}, {transform_indices = @transform_4, window_bounds = array<i64: 32, 256>}]} {
    %c0 = arith.constant 0 : index
    %c0_0 = arith.constant 0 : index
    %0 = vector.load %arg1[%c0, %c0_0] : memref<32x256xbf16, #tpu.memory_space<vmem>>, vector<32x256xbf16>
    %1 = arith.extf %0 : vector<32x256xbf16> to vector<32x256xf32>
    %c0_1 = arith.constant 0 : index
    %c0_2 = arith.constant 0 : index
    %2 = vector.load %arg2[%c0_1, %c0_2] : memref<32x256xbf16, #tpu.memory_space<vmem>>, vector<32x256xbf16>
    %3 = arith.extf %2 : vector<32x256xbf16> to vector<32x256xf32>
    %4 = arith.addf %1, %3 : vector<32x256xf32>
    %5 = arith.truncf %4 : vector<32x256xf32> to vector<32x256xbf16>
    %c0_3 = arith.constant 0 : index
    %c0_4 = arith.constant 0 : index
    %6 = vector.load %arg4[%c0_3, %c0_4] : memref<32x256xbf16, #tpu.memory_space<vmem>>, vector<32x256xbf16>
    tpu.vector_store %arg4[%c0_3, %c0_4], %5 {strides = array<i32>} : memref<32x256xbf16, #tpu.memory_space<vmem>>, vector<32x256xbf16>,
    %7 = arith.mulf %3, %3 : vector<32x256xf32>
    %cst = arith.constant dense<0.000000e+00> : vector<32xf32>
    %8 = vector.multi_reduction <add>, %7, %cst [1] : vector<32x256xf32> to vector<32xf32>
    %9 = vector.shape_cast %8 : vector<32xf32> to vector<32x1xf32>
    %cst_5 = arith.constant 2.560000e+02 : f32
    %10 = vector.broadcast %cst_5 : f32 to vector<32x1xf32>
    %11 = arith.divf %9, %10 : vector<32x1xf32>
    %cst_6 = arith.constant 9.99999997E-7 : f32
    %12 = vector.broadcast %cst_6 : f32 to vector<32x1xf32>
    %13 = arith.addf %11, %12 : vector<32x1xf32>
    %14 = math.sqrt %13 : vector<32x1xf32>
    %15 = vector.broadcast %14 : vector<32x1xf32> to vector<32x256xf32>
    %16 = arith.mulf %3, %15 : vector<32x256xf32>
    %c0_7 = arith.constant 0 : index
    %c0_8 = arith.constant 0 : index
    %17 = vector.load %arg3[%c0_7, %c0_8] : memref<1x256xf32, #tpu.memory_space<vmem>>, vector<1x256xf32>
    %cst_9 = arith.constant 1.000000e+00 : f32
    %18 = vector.broadcast %cst_9 : f32 to vector<1x256xf32>
    %19 = arith.addf %18, %17 : vector<1x256xf32>
    %20 = vector.broadcast %19 : vector<1x256xf32> to vector<32x256xf32>
    %21 = arith.mulf %16, %20 : vector<32x256xf32>
    %22 = arith.truncf %21 : vector<32x256xf32> to vector<32x256xbf16>
    %c0_10 = arith.constant 0 : index
    %c0_11 = arith.constant 0 : index
    %23 = vector.load %arg5[%c0_10, %c0_11] : memref<32x256xbf16, #tpu.memory_space<vmem>>, vector<32x256xbf16>
    tpu.vector_store %arg5[%c0_10, %c0_11], %22 {strides = array<i32>} : memref<32x256xbf16, #tpu.memory_space<vmem>>, vector<32x256xbf16>,
    return
  }
  func.func @transform_0(%arg0: i32) -> (i32, i32) {
    %c0_i32 = arith.constant 0 : i32
    %c0_i32_0 = arith.constant 0 : i32
    return %arg0, %c0_i32 : i32, i32
  }
  func.func @transform_1(%arg0: i32) -> (i32, i32) {
    %c0_i32 = arith.constant 0 : i32
    %c0_i32_0 = arith.constant 0 : i32
    return %arg0, %c0_i32 : i32, i32
  }
  func.func @transform_2(%arg0: i32) -> (i32, i32) {
    %c0_i32 = arith.constant 0 : i32
    %c0_i32_0 = arith.constant 0 : i32
    %c0_i32_1 = arith.constant 0 : i32
    return %c0_i32, %c0_i32_0 : i32, i32
  }
  func.func @transform_3(%arg0: i32) -> (i32, i32) {
    %c0_i32 = arith.constant 0 : i32
    %c0_i32_0 = arith.constant 0 : i32
    return %arg0, %c0_i32 : i32, i32
  }
  func.func @transform_4(%arg0: i32) -> (i32, i32) {
    %c0_i32 = arith.constant 0 : i32
    %c0_i32_0 = arith.constant 0 : i32
    return %arg0, %c0_i32 : i32, i32
  }
}

module attributes {stable_mosaic.version = 11 : i64} {
  func.func @_gate_up_gelu_kernel(%arg0: i32, %arg1: i32, %arg2: i32, %arg3: memref<32x256xbf16, #tpu.memory_space<vmem>>, %arg4: memref<256x256xbf16, #tpu.memory_space<vmem>>, %arg5: memref<256x256xbf16, #tpu.memory_space<vmem>>, %arg6: memref<32x256xbf16, #tpu.memory_space<vmem>>, %arg7: memref<32x256xf32, #tpu.memory_space<vmem>>, %arg8: memref<32x256xf32, #tpu.memory_space<vmem>>) attributes {dimension_semantics = [#tpu.dimension_semantics<parallel>, #tpu.dimension_semantics<parallel>, #tpu.dimension_semantics<arbitrary>], iteration_bounds = array<i64: 1, 2, 1>, scalar_prefetch = 0 : i64, scratch_operands = 2 : i64, tpu.core_type = #tpu.core_type<tc>, window_params = [{transform_indices = @transform_0, window_bounds = array<i64: 32, 256>}, {transform_indices = @transform_1, window_bounds = array<i64: 256, 256>}, {transform_indices = @transform_2, window_bounds = array<i64: 256, 256>}, {transform_indices = @transform_3, window_bounds = array<i64: 32, 256>}]} {
    %c0_i32 = arith.constant 0 : i32
    %0 = arith.cmpi eq, %arg2, %c0_i32 : i32
    %1 = arith.extui %0 : i1 to i32
    %c0_i32_0 = arith.constant 0 : i32
    %2 = arith.cmpi ne, %1, %c0_i32_0 : i32
    scf.if %2 {
      %cst_17 = arith.constant 0.000000e+00 : f32
      %17 = vector.broadcast %cst_17 : f32 to vector<32x256xf32>
      %c0_18 = arith.constant 0 : index
      %c0_19 = arith.constant 0 : index
      %18 = vector.load %arg7[%c0_18, %c0_19] : memref<32x256xf32, #tpu.memory_space<vmem>>, vector<32x256xf32>
      tpu.vector_store %arg7[%c0_18, %c0_19], %17 {strides = array<i32>} : memref<32x256xf32, #tpu.memory_space<vmem>>, vector<32x256xf32>,
      %cst_20 = arith.constant 0.000000e+00 : f32
      %19 = vector.broadcast %cst_20 : f32 to vector<32x256xf32>
      %c0_21 = arith.constant 0 : index
      %c0_22 = arith.constant 0 : index
      %20 = vector.load %arg8[%c0_21, %c0_22] : memref<32x256xf32, #tpu.memory_space<vmem>>, vector<32x256xf32>
      tpu.vector_store %arg8[%c0_21, %c0_22], %19 {strides = array<i32>} : memref<32x256xf32, #tpu.memory_space<vmem>>, vector<32x256xf32>,
    } else {
    }
    %c0 = arith.constant 0 : index
    %c0_1 = arith.constant 0 : index
    %3 = vector.load %arg3[%c0, %c0_1] : memref<32x256xbf16, #tpu.memory_space<vmem>>, vector<32x256xbf16>
    %c0_2 = arith.constant 0 : index
    %c0_3 = arith.constant 0 : index
    %4 = vector.load %arg7[%c0_2, %c0_3] : memref<32x256xf32, #tpu.memory_space<vmem>>, vector<32x256xf32>
    %c0_4 = arith.constant 0 : index
    %c0_5 = arith.constant 0 : index
    %5 = vector.load %arg4[%c0_4, %c0_5] : memref<256x256xbf16, #tpu.memory_space<vmem>>, vector<256x256xbf16>
    %cst = arith.constant dense<0.000000e+00> : vector<32x256xf32>
    %6 = tpu.matmul %3, %5, %cst {dimension_numbers = #tpu.dot_dimension_numbers<[1], [0], [0], [1], [0, 0, 1, 1], [], []>} : vector<32x256xbf16>, vector<256x256xbf16>, vector<32x256xf32> -> vector<32x256xf32>
    %7 = arith.addf %4, %6 : vector<32x256xf32>
    %c0_6 = arith.constant 0 : index
    %c0_7 = arith.constant 0 : index
    %8 = vector.load %arg7[%c0_6, %c0_7] : memref<32x256xf32, #tpu.memory_space<vmem>>, vector<32x256xf32>
    tpu.vector_store %arg7[%c0_6, %c0_7], %7 {strides = array<i32>} : memref<32x256xf32, #tpu.memory_space<vmem>>, vector<32x256xf32>,
    %c0_8 = arith.constant 0 : index
    %c0_9 = arith.constant 0 : index
    %9 = vector.load %arg8[%c0_8, %c0_9] : memref<32x256xf32, #tpu.memory_space<vmem>>, vector<32x256xf32>
    %c0_10 = arith.constant 0 : index
    %c0_11 = arith.constant 0 : index
    %10 = vector.load %arg5[%c0_10, %c0_11] : memref<256x256xbf16, #tpu.memory_space<vmem>>, vector<256x256xbf16>
    %cst_12 = arith.constant dense<0.000000e+00> : vector<32x256xf32>
    %11 = tpu.matmul %3, %10, %cst_12 {dimension_numbers = #tpu.dot_dimension_numbers<[1], [0], [0], [1], [0, 0, 1, 1], [], []>} : vector<32x256xbf16>, vector<256x256xbf16>, vector<32x256xf32> -> vector<32x256xf32>
    %12 = arith.addf %9, %11 : vector<32x256xf32>
    %c0_13 = arith.constant 0 : index
    %c0_14 = arith.constant 0 : index
    %13 = vector.load %arg8[%c0_13, %c0_14] : memref<32x256xf32, #tpu.memory_space<vmem>>, vector<32x256xf32>
    tpu.vector_store %arg8[%c0_13, %c0_14], %12 {strides = array<i32>} : memref<32x256xf32, #tpu.memory_space<vmem>>, vector<32x256xf32>,
    %c0_i32_15 = arith.constant 0 : i32
    %14 = arith.cmpi eq, %arg2, %c0_i32_15 : i32
    %15 = arith.extui %14 : i1 to i32
    %c0_i32_16 = arith.constant 0 : i32
    %16 = arith.cmpi ne, %15, %c0_i32_16 : i32
    scf.if %16 {
      %c0_17 = arith.constant 0 : index
      %c0_18 = arith.constant 0 : index
      %17 = vector.load %arg7[%c0_17, %c0_18] : memref<32x256xf32, #tpu.memory_space<vmem>>, vector<32x256xf32>
      %cst_19 = arith.constant 5.000000e-01 : f32
      %18 = vector.broadcast %cst_19 : f32 to vector<32x256xf32>
      %19 = arith.mulf %18, %17 : vector<32x256xf32>
      %cst_20 = arith.constant 0.707106769 : f32
      %20 = vector.broadcast %cst_20 : f32 to vector<32x256xf32>
      %21 = arith.mulf %17, %20 : vector<32x256xf32>
      %cst_21 = arith.constant -4.000000e+00 : f32
      %cst_22 = arith.constant 4.000000e+00 : f32
      %22 = vector.broadcast %cst_21 : f32 to vector<32x256xf32>
      %23 = arith.maximumf %22, %21 : vector<32x256xf32>
      %24 = vector.broadcast %cst_22 : f32 to vector<32x256xf32>
      %25 = arith.minimumf %24, %23 : vector<32x256xf32>
      %26 = arith.mulf %25, %25 : vector<32x256xf32>
      %cst_23 = arith.constant -2.72614237E-10 : f32
      %27 = vector.broadcast %cst_23 : f32 to vector<32x256xf32>
      %28 = arith.mulf %27, %26 : vector<32x256xf32>
      %cst_24 = arith.constant 2.77068146E-8 : f32
      %29 = vector.broadcast %cst_24 : f32 to vector<32x256xf32>
      %30 = arith.addf %28, %29 : vector<32x256xf32>
      %31 = arith.mulf %30, %26 : vector<32x256xf32>
      %cst_25 = arith.constant -2.10102394E-6 : f32
      %32 = vector.broadcast %cst_25 : f32 to vector<32x256xf32>
      %33 = arith.addf %31, %32 : vector<32x256xf32>
      %34 = arith.mulf %33, %26 : vector<32x256xf32>
      %cst_26 = arith.constant -5.69250624E-5 : f32
      %35 = vector.broadcast %cst_26 : f32 to vector<32x256xf32>
      %36 = arith.addf %34, %35 : vector<32x256xf32>
      %37 = arith.mulf %36, %26 : vector<32x256xf32>
      %cst_27 = arith.constant -7.34990637E-4 : f32
      %38 = vector.broadcast %cst_27 : f32 to vector<32x256xf32>
      %39 = arith.addf %37, %38 : vector<32x256xf32>
      %40 = arith.mulf %39, %26 : vector<32x256xf32>
      %cst_28 = arith.constant -2.954600e-03 : f32
      %41 = vector.broadcast %cst_28 : f32 to vector<32x256xf32>
      %42 = arith.addf %40, %41 : vector<32x256xf32>
      %43 = arith.mulf %42, %26 : vector<32x256xf32>
      %cst_29 = arith.constant -0.0160960332 : f32
      %44 = vector.broadcast %cst_29 : f32 to vector<32x256xf32>
      %45 = arith.addf %43, %44 : vector<32x256xf32>
      %46 = arith.mulf %45, %25 : vector<32x256xf32>
      %cst_30 = arith.constant -1.45660715E-5 : f32
      %47 = vector.broadcast %cst_30 : f32 to vector<32x256xf32>
      %48 = arith.mulf %47, %26 : vector<32x256xf32>
      %cst_31 = arith.constant -2.13374049E-4 : f32
      %49 = vector.broadcast %cst_31 : f32 to vector<32x256xf32>
      %50 = arith.addf %48, %49 : vector<32x256xf32>
      %51 = arith.mulf %50, %26 : vector<32x256xf32>
      %cst_32 = arith.constant -0.00168282702 : f32
      %52 = vector.broadcast %cst_32 : f32 to vector<32x256xf32>
      %53 = arith.addf %51, %52 : vector<32x256xf32>
      %54 = arith.mulf %53, %26 : vector<32x256xf32>
      %cst_33 = arith.constant -0.00737332925 : f32
      %55 = vector.broadcast %cst_33 : f32 to vector<32x256xf32>
      %56 = arith.addf %54, %55 : vector<32x256xf32>
      %57 = arith.mulf %56, %26 : vector<32x256xf32>
      %cst_34 = arith.constant -0.0142647391 : f32
      %58 = vector.broadcast %cst_34 : f32 to vector<32x256xf32>
      %59 = arith.addf %57, %58 : vector<32x256xf32>
      %60 = arith.divf %46, %59 : vector<32x256xf32>
      %cst_35 = arith.constant 1.000000e+00 : f32
      %61 = vector.broadcast %cst_35 : f32 to vector<32x256xf32>
      %62 = arith.addf %61, %60 : vector<32x256xf32>
      %63 = arith.mulf %19, %62 : vector<32x256xf32>
      %c0_36 = arith.constant 0 : index
      %c0_37 = arith.constant 0 : index
      %64 = vector.load %arg8[%c0_36, %c0_37] : memref<32x256xf32, #tpu.memory_space<vmem>>, vector<32x256xf32>
      %65 = arith.mulf %63, %64 : vector<32x256xf32>
      %66 = arith.truncf %65 : vector<32x256xf32> to vector<32x256xbf16>
      %c0_38 = arith.constant 0 : index
      %c0_39 = arith.constant 0 : index
      %67 = vector.load %arg6[%c0_38, %c0_39] : memref<32x256xbf16, #tpu.memory_space<vmem>>, vector<32x256xbf16>
      tpu.vector_store %arg6[%c0_38, %c0_39], %66 {strides = array<i32>} : memref<32x256xbf16, #tpu.memory_space<vmem>>, vector<32x256xbf16>,
    } else {
    }
    return
  }
  func.func @transform_0(%arg0: i32, %arg1: i32, %arg2: i32) -> (i32, i32) {
    %c0_i32 = arith.constant 0 : i32
    return %arg0, %arg2 : i32, i32
  }
  func.func @transform_1(%arg0: i32, %arg1: i32, %arg2: i32) -> (i32, i32) {
    %c0_i32 = arith.constant 0 : i32
    return %arg2, %arg1 : i32, i32
  }
  func.func @transform_2(%arg0: i32, %arg1: i32, %arg2: i32) -> (i32, i32) {
    %c0_i32 = arith.constant 0 : i32
    return %arg2, %arg1 : i32, i32
  }
  func.func @transform_3(%arg0: i32, %arg1: i32, %arg2: i32) -> (i32, i32) {
    %c0_i32 = arith.constant 0 : i32
    return %arg0, %arg1 : i32, i32
  }
}

module attributes {stable_mosaic.version = 11 : i64} {
  func.func @_matmul_resid_kernel(%arg0: i32, %arg1: i32, %arg2: i32, %arg3: memref<32x512xbf16, #tpu.memory_space<vmem>>, %arg4: memref<512x128xbf16, #tpu.memory_space<vmem>>, %arg5: memref<32x128xbf16, #tpu.memory_space<vmem>>, %arg6: memref<32x128xbf16, #tpu.memory_space<vmem>>, %arg7: memref<32x128xf32, #tpu.memory_space<vmem>>) attributes {dimension_semantics = [#tpu.dimension_semantics<parallel>, #tpu.dimension_semantics<parallel>, #tpu.dimension_semantics<arbitrary>], iteration_bounds = array<i64: 1, 2, 1>, scalar_prefetch = 0 : i64, scratch_operands = 1 : i64, tpu.core_type = #tpu.core_type<tc>, window_params = [{transform_indices = @transform_0, window_bounds = array<i64: 32, 512>}, {transform_indices = @transform_1, window_bounds = array<i64: 512, 128>}, {transform_indices = @transform_2, window_bounds = array<i64: 32, 128>}, {transform_indices = @transform_3, window_bounds = array<i64: 32, 128>}]} {
    %c0_i32 = arith.constant 0 : i32
    %0 = arith.cmpi eq, %arg2, %c0_i32 : i32
    %1 = arith.extui %0 : i1 to i32
    %c0_i32_0 = arith.constant 0 : i32
    %2 = arith.cmpi ne, %1, %c0_i32_0 : i32
    scf.if %2 {
      %cst_10 = arith.constant 0.000000e+00 : f32
      %12 = vector.broadcast %cst_10 : f32 to vector<32x128xf32>
      %c0_11 = arith.constant 0 : index
      %c0_12 = arith.constant 0 : index
      %13 = vector.load %arg7[%c0_11, %c0_12] : memref<32x128xf32, #tpu.memory_space<vmem>>, vector<32x128xf32>
      tpu.vector_store %arg7[%c0_11, %c0_12], %12 {strides = array<i32>} : memref<32x128xf32, #tpu.memory_space<vmem>>, vector<32x128xf32>,
    } else {
    }
    %c0 = arith.constant 0 : index
    %c0_1 = arith.constant 0 : index
    %3 = vector.load %arg7[%c0, %c0_1] : memref<32x128xf32, #tpu.memory_space<vmem>>, vector<32x128xf32>
    %c0_2 = arith.constant 0 : index
    %c0_3 = arith.constant 0 : index
    %4 = vector.load %arg3[%c0_2, %c0_3] : memref<32x512xbf16, #tpu.memory_space<vmem>>, vector<32x512xbf16>
    %c0_4 = arith.constant 0 : index
    %c0_5 = arith.constant 0 : index
    %5 = vector.load %arg4[%c0_4, %c0_5] : memref<512x128xbf16, #tpu.memory_space<vmem>>, vector<512x128xbf16>
    %cst = arith.constant dense<0.000000e+00> : vector<32x128xf32>
    %6 = tpu.matmul %4, %5, %cst {dimension_numbers = #tpu.dot_dimension_numbers<[1], [0], [0], [1], [0, 0, 1, 1], [], []>} : vector<32x512xbf16>, vector<512x128xbf16>, vector<32x128xf32> -> vector<32x128xf32>
    %7 = arith.addf %3, %6 : vector<32x128xf32>
    %c0_6 = arith.constant 0 : index
    %c0_7 = arith.constant 0 : index
    %8 = vector.load %arg7[%c0_6, %c0_7] : memref<32x128xf32, #tpu.memory_space<vmem>>, vector<32x128xf32>
    tpu.vector_store %arg7[%c0_6, %c0_7], %7 {strides = array<i32>} : memref<32x128xf32, #tpu.memory_space<vmem>>, vector<32x128xf32>,
    %c0_i32_8 = arith.constant 0 : i32
    %9 = arith.cmpi eq, %arg2, %c0_i32_8 : i32
    %10 = arith.extui %9 : i1 to i32
    %c0_i32_9 = arith.constant 0 : i32
    %11 = arith.cmpi ne, %10, %c0_i32_9 : i32
    scf.if %11 {
      %c0_10 = arith.constant 0 : index
      %c0_11 = arith.constant 0 : index
      %12 = vector.load %arg7[%c0_10, %c0_11] : memref<32x128xf32, #tpu.memory_space<vmem>>, vector<32x128xf32>
      %c0_12 = arith.constant 0 : index
      %c0_13 = arith.constant 0 : index
      %13 = vector.load %arg5[%c0_12, %c0_13] : memref<32x128xbf16, #tpu.memory_space<vmem>>, vector<32x128xbf16>
      %14 = arith.extf %13 : vector<32x128xbf16> to vector<32x128xf32>
      %15 = arith.addf %12, %14 : vector<32x128xf32>
      %16 = arith.truncf %15 : vector<32x128xf32> to vector<32x128xbf16>
      %c0_14 = arith.constant 0 : index
      %c0_15 = arith.constant 0 : index
      %17 = vector.load %arg6[%c0_14, %c0_15] : memref<32x128xbf16, #tpu.memory_space<vmem>>, vector<32x128xbf16>
      tpu.vector_store %arg6[%c0_14, %c0_15], %16 {strides = array<i32>} : memref<32x128xbf16, #tpu.memory_space<vmem>>, vector<32x128xbf16>,
    } else {
    }
    return
  }
  func.func @transform_0(%arg0: i32, %arg1: i32, %arg2: i32) -> (i32, i32) {
    %c0_i32 = arith.constant 0 : i32
    return %arg0, %arg2 : i32, i32
  }
  func.func @transform_1(%arg0: i32, %arg1: i32, %arg2: i32) -> (i32, i32) {
    %c0_i32 = arith.constant 0 : i32
    return %arg2, %arg1 : i32, i32
  }
  func.func @transform_2(%arg0: i32, %arg1: i32, %arg2: i32) -> (i32, i32) {
    %c0_i32 = arith.constant 0 : i32
    return %arg0, %arg1 : i32, i32
  }
  func.func @transform_3(%arg0: i32, %arg1: i32, %arg2: i32) -> (i32, i32) {
    %c0_i32 = arith.constant 0 : i32
    return %arg0, %arg1 : i32, i32
  }
}

module attributes {stable_mosaic.version = 11 : i64} {
  func.func @_matmul_kernel(%arg0: i32, %arg1: i32, %arg2: i32, %arg3: memref<32x256xbf16, #tpu.memory_space<vmem>>, %arg4: memref<256x512xbf16, #tpu.memory_space<vmem>>, %arg5: memref<32x512xbf16, #tpu.memory_space<vmem>>, %arg6: memref<32x512xf32, #tpu.memory_space<vmem>>) attributes {dimension_semantics = [#tpu.dimension_semantics<parallel>, #tpu.dimension_semantics<parallel>, #tpu.dimension_semantics<arbitrary>], iteration_bounds = array<i64: 1, 2, 1>, scalar_prefetch = 0 : i64, scratch_operands = 1 : i64, tpu.core_type = #tpu.core_type<tc>, window_params = [{transform_indices = @transform_0, window_bounds = array<i64: 32, 256>}, {transform_indices = @transform_1, window_bounds = array<i64: 256, 512>}, {transform_indices = @transform_2, window_bounds = array<i64: 32, 512>}]} {
    %c0_i32 = arith.constant 0 : i32
    %0 = arith.cmpi eq, %arg2, %c0_i32 : i32
    %1 = arith.extui %0 : i1 to i32
    %c0_i32_0 = arith.constant 0 : i32
    %2 = arith.cmpi ne, %1, %c0_i32_0 : i32
    scf.if %2 {
      %cst_10 = arith.constant 0.000000e+00 : f32
      %12 = vector.broadcast %cst_10 : f32 to vector<32x512xf32>
      %c0_11 = arith.constant 0 : index
      %c0_12 = arith.constant 0 : index
      %13 = vector.load %arg6[%c0_11, %c0_12] : memref<32x512xf32, #tpu.memory_space<vmem>>, vector<32x512xf32>
      tpu.vector_store %arg6[%c0_11, %c0_12], %12 {strides = array<i32>} : memref<32x512xf32, #tpu.memory_space<vmem>>, vector<32x512xf32>,
    } else {
    }
    %c0 = arith.constant 0 : index
    %c0_1 = arith.constant 0 : index
    %3 = vector.load %arg6[%c0, %c0_1] : memref<32x512xf32, #tpu.memory_space<vmem>>, vector<32x512xf32>
    %c0_2 = arith.constant 0 : index
    %c0_3 = arith.constant 0 : index
    %4 = vector.load %arg3[%c0_2, %c0_3] : memref<32x256xbf16, #tpu.memory_space<vmem>>, vector<32x256xbf16>
    %c0_4 = arith.constant 0 : index
    %c0_5 = arith.constant 0 : index
    %5 = vector.load %arg4[%c0_4, %c0_5] : memref<256x512xbf16, #tpu.memory_space<vmem>>, vector<256x512xbf16>
    %cst = arith.constant dense<0.000000e+00> : vector<32x512xf32>
    %6 = tpu.matmul %4, %5, %cst {dimension_numbers = #tpu.dot_dimension_numbers<[1], [0], [0], [1], [0, 0, 1, 1], [], []>} : vector<32x256xbf16>, vector<256x512xbf16>, vector<32x512xf32> -> vector<32x512xf32>
    %7 = arith.addf %3, %6 : vector<32x512xf32>
    %c0_6 = arith.constant 0 : index
    %c0_7 = arith.constant 0 : index
    %8 = vector.load %arg6[%c0_6, %c0_7] : memref<32x512xf32, #tpu.memory_space<vmem>>, vector<32x512xf32>
    tpu.vector_store %arg6[%c0_6, %c0_7], %7 {strides = array<i32>} : memref<32x512xf32, #tpu.memory_space<vmem>>, vector<32x512xf32>,
    %c0_i32_8 = arith.constant 0 : i32
    %9 = arith.cmpi eq, %arg2, %c0_i32_8 : i32
    %10 = arith.extui %9 : i1 to i32
    %c0_i32_9 = arith.constant 0 : i32
    %11 = arith.cmpi ne, %10, %c0_i32_9 : i32
    scf.if %11 {
      %c0_10 = arith.constant 0 : index
      %c0_11 = arith.constant 0 : index
      %12 = vector.load %arg6[%c0_10, %c0_11] : memref<32x512xf32, #tpu.memory_space<vmem>>, vector<32x512xf32>
      %13 = arith.truncf %12 : vector<32x512xf32> to vector<32x512xbf16>
      %c0_12 = arith.constant 0 : index
      %c0_13 = arith.constant 0 : index
      %14 = vector.load %arg5[%c0_12, %c0_13] : memref<32x512xbf16, #tpu.memory_space<vmem>>, vector<32x512xbf16>
      tpu.vector_store %arg5[%c0_12, %c0_13], %13 {strides = array<i32>} : memref<32x512xbf16, #tpu.memory_space<vmem>>, vector<32x512xbf16>,
    } else {
    }
    return
  }
  func.func @transform_0(%arg0: i32, %arg1: i32, %arg2: i32) -> (i32, i32) {
    %c0_i32 = arith.constant 0 : i32
    return %arg0, %arg2 : i32, i32
  }
  func.func @transform_1(%arg0: i32, %arg1: i32, %arg2: i32) -> (i32, i32) {
    %c0_i32 = arith.constant 0 : i32
    return %arg2, %arg1 : i32, i32
  }
  func.func @transform_2(%arg0: i32, %arg1: i32, %arg2: i32) -> (i32, i32) {
    %c0_i32 = arith.constant 0 : i32
    return %arg0, %arg1 : i32, i32
  }
}

module attributes {stable_mosaic.version = 11 : i64} {
  func.func @_rmsnorm_kernel(%arg0: i32, %arg1: memref<32x256xbf16, #tpu.memory_space<vmem>>, %arg2: memref<1x256xf32, #tpu.memory_space<vmem>>, %arg3: memref<32x256xbf16, #tpu.memory_space<vmem>>) attributes {dimension_semantics = [#tpu.dimension_semantics<parallel>], iteration_bounds = array<i64: 1>, scalar_prefetch = 0 : i64, scratch_operands = 0 : i64, tpu.core_type = #tpu.core_type<tc>, window_params = [{transform_indices = @transform_0, window_bounds = array<i64: 32, 256>}, {pipeline_mode = #tpu.pipeline_mode<synchronous>, transform_indices = @transform_1, window_bounds = array<i64: 1, 256>}, {transform_indices = @transform_2, window_bounds = array<i64: 32, 256>}]} {
    %c0 = arith.constant 0 : index
    %c0_0 = arith.constant 0 : index
    %0 = vector.load %arg1[%c0, %c0_0] : memref<32x256xbf16, #tpu.memory_space<vmem>>, vector<32x256xbf16>
    %1 = arith.extf %0 : vector<32x256xbf16> to vector<32x256xf32>
    %2 = arith.mulf %1, %1 : vector<32x256xf32>
    %cst = arith.constant dense<0.000000e+00> : vector<32xf32>
    %3 = vector.multi_reduction <add>, %2, %cst [1] : vector<32x256xf32> to vector<32xf32>
    %4 = vector.shape_cast %3 : vector<32xf32> to vector<32x1xf32>
    %cst_1 = arith.constant 2.560000e+02 : f32
    %5 = vector.broadcast %cst_1 : f32 to vector<32x1xf32>
    %6 = arith.divf %4, %5 : vector<32x1xf32>
    %cst_2 = arith.constant 9.99999997E-7 : f32
    %7 = vector.broadcast %cst_2 : f32 to vector<32x1xf32>
    %8 = arith.addf %6, %7 : vector<32x1xf32>
    %9 = math.sqrt %8 : vector<32x1xf32>
    %10 = vector.broadcast %9 : vector<32x1xf32> to vector<32x256xf32>
    %11 = arith.mulf %1, %10 : vector<32x256xf32>
    %c0_3 = arith.constant 0 : index
    %c0_4 = arith.constant 0 : index
    %12 = vector.load %arg2[%c0_3, %c0_4] : memref<1x256xf32, #tpu.memory_space<vmem>>, vector<1x256xf32>
    %cst_5 = arith.constant 1.000000e+00 : f32
    %13 = vector.broadcast %cst_5 : f32 to vector<1x256xf32>
    %14 = arith.addf %13, %12 : vector<1x256xf32>
    %15 = vector.broadcast %14 : vector<1x256xf32> to vector<32x256xf32>
    %16 = arith.mulf %11, %15 : vector<32x256xf32>
    %17 = arith.truncf %16 : vector<32x256xf32> to vector<32x256xbf16>
    %c0_6 = arith.constant 0 : index
    %c0_7 = arith.constant 0 : index
    %18 = vector.load %arg3[%c0_6, %c0_7] : memref<32x256xbf16, #tpu.memory_space<vmem>>, vector<32x256xbf16>
    tpu.vector_store %arg3[%c0_6, %c0_7], %17 {strides = array<i32>} : memref<32x256xbf16, #tpu.memory_space<vmem>>, vector<32x256xbf16>,
    return
  }
  func.func @transform_0(%arg0: i32) -> (i32, i32) {
    %c0_i32 = arith.constant 0 : i32
    %c0_i32_0 = arith.constant 0 : i32
    return %arg0, %c0_i32 : i32, i32
  }
  func.func @transform_1(%arg0: i32) -> (i32, i32) {
    %c0_i32 = arith.constant 0 : i32
    %c0_i32_0 = arith.constant 0 : i32
    %c0_i32_1 = arith.constant 0 : i32
    return %c0_i32, %c0_i32_0 : i32, i32
  }
  func.func @transform_2(%arg0: i32) -> (i32, i32) {
    %c0_i32 = arith.constant 0 : i32
    %c0_i32_0 = arith.constant 0 : i32
    return %arg0, %c0_i32 : i32, i32
  }
}

</mosaic_0001>

<llo_original>
// kernel: _lambda_.16
$region0: #{_lambda_.16}
  #allocation0 [shape = 'u32[]', space=smem, size = 0x4, offset = 0x4, fixed_abs, tag = 'smem constant byte address 0x4 - core index']
  #allocation1 [shape = 'u32[144,128]{1,0:T(1,128)}', space=vmem, size = 0x12000, scoped, tag = 'internal scratch']
  %s0 = inlined_call_operand.vmem [shape: bf16[32,256], index: 0, kind: input, shape index: {}]
  %s1 = inlined_call_operand.vmem [shape: bf16[32,256], index: 1, kind: input, shape index: {}]
  %s2 = inlined_call_operand.vmem [shape: f32[1,256], index: 2, kind: input, shape index: {}]
  %s3 = inlined_call_operand.vmem [shape: bf16[32,256], index: 3, kind: output, shape index: {0}]
  %s4 = inlined_call_operand.vmem [shape: bf16[32,256], index: 4, kind: output, shape index: {1}]
  %5 = xla_tuple %s3, %s4
  %s6 = sld [smem:[#allocation0]]
  $region30: #{_lambda_.16} parent=0
    _
  %s8 = ssub.s32 1, %s6
  %s9 = scalar_select 0, %s8, %s6
  // Predicated region
  $region2: #{_lambda_.16} parent=0 // pred_check
    _
  $region3: #{_lambda_.16} parent=0 // pred_check_branch
    %11 = sbr.rel (0) target = $region5
  $region4: #{_lambda_.16} parent=0 // pred_region
    _
  $region5: #{_lambda_.16} parent=0 // pred_fallthru
    _
  // Predicated region
  $region6: #{_lambda_.16} parent=0 // pred_check
    _
  $region7: #{_lambda_.16} parent=0 // pred_check_branch
    %13 = sbr.rel (0) target = $region9
  $region8: #{_lambda_.16} parent=0 // pred_region
    _
  $region9: #{_lambda_.16} parent=0 // pred_fallthru
    _
  // Predicated region
  $region10: #{_lambda_.16} parent=0 // pred_check
    _
  $region11: #{_lambda_.16} parent=0 // pred_check_branch
    %15 = sbr.rel (0) target = $region13
  $region12: #{_lambda_.16} parent=0 // pred_region
    _
  $region13: #{_lambda_.16} parent=0 // pred_fallthru
    _
  %v16 = vld [vmem:[%s0] sm:$0xff]
  %v17 = vld [vmem:[%s0 + $0x8] sm:$0xff]
  %v18 = vld [vmem:[%s0 + $0x10] sm:$0xff]
  %v19 = vld [vmem:[%s0 + $0x18] sm:$0xff]
  %v20 = vunpack.c.l.bf16 %v16
  %v21 = vunpack.c.h.bf16 %v16
  %v22 = vunpack.c.l.bf16 %v17
  %v23 = vunpack.c.h.bf16 %v17
  %v24 = vunpack.c.l.bf16 %v18
  %v25 = vunpack.c.h.bf16 %v18
  %v26 = vunpack.c.l.bf16 %v19
  %v27 = vunpack.c.h.bf16 %v19
  %v28 = vld [vmem:[%s1] sm:$0xff]
  %v29 = vld [vmem:[%s1 + $0x8] sm:$0xff]
  %v30 = vld [vmem:[%s1 + $0x10] sm:$0xff]
  %v31 = vld [vmem:[%s1 + $0x18] sm:$0xff]
  %v32 = vunpack.c.l.bf16 %v28
  %v33 = vunpack.c.h.bf16 %v28
  %v34 = vunpack.c.l.bf16 %v29
  %v35 = vunpack.c.h.bf16 %v29
  %v36 = vunpack.c.l.bf16 %v30
  %v37 = vunpack.c.h.bf16 %v30
  %v38 = vunpack.c.l.bf16 %v31
  %v39 = vunpack.c.h.bf16 %v31
  %v40 = vadd.f32 %v20, %v32
  %v41 = vadd.f32 %v21, %v33
  %v42 = vadd.f32 %v22, %v34
  %v43 = vadd.f32 %v23, %v35
  %v44 = vadd.f32 %v24, %v36
  %v45 = vadd.f32 %v25, %v37
  %v46 = vadd.f32 %v26, %v38
  %v47 = vadd.f32 %v27, %v39
  %v48 = vpack.c.bf16 %v42, %v40
  %v49 = vpack.c.bf16 %v43, %v41
  %v50 = vpack.c.bf16 %v46, %v44
  %v51 = vpack.c.bf16 %v47, %v45
  %v56 = vunpack.c.l.b16 %v48
  %v57 = vunpack.c.l.b16 %v49
  %v58 = vunpack.c.h.b16 %v48
  %v59 = vunpack.c.h.b16 %v49
  %v60 = vunpack.c.l.b16 %v50
  %v61 = vunpack.c.l.b16 %v51
  %v62 = vunpack.c.h.b16 %v50
  %v63 = vunpack.c.h.b16 %v51
  %v64 = vpack.c.b16 %v57, %v56
  %v65 = vpack.c.b16 %v59, %v58
  %v66 = vpack.c.b16 %v61, %v60
  %v67 = vpack.c.b16 %v63, %v62
  %72 = vst [vmem:[%s3] sm:$0xff] %v64
  %73 = vst [vmem:[%s3 + $0x8] sm:$0xff] %v65
  %74 = vst [vmem:[%s3 + $0x10] sm:$0xff] %v66
  %75 = vst [vmem:[%s3 + $0x18] sm:$0xff] %v67
  %v76 = vmul.f32 %v32, %v32
  %v77 = vmul.f32 %v33, %v33
  %v78 = vmul.f32 %v34, %v34
  %v79 = vmul.f32 %v35, %v35
  %v80 = vmul.f32 %v36, %v36
  %v81 = vmul.f32 %v37, %v37
  %v82 = vmul.f32 %v38, %v38
  %v83 = vmul.f32 %v39, %v39
  %v84 = vadd.f32 %v76, %v77
  %85 = vadd.xlane.f32.xlu0 %v84
  %v86 = vpop.xlane.xlu0 %85
  %v87 = vadd.f32 %v78, %v79
  %88 = vadd.xlane.f32.xlu0 %v87
  %v89 = vpop.xlane.xlu0 %88
  %v90 = vadd.f32 %v80, %v81
  %91 = vadd.xlane.f32.xlu0 %v90
  %v92 = vpop.xlane.xlu0 %91
  %v93 = vadd.f32 %v82, %v83
  %94 = vadd.xlane.f32.xlu0 %v93
  %v95 = vpop.xlane.xlu0 %94
  %v96 = vrcp.pop 256.0
  %v97 = vmul.f32 %v86, %v96
  %v98 = vmul.f32 %v89, %v96
  %v99 = vmul.f32 %v92, %v96
  %v100 = vmul.f32 %v95, %v96
  %v101 = vadd.f32 %v97, 1e-06
  %v102 = vadd.f32 %v98, 1e-06
  %v103 = vadd.f32 %v99, 1e-06
  %v104 = vadd.f32 %v100, 1e-06
  %v105 = vrsqrt.pop %v101
  %v106 = vmul.f32 %v101, %v105
  %vm107 = vcmp.eq.f32.partialorder %v101, inf
  %v108 = vsel %vm107, %v101, %v106
  %vm109 = vcmp.eq.f32.partialorder %v101, 0.0
  %v110 = vand.u32 %v101, 2147483648
  %v111 = vsel %vm109, %v110, %v108
  %v112 = vrsqrt.pop %v102
  %v113 = vmul.f32 %v102, %v112
  %vm114 = vcmp.eq.f32.partialorder %v102, inf
  %v115 = vsel %vm114, %v102, %v113
  %vm116 = vcmp.eq.f32.partialorder %v102, 0.0
  %v117 = vand.u32 %v102, 2147483648
  %v118 = vsel %vm116, %v117, %v115
  %v119 = vrsqrt.pop %v103
  %v120 = vmul.f32 %v103, %v119
  %vm121 = vcmp.eq.f32.partialorder %v103, inf
  %v122 = vsel %vm121, %v103, %v120
  %vm123 = vcmp.eq.f32.partialorder %v103, 0.0
  %v124 = vand.u32 %v103, 2147483648
  %v125 = vsel %vm123, %v124, %v122
  %v126 = vrsqrt.pop %v104
  %v127 = vmul.f32 %v104, %v126
  %vm128 = vcmp.eq.f32.partialorder %v104, inf
  %v129 = vsel %vm128, %v104, %v127
  %vm130 = vcmp.eq.f32.partialorder %v104, 0.0
  %v131 = vand.u32 %v104, 2147483648
  %v132 = vsel %vm130, %v131, %v129
  %v133 = vmul.f32 %v32, %v111
  %v134 = vmul.f32 %v33, %v111
  %v135 = vmul.f32 %v34, %v118
  %v136 = vmul.f32 %v35, %v118
  %v137 = vmul.f32 %v36, %v125
  %v138 = vmul.f32 %v37, %v125
  %v139 = vmul.f32 %v38, %v132
  %v140 = vmul.f32 %v39, %v132
  %v141 = vld [vmem:[%s2] sm:$0x3]
  %v142 = vadd.f32 %v141, 1.0
  %v144 = vlaneseq
  %v145 = vshrl.u32 %v144, 7
  %v146 = vsub.s32 0, %v145
  %v147 = vrot.slane %v142, %v146
  %v148 = vlaneseq
  %v149 = vshrl.u32 %v148, 7
  %v150 = vsub.s32 1, %v149
  %v151 = vrot.slane %v142, %v150
  %v154 = vmul.f32 %v133, %v147
  %v155 = vmul.f32 %v134, %v151
  %v156 = vmul.f32 %v135, %v147
  %v157 = vmul.f32 %v136, %v151
  %v158 = vmul.f32 %v137, %v147
  %v159 = vmul.f32 %v138, %v151
  %v160 = vmul.f32 %v139, %v147
  %v161 = vmul.f32 %v140, %v151
  %v162 = vpack.c.bf16 %v156, %v154
  %v163 = vpack.c.bf16 %v157, %v155
  %v164 = vpack.c.bf16 %v160, %v158
  %v165 = vpack.c.bf16 %v161, %v159
  %v170 = vunpack.c.l.b16 %v162
  %v171 = vunpack.c.l.b16 %v163
  %v172 = vunpack.c.h.b16 %v162
  %v173 = vunpack.c.h.b16 %v163
  %v174 = vunpack.c.l.b16 %v164
  %v175 = vunpack.c.l.b16 %v165
  %v176 = vunpack.c.h.b16 %v164
  %v177 = vunpack.c.h.b16 %v165
  %v178 = vpack.c.b16 %v171, %v170
  %v179 = vpack.c.b16 %v173, %v172
  %v180 = vpack.c.b16 %v175, %v174
  %v181 = vpack.c.b16 %v177, %v176
  %186 = vst [vmem:[%s4] sm:$0xff] %v178
  %187 = vst [vmem:[%s4 + $0x8] sm:$0xff] %v179
  %188 = vst [vmem:[%s4 + $0x10] sm:$0xff] %v180
  %189 = vst [vmem:[%s4 + $0x18] sm:$0xff] %v181
  // Predicated region
  $region14: #{_lambda_.16} parent=0 // pred_check
    _
  $region15: #{_lambda_.16} parent=0 // pred_check_branch
    %191 = sbr.rel (0) target = $region17
  $region16: #{_lambda_.16} parent=0 // pred_region
    _
  $region17: #{_lambda_.16} parent=0 // pred_fallthru
    _
  // Predicated region
  $region18: #{_lambda_.16} parent=0 // pred_check
    _
  $region19: #{_lambda_.16} parent=0 // pred_check_branch
    %193 = sbr.rel (0) target = $region21
  $region20: #{_lambda_.16} parent=0 // pred_region
    _
  $region21: #{_lambda_.16} parent=0 // pred_fallthru
    _
  // Predicated region
  $region22: #{_lambda_.16} parent=0 // pred_check
    _
  $region23: #{_lambda_.16} parent=0 // pred_check_branch
    %195 = sbr.rel (0) target = $region25
  $region24: #{_lambda_.16} parent=0 // pred_region
    _
  $region25: #{_lambda_.16} parent=0 // pred_fallthru
    _
  // Predicated region
  $region26: #{_lambda_.16} parent=0 // pred_check
    _
  $region27: #{_lambda_.16} parent=0 // pred_check_branch
    %197 = sbr.rel (0) target = $region29
  $region28: #{_lambda_.16} parent=0 // pred_region
    _
  $region29: #{_lambda_.16} parent=0 // pred_fallthru
    _

// kernel: _lambda_.14
$region0: #{_lambda_.14}
  #allocation0 [shape = 'u32[]', space=smem, size = 0x4, offset = 0x4, fixed_abs, tag = 'smem constant byte address 0x4 - core index']
  #allocation1 [shape = 'u32[144,128]{1,0:T(1,128)}', space=vmem, size = 0x12000, scoped, tag = 'internal scratch']
  #allocation2 [shape = 'f32[2,16,1]{2,1,0:T(8,128)}', space=vmem, size = 0x4000, scoped, tag = 'scratch operand']
  #allocation3 [shape = 'f32[2,16,1]{2,1,0:T(8,128)}', space=vmem, size = 0x4000, scoped, tag = 'scratch operand']
  #allocation4 [shape = 'f32[16,256]{1,0:T(8,128)}', space=vmem, size = 0x4000, scoped, tag = 'scratch operand']
  %s0 = inlined_call_operand.vmem [shape: bf16[2,16,1024], index: 0, kind: input, shape index: {}, may-alias: {0,1,2}]
  %s1 = inlined_call_operand.vmem [shape: bf16[2,16,1024], index: 1, kind: input, shape index: {}, may-alias: {0,1,2}]
  %s2 = inlined_call_operand.vmem [shape: bf16[2,16,1024], index: 2, kind: input, shape index: {}, may-alias: {0,1,2}]
  %s3 = inlined_call_operand.vmem [shape: f32[2,16,128], index: 3, kind: input, shape index: {}, may-alias: {3,5}]
  %s4 = inlined_call_operand.vmem [shape: f32[2,16,128], index: 4, kind: input, shape index: {}, may-alias: {4,6}]
  %s5 = inlined_call_operand.vmem [shape: f32[2,16,128], index: 5, kind: input, shape index: {}, may-alias: {3,5}]
  %s6 = inlined_call_operand.vmem [shape: f32[2,16,128], index: 6, kind: input, shape index: {}, may-alias: {4,6}]
  %s7 = inlined_call_operand.vmem [shape: bf16[2,16,512], index: 7, kind: output, shape index: {}]
  %s8 = sld [smem:[#allocation0]]
  $region223: #{_lambda_.14} parent=0
    _
  %s10 = ssub.s32 1, %s8
  %s11 = scalar_select 0, %s10, %s8
  $region1: #{_lambda_.14} parent=0
    #allocation5 [shape = 'u8[16384]{0}', space=vmem, size = 0x4000, scoped, tag = 'input window, operand 0']
    #allocation6 [shape = 'u8[8192]{0}', space=vmem, size = 0x2000, scoped, tag = 'input window, operand 1']
    #allocation7 [shape = 'u8[8192]{0}', space=vmem, size = 0x2000, scoped, tag = 'input window, operand 2']
    #allocation8 [shape = 'u8[16384]{0}', space=vmem, size = 0x4000, scoped, tag = 'output window, operand 0']
    loop: start=0, step=1, limit=6
    $region2: #{_lambda_.14} parent=1 // loop_pre_header
      _
    $region3: #{_lambda_.14} parent=1 // loop_header
      %s13 = sphi 0, %s17
      %p14 = scmp.ge.s32.totalorder %s13, 6
      %s20 = sphi 0, %s46
      %s21 = sphi 0, %s42
      %s22 = sphi 0, %s38
      %s23 = sphi 0, %s34
      %s24 = sphi 0, %s20
      %s25 = sphi 0, %s21
      %s26 = sphi 0, %s22
      %s27 = sphi 0, %s23
      %s28 = sphi 0, %s24
      %s29 = sphi 0, %s25
      %s30 = sphi 0, %s26
      %s31 = sphi 0, %s27
      %s53 = sphi 0, %s55
      %s56 = sphi 0, %s53
      %s57 = sphi 0, %s56
      %s73 = sphi 0, %s57
      %s85 = sphi 0, %s87
      %s88 = sphi 0, %s85
      %s89 = sphi 0, %s88
      %s105 = sphi 0, %s89
      %s117 = sphi 0, %s119
      %s120 = sphi 0, %s117
      %s121 = sphi 0, %s120
      %s137 = sphi 0, %s121
      %s145 = sphi 0, %s147
      %s148 = sphi 0, %s145
      %s149 = sphi 0, %s148
      %s165 = sphi 0, %s149
      %s173 = sphi 0, %s175
      %s176 = sphi 0, %s173
      %s177 = sphi 0, %s176
      %s193 = sphi 0, %s177
      %s201 = sphi 0, %s203
      %s204 = sphi 0, %s201
      %s205 = sphi 0, %s204
      %s221 = sphi 0, %s205
      %s229 = sphi 0, %s231
      %s232 = sphi 0, %s229
      %s233 = sphi 0, %s232
      %s249 = sphi 0, %s233
      %s259 = sphi 0, %s261
      %s262 = sphi 0, %s259
      %s263 = sphi 0, %s262
      %s279 = sphi 0, %s263
    $region4: #{_lambda_.14} parent=1 // loop_header_branch
      %16 = sbr.rel (%p14) target = $region8
    $region5: #{_lambda_.14} parent=1 // loop_body
      %s18 = ssub.s32 %s13, 1
      %s19 = ssub.s32 %s13, 2
      %s32 = sadd.s32 1, %s23
      %p33 = scmp.ge.s32.totalorder %s32, 1
      %s34 = scalar_select %p33, 0, %s32
      %s35 = sadd.s32 1, %s22
      %s36 = scalar_select %p33, %s35, %s22
      %p37 = scmp.ge.s32.totalorder %s36, 1
      %s38 = scalar_select %p37, 0, %s36
      %s39 = sadd.s32 1, %s21
      %s40 = scalar_select %p37, %s39, %s21
      %p41 = scmp.ge.s32.totalorder %s40, 2
      %s42 = scalar_select %p41, 0, %s40
      %s43 = sadd.s32 1, %s20
      %s44 = scalar_select %p41, %s43, %s20
      %p45 = scmp.ge.s32.totalorder %s44, 2
      %s46 = scalar_select %p45, 0, %s44
      %s47 = ssub.s32 %s20, %s46
      %s48 = ssub.s32 %s22, %s38
      %s49 = sor.u32 %s47, %s48
      %s50 = ssub.s32 %s21, %s42
      %s51 = sor.u32 %s49, %s50
      %p52 = scmp.eq.s32.totalorder %s51, 0
      %s54 = sadd.s32 %s53, 1
      %s55 = scalar_select %p52, %s53, %s54
      %p58 = pneg %p52
      %p59 = scmp.eq.s32.totalorder %s13, 3
      %p60 = por %p58, %p59
      %p61 = scmp.ne.s32.totalorder %s53, %s56
      %p62 = scmp.eq.s32.totalorder %s13, 0
      %p63 = por %p61, %p62
      %p64 = scmp.ne.s32.totalorder %s53, %s56
      %p65 = scmp.eq.s32.totalorder %s18, 3
      %p66 = por %p64, %p65
      %p67 = scmp.ne.s32.totalorder %s56, %s57
      %p68 = scmp.eq.s32.totalorder %s18, 0
      %p69 = por %p67, %p68
      %p70 = scmp.ne.s32.totalorder %s56, %s57
      %p71 = scmp.eq.s32.totalorder %s19, 3
      %p72 = por %p70, %p71
      %p74 = scmp.ne.s32.totalorder %s57, %s73
      %p75 = scmp.eq.s32.totalorder %s19, 0
      %p76 = por %p74, %p75
      %s77 = sadd.s32 %s21, 4
      %s78 = sadd.s32 %s42, 4
      %s79 = ssub.s32 %s20, %s46
      %s80 = ssub.s32 %s23, %s34
      %s81 = sor.u32 %s79, %s80
      %s82 = ssub.s32 %s77, %s78
      %s83 = sor.u32 %s81, %s82
      %p84 = scmp.eq.s32.totalorder %s83, 0
      %s86 = sadd.s32 %s85, 1
      %s87 = scalar_select %p84, %s85, %s86
      %p90 = pneg %p84
      %p91 = scmp.eq.s32.totalorder %s13, 3
      %p92 = por %p90, %p91
      %p93 = scmp.ne.s32.totalorder %s85, %s88
      %p94 = scmp.eq.s32.totalorder %s13, 0
      %p95 = por %p93, %p94
      %p96 = scmp.ne.s32.totalorder %s85, %s88
      %p97 = scmp.eq.s32.totalorder %s18, 3
      %p98 = por %p96, %p97
      %p99 = scmp.ne.s32.totalorder %s88, %s89
      %p100 = scmp.eq.s32.totalorder %s18, 0
      %p101 = por %p99, %p100
      %p102 = scmp.ne.s32.totalorder %s88, %s89
      %p103 = scmp.eq.s32.totalorder %s19, 3
      %p104 = por %p102, %p103
      %p106 = scmp.ne.s32.totalorder %s89, %s105
      %p107 = scmp.eq.s32.totalorder %s19, 0
      %p108 = por %p106, %p107
      %s109 = sadd.s32 %s21, 6
      %s110 = sadd.s32 %s42, 6
      %s111 = ssub.s32 %s20, %s46
      %s112 = ssub.s32 %s23, %s34
      %s113 = sor.u32 %s111, %s112
      %s114 = ssub.s32 %s109, %s110
      %s115 = sor.u32 %s113, %s114
      %p116 = scmp.eq.s32.totalorder %s115, 0
      %s118 = sadd.s32 %s117, 1
      %s119 = scalar_select %p116, %s117, %s118
      %p122 = pneg %p116
      %p123 = scmp.eq.s32.totalorder %s13, 3
      %p124 = por %p122, %p123
      %p125 = scmp.ne.s32.totalorder %s117, %s120
      %p126 = scmp.eq.s32.totalorder %s13, 0
      %p127 = por %p125, %p126
      %p128 = scmp.ne.s32.totalorder %s117, %s120
      %p129 = scmp.eq.s32.totalorder %s18, 3
      %p130 = por %p128, %p129
      %p131 = scmp.ne.s32.totalorder %s120, %s121
      %p132 = scmp.eq.s32.totalorder %s18, 0
      %p133 = por %p131, %p132
      %p134 = scmp.ne.s32.totalorder %s120, %s121
      %p135 = scmp.eq.s32.totalorder %s19, 3
      %p136 = por %p134, %p135
      %p138 = scmp.ne.s32.totalorder %s121, %s137
      %p139 = scmp.eq.s32.totalorder %s19, 0
      %p140 = por %p138, %p139
      %s141 = ssub.s32 %s20, %s46
      %s142 = ssub.s32 %s22, %s38
      %s143 = sor.u32 %s141, %s142
      %p144 = scmp.eq.s32.totalorder %s143, 0
      %s146 = sadd.s32 %s145, 1
      %s147 = scalar_select %p144, %s145, %s146
      %p150 = pneg %p144
      %p151 = scmp.eq.s32.totalorder %s13, 3
      %p152 = por %p150, %p151
      %p153 = scmp.ne.s32.totalorder %s145, %s148
      %p154 = scmp.eq.s32.totalorder %s13, 0
      %p155 = por %p153, %p154
      %p156 = scmp.ne.s32.totalorder %s145, %s148
      %p157 = scmp.eq.s32.totalorder %s18, 3
      %p158 = por %p156, %p157
      %p159 = scmp.ne.s32.totalorder %s148, %s149
      %p160 = scmp.eq.s32.totalorder %s18, 0
      %p161 = por %p159, %p160
      %p162 = scmp.ne.s32.totalorder %s148, %s149
      %p163 = scmp.eq.s32.totalorder %s19, 3
      %p164 = por %p162, %p163
      %p166 = scmp.ne.s32.totalorder %s149, %s165
      %p167 = scmp.eq.s32.totalorder %s19, 0
      %p168 = por %p166, %p167
      %s169 = ssub.s32 %s20, %s46
      %s170 = ssub.s32 %s22, %s38
      %s171 = sor.u32 %s169, %s170
      %p172 = scmp.eq.s32.totalorder %s171, 0
      %s174 = sadd.s32 %s173, 1
      %s175 = scalar_select %p172, %s173, %s174
      %p178 = pneg %p172
      %p179 = scmp.eq.s32.totalorder %s13, 3
      %p180 = por %p178, %p179
      %p181 = scmp.ne.s32.totalorder %s173, %s176
      %p182 = scmp.eq.s32.totalorder %s13, 0
      %p183 = por %p181, %p182
      %p184 = scmp.ne.s32.totalorder %s173, %s176
      %p185 = scmp.eq.s32.totalorder %s18, 3
      %p186 = por %p184, %p185
      %p187 = scmp.ne.s32.totalorder %s176, %s177
      %p188 = scmp.eq.s32.totalorder %s18, 0
      %p189 = por %p187, %p188
      %p190 = scmp.ne.s32.totalorder %s176, %s177
      %p191 = scmp.eq.s32.totalorder %s19, 3
      %p192 = por %p190, %p191
      %p194 = scmp.ne.s32.totalorder %s177, %s193
      %p195 = scmp.eq.s32.totalorder %s19, 0
      %p196 = por %p194, %p195
      %s197 = ssub.s32 %s20, %s46
      %s198 = ssub.s32 %s23, %s34
      %s199 = sor.u32 %s197, %s198
      %p200 = scmp.eq.s32.totalorder %s199, 0
      %s202 = sadd.s32 %s201, 1
      %s203 = scalar_select %p200, %s201, %s202
      %p206 = pneg %p200
      %p207 = scmp.eq.s32.totalorder %s13, 3
      %p208 = por %p206, %p207
      %p209 = scmp.ne.s32.totalorder %s201, %s204
      %p210 = scmp.eq.s32.totalorder %s13, 0
      %p211 = por %p209, %p210
      %p212 = scmp.ne.s32.totalorder %s201, %s204
      %p213 = scmp.eq.s32.totalorder %s18, 3
      %p214 = por %p212, %p213
      %p215 = scmp.ne.s32.totalorder %s204, %s205
      %p216 = scmp.eq.s32.totalorder %s18, 0
      %p217 = por %p215, %p216
      %p218 = scmp.ne.s32.totalorder %s204, %s205
      %p219 = scmp.eq.s32.totalorder %s19, 3
      %p220 = por %p218, %p219
      %p222 = scmp.ne.s32.totalorder %s205, %s221
      %p223 = scmp.eq.s32.totalorder %s19, 0
      %p224 = por %p222, %p223
      %s225 = ssub.s32 %s20, %s46
      %s226 = ssub.s32 %s23, %s34
      %s227 = sor.u32 %s225, %s226
      %p228 = scmp.eq.s32.totalorder %s227, 0
      %s230 = sadd.s32 %s229, 1
      %s231 = scalar_select %p228, %s229, %s230
      %p234 = pneg %p228
      %p235 = scmp.eq.s32.totalorder %s13, 3
      %p236 = por %p234, %p235
      %p237 = scmp.ne.s32.totalorder %s229, %s232
      %p238 = scmp.eq.s32.totalorder %s13, 0
      %p239 = por %p237, %p238
      %p240 = scmp.ne.s32.totalorder %s229, %s232
      %p241 = scmp.eq.s32.totalorder %s18, 3
      %p242 = por %p240, %p241
      %p243 = scmp.ne.s32.totalorder %s232, %s233
      %p244 = scmp.eq.s32.totalorder %s18, 0
      %p245 = por %p243, %p244
      %p246 = scmp.ne.s32.totalorder %s232, %s233
      %p247 = scmp.eq.s32.totalorder %s19, 3
      %p248 = por %p246, %p247
      %p250 = scmp.ne.s32.totalorder %s233, %s249
      %p251 = scmp.eq.s32.totalorder %s19, 0
      %p252 = por %p250, %p251
      %s253 = ssub.s32 %s20, %s46
      %s254 = ssub.s32 %s22, %s38
      %s255 = sor.u32 %s253, %s254
      %s256 = ssub.s32 %s21, %s42
      %s257 = sor.u32 %s255, %s256
      %p258 = scmp.eq.s32.totalorder %s257, 0
      %s260 = sadd.s32 %s259, 1
      %s261 = scalar_select %p258, %s259, %s260
      %p264 = pneg %p258
      %p265 = scmp.eq.s32.totalorder %s13, 3
      %p266 = por %p264, %p265
      %p267 = scmp.ne.s32.totalorder %s259, %s262
      %p268 = scmp.eq.s32.totalorder %s13, 0
      %p269 = por %p267, %p268
      %p270 = scmp.ne.s32.totalorder %s259, %s262
      %p271 = scmp.eq.s32.totalorder %s18, 3
      %p272 = por %p270, %p271
      %p273 = scmp.ne.s32.totalorder %s262, %s263
      %p274 = scmp.eq.s32.totalorder %s18, 0
      %p275 = por %p273, %p274
      %p276 = scmp.ne.s32.totalorder %s262, %s263
      %p277 = scmp.eq.s32.totalorder %s19, 3
      %p278 = por %p276, %p277
      %p280 = scmp.ne.s32.totalorder %s263, %s279
      %p281 = scmp.eq.s32.totalorder %s19, 0
      %p282 = por %p280, %p281
      %p283 = scmp.le.s32.totalorder 1, %s13
      %p284 = scmp.lt.s32.totalorder %s13, 5
      %p285 = pnand %p283, %p284
      %p286 = pneg %p285
      // Predicated region
      $region9: #{_lambda_.14} parent=5 // pred_check
        _
      $region10: #{_lambda_.14} parent=5 // pred_check_branch
        %288 = sbr.rel (%p285) target = $region12
      $region11: #{_lambda_.14} parent=5 // pred_region
        %s289 = ssub.s32 %s13, 1
      $region12: #{_lambda_.14} parent=5 // pred_fallthru
        _
      %p290 = scmp.lt.s32.totalorder %s13, 4
      // Predicated region
      $region13: #{_lambda_.14} parent=5 // pred_check
        %p291 = pneg %p290
      $region14: #{_lambda_.14} parent=5 // pred_check_branch
        %293 = sbr.rel (%p291) target = $region16
      $region15: #{_lambda_.14} parent=5 // pred_region
        // Predicated region
        $region17: #{_lambda_.14} parent=15 // pred_check
          %p294 = pneg %p63
        $region18: #{_lambda_.14} parent=15 // pred_check_branch
          %296 = sbr.rel (%p294) target = $region20
        $region19: #{_lambda_.14} parent=15 // pred_region
          %s297 = sand.u32 %s53, 1
          %s298 = sand.u32 %s53, 1
          %s299 = smul.addr %s298, 16
          %s300 = scalar_lea.vmem [#allocation5], %s299
          %s301 = smul.u32 2, %s22
          %s302 = smul.u32 2, %s21
          %s303 = smul.addr %s301, 8
          %s304 = sadd.s32 %s302, %s303
          %s305 = smul.addr %s20, 16
          %s306 = sadd.s32 %s304, %s305
          %s307 = smul.addr %s306, 4
          %s308 = scalar_lea.vmem %s0, %s307
          // Predicated region
          $region21: #{_lambda_.14} parent=19 // pred_check
            _
          $region22: #{_lambda_.14} parent=19 // pred_check_branch
            %310 = sbr.rel (0) target = $region24
          $region23: #{_lambda_.14} parent=19 // pred_region
            // Predicated region
            $region25: #{_lambda_.14} parent=23 // pred_check
              _
            $region26: #{_lambda_.14} parent=23 // pred_check_branch
              %312 = sbr.rel (0) target = $region28
            $region27: #{_lambda_.14} parent=23 // pred_region
              // Predicated region
              $region40: #{_lambda_.14} parent=27 // pred_check
                _
              $region41: #{_lambda_.14} parent=27 // pred_check_branch
                %329 = sbr.rel (0) target = $region43
              $region42: #{_lambda_.14} parent=27 // pred_region
                loop: start=0, step=1, limit=1
                $region44: #{_lambda_.14} parent=42 // loop_pre_header
                  _
                $region45: #{_lambda_.14} parent=42 // loop_header
                  %s331 = sphi 0, %s335
                  %p332 = scmp.ge.s32.totalorder %s331, 1
                  %s336 = sphi %s308, %s308
                  %s337 = sphi %s300, %s300
                $region46: #{_lambda_.14} parent=42 // loop_header_branch
                  %334 = sbr.rel (%p332) target = $region50
                $region47: #{_lambda_.14} parent=42 // loop_body
                  %v338 = vld [vmem:[%s336] sm:$0xff]
                  %339 = vst [vmem:[%s337] sm:$0xff] %v338
                  %v340 = vld [vmem:[%s336 + $0x20] sm:$0xff]
                  %341 = vst [vmem:[%s337 + $0x8] sm:$0xff] %v340
                $region48: #{_lambda_.14} parent=42 // loop_footer
                  %s335 = sadd.s32 1, %s331
                $region49: #{_lambda_.14} parent=42 // loop_footer_branch
                  %330 = sbr.rel target = $region45
                $region50: #{_lambda_.14} parent=42 // loop_exit
                  _
              $region43: #{_lambda_.14} parent=27 // pred_fallthru
                _
              // Predicated region
              $region51: #{_lambda_.14} parent=27 // pred_check
                _
              $region52: #{_lambda_.14} parent=27 // pred_check_branch
                %343 = sbr.rel target = $region54
              $region53: #{_lambda_.14} parent=27 // pred_region
                _
              $region54: #{_lambda_.14} parent=27 // pred_fallthru
                _
            $region28: #{_lambda_.14} parent=23 // pred_fallthru
              _
            // Predicated region
            $region29: #{_lambda_.14} parent=23 // pred_check
              _
            $region30: #{_lambda_.14} parent=23 // pred_check_branch
              %314 = sbr.rel target = $region32
            $region31: #{_lambda_.14} parent=23 // pred_region
              loop: start=0, step=1, limit=1
              $region33: #{_lambda_.14} parent=31 // loop_pre_header
                _
              $region34: #{_lambda_.14} parent=31 // loop_header
                %s317 = sphi 0, %s321
                %p318 = scmp.ge.s32.totalorder %s317, 1
                %s322 = sphi %s308, %s308
                %s323 = sphi %s300, %s300
              $region35: #{_lambda_.14} parent=31 // loop_header_branch
                %320 = sbr.rel (%p318) target = $region39
              $region36: #{_lambda_.14} parent=31 // loop_body
                %v324 = vld [vmem:[%s322] sm:$0xff]
                %325 = vst [vmem:[%s323] sm:$0xff] %v324
                %v326 = vld [vmem:[%s322 + $0x20] sm:$0xff]
                %327 = vst [vmem:[%s323 + $0x8] sm:$0xff] %v326
              $region37: #{_lambda_.14} parent=31 // loop_footer
                %s321 = sadd.s32 1, %s317
              $region38: #{_lambda_.14} parent=31 // loop_footer_branch
                %316 = sbr.rel target = $region34
              $region39: #{_lambda_.14} parent=31 // loop_exit
                _
            $region32: #{_lambda_.14} parent=23 // pred_fallthru
              _
          $region24: #{_lambda_.14} parent=19 // pred_fallthru
            _
          %344 = vnop
        $region20: #{_lambda_.14} parent=15 // pred_fallthru
          _
        // Predicated region
        $region55: #{_lambda_.14} parent=15 // pred_check
          %p345 = pneg %p95
        $region56: #{_lambda_.14} parent=15 // pred_check_branch
          %347 = sbr.rel (%p345) target = $region58
        $region57: #{_lambda_.14} parent=15 // pred_region
          %s348 = sand.u32 %s85, 1
          %s349 = sand.u32 %s85, 1
          %s350 = smul.addr %s349, 8
          %s351 = scalar_lea.vmem [#allocation6], %s350
          %s352 = sadd.s32 %s21, 4
          %s353 = smul.u32 2, %s23
          %s354 = smul.addr %s353, 8
          %s355 = sadd.s32 %s352, %s354
          %s356 = smul.addr %s20, 16
          %s357 = sadd.s32 %s355, %s356
          %s358 = smul.addr %s357, 4
          %s359 = scalar_lea.vmem %s1, %s358
          // Predicated region
          $region59: #{_lambda_.14} parent=57 // pred_check
            _
          $region60: #{_lambda_.14} parent=57 // pred_check_branch
            %361 = sbr.rel (0) target = $region62
          $region61: #{_lambda_.14} parent=57 // pred_region
            // Predicated region
            $region63: #{_lambda_.14} parent=61 // pred_check
              _
            $region64: #{_lambda_.14} parent=61 // pred_check_branch
              %363 = sbr.rel target = $region66
            $region65: #{_lambda_.14} parent=61 // pred_region
              // Predicated region
              $region78: #{_lambda_.14} parent=65 // pred_check
                _
              $region79: #{_lambda_.14} parent=65 // pred_check_branch
                %380 = sbr.rel (0) target = $region81
              $region80: #{_lambda_.14} parent=65 // pred_region
                loop: start=0, step=1, limit=1
                $region82: #{_lambda_.14} parent=80 // loop_pre_header
                  _
                $region83: #{_lambda_.14} parent=80 // loop_header
                  %s382 = sphi 0, %s386
                  %p383 = scmp.ge.s32.totalorder %s382, 1
                  %s387 = sphi %s359, %s359
                  %s388 = sphi %s351, %s351
                $region84: #{_lambda_.14} parent=80 // loop_header_branch
                  %385 = sbr.rel (%p383) target = $region88
                $region85: #{_lambda_.14} parent=80 // loop_body
                  _
                $region86: #{_lambda_.14} parent=80 // loop_footer
                  %s386 = sadd.s32 1, %s382
                $region87: #{_lambda_.14} parent=80 // loop_footer_branch
                  %381 = sbr.rel target = $region83
                $region88: #{_lambda_.14} parent=80 // loop_exit
                  _
                loop: start=0, step=1, limit=1
                $region89: #{_lambda_.14} parent=80 // loop_pre_header
                  _
                $region90: #{_lambda_.14} parent=80 // loop_header
                  %s391 = sphi 0, %s395
                  %p392 = scmp.ge.s32.totalorder %s391, 1
                  %s396 = sphi %s359, %s359
                  %s397 = sphi %s351, %s351
                $region91: #{_lambda_.14} parent=80 // loop_header_branch
                  %394 = sbr.rel (%p392) target = $region95
                $region92: #{_lambda_.14} parent=80 // loop_body
                  %v398 = vld [vmem:[%s396] sm:$0xf]
                  %399 = vst [vmem:[%s397] sm:$0xf] %v398
                  %v400 = vld [vmem:[%s396 + $0x20] sm:$0xf]
                  %401 = vst [vmem:[%s397 + $0x4] sm:$0xf] %v400
                $region93: #{_lambda_.14} parent=80 // loop_footer
                  %s395 = sadd.s32 1, %s391
                $region94: #{_lambda_.14} parent=80 // loop_footer_branch
                  %390 = sbr.rel target = $region90
                $region95: #{_lambda_.14} parent=80 // loop_exit
                  _
              $region81: #{_lambda_.14} parent=65 // pred_fallthru
                _
            $region66: #{_lambda_.14} parent=61 // pred_fallthru
              _
            // Predicated region
            $region67: #{_lambda_.14} parent=61 // pred_check
              _
            $region68: #{_lambda_.14} parent=61 // pred_check_branch
              %365 = sbr.rel (0) target = $region70
            $region69: #{_lambda_.14} parent=61 // pred_region
              loop: start=0, step=1, limit=1
              $region71: #{_lambda_.14} parent=69 // loop_pre_header
                _
              $region72: #{_lambda_.14} parent=69 // loop_header
                %s368 = sphi 0, %s372
                %p369 = scmp.ge.s32.totalorder %s368, 1
                %s373 = sphi %s359, %s359
                %s374 = sphi %s351, %s351
              $region73: #{_lambda_.14} parent=69 // loop_header_branch
                %371 = sbr.rel (%p369) target = $region77
              $region74: #{_lambda_.14} parent=69 // loop_body
                %v375 = vld [vmem:[%s373] sm:$0xf]
                %376 = vst [vmem:[%s374] sm:$0xf] %v375
                %v377 = vld [vmem:[%s373 + $0x20] sm:$0xf]
                %378 = vst [vmem:[%s374 + $0x4] sm:$0xf] %v377
              $region75: #{_lambda_.14} parent=69 // loop_footer
                %s372 = sadd.s32 1, %s368
              $region76: #{_lambda_.14} parent=69 // loop_footer_branch
                %367 = sbr.rel target = $region72
              $region77: #{_lambda_.14} parent=69 // loop_exit
                _
            $region70: #{_lambda_.14} parent=61 // pred_fallthru
              _
          $region62: #{_lambda_.14} parent=57 // pred_fallthru
            _
          %402 = vnop
        $region58: #{_lambda_.14} parent=15 // pred_fallthru
          _
        // Predicated region
        $region96: #{_lambda_.14} parent=15 // pred_check
          %p403 = pneg %p127
        $region97: #{_lambda_.14} parent=15 // pred_check_branch
          %405 = sbr.rel (%p403) target = $region99
        $region98: #{_lambda_.14} parent=15 // pred_region
          %s406 = sand.u32 %s117, 1
          %s407 = sand.u32 %s117, 1
          %s408 = smul.addr %s407, 8
          %s409 = scalar_lea.vmem [#allocation7], %s408
          %s410 = sadd.s32 %s21, 6
          %s411 = smul.u32 2, %s23
          %s412 = smul.addr %s411, 8
          %s413 = sadd.s32 %s410, %s412
          %s414 = smul.addr %s20, 16
          %s415 = sadd.s32 %s413, %s414
          %s416 = smul.addr %s415, 4
          %s417 = scalar_lea.vmem %s2, %s416
          // Predicated region
          $region100: #{_lambda_.14} parent=98 // pred_check
            _
          $region101: #{_lambda_.14} parent=98 // pred_check_branch
            %419 = sbr.rel (0) target = $region103
          $region102: #{_lambda_.14} parent=98 // pred_region
            // Predicated region
            $region104: #{_lambda_.14} parent=102 // pred_check
              _
            $region105: #{_lambda_.14} parent=102 // pred_check_branch
              %421 = sbr.rel target = $region107
            $region106: #{_lambda_.14} parent=102 // pred_region
              // Predicated region
              $region119: #{_lambda_.14} parent=106 // pred_check
                _
              $region120: #{_lambda_.14} parent=106 // pred_check_branch
                %438 = sbr.rel (0) target = $region122
              $region121: #{_lambda_.14} parent=106 // pred_region
                loop: start=0, step=1, limit=1
                $region123: #{_lambda_.14} parent=121 // loop_pre_header
                  _
                $region124: #{_lambda_.14} parent=121 // loop_header
                  %s440 = sphi 0, %s444
                  %p441 = scmp.ge.s32.totalorder %s440, 1
                  %s445 = sphi %s417, %s417
                  %s446 = sphi %s409, %s409
                $region125: #{_lambda_.14} parent=121 // loop_header_branch
                  %443 = sbr.rel (%p441) target = $region129
                $region126: #{_lambda_.14} parent=121 // loop_body
                  _
                $region127: #{_lambda_.14} parent=121 // loop_footer
                  %s444 = sadd.s32 1, %s440
                $region128: #{_lambda_.14} parent=121 // loop_footer_branch
                  %439 = sbr.rel target = $region124
                $region129: #{_lambda_.14} parent=121 // loop_exit
                  _
                loop: start=0, step=1, limit=1
                $region130: #{_lambda_.14} parent=121 // loop_pre_header
                  _
                $region131: #{_lambda_.14} parent=121 // loop_header
                  %s449 = sphi 0, %s453
                  %p450 = scmp.ge.s32.totalorder %s449, 1
                  %s454 = sphi %s417, %s417
                  %s455 = sphi %s409, %s409
                $region132: #{_lambda_.14} parent=121 // loop_header_branch
                  %452 = sbr.rel (%p450) target = $region136
                $region133: #{_lambda_.14} parent=121 // loop_body
                  %v456 = vld [vmem:[%s454] sm:$0xf]
                  %457 = vst [vmem:[%s455] sm:$0xf] %v456
                  %v458 = vld [vmem:[%s454 + $0x20] sm:$0xf]
                  %459 = vst [vmem:[%s455 + $0x4] sm:$0xf] %v458
                $region134: #{_lambda_.14} parent=121 // loop_footer
                  %s453 = sadd.s32 1, %s449
                $region135: #{_lambda_.14} parent=121 // loop_footer_branch
                  %448 = sbr.rel target = $region131
                $region136: #{_lambda_.14} parent=121 // loop_exit
                  _
              $region122: #{_lambda_.14} parent=106 // pred_fallthru
                _
            $region107: #{_lambda_.14} parent=102 // pred_fallthru
              _
            // Predicated region
            $region108: #{_lambda_.14} parent=102 // pred_check
              _
            $region109: #{_lambda_.14} parent=102 // pred_check_branch
              %423 = sbr.rel (0) target = $region111
            $region110: #{_lambda_.14} parent=102 // pred_region
              loop: start=0, step=1, limit=1
              $region112: #{_lambda_.14} parent=110 // loop_pre_header
                _
              $region113: #{_lambda_.14} parent=110 // loop_header
                %s426 = sphi 0, %s430
                %p427 = scmp.ge.s32.totalorder %s426, 1
                %s431 = sphi %s417, %s417
                %s432 = sphi %s409, %s409
              $region114: #{_lambda_.14} parent=110 // loop_header_branch
                %429 = sbr.rel (%p427) target = $region118
              $region115: #{_lambda_.14} parent=110 // loop_body
                %v433 = vld [vmem:[%s431] sm:$0xf]
                %434 = vst [vmem:[%s432] sm:$0xf] %v433
                %v435 = vld [vmem:[%s431 + $0x20] sm:$0xf]
                %436 = vst [vmem:[%s432 + $0x4] sm:$0xf] %v435
              $region116: #{_lambda_.14} parent=110 // loop_footer
                %s430 = sadd.s32 1, %s426
              $region117: #{_lambda_.14} parent=110 // loop_footer_branch
                %425 = sbr.rel target = $region113
              $region118: #{_lambda_.14} parent=110 // loop_exit
                _
            $region111: #{_lambda_.14} parent=102 // pred_fallthru
              _
          $region103: #{_lambda_.14} parent=98 // pred_fallthru
            _
          %460 = vnop
        $region99: #{_lambda_.14} parent=15 // pred_fallthru
          _
        // Predicated region
        $region137: #{_lambda_.14} parent=15 // pred_check
          %p461 = pneg %p155
        $region138: #{_lambda_.14} parent=15 // pred_check_branch
          %463 = sbr.rel (%p461) target = $region140
        $region139: #{_lambda_.14} parent=15 // pred_region
          %s464 = smul.u32 2, %s22
          %p465 = scmp.lt.s32.totalorder %s20, 1
          %s466 = scalar_select %p465, %s20, 1
          %p467 = scmp.lt.s32.totalorder %s464, 1
          %s468 = scalar_select %p467, %s464, 1
          %s469 = smul.addr %s466, 2
          %s470 = sadd.s32 %s468, %s469
          %s471 = smul.addr %s470, 8
          %s472 = scalar_lea.vmem %s3, %s471
          %s473 = smul.u32 2, %s22
        $region140: #{_lambda_.14} parent=15 // pred_fallthru
          _
        // Predicated region
        $region141: #{_lambda_.14} parent=15 // pred_check
          %p474 = pneg %p183
        $region142: #{_lambda_.14} parent=15 // pred_check_branch
          %476 = sbr.rel (%p474) target = $region144
        $region143: #{_lambda_.14} parent=15 // pred_region
          %s477 = smul.u32 2, %s22
          %p478 = scmp.lt.s32.totalorder %s20, 1
          %s479 = scalar_select %p478, %s20, 1
          %p480 = scmp.lt.s32.totalorder %s477, 1
          %s481 = scalar_select %p480, %s477, 1
          %s482 = smul.addr %s479, 2
          %s483 = sadd.s32 %s481, %s482
          %s484 = smul.addr %s483, 8
          %s485 = scalar_lea.vmem %s4, %s484
          %s486 = smul.u32 2, %s22
        $region144: #{_lambda_.14} parent=15 // pred_fallthru
          _
        // Predicated region
        $region145: #{_lambda_.14} parent=15 // pred_check
          %p487 = pneg %p211
        $region146: #{_lambda_.14} parent=15 // pred_check_branch
          %489 = sbr.rel (%p487) target = $region148
        $region147: #{_lambda_.14} parent=15 // pred_region
          %s490 = smul.u32 2, %s23
          %p491 = scmp.lt.s32.totalorder %s20, 1
          %s492 = scalar_select %p491, %s20, 1
          %p493 = scmp.lt.s32.totalorder %s490, 1
          %s494 = scalar_select %p493, %s490, 1
          %s495 = smul.addr %s492, 2
          %s496 = sadd.s32 %s494, %s495
          %s497 = smul.addr %s496, 8
          %s498 = scalar_lea.vmem %s5, %s497
          %s499 = smul.u32 2, %s23
        $region148: #{_lambda_.14} parent=15 // pred_fallthru
          _
        // Predicated region
        $region149: #{_lambda_.14} parent=15 // pred_check
          %p500 = pneg %p239
        $region150: #{_lambda_.14} parent=15 // pred_check_branch
          %502 = sbr.rel (%p500) target = $region152
        $region151: #{_lambda_.14} parent=15 // pred_region
          %s503 = smul.u32 2, %s23
          %p504 = scmp.lt.s32.totalorder %s20, 1
          %s505 = scalar_select %p504, %s20, 1
          %p506 = scmp.lt.s32.totalorder %s503, 1
          %s507 = scalar_select %p506, %s503, 1
          %s508 = smul.addr %s505, 2
          %s509 = sadd.s32 %s507, %s508
          %s510 = smul.addr %s509, 8
          %s511 = scalar_lea.vmem %s6, %s510
          %s512 = smul.u32 2, %s23
        $region152: #{_lambda_.14} parent=15 // pred_fallthru
          _
      $region16: #{_lambda_.14} parent=5 // pred_fallthru
        _
      %p513 = scmp.le.s32.totalorder 1, %s13
      %p514 = scmp.lt.s32.totalorder %s13, 5
      %p515 = pnand %p513, %p514
      %p516 = pneg %p515
      // Predicated region
      $region153: #{_lambda_.14} parent=5 // pred_check
        _
      $region154: #{_lambda_.14} parent=5 // pred_check_branch
        %518 = sbr.rel (%p515) target = $region156
      $region155: #{_lambda_.14} parent=5 // pred_region
        %s519 = ssub.s32 %s13, 1
        %s520 = sand.u32 %s56, 1
        %s521 = sand.u32 %s56, 1
        %s522 = smul.addr %s521, 16
        %s523 = scalar_lea.vmem [#allocation5], %s522
        // Predicated region
        $region157: #{_lambda_.14} parent=155 // pred_check
          %p524 = pneg %p69
        $region158: #{_lambda_.14} parent=155 // pred_check_branch
          %526 = sbr.rel (%p524) target = $region160
        $region159: #{_lambda_.14} parent=155 // pred_region
          _
        $region160: #{_lambda_.14} parent=155 // pred_fallthru
          _
        %s527 = sand.u32 %s88, 1
        %s528 = sand.u32 %s88, 1
        %s529 = smul.addr %s528, 8
        %s530 = scalar_lea.vmem [#allocation6], %s529
        // Predicated region
        $region161: #{_lambda_.14} parent=155 // pred_check
          %p531 = pneg %p101
        $region162: #{_lambda_.14} parent=155 // pred_check_branch
          %533 = sbr.rel (%p531) target = $region164
        $region163: #{_lambda_.14} parent=155 // pred_region
          _
        $region164: #{_lambda_.14} parent=155 // pred_fallthru
          _
        %s534 = sand.u32 %s120, 1
        %s535 = sand.u32 %s120, 1
        %s536 = smul.addr %s535, 8
        %s537 = scalar_lea.vmem [#allocation7], %s536
        // Predicated region
        $region165: #{_lambda_.14} parent=155 // pred_check
          %p538 = pneg %p133
        $region166: #{_lambda_.14} parent=155 // pred_check_branch
          %540 = sbr.rel (%p538) target = $region168
        $region167: #{_lambda_.14} parent=155 // pred_region
          _
        $region168: #{_lambda_.14} parent=155 // pred_fallthru
          _
        %s541 = sand.u32 %s56, 1
        %s542 = sand.u32 %s56, 1
        %s543 = smul.addr %s542, 16
        %s544 = scalar_lea.vmem [#allocation5], %s543
        %p545 = pneg %p69
        %p546 = pneg %p66
        %s547 = sand.u32 %s88, 1
        %s548 = sand.u32 %s88, 1
        %s549 = smul.addr %s548, 8
        %s550 = scalar_lea.vmem [#allocation6], %s549
        %p551 = pneg %p101
        %p552 = pneg %p98
        %s553 = sand.u32 %s120, 1
        %s554 = sand.u32 %s120, 1
        %s555 = smul.addr %s554, 8
        %s556 = scalar_lea.vmem [#allocation7], %s555
        %p557 = pneg %p133
        %p558 = pneg %p130
        %s559 = smul.u32 2, %s26
        %p560 = scmp.lt.s32.totalorder %s24, 1
        %s561 = scalar_select %p560, %s24, 1
        %p562 = scmp.lt.s32.totalorder %s559, 1
        %s563 = scalar_select %p562, %s559, 1
        %s564 = smul.addr %s561, 2
        %s565 = sadd.s32 %s563, %s564
        %s566 = smul.addr %s565, 8
        %s567 = scalar_lea.vmem %s3, %s566
        %p568 = pneg %p161
        %p569 = pneg %p158
        %s570 = smul.u32 2, %s26
        %p571 = scmp.lt.s32.totalorder %s24, 1
        %s572 = scalar_select %p571, %s24, 1
        %p573 = scmp.lt.s32.totalorder %s570, 1
        %s574 = scalar_select %p573, %s570, 1
        %s575 = smul.addr %s572, 2
        %s576 = sadd.s32 %s574, %s575
        %s577 = smul.addr %s576, 8
        %s578 = scalar_lea.vmem %s4, %s577
        %p579 = pneg %p189
        %p580 = pneg %p186
        %s581 = smul.u32 2, %s27
        %p582 = scmp.lt.s32.totalorder %s24, 1
        %s583 = scalar_select %p582, %s24, 1
        %p584 = scmp.lt.s32.totalorder %s581, 1
        %s585 = scalar_select %p584, %s581, 1
        %s586 = smul.addr %s583, 2
        %s587 = sadd.s32 %s585, %s586
        %s588 = smul.addr %s587, 8
        %s589 = scalar_lea.vmem %s5, %s588
        %p590 = pneg %p217
        %p591 = pneg %p214
        %s592 = smul.u32 2, %s27
        %p593 = scmp.lt.s32.totalorder %s24, 1
        %s594 = scalar_select %p593, %s24, 1
        %p595 = scmp.lt.s32.totalorder %s592, 1
        %s596 = scalar_select %p595, %s592, 1
        %s597 = smul.addr %s594, 2
        %s598 = sadd.s32 %s596, %s597
        %s599 = smul.addr %s598, 8
        %s600 = scalar_lea.vmem %s6, %s599
        %p601 = pneg %p245
        %p602 = pneg %p242
        %p603 = pneg %p275
        %p604 = pneg %p272
        %s605 = sand.u32 %s262, 1
        %s606 = sand.u32 %s262, 1
        %s607 = smul.addr %s606, 16
        %s608 = scalar_lea.vmem [#allocation8], %s607
        %s609 = smul.u32 2, %s26
        %s610 = smul.u32 2, %s25
        %s611 = sadd.s32 %s25, 4
        %s612 = smul.u32 2, %s27
        %s613 = sadd.s32 %s25, 6
        %s614 = smul.u32 2, %s27
        %s615 = smul.u32 2, %s26
        %p616 = scmp.lt.s32.totalorder %s24, 1
        %s617 = scalar_select %p616, %s24, 1
        %p618 = scmp.lt.s32.totalorder %s615, 1
        %s619 = scalar_select %p618, %s615, 1
        %s620 = smul.addr %s617, 2
        %s621 = sadd.s32 %s619, %s620
        %s622 = smul.addr %s621, 8
        %s623 = scalar_lea.vmem %s3, %s622
        %s624 = smul.u32 2, %s26
        %s625 = smul.u32 2, %s26
        %p626 = scmp.lt.s32.totalorder %s24, 1
        %s627 = scalar_select %p626, %s24, 1
        %p628 = scmp.lt.s32.totalorder %s625, 1
        %s629 = scalar_select %p628, %s625, 1
        %s630 = smul.addr %s627, 2
        %s631 = sadd.s32 %s629, %s630
        %s632 = smul.addr %s631, 8
        %s633 = scalar_lea.vmem %s4, %s632
        %s634 = smul.u32 2, %s26
        %s635 = smul.u32 2, %s27
        %p636 = scmp.lt.s32.totalorder %s24, 1
        %s637 = scalar_select %p636, %s24, 1
        %p638 = scmp.lt.s32.totalorder %s635, 1
        %s639 = scalar_select %p638, %s635, 1
        %s640 = smul.addr %s637, 2
        %s641 = sadd.s32 %s639, %s640
        %s642 = smul.addr %s641, 8
        %s643 = scalar_lea.vmem %s5, %s642
        %s644 = smul.u32 2, %s27
        %s645 = smul.u32 2, %s27
        %p646 = scmp.lt.s32.totalorder %s24, 1
        %s647 = scalar_select %p646, %s24, 1
        %p648 = scmp.lt.s32.totalorder %s645, 1
        %s649 = scalar_select %p648, %s645, 1
        %s650 = smul.addr %s647, 2
        %s651 = sadd.s32 %s649, %s650
        %s652 = smul.addr %s651, 8
        %s653 = scalar_lea.vmem %s6, %s652
        %s654 = smul.u32 2, %s27
        %s655 = smul.u32 2, %s26
        %s656 = smul.u32 2, %s25
        %p658 = scmp.eq.s32.totalorder %s27, 0
        // Predicated region
        $region169: #{_lambda_.14} parent=155 // pred_check
          %p659 = pneg %p658
        $region170: #{_lambda_.14} parent=155 // pred_check_branch
          %661 = sbr.rel (%p659) target = $region172
        $region171: #{_lambda_.14} parent=155 // pred_region
          %vm662 = vcmask 7168
          %663 = vst.msk [vmem:[#allocation2] sm:$0xff] %vm662, -inf
          %664 = vst.msk [vmem:[#allocation2 + $0x8] sm:$0xff] %vm662, -inf
          %665 = vst.msk [vmem:[#allocation2 + $0x10] sm:$0xff] %vm662, -inf
          %666 = vst.msk [vmem:[#allocation2 + $0x18] sm:$0xff] %vm662, -inf
          %667 = vst.msk [vmem:[#allocation3] sm:$0xff] %vm662, 0.0
          %668 = vst.msk [vmem:[#allocation3 + $0x8] sm:$0xff] %vm662, 0.0
          %669 = vst.msk [vmem:[#allocation3 + $0x10] sm:$0xff] %vm662, 0.0
          %670 = vst.msk [vmem:[#allocation3 + $0x18] sm:$0xff] %vm662, 0.0
          %671 = vst [vmem:[#allocation4] sm:$0xff] 0.0
          %672 = vst [vmem:[#allocation4 + $0x8] sm:$0xff] 0.0
          %673 = vst [vmem:[#allocation4 + $0x10] sm:$0xff] 0.0
          %674 = vst [vmem:[#allocation4 + $0x18] sm:$0xff] 0.0
        $region172: #{_lambda_.14} parent=155 // pred_fallthru
          _
        %v675 = vld [vmem:[%s530] sm:$0xf]
        %v676 = vld [vmem:[%s530 + $0x4] sm:$0xf]
        %v677 = vunpack.c.l.bf16 %v675
        %v678 = vunpack.c.l.bf16 %v676
        %v679 = vld [vmem:[%s643] sm:$0xff]
        %v680 = vld [vmem:[%s643 + $0x8] sm:$0xff]
        %v681 = vld [vmem:[%s653] sm:$0xff]
        %v682 = vld [vmem:[%s653 + $0x8] sm:$0xff]
        %683 = vrot.lane.b32.xlu0 %v677, 64
        %v684 = vpop.permute.xlu0 %683
        %685 = vrot.lane.b32.xlu0 %v678, 64
        %v686 = vpop.permute.xlu0 %685
        %v687 = vlaneseq
        %v688 = vand.u32 %v687, 127
        %vm689 = vcmp.lt.s32.totalorder %v688, 64
        %v690 = vsub.f32 0.0, %v684
        %v691 = vsub.f32 0.0, %v686
        %v692 = vsel %vm689, %v690, %v684
        %v693 = vsel %vm689, %v691, %v686
        %v694 = vmul.f32 %v677, %v679
        %v695 = vmul.f32 %v678, %v680
        %v696 = vmul.f32 %v692, %v681
        %v697 = vmul.f32 %v693, %v682
        %v698 = vadd.f32 %v694, %v696
        %v699 = vadd.f32 %v695, %v697
        %v700 = vpack.c.bf16 %v699, %v698
        %v701 = vld [vmem:[%s537] sm:$0xf]
        %v702 = vld [vmem:[%s537 + $0x4] sm:$0xf]
        %v703 = vld [vmem:[%s523] sm:$0xff]
        %v704 = vld [vmem:[%s523 + $0x8] sm:$0xff]
        %v705 = vld [vmem:[%s623] sm:$0xff]
        %v706 = vld [vmem:[%s623 + $0x8] sm:$0xff]
        %v707 = vld [vmem:[%s633] sm:$0xff]
        %v708 = vld [vmem:[%s633 + $0x8] sm:$0xff]
        %v709 = vunpack.c.l.bf16 %v703
        %v710 = vunpack.c.l.bf16 %v704
        %711 = vrot.lane.b32.xlu0 %v709, 64
        %v712 = vpop.permute.xlu0 %711
        %713 = vrot.lane.b32.xlu0 %v710, 64
        %v714 = vpop.permute.xlu0 %713
        %v715 = vsub.f32 0.0, %v712
        %v716 = vsub.f32 0.0, %v714
        %v717 = vsel %vm689, %v715, %v712
        %v718 = vsel %vm689, %v716, %v714
        %v719 = vmul.f32 %v709, %v705
        %v720 = vmul.f32 %v710, %v706
        %v721 = vmul.f32 %v717, %v707
        %v722 = vmul.f32 %v718, %v708
        %v723 = vadd.f32 %v719, %v721
        %v724 = vadd.f32 %v720, %v722
        %v725 = vpack.c.bf16 %v724, %v723
        %726 = vmatprep.subr.bf16.mxu0 0
        %727 = vmatpush1.bf16.xpose.msra.mxu0 %v700
        %728 = vmatprep.subr.bf16.mxu0 0
        %729 = vmatpush1.bf16.xpose.msra.mxu0 0
        %730 = vmatprep.subr.bf16.mxu0 0
        %731 = vmatpush1.bf16.xpose.msra.mxu0 0
        %732 = vmatprep.subr.bf16.mxu0 0
        %733 = vmatpush1.bf16.xpose.msra.mxu0 0
        %734 = vmatprep.subr.bf16.mxu0 0
        %735 = vmatpush1.bf16.xpose.msra.mxu0 0
        %736 = vmatprep.subr.bf16.mxu0 0
        %737 = vmatpush1.bf16.xpose.msra.mxu0 0
        %738 = vmatprep.subr.bf16.mxu0 0
        %739 = vmatpush1.bf16.xpose.msra.mxu0 0
        %740 = vmatprep.subr.bf16.mxu0 0
        %741 = vmatpush1.bf16.xpose.msra.mxu0 0
        %742 = vmatprep.subr.bf16.mxu0 0
        %743 = vmatpush1.bf16.xpose.msra.mxu0 0
        %744 = vmatprep.subr.bf16.mxu0 0
        %745 = vmatpush1.bf16.xpose.msra.mxu0 0
        %746 = vmatprep.subr.bf16.mxu0 0
        %747 = vmatpush1.bf16.xpose.msra.mxu0 0
        %748 = vmatprep.subr.bf16.mxu0 0
        %749 = vmatpush1.bf16.xpose.msra.mxu0 0
        %750 = vmatprep.subr.bf16.mxu0 0
        %751 = vmatpush1.bf16.xpose.msra.mxu0 0
        %752 = vmatprep.subr.bf16.mxu0 0
        %753 = vmatpush1.bf16.xpose.msra.mxu0 0
        %754 = vmatprep.subr.bf16.mxu0 0
        %755 = vmatpush1.bf16.xpose.msra.mxu0 0
        %756 = vmatprep.subr.bf16.mxu0 0
        %757 = vmatpush1.bf16.xpose.msra.mxu0 0
        %758 = vmatprep.mubr.bf16.mxu0 0
        %759 = vmatmul.mubr.bf16.gmra.mrb[0].mxu0 %v725
        %v760 = vpop.f32.mrb[0].mxu0
        %v761 = vadd.f32 0.0, %v760
        %v762 = vpop.f32.mrb[0].mxu0
        %v763 = vpop.f32.mrb[0].mxu0
        %v764 = vadd.f32 0.0, %v763
        %v765 = vpop.f32.mrb[0].mxu0
        %766 = vdwg.mxu0
        %v767 = vmul.f32 %v761, 0.088388346
        %v768 = vmul.f32 %v764, 0.088388346
        %v769 = vld [vmem:[#allocation2] sm:$0xff]
        %v770 = vld [vmem:[#allocation2 + $0x8] sm:$0xff]
        %vm771 = vcmask 130048
        %v772 = vsel %vm771, %v767, -inf
        %773 = vmax.xlane.f32.xlu0 %v772
        %v774 = vpop.xlane.xlu0 %773
        %v775 = vsel %vm771, %v768, -inf
        %776 = vmax.xlane.f32.xlu0 %v775
        %v777 = vpop.xlane.xlu0 %776
        %v778 = vmax.f32 %v769, %v774
        %v779 = vmax.f32 %v770, %v777
        %v780 = vmax.f32 %v778, -1e+30
        %v781 = vmax.f32 %v779, -1e+30
        %v782 = vsub.f32 %v769, %v780
        %v783 = vsub.f32 %v770, %v781
        %v784 = vmul.f32 %v782, 1.442695
        %v785 = vpow.pop %v784
        %v786 = vmul.f32 %v783, 1.442695
        %v787 = vpow.pop %v786
        %789 = vset.pattern.permute.xlu0 0
        %790 = vperm.xlu0 %789, %v780
        %v791 = vpop.permute.xlu0 %790
        %794 = vset.pattern.permute.xlu0 0
        %795 = vperm.xlu0 %794, %v781
        %v796 = vpop.permute.xlu0 %795
        %v798 = vsub.f32 %v767, %v791
        %v799 = vsub.f32 %v768, %v796
        %v800 = vmul.f32 %v798, 1.442695
        %v801 = vpow.pop %v800
        %v802 = vmul.f32 %v799, 1.442695
        %v803 = vpow.pop %v802
        %v804 = vld [vmem:[#allocation3] sm:$0xff]
        %v805 = vld [vmem:[#allocation3 + $0x8] sm:$0xff]
        %v806 = vmul.f32 %v785, %v804
        %v807 = vmul.f32 %v787, %v805
        %v808 = vsel %vm771, %v801, 0.0
        %809 = vadd.xlane.f32.xlu0 %v808
        %v810 = vpop.xlane.xlu0 %809
        %v811 = vsel %vm771, %v803, 0.0
        %812 = vadd.xlane.f32.xlu0 %v811
        %v813 = vpop.xlane.xlu0 %812
        %v814 = vadd.f32 %v806, %v810
        %v815 = vadd.f32 %v807, %v813
        %vm816 = vcmask 7168
        %817 = vst.msk [vmem:[#allocation3] sm:$0xff] %vm816, %v814
        %818 = vst.msk [vmem:[#allocation3 + $0x8] sm:$0xff] %vm816, %v815
        %v819 = vld [vmem:[#allocation4] sm:$0xff]
        %v820 = vld [vmem:[#allocation4 + $0x10] sm:$0xff]
        %822 = vset.pattern.permute.xlu0 0
        %823 = vperm.xlu0 %822, %v785
        %v824 = vpop.permute.xlu0 %823
        %827 = vset.pattern.permute.xlu0 0
        %828 = vperm.xlu0 %827, %v787
        %v829 = vpop.permute.xlu0 %828
        %v831 = vmul.f32 %v824, %v819
        %v832 = vmul.f32 %v829, %v820
        %v833 = vpack.c.bf16 %v803, %v801
        %v836 = vunpack.c.l.b16 %v701
        %v837 = vunpack.c.l.b16 %v702
        %v838 = vpack.c.b16 %v837, %v836
        %v841 = vsel %vm771, %v833, 0
        %843 = vmatprep.subr.bf16.mxu0 0
        %844 = vmatpush1.bf16.msra.mxu0 %v838
        %845 = vmatprep.subr.bf16.mxu0 0
        %846 = vmatpush1.bf16.msra.mxu0 0
        %847 = vmatprep.subr.bf16.mxu0 0
        %848 = vmatpush1.bf16.msra.mxu0 0
        %849 = vmatprep.subr.bf16.mxu0 0
        %850 = vmatpush1.bf16.msra.mxu0 0
        %851 = vmatprep.subr.bf16.mxu0 0
        %852 = vmatpush1.bf16.msra.mxu0 0
        %853 = vmatprep.subr.bf16.mxu0 0
        %854 = vmatpush1.bf16.msra.mxu0 0
        %855 = vmatprep.subr.bf16.mxu0 0
        %856 = vmatpush1.bf16.msra.mxu0 0
        %857 = vmatprep.subr.bf16.mxu0 0
        %858 = vmatpush1.bf16.msra.mxu0 0
        %859 = vmatprep.subr.bf16.mxu0 0
        %860 = vmatpush1.bf16.msra.mxu0 0
        %861 = vmatprep.subr.bf16.mxu0 0
        %862 = vmatpush1.bf16.msra.mxu0 0
        %863 = vmatprep.subr.bf16.mxu0 0
        %864 = vmatpush1.bf16.msra.mxu0 0
        %865 = vmatprep.subr.bf16.mxu0 0
        %866 = vmatpush1.bf16.msra.mxu0 0
        %867 = vmatprep.subr.bf16.mxu0 0
        %868 = vmatpush1.bf16.msra.mxu0 0
        %869 = vmatprep.subr.bf16.mxu0 0
        %870 = vmatpush1.bf16.msra.mxu0 0
        %871 = vmatprep.subr.bf16.mxu0 0
        %872 = vmatpush1.bf16.msra.mxu0 0
        %873 = vmatprep.subr.bf16.mxu0 0
        %874 = vmatpush1.bf16.msra.mxu0 0
        %875 = vmatprep.mubr.bf16.mxu0 0
        %876 = vmatmul.mubr.bf16.gmra.mrb[0].mxu0 %v841
        %v877 = vpop.f32.mrb[0].mxu0
        %v878 = vadd.f32 0.0, %v877
        %v879 = vpop.f32.mrb[0].mxu0
        %v880 = vpop.f32.mrb[0].mxu0
        %v881 = vadd.f32 0.0, %v880
        %v882 = vpop.f32.mrb[0].mxu0
        %883 = vdwg.mxu0
        %v884 = vadd.f32 %v831, %v878
        %v885 = vadd.f32 %v832, %v881
        %886 = vst [vmem:[#allocation4] sm:$0xff] %v884
        %887 = vst [vmem:[#allocation4 + $0x10] sm:$0xff] %v885
        %888 = vst.msk [vmem:[#allocation2] sm:$0xff] %vm816, %v780
        %889 = vst.msk [vmem:[#allocation2 + $0x8] sm:$0xff] %vm816, %v781
        %v892 = vrot.slane %v703, 4
        %v893 = vrot.slane %v704, 4
        %v896 = vunpack.c.l.bf16 %v892
        %v897 = vunpack.c.l.bf16 %v893
        %898 = vrot.lane.b32.xlu0 %v896, 64
        %v899 = vpop.permute.xlu0 %898
        %900 = vrot.lane.b32.xlu0 %v897, 64
        %v901 = vpop.permute.xlu0 %900
        %v902 = vsub.f32 0.0, %v899
        %v903 = vsub.f32 0.0, %v901
        %v904 = vsel %vm689, %v902, %v899
        %v905 = vsel %vm689, %v903, %v901
        %v906 = vmul.f32 %v896, %v705
        %v907 = vmul.f32 %v897, %v706
        %v908 = vmul.f32 %v904, %v707
        %v909 = vmul.f32 %v905, %v708
        %v910 = vadd.f32 %v906, %v908
        %v911 = vadd.f32 %v907, %v909
        %v912 = vpack.c.bf16 %v911, %v910
        %913 = vmatprep.subr.bf16.mxu0 0
        %914 = vmatpush1.bf16.xpose.msra.mxu0 %v700
        %915 = vmatprep.subr.bf16.mxu0 0
        %916 = vmatpush1.bf16.xpose.msra.mxu0 0
        %917 = vmatprep.subr.bf16.mxu0 0
        %918 = vmatpush1.bf16.xpose.msra.mxu0 0
        %919 = vmatprep.subr.bf16.mxu0 0
        %920 = vmatpush1.bf16.xpose.msra.mxu0 0
        %921 = vmatprep.subr.bf16.mxu0 0
        %922 = vmatpush1.bf16.xpose.msra.mxu0 0
        %923 = vmatprep.subr.bf16.mxu0 0
        %924 = vmatpush1.bf16.xpose.msra.mxu0 0
        %925 = vmatprep.subr.bf16.mxu0 0
        %926 = vmatpush1.bf16.xpose.msra.mxu0 0
        %927 = vmatprep.subr.bf16.mxu0 0
        %928 = vmatpush1.bf16.xpose.msra.mxu0 0
        %929 = vmatprep.subr.bf16.mxu0 0
        %930 = vmatpush1.bf16.xpose.msra.mxu0 0
        %931 = vmatprep.subr.bf16.mxu0 0
        %932 = vmatpush1.bf16.xpose.msra.mxu0 0
        %933 = vmatprep.subr.bf16.mxu0 0
        %934 = vmatpush1.bf16.xpose.msra.mxu0 0
        %935 = vmatprep.subr.bf16.mxu0 0
        %936 = vmatpush1.bf16.xpose.msra.mxu0 0
        %937 = vmatprep.subr.bf16.mxu0 0
        %938 = vmatpush1.bf16.xpose.msra.mxu0 0
        %939 = vmatprep.subr.bf16.mxu0 0
        %940 = vmatpush1.bf16.xpose.msra.mxu0 0
        %941 = vmatprep.subr.bf16.mxu0 0
        %942 = vmatpush1.bf16.xpose.msra.mxu0 0
        %943 = vmatprep.subr.bf16.mxu0 0
        %944 = vmatpush1.bf16.xpose.msra.mxu0 0
        %945 = vmatprep.mubr.bf16.mxu0 0
        %946 = vmatmul.mubr.bf16.gmra.mrb[0].mxu0 %v912
        %v947 = vpop.f32.mrb[0].mxu0
        %v948 = vadd.f32 0.0, %v947
        %v949 = vpop.f32.mrb[0].mxu0
        %v950 = vpop.f32.mrb[0].mxu0
        %v951 = vadd.f32 0.0, %v950
        %v952 = vpop.f32.mrb[0].mxu0
        %953 = vdwg.mxu0
        %v954 = vmul.f32 %v948, 0.088388346
        %v955 = vmul.f32 %v951, 0.088388346
        %s956 = scalar_lea.vmem [#allocation2], 16
        %v957 = vld [vmem:[%s956] sm:$0xff]
        %v958 = vld [vmem:[%s956 + $0x8] sm:$0xff]
        %v959 = vsel %vm771, %v954, -inf
        %960 = vmax.xlane.f32.xlu0 %v959
        %v961 = vpop.xlane.xlu0 %960
        %v962 = vsel %vm771, %v955, -inf
        %963 = vmax.xlane.f32.xlu0 %v962
        %v964 = vpop.xlane.xlu0 %963
        %v965 = vmax.f32 %v957, %v961
        %v966 = vmax.f32 %v958, %v964
        %v967 = vmax.f32 %v965, -1e+30
        %v968 = vmax.f32 %v966, -1e+30
        %v969 = vsub.f32 %v957, %v967
        %v970 = vsub.f32 %v958, %v968
        %v971 = vmul.f32 %v969, 1.442695
        %v972 = vpow.pop %v971
        %v973 = vmul.f32 %v970, 1.442695
        %v974 = vpow.pop %v973
        %976 = vset.pattern.permute.xlu0 0
        %977 = vperm.xlu0 %976, %v967
        %v978 = vpop.permute.xlu0 %977
        %981 = vset.pattern.permute.xlu0 0
        %982 = vperm.xlu0 %981, %v968
        %v983 = vpop.permute.xlu0 %982
        %v985 = vsub.f32 %v954, %v978
        %v986 = vsub.f32 %v955, %v983
        %v987 = vmul.f32 %v985, 1.442695
        %v988 = vpow.pop %v987
        %v989 = vmul.f32 %v986, 1.442695
        %v990 = vpow.pop %v989
        %s991 = scalar_lea.vmem [#allocation3], 16
        %v992 = vld [vmem:[%s991] sm:$0xff]
        %v993 = vld [vmem:[%s991 + $0x8] sm:$0xff]
        %v994 = vmul.f32 %v972, %v992
        %v995 = vmul.f32 %v974, %v993
        %v996 = vsel %vm771, %v988, 0.0
        %997 = vadd.xlane.f32.xlu0 %v996
        %v998 = vpop.xlane.xlu0 %997
        %v999 = vsel %vm771, %v990, 0.0
        %1000 = vadd.xlane.f32.xlu0 %v999
        %v1001 = vpop.xlane.xlu0 %1000
        %v1002 = vadd.f32 %v994, %v998
        %v1003 = vadd.f32 %v995, %v1001
        %1004 = vst.msk [vmem:[%s991] sm:$0xff] %vm816, %v1002
        %1005 = vst.msk [vmem:[%s991 + $0x8] sm:$0xff] %vm816, %v1003
        %v1006 = vld [vmem:[#allocation4 + $0x8] sm:$0xff]
        %v1007 = vld [vmem:[#allocation4 + $0x18] sm:$0xff]
        %1009 = vset.pattern.permute.xlu0 0
        %1010 = vperm.xlu0 %1009, %v972
        %v1011 = vpop.permute.xlu0 %1010
        %1014 = vset.pattern.permute.xlu0 0
        %1015 = vperm.xlu0 %1014, %v974
        %v1016 = vpop.permute.xlu0 %1015
        %v1018 = vmul.f32 %v1011, %v1006
        %v1019 = vmul.f32 %v1016, %v1007
        %v1020 = vpack.c.bf16 %v990, %v988
        %v1022 = vsel %vm771, %v1020, 0
        %1024 = vmatprep.subr.bf16.mxu0 0
        %1025 = vmatpush1.bf16.msra.mxu0 %v838
        %1026 = vmatprep.subr.bf16.mxu0 0
        %1027 = vmatpush1.bf16.msra.mxu0 0
        %1028 = vmatprep.subr.bf16.mxu0 0
        %1029 = vmatpush1.bf16.msra.mxu0 0
        %1030 = vmatprep.subr.bf16.mxu0 0
        %1031 = vmatpush1.bf16.msra.mxu0 0
        %1032 = vmatprep.subr.bf16.mxu0 0
        %1033 = vmatpush1.bf16.msra.mxu0 0
        %1034 = vmatprep.subr.bf16.mxu0 0
        %1035 = vmatpush1.bf16.msra.mxu0 0
        %1036 = vmatprep.subr.bf16.mxu0 0
        %1037 = vmatpush1.bf16.msra.mxu0 0
        %1038 = vmatprep.subr.bf16.mxu0 0
        %1039 = vmatpush1.bf16.msra.mxu0 0
        %1040 = vmatprep.subr.bf16.mxu0 0
        %1041 = vmatpush1.bf16.msra.mxu0 0
        %1042 = vmatprep.subr.bf16.mxu0 0
        %1043 = vmatpush1.bf16.msra.mxu0 0
        %1044 = vmatprep.subr.bf16.mxu0 0
        %1045 = vmatpush1.bf16.msra.mxu0 0
        %1046 = vmatprep.subr.bf16.mxu0 0
        %1047 = vmatpush1.bf16.msra.mxu0 0
        %1048 = vmatprep.subr.bf16.mxu0 0
        %1049 = vmatpush1.bf16.msra.mxu0 0
        %1050 = vmatprep.subr.bf16.mxu0 0
        %1051 = vmatpush1.bf16.msra.mxu0 0
        %1052 = vmatprep.subr.bf16.mxu0 0
        %1053 = vmatpush1.bf16.msra.mxu0 0
        %1054 = vmatprep.subr.bf16.mxu0 0
        %1055 = vmatpush1.bf16.msra.mxu0 0
        %1056 = vmatprep.mubr.bf16.mxu0 0
        %1057 = vmatmul.mubr.bf16.gmra.mrb[0].mxu0 %v1022
        %v1058 = vpop.f32.mrb[0].mxu0
        %v1059 = vadd.f32 0.0, %v1058
        %v1060 = vpop.f32.mrb[0].mxu0
        %v1061 = vpop.f32.mrb[0].mxu0
        %v1062 = vadd.f32 0.0, %v1061
        %v1063 = vpop.f32.mrb[0].mxu0
        %1064 = vdwg.mxu0
        %v1065 = vadd.f32 %v1018, %v1059
        %v1066 = vadd.f32 %v1019, %v1062
        %1067 = vst [vmem:[#allocation4 + $0x8] sm:$0xff] %v1065
        %1068 = vst [vmem:[#allocation4 + $0x18] sm:$0xff] %v1066
        %1069 = vst.msk [vmem:[%s956] sm:$0xff] %vm816, %v967
        %1070 = vst.msk [vmem:[%s956 + $0x8] sm:$0xff] %vm816, %v968
        // Predicated region
        $region173: #{_lambda_.14} parent=155 // pred_check
          %p1071 = pneg %p658
        $region174: #{_lambda_.14} parent=155 // pred_check_branch
          %1073 = sbr.rel (%p1071) target = $region176
        $region175: #{_lambda_.14} parent=155 // pred_region
          %v1074 = vld [vmem:[#allocation3] sm:$0xff]
          %v1075 = vld [vmem:[#allocation3 + $0x8] sm:$0xff]
          %v1076 = vrcp.pop %v1074
          %v1077 = vrcp.pop %v1075
          %v1078 = vld [vmem:[#allocation4] sm:$0xff]
          %v1079 = vld [vmem:[#allocation4 + $0x10] sm:$0xff]
          %1081 = vset.pattern.permute.xlu0 0
          %1082 = vperm.xlu0 %1081, %v1076
          %v1083 = vpop.permute.xlu0 %1082
          %1086 = vset.pattern.permute.xlu0 0
          %1087 = vperm.xlu0 %1086, %v1077
          %v1088 = vpop.permute.xlu0 %1087
          %v1090 = vmul.f32 %v1078, %v1083
          %v1091 = vmul.f32 %v1079, %v1088
          %v1092 = vpack.c.bf16 %v1091, %v1090
          %v1094 = vunpack.c.l.b16 %v1092
          %v1095 = vunpack.c.h.b16 %v1092
          %v1096 = vpack.c.b16 %v1094, %v1094
          %v1097 = vpack.c.b16 %v1095, %v1095
          %1100 = vst [vmem:[%s608] sm:$0xf] %v1096
          %1101 = vst [vmem:[%s608 + $0x8] sm:$0xf] %v1097
          %v1102 = vld [vmem:[%s991] sm:$0xff]
          %v1103 = vld [vmem:[%s991 + $0x8] sm:$0xff]
          %v1104 = vrcp.pop %v1102
          %v1105 = vrcp.pop %v1103
          %v1106 = vld [vmem:[#allocation4 + $0x8] sm:$0xff]
          %v1107 = vld [vmem:[#allocation4 + $0x18] sm:$0xff]
          %1109 = vset.pattern.permute.xlu0 0
          %1110 = vperm.xlu0 %1109, %v1104
          %v1111 = vpop.permute.xlu0 %1110
          %1114 = vset.pattern.permute.xlu0 0
          %1115 = vperm.xlu0 %1114, %v1105
          %v1116 = vpop.permute.xlu0 %1115
          %v1118 = vmul.f32 %v1106, %v1111
          %v1119 = vmul.f32 %v1107, %v1116
          %v1120 = vpack.c.bf16 %v1119, %v1118
          %v1122 = vunpack.c.l.b16 %v1120
          %v1123 = vunpack.c.h.b16 %v1120
          %v1124 = vpack.c.b16 %v1122, %v1122
          %v1125 = vpack.c.b16 %v1123, %v1123
          %1128 = vst [vmem:[%s608 + $0x4] sm:$0xf] %v1124
          %1129 = vst [vmem:[%s608 + $0xc] sm:$0xf] %v1125
        $region176: #{_lambda_.14} parent=155 // pred_fallthru
          _
        %s1130 = sand.u32 %s262, 1
        %s1131 = sand.u32 %s262, 1
        %s1132 = smul.addr %s1131, 16
        %s1133 = scalar_lea.vmem [#allocation8], %s1132
        // Predicated region
        $region177: #{_lambda_.14} parent=155 // pred_check
          %p1134 = pneg %p272
        $region178: #{_lambda_.14} parent=155 // pred_check_branch
          %1136 = sbr.rel (%p1134) target = $region180
        $region179: #{_lambda_.14} parent=155 // pred_region
          %s1137 = smul.u32 2, %s26
          %s1138 = smul.u32 2, %s25
          %s1139 = smul.addr %s1137, 4
          %s1140 = sadd.s32 %s1138, %s1139
          %s1141 = smul.addr %s24, 8
          %s1142 = sadd.s32 %s1140, %s1141
          %s1143 = smul.addr %s1142, 4
          %s1144 = scalar_lea.vmem %s7, %s1143
          // Predicated region
          $region181: #{_lambda_.14} parent=179 // pred_check
            _
          $region182: #{_lambda_.14} parent=179 // pred_check_branch
            %1146 = sbr.rel (0) target = $region184
          $region183: #{_lambda_.14} parent=179 // pred_region
            // Predicated region
            $region185: #{_lambda_.14} parent=183 // pred_check
              _
            $region186: #{_lambda_.14} parent=183 // pred_check_branch
              %1148 = sbr.rel (0) target = $region188
            $region187: #{_lambda_.14} parent=183 // pred_region
              // Predicated region
              $region200: #{_lambda_.14} parent=187 // pred_check
                _
              $region201: #{_lambda_.14} parent=187 // pred_check_branch
                %1165 = sbr.rel (0) target = $region203
              $region202: #{_lambda_.14} parent=187 // pred_region
                loop: start=0, step=1, limit=1
                $region204: #{_lambda_.14} parent=202 // loop_pre_header
                  _
                $region205: #{_lambda_.14} parent=202 // loop_header
                  %s1167 = sphi 0, %s1171
                  %p1168 = scmp.ge.s32.totalorder %s1167, 1
                  %s1172 = sphi %s1133, %s1133
                  %s1173 = sphi %s1144, %s1144
                $region206: #{_lambda_.14} parent=202 // loop_header_branch
                  %1170 = sbr.rel (%p1168) target = $region210
                $region207: #{_lambda_.14} parent=202 // loop_body
                  %v1174 = vld [vmem:[%s1172] sm:$0xff]
                  %1175 = vst [vmem:[%s1173] sm:$0xff] %v1174
                  %v1176 = vld [vmem:[%s1172 + $0x8] sm:$0xff]
                  %1177 = vst [vmem:[%s1173 + $0x10] sm:$0xff] %v1176
                $region208: #{_lambda_.14} parent=202 // loop_footer
                  %s1171 = sadd.s32 1, %s1167
                $region209: #{_lambda_.14} parent=202 // loop_footer_branch
                  %1166 = sbr.rel target = $region205
                $region210: #{_lambda_.14} parent=202 // loop_exit
                  _
              $region203: #{_lambda_.14} parent=187 // pred_fallthru
                _
              // Predicated region
              $region211: #{_lambda_.14} parent=187 // pred_check
                _
              $region212: #{_lambda_.14} parent=187 // pred_check_branch
                %1179 = sbr.rel target = $region214
              $region213: #{_lambda_.14} parent=187 // pred_region
                _
              $region214: #{_lambda_.14} parent=187 // pred_fallthru
                _
            $region188: #{_lambda_.14} parent=183 // pred_fallthru
              _
            // Predicated region
            $region189: #{_lambda_.14} parent=183 // pred_check
              _
            $region190: #{_lambda_.14} parent=183 // pred_check_branch
              %1150 = sbr.rel target = $region192
            $region191: #{_lambda_.14} parent=183 // pred_region
              loop: start=0, step=1, limit=1
              $region193: #{_lambda_.14} parent=191 // loop_pre_header
                _
              $region194: #{_lambda_.14} parent=191 // loop_header
                %s1153 = sphi 0, %s1157
                %p1154 = scmp.ge.s32.totalorder %s1153, 1
                %s1158 = sphi %s1133, %s1133
                %s1159 = sphi %s1144, %s1144
              $region195: #{_lambda_.14} parent=191 // loop_header_branch
                %1156 = sbr.rel (%p1154) target = $region199
              $region196: #{_lambda_.14} parent=191 // loop_body
                %v1160 = vld [vmem:[%s1158] sm:$0xff]
                %1161 = vst [vmem:[%s1159] sm:$0xff] %v1160
                %v1162 = vld [vmem:[%s1158 + $0x8] sm:$0xff]
                %1163 = vst [vmem:[%s1159 + $0x10] sm:$0xff] %v1162
              $region197: #{_lambda_.14} parent=191 // loop_footer
                %s1157 = sadd.s32 1, %s1153
              $region198: #{_lambda_.14} parent=191 // loop_footer_branch
                %1152 = sbr.rel target = $region194
              $region199: #{_lambda_.14} parent=191 // loop_exit
                _
            $region192: #{_lambda_.14} parent=183 // pred_fallthru
              _
          $region184: #{_lambda_.14} parent=179 // pred_fallthru
            _
          %1180 = vnop
        $region180: #{_lambda_.14} parent=155 // pred_fallthru
          _
      $region156: #{_lambda_.14} parent=5 // pred_fallthru
        _
      %p1181 = scmp.le.s32.totalorder 2, %s13
      // Predicated region
      $region215: #{_lambda_.14} parent=5 // pred_check
        %p1182 = pneg %p1181
      $region216: #{_lambda_.14} parent=5 // pred_check_branch
        %1184 = sbr.rel (%p1182) target = $region218
      $region217: #{_lambda_.14} parent=5 // pred_region
        %s1185 = ssub.s32 %s13, 2
        // Predicated region
        $region219: #{_lambda_.14} parent=217 // pred_check
          %p1186 = pneg %p278
        $region220: #{_lambda_.14} parent=217 // pred_check_branch
          %1188 = sbr.rel (%p1186) target = $region222
        $region221: #{_lambda_.14} parent=217 // pred_region
          %s1189 = sand.u32 %s263, 1
          %s1190 = sand.u32 %s263, 1
          %s1191 = smul.addr %s1190, 16
          %s1192 = scalar_lea.vmem [#allocation8], %s1191
        $region222: #{_lambda_.14} parent=217 // pred_fallthru
          _
      $region218: #{_lambda_.14} parent=5 // pred_fallthru
        _
    $region6: #{_lambda_.14} parent=1 // loop_footer
      %s17 = sadd.s32 1, %s13
    $region7: #{_lambda_.14} parent=1 // loop_footer_branch
      %12 = sbr.rel target = $region3
    $region8: #{_lambda_.14} parent=1 // loop_exit
      _

// kernel: _lambda_.15
$region0: #{_lambda_.15}
  #allocation0 [shape = 'u32[]', space=smem, size = 0x4, offset = 0x4, fixed_abs, tag = 'smem constant byte address 0x4 - core index']
  #allocation1 [shape = 'u32[144,128]{1,0:T(1,128)}', space=vmem, size = 0x12000, scoped, tag = 'internal scratch']
  #allocation2 [shape = 'f32[32,128]{1,0:T(8,128)}', space=vmem, size = 0x4000, scoped, tag = 'scratch operand']
  %s0 = inlined_call_operand.vmem [shape: bf16[32,512], index: 0, kind: input, shape index: {}]
  %s1 = inlined_call_operand.vmem [shape: bf16[512,256], index: 1, kind: input, shape index: {}]
  %s2 = inlined_call_operand.vmem [shape: bf16[32,256], index: 2, kind: output, shape index: {}]
  %s3 = sld [smem:[#allocation0]]
  $region127: #{_lambda_.15} parent=0
    _
  %s5 = ssub.s32 1, %s3
  %s6 = scalar_select 0, %s5, %s3
  $region1: #{_lambda_.15} parent=0
    #allocation3 [shape = 'u8[262144]{0}', space=vmem, size = 0x40000, scoped, tag = 'input window, operand 1']
    #allocation4 [shape = 'u8[16384]{0}', space=vmem, size = 0x4000, scoped, tag = 'output window, operand 0']
    loop: start=0, step=1, limit=4
    $region2: #{_lambda_.15} parent=1 // loop_pre_header
      _
    $region3: #{_lambda_.15} parent=1 // loop_header
      %s8 = sphi 0, %s12
      %p9 = scmp.ge.s32.totalorder %s8, 4
      %s15 = sphi 0, %s34
      %s16 = sphi 0, %s30
      %s17 = sphi 0, %s26
      %s18 = sphi 0, %s15
      %s19 = sphi 0, %s16
      %s20 = sphi 0, %s17
      %s21 = sphi 0, %s18
      %s22 = sphi 0, %s19
      %s23 = sphi 0, %s20
      %s39 = sphi 0, %s41
      %s42 = sphi 0, %s39
      %s43 = sphi 0, %s42
      %s59 = sphi 0, %s43
      %s67 = sphi 0, %s69
      %s70 = sphi 0, %s67
      %s71 = sphi 0, %s70
      %s87 = sphi 0, %s71
      %s95 = sphi 0, %s97
      %s98 = sphi 0, %s95
      %s99 = sphi 0, %s98
      %s115 = sphi 0, %s99
    $region4: #{_lambda_.15} parent=1 // loop_header_branch
      %11 = sbr.rel (%p9) target = $region8
    $region5: #{_lambda_.15} parent=1 // loop_body
      %s13 = ssub.s32 %s8, 1
      %s14 = ssub.s32 %s8, 2
      %s24 = sadd.s32 1, %s17
      %p25 = scmp.ge.s32.totalorder %s24, 1
      %s26 = scalar_select %p25, 0, %s24
      %s27 = sadd.s32 1, %s16
      %s28 = scalar_select %p25, %s27, %s16
      %p29 = scmp.ge.s32.totalorder %s28, 2
      %s30 = scalar_select %p29, 0, %s28
      %s31 = sadd.s32 1, %s15
      %s32 = scalar_select %p29, %s31, %s15
      %p33 = scmp.ge.s32.totalorder %s32, 1
      %s34 = scalar_select %p33, 0, %s32
      %s35 = ssub.s32 %s15, %s34
      %s36 = ssub.s32 %s17, %s26
      %s37 = sor.u32 %s35, %s36
      %p38 = scmp.eq.s32.totalorder %s37, 0
      %s40 = sadd.s32 %s39, 1
      %s41 = scalar_select %p38, %s39, %s40
      %p44 = pneg %p38
      %p45 = scmp.eq.s32.totalorder %s8, 1
      %p46 = por %p44, %p45
      %p47 = scmp.ne.s32.totalorder %s39, %s42
      %p48 = scmp.eq.s32.totalorder %s8, 0
      %p49 = por %p47, %p48
      %p50 = scmp.ne.s32.totalorder %s39, %s42
      %p51 = scmp.eq.s32.totalorder %s13, 1
      %p52 = por %p50, %p51
      %p53 = scmp.ne.s32.totalorder %s42, %s43
      %p54 = scmp.eq.s32.totalorder %s13, 0
      %p55 = por %p53, %p54
      %p56 = scmp.ne.s32.totalorder %s42, %s43
      %p57 = scmp.eq.s32.totalorder %s14, 1
      %p58 = por %p56, %p57
      %p60 = scmp.ne.s32.totalorder %s43, %s59
      %p61 = scmp.eq.s32.totalorder %s14, 0
      %p62 = por %p60, %p61
      %s63 = ssub.s32 %s17, %s26
      %s64 = ssub.s32 %s16, %s30
      %s65 = sor.u32 %s63, %s64
      %p66 = scmp.eq.s32.totalorder %s65, 0
      %s68 = sadd.s32 %s67, 1
      %s69 = scalar_select %p66, %s67, %s68
      %p72 = pneg %p66
      %p73 = scmp.eq.s32.totalorder %s8, 1
      %p74 = por %p72, %p73
      %p75 = scmp.ne.s32.totalorder %s67, %s70
      %p76 = scmp.eq.s32.totalorder %s8, 0
      %p77 = por %p75, %p76
      %p78 = scmp.ne.s32.totalorder %s67, %s70
      %p79 = scmp.eq.s32.totalorder %s13, 1
      %p80 = por %p78, %p79
      %p81 = scmp.ne.s32.totalorder %s70, %s71
      %p82 = scmp.eq.s32.totalorder %s13, 0
      %p83 = por %p81, %p82
      %p84 = scmp.ne.s32.totalorder %s70, %s71
      %p85 = scmp.eq.s32.totalorder %s14, 1
      %p86 = por %p84, %p85
      %p88 = scmp.ne.s32.totalorder %s71, %s87
      %p89 = scmp.eq.s32.totalorder %s14, 0
      %p90 = por %p88, %p89
      %s91 = ssub.s32 %s15, %s34
      %s92 = ssub.s32 %s16, %s30
      %s93 = sor.u32 %s91, %s92
      %p94 = scmp.eq.s32.totalorder %s93, 0
      %s96 = sadd.s32 %s95, 1
      %s97 = scalar_select %p94, %s95, %s96
      %p100 = pneg %p94
      %p101 = scmp.eq.s32.totalorder %s8, 1
      %p102 = por %p100, %p101
      %p103 = scmp.ne.s32.totalorder %s95, %s98
      %p104 = scmp.eq.s32.totalorder %s8, 0
      %p105 = por %p103, %p104
      %p106 = scmp.ne.s32.totalorder %s95, %s98
      %p107 = scmp.eq.s32.totalorder %s13, 1
      %p108 = por %p106, %p107
      %p109 = scmp.ne.s32.totalorder %s98, %s99
      %p110 = scmp.eq.s32.totalorder %s13, 0
      %p111 = por %p109, %p110
      %p112 = scmp.ne.s32.totalorder %s98, %s99
      %p113 = scmp.eq.s32.totalorder %s14, 1
      %p114 = por %p112, %p113
      %p116 = scmp.ne.s32.totalorder %s99, %s115
      %p117 = scmp.eq.s32.totalorder %s14, 0
      %p118 = por %p116, %p117
      %p119 = scmp.le.s32.totalorder 1, %s8
      %p120 = scmp.lt.s32.totalorder %s8, 3
      %p121 = pnand %p119, %p120
      %p122 = pneg %p121
      // Predicated region
      $region9: #{_lambda_.15} parent=5 // pred_check
        _
      $region10: #{_lambda_.15} parent=5 // pred_check_branch
        %124 = sbr.rel (%p121) target = $region12
      $region11: #{_lambda_.15} parent=5 // pred_region
        %s125 = ssub.s32 %s8, 1
        // Predicated region
        $region13: #{_lambda_.15} parent=11 // pred_check
          %p126 = pneg %p55
        $region14: #{_lambda_.15} parent=11 // pred_check_branch
          %128 = sbr.rel (%p126) target = $region16
        $region15: #{_lambda_.15} parent=11 // pred_region
          %s129 = smul.u32 4, %s18
          %s130 = smul.u32 4, %s20
          %p131 = scmp.lt.s32.totalorder %s129, 3
          %s132 = scalar_select %p131, %s129, 3
          %p133 = scmp.lt.s32.totalorder %s130, 3
          %s134 = scalar_select %p133, %s130, 3
          %s135 = smul.addr %s132, 4
          %s136 = sadd.s32 %s134, %s135
          %s137 = smul.addr %s136, 4
          %s138 = scalar_lea.vmem %s0, %s137
          %s139 = smul.u32 4, %s18
          %s140 = smul.u32 4, %s20
        $region16: #{_lambda_.15} parent=11 // pred_fallthru
          _
      $region12: #{_lambda_.15} parent=5 // pred_fallthru
        _
      %p141 = scmp.lt.s32.totalorder %s8, 2
      // Predicated region
      $region17: #{_lambda_.15} parent=5 // pred_check
        %p142 = pneg %p141
      $region18: #{_lambda_.15} parent=5 // pred_check_branch
        %144 = sbr.rel (%p142) target = $region20
      $region19: #{_lambda_.15} parent=5 // pred_region
        // Predicated region
        $region21: #{_lambda_.15} parent=19 // pred_check
          %p145 = pneg %p77
        $region22: #{_lambda_.15} parent=19 // pred_check_branch
          %147 = sbr.rel (%p145) target = $region24
        $region23: #{_lambda_.15} parent=19 // pred_region
          %s148 = sand.u32 %s67, 1
          %s149 = sand.u32 %s67, 1
          %s150 = smul.addr %s149, 256
          %s151 = scalar_lea.vmem [#allocation3], %s150
          %s152 = smul.u32 64, %s17
          %s153 = smul.addr %s152, 2
          %s154 = sadd.s32 %s16, %s153
          %s155 = smul.addr %s154, 4
          %s156 = scalar_lea.vmem %s1, %s155
          // Predicated region
          $region25: #{_lambda_.15} parent=23 // pred_check
            _
          $region26: #{_lambda_.15} parent=23 // pred_check_branch
            %158 = sbr.rel (0) target = $region28
          $region27: #{_lambda_.15} parent=23 // pred_region
            // Predicated region
            $region29: #{_lambda_.15} parent=27 // pred_check
              _
            $region30: #{_lambda_.15} parent=27 // pred_check_branch
              %160 = sbr.rel target = $region32
            $region31: #{_lambda_.15} parent=27 // pred_region
              // Predicated region
              $region44: #{_lambda_.15} parent=31 // pred_check
                _
              $region45: #{_lambda_.15} parent=31 // pred_check_branch
                %301 = sbr.rel (0) target = $region47
              $region46: #{_lambda_.15} parent=31 // pred_region
                loop: start=0, step=1, limit=1
                $region48: #{_lambda_.15} parent=46 // loop_pre_header
                  _
                $region49: #{_lambda_.15} parent=46 // loop_header
                  %s303 = sphi 0, %s307
                  %p304 = scmp.ge.s32.totalorder %s303, 1
                  %s308 = sphi %s156, %s156
                  %s309 = sphi %s151, %s151
                $region50: #{_lambda_.15} parent=46 // loop_header_branch
                  %306 = sbr.rel (%p304) target = $region54
                $region51: #{_lambda_.15} parent=46 // loop_body
                  _
                $region52: #{_lambda_.15} parent=46 // loop_footer
                  %s307 = sadd.s32 1, %s303
                $region53: #{_lambda_.15} parent=46 // loop_footer_branch
                  %302 = sbr.rel target = $region49
                $region54: #{_lambda_.15} parent=46 // loop_exit
                  _
                loop: start=0, step=1, limit=1
                $region55: #{_lambda_.15} parent=46 // loop_pre_header
                  _
                $region56: #{_lambda_.15} parent=46 // loop_header
                  %s312 = sphi 0, %s316
                  %p313 = scmp.ge.s32.totalorder %s312, 1
                  %s317 = sphi %s156, %s156
                  %s318 = sphi %s151, %s151
                $region57: #{_lambda_.15} parent=46 // loop_header_branch
                  %315 = sbr.rel (%p313) target = $region61
                $region58: #{_lambda_.15} parent=46 // loop_body
                  %v319 = vld [vmem:[%s317] sm:$0xf]
                  %320 = vst [vmem:[%s318] sm:$0xf] %v319
                  %v321 = vld [vmem:[%s317 + $0x8] sm:$0xf]
                  %322 = vst [vmem:[%s318 + $0x4] sm:$0xf] %v321
                  %v323 = vld [vmem:[%s317 + $0x10] sm:$0xf]
                  %324 = vst [vmem:[%s318 + $0x8] sm:$0xf] %v323
                  %v325 = vld [vmem:[%s317 + $0x18] sm:$0xf]
                  %326 = vst [vmem:[%s318 + $0xc] sm:$0xf] %v325
                  %v327 = vld [vmem:[%s317 + $0x20] sm:$0xf]
                  %328 = vst [vmem:[%s318 + $0x10] sm:$0xf] %v327
                  %v329 = vld [vmem:[%s317 + $0x28] sm:$0xf]
                  %330 = vst [vmem:[%s318 + $0x14] sm:$0xf] %v329
                  %v331 = vld [vmem:[%s317 + $0x30] sm:$0xf]
                  %332 = vst [vmem:[%s318 + $0x18] sm:$0xf] %v331
                  %v333 = vld [vmem:[%s317 + $0x38] sm:$0xf]
                  %334 = vst [vmem:[%s318 + $0x1c] sm:$0xf] %v333
                  %v335 = vld [vmem:[%s317 + $0x40] sm:$0xf]
                  %336 = vst [vmem:[%s318 + $0x20] sm:$0xf] %v335
                  %v337 = vld [vmem:[%s317 + $0x48] sm:$0xf]
                  %338 = vst [vmem:[%s318 + $0x24] sm:$0xf] %v337
                  %v339 = vld [vmem:[%s317 + $0x50] sm:$0xf]
                  %340 = vst [vmem:[%s318 + $0x28] sm:$0xf] %v339
                  %v341 = vld [vmem:[%s317 + $0x58] sm:$0xf]
                  %342 = vst [vmem:[%s318 + $0x2c] sm:$0xf] %v341
                  %v343 = vld [vmem:[%s317 + $0x60] sm:$0xf]
                  %344 = vst [vmem:[%s318 + $0x30] sm:$0xf] %v343
                  %v345 = vld [vmem:[%s317 + $0x68] sm:$0xf]
                  %346 = vst [vmem:[%s318 + $0x34] sm:$0xf] %v345
                  %v347 = vld [vmem:[%s317 + $0x70] sm:$0xf]
                  %348 = vst [vmem:[%s318 + $0x38] sm:$0xf] %v347
                  %v349 = vld [vmem:[%s317 + $0x78] sm:$0xf]
                  %350 = vst [vmem:[%s318 + $0x3c] sm:$0xf] %v349
                  %v351 = vld [vmem:[%s317 + $0x80] sm:$0xf]
                  %352 = vst [vmem:[%s318 + $0x40] sm:$0xf] %v351
                  %v353 = vld [vmem:[%s317 + $0x88] sm:$0xf]
                  %354 = vst [vmem:[%s318 + $0x44] sm:$0xf] %v353
                  %v355 = vld [vmem:[%s317 + $0x90] sm:$0xf]
                  %356 = vst [vmem:[%s318 + $0x48] sm:$0xf] %v355
                  %v357 = vld [vmem:[%s317 + $0x98] sm:$0xf]
                  %358 = vst [vmem:[%s318 + $0x4c] sm:$0xf] %v357
                  %v359 = vld [vmem:[%s317 + $0xa0] sm:$0xf]
                  %360 = vst [vmem:[%s318 + $0x50] sm:$0xf] %v359
                  %v361 = vld [vmem:[%s317 + $0xa8] sm:$0xf]
                  %362 = vst [vmem:[%s318 + $0x54] sm:$0xf] %v361
                  %v363 = vld [vmem:[%s317 + $0xb0] sm:$0xf]
                  %364 = vst [vmem:[%s318 + $0x58] sm:$0xf] %v363
                  %v365 = vld [vmem:[%s317 + $0xb8] sm:$0xf]
                  %366 = vst [vmem:[%s318 + $0x5c] sm:$0xf] %v365
                  %v367 = vld [vmem:[%s317 + $0xc0] sm:$0xf]
                  %368 = vst [vmem:[%s318 + $0x60] sm:$0xf] %v367
                  %v369 = vld [vmem:[%s317 + $0xc8] sm:$0xf]
                  %370 = vst [vmem:[%s318 + $0x64] sm:$0xf] %v369
                  %v371 = vld [vmem:[%s317 + $0xd0] sm:$0xf]
                  %372 = vst [vmem:[%s318 + $0x68] sm:$0xf] %v371
                  %v373 = vld [vmem:[%s317 + $0xd8] sm:$0xf]
                  %374 = vst [vmem:[%s318 + $0x6c] sm:$0xf] %v373
                  %v375 = vld [vmem:[%s317 + $0xe0] sm:$0xf]
                  %376 = vst [vmem:[%s318 + $0x70] sm:$0xf] %v375
                  %v377 = vld [vmem:[%s317 + $0xe8] sm:$0xf]
                  %378 = vst [vmem:[%s318 + $0x74] sm:$0xf] %v377
                  %v379 = vld [vmem:[%s317 + $0xf0] sm:$0xf]
                  %380 = vst [vmem:[%s318 + $0x78] sm:$0xf] %v379
                  %v381 = vld [vmem:[%s317 + $0xf8] sm:$0xf]
                  %382 = vst [vmem:[%s318 + $0x7c] sm:$0xf] %v381
                  %v383 = vld [vmem:[%s317 + $0x100] sm:$0xf]
                  %384 = vst [vmem:[%s318 + $0x80] sm:$0xf] %v383
                  %v385 = vld [vmem:[%s317 + $0x108] sm:$0xf]
                  %386 = vst [vmem:[%s318 + $0x84] sm:$0xf] %v385
                  %v387 = vld [vmem:[%s317 + $0x110] sm:$0xf]
                  %388 = vst [vmem:[%s318 + $0x88] sm:$0xf] %v387
                  %v389 = vld [vmem:[%s317 + $0x118] sm:$0xf]
                  %390 = vst [vmem:[%s318 + $0x8c] sm:$0xf] %v389
                  %v391 = vld [vmem:[%s317 + $0x120] sm:$0xf]
                  %392 = vst [vmem:[%s318 + $0x90] sm:$0xf] %v391
                  %v393 = vld [vmem:[%s317 + $0x128] sm:$0xf]
                  %394 = vst [vmem:[%s318 + $0x94] sm:$0xf] %v393
                  %v395 = vld [vmem:[%s317 + $0x130] sm:$0xf]
                  %396 = vst [vmem:[%s318 + $0x98] sm:$0xf] %v395
                  %v397 = vld [vmem:[%s317 + $0x138] sm:$0xf]
                  %398 = vst [vmem:[%s318 + $0x9c] sm:$0xf] %v397
                  %v399 = vld [vmem:[%s317 + $0x140] sm:$0xf]
                  %400 = vst [vmem:[%s318 + $0xa0] sm:$0xf] %v399
                  %v401 = vld [vmem:[%s317 + $0x148] sm:$0xf]
                  %402 = vst [vmem:[%s318 + $0xa4] sm:$0xf] %v401
                  %v403 = vld [vmem:[%s317 + $0x150] sm:$0xf]
                  %404 = vst [vmem:[%s318 + $0xa8] sm:$0xf] %v403
                  %v405 = vld [vmem:[%s317 + $0x158] sm:$0xf]
                  %406 = vst [vmem:[%s318 + $0xac] sm:$0xf] %v405
                  %v407 = vld [vmem:[%s317 + $0x160] sm:$0xf]
                  %408 = vst [vmem:[%s318 + $0xb0] sm:$0xf] %v407
                  %v409 = vld [vmem:[%s317 + $0x168] sm:$0xf]
                  %410 = vst [vmem:[%s318 + $0xb4] sm:$0xf] %v409
                  %v411 = vld [vmem:[%s317 + $0x170] sm:$0xf]
                  %412 = vst [vmem:[%s318 + $0xb8] sm:$0xf] %v411
                  %v413 = vld [vmem:[%s317 + $0x178] sm:$0xf]
                  %414 = vst [vmem:[%s318 + $0xbc] sm:$0xf] %v413
                  %v415 = vld [vmem:[%s317 + $0x180] sm:$0xf]
                  %416 = vst [vmem:[%s318 + $0xc0] sm:$0xf] %v415
                  %v417 = vld [vmem:[%s317 + $0x188] sm:$0xf]
                  %418 = vst [vmem:[%s318 + $0xc4] sm:$0xf] %v417
                  %v419 = vld [vmem:[%s317 + $0x190] sm:$0xf]
                  %420 = vst [vmem:[%s318 + $0xc8] sm:$0xf] %v419
                  %v421 = vld [vmem:[%s317 + $0x198] sm:$0xf]
                  %422 = vst [vmem:[%s318 + $0xcc] sm:$0xf] %v421
                  %v423 = vld [vmem:[%s317 + $0x1a0] sm:$0xf]
                  %424 = vst [vmem:[%s318 + $0xd0] sm:$0xf] %v423
                  %v425 = vld [vmem:[%s317 + $0x1a8] sm:$0xf]
                  %426 = vst [vmem:[%s318 + $0xd4] sm:$0xf] %v425
                  %v427 = vld [vmem:[%s317 + $0x1b0] sm:$0xf]
                  %428 = vst [vmem:[%s318 + $0xd8] sm:$0xf] %v427
                  %v429 = vld [vmem:[%s317 + $0x1b8] sm:$0xf]
                  %430 = vst [vmem:[%s318 + $0xdc] sm:$0xf] %v429
                  %v431 = vld [vmem:[%s317 + $0x1c0] sm:$0xf]
                  %432 = vst [vmem:[%s318 + $0xe0] sm:$0xf] %v431
                  %v433 = vld [vmem:[%s317 + $0x1c8] sm:$0xf]
                  %434 = vst [vmem:[%s318 + $0xe4] sm:$0xf] %v433
                  %v435 = vld [vmem:[%s317 + $0x1d0] sm:$0xf]
                  %436 = vst [vmem:[%s318 + $0xe8] sm:$0xf] %v435
                  %v437 = vld [vmem:[%s317 + $0x1d8] sm:$0xf]
                  %438 = vst [vmem:[%s318 + $0xec] sm:$0xf] %v437
                  %v439 = vld [vmem:[%s317 + $0x1e0] sm:$0xf]
                  %440 = vst [vmem:[%s318 + $0xf0] sm:$0xf] %v439
                  %v441 = vld [vmem:[%s317 + $0x1e8] sm:$0xf]
                  %442 = vst [vmem:[%s318 + $0xf4] sm:$0xf] %v441
                  %v443 = vld [vmem:[%s317 + $0x1f0] sm:$0xf]
                  %444 = vst [vmem:[%s318 + $0xf8] sm:$0xf] %v443
                  %v445 = vld [vmem:[%s317 + $0x1f8] sm:$0xf]
                  %446 = vst [vmem:[%s318 + $0xfc] sm:$0xf] %v445
                $region59: #{_lambda_.15} parent=46 // loop_footer
                  %s316 = sadd.s32 1, %s312
                $region60: #{_lambda_.15} parent=46 // loop_footer_branch
                  %311 = sbr.rel target = $region56
                $region61: #{_lambda_.15} parent=46 // loop_exit
                  _
              $region47: #{_lambda_.15} parent=31 // pred_fallthru
                _
            $region32: #{_lambda_.15} parent=27 // pred_fallthru
              _
            // Predicated region
            $region33: #{_lambda_.15} parent=27 // pred_check
              _
            $region34: #{_lambda_.15} parent=27 // pred_check_branch
              %162 = sbr.rel (0) target = $region36
            $region35: #{_lambda_.15} parent=27 // pred_region
              loop: start=0, step=1, limit=1
              $region37: #{_lambda_.15} parent=35 // loop_pre_header
                _
              $region38: #{_lambda_.15} parent=35 // loop_header
                %s165 = sphi 0, %s169
                %p166 = scmp.ge.s32.totalorder %s165, 1
                %s170 = sphi %s156, %s156
                %s171 = sphi %s151, %s151
              $region39: #{_lambda_.15} parent=35 // loop_header_branch
                %168 = sbr.rel (%p166) target = $region43
              $region40: #{_lambda_.15} parent=35 // loop_body
                %v172 = vld [vmem:[%s170] sm:$0xf]
                %173 = vst [vmem:[%s171] sm:$0xf] %v172
                %v174 = vld [vmem:[%s170 + $0x8] sm:$0xf]
                %175 = vst [vmem:[%s171 + $0x4] sm:$0xf] %v174
                %v176 = vld [vmem:[%s170 + $0x10] sm:$0xf]
                %177 = vst [vmem:[%s171 + $0x8] sm:$0xf] %v176
                %v178 = vld [vmem:[%s170 + $0x18] sm:$0xf]
                %179 = vst [vmem:[%s171 + $0xc] sm:$0xf] %v178
                %v180 = vld [vmem:[%s170 + $0x20] sm:$0xf]
                %181 = vst [vmem:[%s171 + $0x10] sm:$0xf] %v180
                %v182 = vld [vmem:[%s170 + $0x28] sm:$0xf]
                %183 = vst [vmem:[%s171 + $0x14] sm:$0xf] %v182
                %v184 = vld [vmem:[%s170 + $0x30] sm:$0xf]
                %185 = vst [vmem:[%s171 + $0x18] sm:$0xf] %v184
                %v186 = vld [vmem:[%s170 + $0x38] sm:$0xf]
                %187 = vst [vmem:[%s171 + $0x1c] sm:$0xf] %v186
                %v188 = vld [vmem:[%s170 + $0x40] sm:$0xf]
                %189 = vst [vmem:[%s171 + $0x20] sm:$0xf] %v188
                %v190 = vld [vmem:[%s170 + $0x48] sm:$0xf]
                %191 = vst [vmem:[%s171 + $0x24] sm:$0xf] %v190
                %v192 = vld [vmem:[%s170 + $0x50] sm:$0xf]
                %193 = vst [vmem:[%s171 + $0x28] sm:$0xf] %v192
                %v194 = vld [vmem:[%s170 + $0x58] sm:$0xf]
                %195 = vst [vmem:[%s171 + $0x2c] sm:$0xf] %v194
                %v196 = vld [vmem:[%s170 + $0x60] sm:$0xf]
                %197 = vst [vmem:[%s171 + $0x30] sm:$0xf] %v196
                %v198 = vld [vmem:[%s170 + $0x68] sm:$0xf]
                %199 = vst [vmem:[%s171 + $0x34] sm:$0xf] %v198
                %v200 = vld [vmem:[%s170 + $0x70] sm:$0xf]
                %201 = vst [vmem:[%s171 + $0x38] sm:$0xf] %v200
                %v202 = vld [vmem:[%s170 + $0x78] sm:$0xf]
                %203 = vst [vmem:[%s171 + $0x3c] sm:$0xf] %v202
                %v204 = vld [vmem:[%s170 + $0x80] sm:$0xf]
                %205 = vst [vmem:[%s171 + $0x40] sm:$0xf] %v204
                %v206 = vld [vmem:[%s170 + $0x88] sm:$0xf]
                %207 = vst [vmem:[%s171 + $0x44] sm:$0xf] %v206
                %v208 = vld [vmem:[%s170 + $0x90] sm:$0xf]
                %209 = vst [vmem:[%s171 + $0x48] sm:$0xf] %v208
                %v210 = vld [vmem:[%s170 + $0x98] sm:$0xf]
                %211 = vst [vmem:[%s171 + $0x4c] sm:$0xf] %v210
                %v212 = vld [vmem:[%s170 + $0xa0] sm:$0xf]
                %213 = vst [vmem:[%s171 + $0x50] sm:$0xf] %v212
                %v214 = vld [vmem:[%s170 + $0xa8] sm:$0xf]
                %215 = vst [vmem:[%s171 + $0x54] sm:$0xf] %v214
                %v216 = vld [vmem:[%s170 + $0xb0] sm:$0xf]
                %217 = vst [vmem:[%s171 + $0x58] sm:$0xf] %v216
                %v218 = vld [vmem:[%s170 + $0xb8] sm:$0xf]
                %219 = vst [vmem:[%s171 + $0x5c] sm:$0xf] %v218
                %v220 = vld [vmem:[%s170 + $0xc0] sm:$0xf]
                %221 = vst [vmem:[%s171 + $0x60] sm:$0xf] %v220
                %v222 = vld [vmem:[%s170 + $0xc8] sm:$0xf]
                %223 = vst [vmem:[%s171 + $0x64] sm:$0xf] %v222
                %v224 = vld [vmem:[%s170 + $0xd0] sm:$0xf]
                %225 = vst [vmem:[%s171 + $0x68] sm:$0xf] %v224
                %v226 = vld [vmem:[%s170 + $0xd8] sm:$0xf]
                %227 = vst [vmem:[%s171 + $0x6c] sm:$0xf] %v226
                %v228 = vld [vmem:[%s170 + $0xe0] sm:$0xf]
                %229 = vst [vmem:[%s171 + $0x70] sm:$0xf] %v228
                %v230 = vld [vmem:[%s170 + $0xe8] sm:$0xf]
                %231 = vst [vmem:[%s171 + $0x74] sm:$0xf] %v230
                %v232 = vld [vmem:[%s170 + $0xf0] sm:$0xf]
                %233 = vst [vmem:[%s171 + $0x78] sm:$0xf] %v232
                %v234 = vld [vmem:[%s170 + $0xf8] sm:$0xf]
                %235 = vst [vmem:[%s171 + $0x7c] sm:$0xf] %v234
                %v236 = vld [vmem:[%s170 + $0x100] sm:$0xf]
                %237 = vst [vmem:[%s171 + $0x80] sm:$0xf] %v236
                %v238 = vld [vmem:[%s170 + $0x108] sm:$0xf]
                %239 = vst [vmem:[%s171 + $0x84] sm:$0xf] %v238
                %v240 = vld [vmem:[%s170 + $0x110] sm:$0xf]
                %241 = vst [vmem:[%s171 + $0x88] sm:$0xf] %v240
                %v242 = vld [vmem:[%s170 + $0x118] sm:$0xf]
                %243 = vst [vmem:[%s171 + $0x8c] sm:$0xf] %v242
                %v244 = vld [vmem:[%s170 + $0x120] sm:$0xf]
                %245 = vst [vmem:[%s171 + $0x90] sm:$0xf] %v244
                %v246 = vld [vmem:[%s170 + $0x128] sm:$0xf]
                %247 = vst [vmem:[%s171 + $0x94] sm:$0xf] %v246
                %v248 = vld [vmem:[%s170 + $0x130] sm:$0xf]
                %249 = vst [vmem:[%s171 + $0x98] sm:$0xf] %v248
                %v250 = vld [vmem:[%s170 + $0x138] sm:$0xf]
                %251 = vst [vmem:[%s171 + $0x9c] sm:$0xf] %v250
                %v252 = vld [vmem:[%s170 + $0x140] sm:$0xf]
                %253 = vst [vmem:[%s171 + $0xa0] sm:$0xf] %v252
                %v254 = vld [vmem:[%s170 + $0x148] sm:$0xf]
                %255 = vst [vmem:[%s171 + $0xa4] sm:$0xf] %v254
                %v256 = vld [vmem:[%s170 + $0x150] sm:$0xf]
                %257 = vst [vmem:[%s171 + $0xa8] sm:$0xf] %v256
                %v258 = vld [vmem:[%s170 + $0x158] sm:$0xf]
                %259 = vst [vmem:[%s171 + $0xac] sm:$0xf] %v258
                %v260 = vld [vmem:[%s170 + $0x160] sm:$0xf]
                %261 = vst [vmem:[%s171 + $0xb0] sm:$0xf] %v260
                %v262 = vld [vmem:[%s170 + $0x168] sm:$0xf]
                %263 = vst [vmem:[%s171 + $0xb4] sm:$0xf] %v262
                %v264 = vld [vmem:[%s170 + $0x170] sm:$0xf]
                %265 = vst [vmem:[%s171 + $0xb8] sm:$0xf] %v264
                %v266 = vld [vmem:[%s170 + $0x178] sm:$0xf]
                %267 = vst [vmem:[%s171 + $0xbc] sm:$0xf] %v266
                %v268 = vld [vmem:[%s170 + $0x180] sm:$0xf]
                %269 = vst [vmem:[%s171 + $0xc0] sm:$0xf] %v268
                %v270 = vld [vmem:[%s170 + $0x188] sm:$0xf]
                %271 = vst [vmem:[%s171 + $0xc4] sm:$0xf] %v270
                %v272 = vld [vmem:[%s170 + $0x190] sm:$0xf]
                %273 = vst [vmem:[%s171 + $0xc8] sm:$0xf] %v272
                %v274 = vld [vmem:[%s170 + $0x198] sm:$0xf]
                %275 = vst [vmem:[%s171 + $0xcc] sm:$0xf] %v274
                %v276 = vld [vmem:[%s170 + $0x1a0] sm:$0xf]
                %277 = vst [vmem:[%s171 + $0xd0] sm:$0xf] %v276
                %v278 = vld [vmem:[%s170 + $0x1a8] sm:$0xf]
                %279 = vst [vmem:[%s171 + $0xd4] sm:$0xf] %v278
                %v280 = vld [vmem:[%s170 + $0x1b0] sm:$0xf]
                %281 = vst [vmem:[%s171 + $0xd8] sm:$0xf] %v280
                %v282 = vld [vmem:[%s170 + $0x1b8] sm:$0xf]
                %283 = vst [vmem:[%s171 + $0xdc] sm:$0xf] %v282
                %v284 = vld [vmem:[%s170 + $0x1c0] sm:$0xf]
                %285 = vst [vmem:[%s171 + $0xe0] sm:$0xf] %v284
                %v286 = vld [vmem:[%s170 + $0x1c8] sm:$0xf]
                %287 = vst [vmem:[%s171 + $0xe4] sm:$0xf] %v286
                %v288 = vld [vmem:[%s170 + $0x1d0] sm:$0xf]
                %289 = vst [vmem:[%s171 + $0xe8] sm:$0xf] %v288
                %v290 = vld [vmem:[%s170 + $0x1d8] sm:$0xf]
                %291 = vst [vmem:[%s171 + $0xec] sm:$0xf] %v290
                %v292 = vld [vmem:[%s170 + $0x1e0] sm:$0xf]
                %293 = vst [vmem:[%s171 + $0xf0] sm:$0xf] %v292
                %v294 = vld [vmem:[%s170 + $0x1e8] sm:$0xf]
                %295 = vst [vmem:[%s171 + $0xf4] sm:$0xf] %v294
                %v296 = vld [vmem:[%s170 + $0x1f0] sm:$0xf]
                %297 = vst [vmem:[%s171 + $0xf8] sm:$0xf] %v296
                %v298 = vld [vmem:[%s170 + $0x1f8] sm:$0xf]
                %299 = vst [vmem:[%s171 + $0xfc] sm:$0xf] %v298
              $region41: #{_lambda_.15} parent=35 // loop_footer
                %s169 = sadd.s32 1, %s165
              $region42: #{_lambda_.15} parent=35 // loop_footer_branch
                %164 = sbr.rel target = $region38
              $region43: #{_lambda_.15} parent=35 // loop_exit
                _
            $region36: #{_lambda_.15} parent=27 // pred_fallthru
              _
          $region28: #{_lambda_.15} parent=23 // pred_fallthru
            _
          %447 = vnop
        $region24: #{_lambda_.15} parent=19 // pred_fallthru
          _
      $region20: #{_lambda_.15} parent=5 // pred_fallthru
        _
      %p448 = scmp.le.s32.totalorder 1, %s8
      %p449 = scmp.lt.s32.totalorder %s8, 3
      %p450 = pnand %p448, %p449
      %p451 = pneg %p450
      // Predicated region
      $region62: #{_lambda_.15} parent=5 // pred_check
        _
      $region63: #{_lambda_.15} parent=5 // pred_check_branch
        %453 = sbr.rel (%p450) target = $region65
      $region64: #{_lambda_.15} parent=5 // pred_region
        %s454 = ssub.s32 %s8, 1
        %s455 = sand.u32 %s70, 1
        %s456 = sand.u32 %s70, 1
        %s457 = smul.addr %s456, 256
        %s458 = scalar_lea.vmem [#allocation3], %s457
        // Predicated region
        $region66: #{_lambda_.15} parent=64 // pred_check
          %p459 = pneg %p83
        $region67: #{_lambda_.15} parent=64 // pred_check_branch
          %461 = sbr.rel (%p459) target = $region69
        $region68: #{_lambda_.15} parent=64 // pred_region
          _
        $region69: #{_lambda_.15} parent=64 // pred_fallthru
          _
        %s462 = smul.u32 4, %s18
        %s463 = smul.u32 4, %s20
        %p464 = scmp.lt.s32.totalorder %s462, 3
        %s465 = scalar_select %p464, %s462, 3
        %p466 = scmp.lt.s32.totalorder %s463, 3
        %s467 = scalar_select %p466, %s463, 3
        %s468 = smul.addr %s465, 4
        %s469 = sadd.s32 %s467, %s468
        %s470 = smul.addr %s469, 4
        %s471 = scalar_lea.vmem %s0, %s470
        %p472 = pneg %p55
        %p473 = pneg %p52
        %s474 = sand.u32 %s70, 1
        %s475 = sand.u32 %s70, 1
        %s476 = smul.addr %s475, 256
        %s477 = scalar_lea.vmem [#allocation3], %s476
        %p478 = pneg %p83
        %p479 = pneg %p80
        %p480 = pneg %p111
        %p481 = pneg %p108
        %s482 = sand.u32 %s98, 1
        %s483 = sand.u32 %s98, 1
        %s484 = smul.addr %s483, 16
        %s485 = scalar_lea.vmem [#allocation4], %s484
        %s486 = smul.u32 4, %s18
        %s487 = smul.u32 4, %s20
        %p488 = scmp.lt.s32.totalorder %s486, 3
        %s489 = scalar_select %p488, %s486, 3
        %p490 = scmp.lt.s32.totalorder %s487, 3
        %s491 = scalar_select %p490, %s487, 3
        %s492 = smul.addr %s489, 4
        %s493 = sadd.s32 %s491, %s492
        %s494 = smul.addr %s493, 4
        %s495 = scalar_lea.vmem %s0, %s494
        %s496 = smul.u32 4, %s18
        %s497 = smul.u32 4, %s20
        %s498 = smul.u32 64, %s20
        %s499 = smul.u32 4, %s18
        %p501 = scmp.eq.s32.totalorder %s20, 0
        // Predicated region
        $region70: #{_lambda_.15} parent=64 // pred_check
          %p502 = pneg %p501
        $region71: #{_lambda_.15} parent=64 // pred_check_branch
          %504 = sbr.rel (%p502) target = $region73
        $region72: #{_lambda_.15} parent=64 // pred_region
          %505 = vst [vmem:[#allocation2] sm:$0xff] 0.0
          %506 = vst [vmem:[#allocation2 + $0x8] sm:$0xff] 0.0
          %507 = vst [vmem:[#allocation2 + $0x10] sm:$0xff] 0.0
          %508 = vst [vmem:[#allocation2 + $0x18] sm:$0xff] 0.0
        $region73: #{_lambda_.15} parent=64 // pred_fallthru
          _
        %v509 = vld [vmem:[#allocation2] sm:$0xff]
        %v510 = vld [vmem:[#allocation2 + $0x8] sm:$0xff]
        %v511 = vld [vmem:[#allocation2 + $0x10] sm:$0xff]
        %v512 = vld [vmem:[#allocation2 + $0x18] sm:$0xff]
        %v513 = vld [vmem:[%s495] sm:$0xff]
        %v514 = vld [vmem:[%s495 + $0x8] sm:$0xff]
        %v515 = vld [vmem:[%s495 + $0x10] sm:$0xff]
        %v516 = vld [vmem:[%s495 + $0x18] sm:$0xff]
        %v517 = vld [vmem:[%s495 + $0x20] sm:$0xff]
        %v518 = vld [vmem:[%s495 + $0x28] sm:$0xff]
        %v519 = vld [vmem:[%s495 + $0x30] sm:$0xff]
        %v520 = vld [vmem:[%s495 + $0x38] sm:$0xff]
        %v521 = vld [vmem:[%s458] sm:$0xf]
        %v522 = vld [vmem:[%s458 + $0x4] sm:$0xf]
        %v523 = vld [vmem:[%s458 + $0x8] sm:$0xf]
        %v524 = vld [vmem:[%s458 + $0xc] sm:$0xf]
        %v525 = vld [vmem:[%s458 + $0x10] sm:$0xf]
        %v526 = vld [vmem:[%s458 + $0x14] sm:$0xf]
        %v527 = vld [vmem:[%s458 + $0x18] sm:$0xf]
        %v528 = vld [vmem:[%s458 + $0x1c] sm:$0xf]
        %v529 = vld [vmem:[%s458 + $0x20] sm:$0xf]
        %v530 = vld [vmem:[%s458 + $0x24] sm:$0xf]
        %v531 = vld [vmem:[%s458 + $0x28] sm:$0xf]
        %v532 = vld [vmem:[%s458 + $0x2c] sm:$0xf]
        %v533 = vld [vmem:[%s458 + $0x30] sm:$0xf]
        %v534 = vld [vmem:[%s458 + $0x34] sm:$0xf]
        %v535 = vld [vmem:[%s458 + $0x38] sm:$0xf]
        %v536 = vld [vmem:[%s458 + $0x3c] sm:$0xf]
        %v537 = vld [vmem:[%s458 + $0x40] sm:$0xf]
        %v538 = vld [vmem:[%s458 + $0x44] sm:$0xf]
        %v539 = vld [vmem:[%s458 + $0x48] sm:$0xf]
        %v540 = vld [vmem:[%s458 + $0x4c] sm:$0xf]
        %v541 = vld [vmem:[%s458 + $0x50] sm:$0xf]
        %v542 = vld [vmem:[%s458 + $0x54] sm:$0xf]
        %v543 = vld [vmem:[%s458 + $0x58] sm:$0xf]
        %v544 = vld [vmem:[%s458 + $0x5c] sm:$0xf]
        %v545 = vld [vmem:[%s458 + $0x60] sm:$0xf]
        %v546 = vld [vmem:[%s458 + $0x64] sm:$0xf]
        %v547 = vld [vmem:[%s458 + $0x68] sm:$0xf]
        %v548 = vld [vmem:[%s458 + $0x6c] sm:$0xf]
        %v549 = vld [vmem:[%s458 + $0x70] sm:$0xf]
        %v550 = vld [vmem:[%s458 + $0x74] sm:$0xf]
        %v551 = vld [vmem:[%s458 + $0x78] sm:$0xf]
        %v552 = vld [vmem:[%s458 + $0x7c] sm:$0xf]
        %v553 = vld [vmem:[%s458 + $0x80] sm:$0xf]
        %v554 = vld [vmem:[%s458 + $0x84] sm:$0xf]
        %v555 = vld [vmem:[%s458 + $0x88] sm:$0xf]
        %v556 = vld [vmem:[%s458 + $0x8c] sm:$0xf]
        %v557 = vld [vmem:[%s458 + $0x90] sm:$0xf]
        %v558 = vld [vmem:[%s458 + $0x94] sm:$0xf]
        %v559 = vld [vmem:[%s458 + $0x98] sm:$0xf]
        %v560 = vld [vmem:[%s458 + $0x9c] sm:$0xf]
        %v561 = vld [vmem:[%s458 + $0xa0] sm:$0xf]
        %v562 = vld [vmem:[%s458 + $0xa4] sm:$0xf]
        %v563 = vld [vmem:[%s458 + $0xa8] sm:$0xf]
        %v564 = vld [vmem:[%s458 + $0xac] sm:$0xf]
        %v565 = vld [vmem:[%s458 + $0xb0] sm:$0xf]
        %v566 = vld [vmem:[%s458 + $0xb4] sm:$0xf]
        %v567 = vld [vmem:[%s458 + $0xb8] sm:$0xf]
        %v568 = vld [vmem:[%s458 + $0xbc] sm:$0xf]
        %v569 = vld [vmem:[%s458 + $0xc0] sm:$0xf]
        %v570 = vld [vmem:[%s458 + $0xc4] sm:$0xf]
        %v571 = vld [vmem:[%s458 + $0xc8] sm:$0xf]
        %v572 = vld [vmem:[%s458 + $0xcc] sm:$0xf]
        %v573 = vld [vmem:[%s458 + $0xd0] sm:$0xf]
        %v574 = vld [vmem:[%s458 + $0xd4] sm:$0xf]
        %v575 = vld [vmem:[%s458 + $0xd8] sm:$0xf]
        %v576 = vld [vmem:[%s458 + $0xdc] sm:$0xf]
        %v577 = vld [vmem:[%s458 + $0xe0] sm:$0xf]
        %v578 = vld [vmem:[%s458 + $0xe4] sm:$0xf]
        %v579 = vld [vmem:[%s458 + $0xe8] sm:$0xf]
        %v580 = vld [vmem:[%s458 + $0xec] sm:$0xf]
        %v581 = vld [vmem:[%s458 + $0xf0] sm:$0xf]
        %v582 = vld [vmem:[%s458 + $0xf4] sm:$0xf]
        %v583 = vld [vmem:[%s458 + $0xf8] sm:$0xf]
        %v584 = vld [vmem:[%s458 + $0xfc] sm:$0xf]
        %v593 = vunpack.c.l.b16 %v513
        %v594 = vunpack.c.h.b16 %v513
        %v595 = vunpack.c.l.b16 %v514
        %v596 = vunpack.c.h.b16 %v514
        %v597 = vunpack.c.l.b16 %v515
        %v598 = vunpack.c.h.b16 %v515
        %v599 = vunpack.c.l.b16 %v516
        %v600 = vunpack.c.h.b16 %v516
        %v601 = vunpack.c.l.b16 %v517
        %v602 = vunpack.c.h.b16 %v517
        %v603 = vunpack.c.l.b16 %v518
        %v604 = vunpack.c.h.b16 %v518
        %v605 = vunpack.c.l.b16 %v519
        %v606 = vunpack.c.h.b16 %v519
        %v607 = vunpack.c.l.b16 %v520
        %v608 = vunpack.c.h.b16 %v520
        %v609 = vpack.c.b16 %v597, %v593
        %v610 = vpack.c.b16 %v598, %v594
        %v611 = vpack.c.b16 %v599, %v595
        %v612 = vpack.c.b16 %v600, %v596
        %v613 = vpack.c.b16 %v605, %v601
        %v614 = vpack.c.b16 %v606, %v602
        %v615 = vpack.c.b16 %v607, %v603
        %v616 = vpack.c.b16 %v608, %v604
        %v689 = vunpack.c.l.b16 %v521
        %v690 = vunpack.c.l.b16 %v522
        %v691 = vunpack.c.l.b16 %v523
        %v692 = vunpack.c.l.b16 %v524
        %v693 = vunpack.c.l.b16 %v525
        %v694 = vunpack.c.l.b16 %v526
        %v695 = vunpack.c.l.b16 %v527
        %v696 = vunpack.c.l.b16 %v528
        %v697 = vunpack.c.l.b16 %v529
        %v698 = vunpack.c.l.b16 %v530
        %v699 = vunpack.c.l.b16 %v531
        %v700 = vunpack.c.l.b16 %v532
        %v701 = vunpack.c.l.b16 %v533
        %v702 = vunpack.c.l.b16 %v534
        %v703 = vunpack.c.l.b16 %v535
        %v704 = vunpack.c.l.b16 %v536
        %v705 = vunpack.c.l.b16 %v537
        %v706 = vunpack.c.l.b16 %v538
        %v707 = vunpack.c.l.b16 %v539
        %v708 = vunpack.c.l.b16 %v540
        %v709 = vunpack.c.l.b16 %v541
        %v710 = vunpack.c.l.b16 %v542
        %v711 = vunpack.c.l.b16 %v543
        %v712 = vunpack.c.l.b16 %v544
        %v713 = vunpack.c.l.b16 %v545
        %v714 = vunpack.c.l.b16 %v546
        %v715 = vunpack.c.l.b16 %v547
        %v716 = vunpack.c.l.b16 %v548
        %v717 = vunpack.c.l.b16 %v549
        %v718 = vunpack.c.l.b16 %v550
        %v719 = vunpack.c.l.b16 %v551
        %v720 = vunpack.c.l.b16 %v552
        %v721 = vunpack.c.l.b16 %v553
        %v722 = vunpack.c.l.b16 %v554
        %v723 = vunpack.c.l.b16 %v555
        %v724 = vunpack.c.l.b16 %v556
        %v725 = vunpack.c.l.b16 %v557
        %v726 = vunpack.c.l.b16 %v558
        %v727 = vunpack.c.l.b16 %v559
        %v728 = vunpack.c.l.b16 %v560
        %v729 = vunpack.c.l.b16 %v561
        %v730 = vunpack.c.l.b16 %v562
        %v731 = vunpack.c.l.b16 %v563
        %v732 = vunpack.c.l.b16 %v564
        %v733 = vunpack.c.l.b16 %v565
        %v734 = vunpack.c.l.b16 %v566
        %v735 = vunpack.c.l.b16 %v567
        %v736 = vunpack.c.l.b16 %v568
        %v737 = vunpack.c.l.b16 %v569
        %v738 = vunpack.c.l.b16 %v570
        %v739 = vunpack.c.l.b16 %v571
        %v740 = vunpack.c.l.b16 %v572
        %v741 = vunpack.c.l.b16 %v573
        %v742 = vunpack.c.l.b16 %v574
        %v743 = vunpack.c.l.b16 %v575
        %v744 = vunpack.c.l.b16 %v576
        %v745 = vunpack.c.l.b16 %v577
        %v746 = vunpack.c.l.b16 %v578
        %v747 = vunpack.c.l.b16 %v579
        %v748 = vunpack.c.l.b16 %v580
        %v749 = vunpack.c.l.b16 %v581
        %v750 = vunpack.c.l.b16 %v582
        %v751 = vunpack.c.l.b16 %v583
        %v752 = vunpack.c.l.b16 %v584
        %v753 = vpack.c.b16 %v690, %v689
        %v754 = vpack.c.b16 %v692, %v691
        %v755 = vpack.c.b16 %v694, %v693
        %v756 = vpack.c.b16 %v696, %v695
        %v757 = vpack.c.b16 %v698, %v697
        %v758 = vpack.c.b16 %v700, %v699
        %v759 = vpack.c.b16 %v702, %v701
        %v760 = vpack.c.b16 %v704, %v703
        %v761 = vpack.c.b16 %v706, %v705
        %v762 = vpack.c.b16 %v708, %v707
        %v763 = vpack.c.b16 %v710, %v709
        %v764 = vpack.c.b16 %v712, %v711
        %v765 = vpack.c.b16 %v714, %v713
        %v766 = vpack.c.b16 %v716, %v715
        %v767 = vpack.c.b16 %v718, %v717
        %v768 = vpack.c.b16 %v720, %v719
        %v769 = vpack.c.b16 %v722, %v721
        %v770 = vpack.c.b16 %v724, %v723
        %v771 = vpack.c.b16 %v726, %v725
        %v772 = vpack.c.b16 %v728, %v727
        %v773 = vpack.c.b16 %v730, %v729
        %v774 = vpack.c.b16 %v732, %v731
        %v775 = vpack.c.b16 %v734, %v733
        %v776 = vpack.c.b16 %v736, %v735
        %v777 = vpack.c.b16 %v738, %v737
        %v778 = vpack.c.b16 %v740, %v739
        %v779 = vpack.c.b16 %v742, %v741
        %v780 = vpack.c.b16 %v744, %v743
        %v781 = vpack.c.b16 %v746, %v745
        %v782 = vpack.c.b16 %v748, %v747
        %v783 = vpack.c.b16 %v750, %v749
        %v784 = vpack.c.b16 %v752, %v751
        %817 = vmatprep.subr.bf16.mxu0 0
        %818 = vmatpush1.bf16.msra.mxu0 %v753
        %819 = vmatprep.subr.bf16.mxu0 0
        %820 = vmatpush1.bf16.msra.mxu0 %v754
        %821 = vmatprep.subr.bf16.mxu0 0
        %822 = vmatpush1.bf16.msra.mxu0 %v755
        %823 = vmatprep.subr.bf16.mxu0 0
        %824 = vmatpush1.bf16.msra.mxu0 %v756
        %825 = vmatprep.subr.bf16.mxu0 0
        %826 = vmatpush1.bf16.msra.mxu0 %v757
        %827 = vmatprep.subr.bf16.mxu0 0
        %828 = vmatpush1.bf16.msra.mxu0 %v758
        %829 = vmatprep.subr.bf16.mxu0 0
        %830 = vmatpush1.bf16.msra.mxu0 %v759
        %831 = vmatprep.subr.bf16.mxu0 0
        %832 = vmatpush1.bf16.msra.mxu0 %v760
        %833 = vmatprep.subr.bf16.mxu0 0
        %834 = vmatpush1.bf16.msra.mxu0 %v761
        %835 = vmatprep.subr.bf16.mxu0 0
        %836 = vmatpush1.bf16.msra.mxu0 %v762
        %837 = vmatprep.subr.bf16.mxu0 0
        %838 = vmatpush1.bf16.msra.mxu0 %v763
        %839 = vmatprep.subr.bf16.mxu0 0
        %840 = vmatpush1.bf16.msra.mxu0 %v764
        %841 = vmatprep.subr.bf16.mxu0 0
        %842 = vmatpush1.bf16.msra.mxu0 %v765
        %843 = vmatprep.subr.bf16.mxu0 0
        %844 = vmatpush1.bf16.msra.mxu0 %v766
        %845 = vmatprep.subr.bf16.mxu0 0
        %846 = vmatpush1.bf16.msra.mxu0 %v767
        %847 = vmatprep.subr.bf16.mxu0 0
        %848 = vmatpush1.bf16.msra.mxu0 %v768
        %849 = vmatprep.mubr.bf16.mxu0 %v610
        %850 = vmatmul.mubr.bf16.gmra.mrb[0].mxu0 %v609
        %v851 = vpop.f32.mrb[0].mxu0
        %v852 = vadd.f32 0.0, %v851
        %v853 = vpop.f32.mrb[0].mxu0
        %v854 = vpop.f32.mrb[0].mxu0
        %v855 = vadd.f32 0.0, %v854
        %v856 = vpop.f32.mrb[0].mxu0
        %857 = vmatprep.mubr.bf16.mxu0 %v614
        %858 = vmatmul.mubr.bf16.gmra.mrb[0].mxu0 %v613
        %v859 = vpop.f32.mrb[0].mxu0
        %v860 = vadd.f32 0.0, %v859
        %v861 = vpop.f32.mrb[0].mxu0
        %v862 = vpop.f32.mrb[0].mxu0
        %v863 = vadd.f32 0.0, %v862
        %v864 = vpop.f32.mrb[0].mxu0
        %865 = vdwg.mxu0
        %866 = vmatprep.subr.bf16.mxu0 0
        %867 = vmatpush1.bf16.msra.mxu0 %v769
        %868 = vmatprep.subr.bf16.mxu0 0
        %869 = vmatpush1.bf16.msra.mxu0 %v770
        %870 = vmatprep.subr.bf16.mxu0 0
        %871 = vmatpush1.bf16.msra.mxu0 %v771
        %872 = vmatprep.subr.bf16.mxu0 0
        %873 = vmatpush1.bf16.msra.mxu0 %v772
        %874 = vmatprep.subr.bf16.mxu0 0
        %875 = vmatpush1.bf16.msra.mxu0 %v773
        %876 = vmatprep.subr.bf16.mxu0 0
        %877 = vmatpush1.bf16.msra.mxu0 %v774
        %878 = vmatprep.subr.bf16.mxu0 0
        %879 = vmatpush1.bf16.msra.mxu0 %v775
        %880 = vmatprep.subr.bf16.mxu0 0
        %881 = vmatpush1.bf16.msra.mxu0 %v776
        %882 = vmatprep.subr.bf16.mxu0 0
        %883 = vmatpush1.bf16.msra.mxu0 %v777
        %884 = vmatprep.subr.bf16.mxu0 0
        %885 = vmatpush1.bf16.msra.mxu0 %v778
        %886 = vmatprep.subr.bf16.mxu0 0
        %887 = vmatpush1.bf16.msra.mxu0 %v779
        %888 = vmatprep.subr.bf16.mxu0 0
        %889 = vmatpush1.bf16.msra.mxu0 %v780
        %890 = vmatprep.subr.bf16.mxu0 0
        %891 = vmatpush1.bf16.msra.mxu0 %v781
        %892 = vmatprep.subr.bf16.mxu0 0
        %893 = vmatpush1.bf16.msra.mxu0 %v782
        %894 = vmatprep.subr.bf16.mxu0 0
        %895 = vmatpush1.bf16.msra.mxu0 %v783
        %896 = vmatprep.subr.bf16.mxu0 0
        %897 = vmatpush1.bf16.msra.mxu0 %v784
        %898 = vmatprep.mubr.bf16.mxu0 %v612
        %899 = vmatmul.mubr.bf16.gmra.mrb[0].mxu0 %v611
        %v900 = vpop.f32.mrb[0].mxu0
        %v901 = vadd.f32 %v852, %v900
        %v902 = vpop.f32.mrb[0].mxu0
        %v903 = vpop.f32.mrb[0].mxu0
        %v904 = vadd.f32 %v855, %v903
        %v905 = vpop.f32.mrb[0].mxu0
        %906 = vmatprep.mubr.bf16.mxu0 %v616
        %907 = vmatmul.mubr.bf16.gmra.mrb[0].mxu0 %v615
        %v908 = vpop.f32.mrb[0].mxu0
        %v909 = vadd.f32 %v860, %v908
        %v910 = vpop.f32.mrb[0].mxu0
        %v911 = vpop.f32.mrb[0].mxu0
        %v912 = vadd.f32 %v863, %v911
        %v913 = vpop.f32.mrb[0].mxu0
        %914 = vdwg.mxu0
        %v915 = vadd.f32 %v509, %v901
        %v916 = vadd.f32 %v510, %v904
        %v917 = vadd.f32 %v511, %v909
        %v918 = vadd.f32 %v512, %v912
        %919 = vst [vmem:[#allocation2] sm:$0xff] %v915
        %920 = vst [vmem:[#allocation2 + $0x8] sm:$0xff] %v916
        %921 = vst [vmem:[#allocation2 + $0x10] sm:$0xff] %v917
        %922 = vst [vmem:[#allocation2 + $0x18] sm:$0xff] %v918
        // Predicated region
        $region74: #{_lambda_.15} parent=64 // pred_check
          %p923 = pneg %p501
        $region75: #{_lambda_.15} parent=64 // pred_check_branch
          %925 = sbr.rel (%p923) target = $region77
        $region76: #{_lambda_.15} parent=64 // pred_region
          %v926 = vld [vmem:[#allocation2] sm:$0xff]
          %v927 = vld [vmem:[#allocation2 + $0x8] sm:$0xff]
          %v928 = vld [vmem:[#allocation2 + $0x10] sm:$0xff]
          %v929 = vld [vmem:[#allocation2 + $0x18] sm:$0xff]
          %v930 = vpack.c.bf16 %v927, %v926
          %v931 = vpack.c.bf16 %v929, %v928
          %v934 = vunpack.c.l.b16 %v930
          %v935 = vunpack.c.h.b16 %v930
          %v936 = vunpack.c.l.b16 %v931
          %v937 = vunpack.c.h.b16 %v931
          %v938 = vpack.c.b16 %v934, %v934
          %v939 = vpack.c.b16 %v935, %v935
          %v940 = vpack.c.b16 %v936, %v936
          %v941 = vpack.c.b16 %v937, %v937
          %946 = vst [vmem:[%s485] sm:$0xf] %v938
          %947 = vst [vmem:[%s485 + $0x4] sm:$0xf] %v939
          %948 = vst [vmem:[%s485 + $0x8] sm:$0xf] %v940
          %949 = vst [vmem:[%s485 + $0xc] sm:$0xf] %v941
        $region77: #{_lambda_.15} parent=64 // pred_fallthru
          _
        %s950 = sand.u32 %s98, 1
        %s951 = sand.u32 %s98, 1
        %s952 = smul.addr %s951, 16
        %s953 = scalar_lea.vmem [#allocation4], %s952
        // Predicated region
        $region78: #{_lambda_.15} parent=64 // pred_check
          %p954 = pneg %p108
        $region79: #{_lambda_.15} parent=64 // pred_check_branch
          %956 = sbr.rel (%p954) target = $region81
        $region80: #{_lambda_.15} parent=64 // pred_region
          %s957 = smul.u32 4, %s18
          %s958 = smul.addr %s957, 2
          %s959 = sadd.s32 %s19, %s958
          %s960 = smul.addr %s959, 4
          %s961 = scalar_lea.vmem %s2, %s960
          // Predicated region
          $region82: #{_lambda_.15} parent=80 // pred_check
            _
          $region83: #{_lambda_.15} parent=80 // pred_check_branch
            %963 = sbr.rel (0) target = $region85
          $region84: #{_lambda_.15} parent=80 // pred_region
            // Predicated region
            $region86: #{_lambda_.15} parent=84 // pred_check
              _
            $region87: #{_lambda_.15} parent=84 // pred_check_branch
              %965 = sbr.rel target = $region89
            $region88: #{_lambda_.15} parent=84 // pred_region
              // Predicated region
              $region101: #{_lambda_.15} parent=88 // pred_check
                _
              $region102: #{_lambda_.15} parent=88 // pred_check_branch
                %986 = sbr.rel (0) target = $region104
              $region103: #{_lambda_.15} parent=88 // pred_region
                loop: start=0, step=1, limit=1
                $region105: #{_lambda_.15} parent=103 // loop_pre_header
                  _
                $region106: #{_lambda_.15} parent=103 // loop_header
                  %s988 = sphi 0, %s992
                  %p989 = scmp.ge.s32.totalorder %s988, 1
                  %s993 = sphi %s953, %s953
                  %s994 = sphi %s961, %s961
                $region107: #{_lambda_.15} parent=103 // loop_header_branch
                  %991 = sbr.rel (%p989) target = $region111
                $region108: #{_lambda_.15} parent=103 // loop_body
                  _
                $region109: #{_lambda_.15} parent=103 // loop_footer
                  %s992 = sadd.s32 1, %s988
                $region110: #{_lambda_.15} parent=103 // loop_footer_branch
                  %987 = sbr.rel target = $region106
                $region111: #{_lambda_.15} parent=103 // loop_exit
                  _
                loop: start=0, step=1, limit=1
                $region112: #{_lambda_.15} parent=103 // loop_pre_header
                  _
                $region113: #{_lambda_.15} parent=103 // loop_header
                  %s997 = sphi 0, %s1001
                  %p998 = scmp.ge.s32.totalorder %s997, 1
                  %s1002 = sphi %s953, %s953
                  %s1003 = sphi %s961, %s961
                $region114: #{_lambda_.15} parent=103 // loop_header_branch
                  %1000 = sbr.rel (%p998) target = $region118
                $region115: #{_lambda_.15} parent=103 // loop_body
                  %v1004 = vld [vmem:[%s1002] sm:$0xf]
                  %1005 = vst [vmem:[%s1003] sm:$0xf] %v1004
                  %v1006 = vld [vmem:[%s1002 + $0x4] sm:$0xf]
                  %1007 = vst [vmem:[%s1003 + $0x8] sm:$0xf] %v1006
                  %v1008 = vld [vmem:[%s1002 + $0x8] sm:$0xf]
                  %1009 = vst [vmem:[%s1003 + $0x10] sm:$0xf] %v1008
                  %v1010 = vld [vmem:[%s1002 + $0xc] sm:$0xf]
                  %1011 = vst [vmem:[%s1003 + $0x18] sm:$0xf] %v1010
                $region116: #{_lambda_.15} parent=103 // loop_footer
                  %s1001 = sadd.s32 1, %s997
                $region117: #{_lambda_.15} parent=103 // loop_footer_branch
                  %996 = sbr.rel target = $region113
                $region118: #{_lambda_.15} parent=103 // loop_exit
                  _
              $region104: #{_lambda_.15} parent=88 // pred_fallthru
                _
            $region89: #{_lambda_.15} parent=84 // pred_fallthru
              _
            // Predicated region
            $region90: #{_lambda_.15} parent=84 // pred_check
              _
            $region91: #{_lambda_.15} parent=84 // pred_check_branch
              %967 = sbr.rel (0) target = $region93
            $region92: #{_lambda_.15} parent=84 // pred_region
              loop: start=0, step=1, limit=1
              $region94: #{_lambda_.15} parent=92 // loop_pre_header
                _
              $region95: #{_lambda_.15} parent=92 // loop_header
                %s970 = sphi 0, %s974
                %p971 = scmp.ge.s32.totalorder %s970, 1
                %s975 = sphi %s953, %s953
                %s976 = sphi %s961, %s961
              $region96: #{_lambda_.15} parent=92 // loop_header_branch
                %973 = sbr.rel (%p971) target = $region100
              $region97: #{_lambda_.15} parent=92 // loop_body
                %v977 = vld [vmem:[%s975] sm:$0xf]
                %978 = vst [vmem:[%s976] sm:$0xf] %v977
                %v979 = vld [vmem:[%s975 + $0x4] sm:$0xf]
                %980 = vst [vmem:[%s976 + $0x8] sm:$0xf] %v979
                %v981 = vld [vmem:[%s975 + $0x8] sm:$0xf]
                %982 = vst [vmem:[%s976 + $0x10] sm:$0xf] %v981
                %v983 = vld [vmem:[%s975 + $0xc] sm:$0xf]
                %984 = vst [vmem:[%s976 + $0x18] sm:$0xf] %v983
              $region98: #{_lambda_.15} parent=92 // loop_footer
                %s974 = sadd.s32 1, %s970
              $region99: #{_lambda_.15} parent=92 // loop_footer_branch
                %969 = sbr.rel target = $region95
              $region100: #{_lambda_.15} parent=92 // loop_exit
                _
            $region93: #{_lambda_.15} parent=84 // pred_fallthru
              _
          $region85: #{_lambda_.15} parent=80 // pred_fallthru
            _
          %1012 = vnop
        $region81: #{_lambda_.15} parent=64 // pred_fallthru
          _
      $region65: #{_lambda_.15} parent=5 // pred_fallthru
        _
      %p1013 = scmp.le.s32.totalorder 2, %s8
      // Predicated region
      $region119: #{_lambda_.15} parent=5 // pred_check
        %p1014 = pneg %p1013
      $region120: #{_lambda_.15} parent=5 // pred_check_branch
        %1016 = sbr.rel (%p1014) target = $region122
      $region121: #{_lambda_.15} parent=5 // pred_region
        %s1017 = ssub.s32 %s8, 2
        // Predicated region
        $region123: #{_lambda_.15} parent=121 // pred_check
          %p1018 = pneg %p114
        $region124: #{_lambda_.15} parent=121 // pred_check_branch
          %1020 = sbr.rel (%p1018) target = $region126
        $region125: #{_lambda_.15} parent=121 // pred_region
          %s1021 = sand.u32 %s99, 1
          %s1022 = sand.u32 %s99, 1
          %s1023 = smul.addr %s1022, 16
          %s1024 = scalar_lea.vmem [#allocation4], %s1023
        $region126: #{_lambda_.15} parent=121 // pred_fallthru
          _
      $region122: #{_lambda_.15} parent=5 // pred_fallthru
        _
    $region6: #{_lambda_.15} parent=1 // loop_footer
      %s12 = sadd.s32 1, %s8
    $region7: #{_lambda_.15} parent=1 // loop_footer_branch
      %7 = sbr.rel target = $region3
    $region8: #{_lambda_.15} parent=1 // loop_exit
      _

// kernel: _lambda_.13
$region0: #{_lambda_.13}
  #allocation0 [shape = 'u32[]', space=smem, size = 0x4, offset = 0x4, fixed_abs, tag = 'smem constant byte address 0x4 - core index']
  #allocation1 [shape = 'u32[144,128]{1,0:T(1,128)}', space=vmem, size = 0x12000, scoped, tag = 'internal scratch']
  #allocation2 [shape = 'f32[32,512]{1,0:T(8,128)}', space=vmem, size = 0x10000, scoped, tag = 'scratch operand']
  %s0 = inlined_call_operand.vmem [shape: bf16[32,256], index: 0, kind: input, shape index: {}]
  %s1 = inlined_call_operand.hbm [shape: bf16[256,1024], index: 1, kind: input, shape index: {}]
  %s2 = inlined_call_operand.vmem [shape: bf16[32,1024], index: 2, kind: output, shape index: {}]
  %s3 = sld [smem:[#allocation0]]
  $region72: #{_lambda_.13} parent=0
    _
  %s5 = ssub.s32 1, %s3
  %s6 = scalar_select 0, %s5, %s3
  $region1: #{_lambda_.13} parent=0
    #allocation3 [shape = 'u8[524288]{0}', space=vmem, size = 0x80000, scoped, tag = 'input window, operand 1']
    #allocation4 [shape = 's32[2]{0}', space=sflag, size = 0x8, scoped, tag = 'scoped memory for _lambda_.13']
    #allocation5 [shape = 'u8[65536]{0}', space=vmem, size = 0x10000, scoped, tag = 'output window, operand 0']
    %7 = vsyncpa [#allocation4], 0
    %s8 = scalar_lea.sflag [#allocation4], 1
    %9 = vsyncpa %s8, 0
    loop: start=0, step=1, limit=4
    $region2: #{_lambda_.13} parent=1 // loop_pre_header
      _
    $region3: #{_lambda_.13} parent=1 // loop_header
      %s11 = sphi 0, %s15
      %p12 = scmp.ge.s32.totalorder %s11, 4
      %s18 = sphi 0, %s37
      %s19 = sphi 0, %s33
      %s20 = sphi 0, %s29
      %s21 = sphi 0, %s18
      %s22 = sphi 0, %s19
      %s23 = sphi 0, %s20
      %s24 = sphi 0, %s21
      %s25 = sphi 0, %s22
      %s26 = sphi 0, %s23
      %s42 = sphi 0, %s44
      %s45 = sphi 0, %s42
      %s46 = sphi 0, %s45
      %s62 = sphi 0, %s46
      %s70 = sphi 0, %s72
      %s73 = sphi 0, %s70
      %s74 = sphi 0, %s73
      %s90 = sphi 0, %s74
      %s98 = sphi 0, %s100
      %s101 = sphi 0, %s98
      %s102 = sphi 0, %s101
      %s118 = sphi 0, %s102
    $region4: #{_lambda_.13} parent=1 // loop_header_branch
      %14 = sbr.rel (%p12) target = $region8
    $region5: #{_lambda_.13} parent=1 // loop_body
      %s16 = ssub.s32 %s11, 1
      %s17 = ssub.s32 %s11, 2
      %s27 = sadd.s32 1, %s20
      %p28 = scmp.ge.s32.totalorder %s27, 1
      %s29 = scalar_select %p28, 0, %s27
      %s30 = sadd.s32 1, %s19
      %s31 = scalar_select %p28, %s30, %s19
      %p32 = scmp.ge.s32.totalorder %s31, 2
      %s33 = scalar_select %p32, 0, %s31
      %s34 = sadd.s32 1, %s18
      %s35 = scalar_select %p32, %s34, %s18
      %p36 = scmp.ge.s32.totalorder %s35, 1
      %s37 = scalar_select %p36, 0, %s35
      %s38 = ssub.s32 %s18, %s37
      %s39 = ssub.s32 %s20, %s29
      %s40 = sor.u32 %s38, %s39
      %p41 = scmp.eq.s32.totalorder %s40, 0
      %s43 = sadd.s32 %s42, 1
      %s44 = scalar_select %p41, %s42, %s43
      %p47 = pneg %p41
      %p48 = scmp.eq.s32.totalorder %s11, 1
      %p49 = por %p47, %p48
      %p50 = scmp.ne.s32.totalorder %s42, %s45
      %p51 = scmp.eq.s32.totalorder %s11, 0
      %p52 = por %p50, %p51
      %p53 = scmp.ne.s32.totalorder %s42, %s45
      %p54 = scmp.eq.s32.totalorder %s16, 1
      %p55 = por %p53, %p54
      %p56 = scmp.ne.s32.totalorder %s45, %s46
      %p57 = scmp.eq.s32.totalorder %s16, 0
      %p58 = por %p56, %p57
      %p59 = scmp.ne.s32.totalorder %s45, %s46
      %p60 = scmp.eq.s32.totalorder %s17, 1
      %p61 = por %p59, %p60
      %p63 = scmp.ne.s32.totalorder %s46, %s62
      %p64 = scmp.eq.s32.totalorder %s17, 0
      %p65 = por %p63, %p64
      %s66 = ssub.s32 %s20, %s29
      %s67 = ssub.s32 %s19, %s33
      %s68 = sor.u32 %s66, %s67
      %p69 = scmp.eq.s32.totalorder %s68, 0
      %s71 = sadd.s32 %s70, 1
      %s72 = scalar_select %p69, %s70, %s71
      %p75 = pneg %p69
      %p76 = scmp.eq.s32.totalorder %s11, 1
      %p77 = por %p75, %p76
      %p78 = scmp.ne.s32.totalorder %s70, %s73
      %p79 = scmp.eq.s32.totalorder %s11, 0
      %p80 = por %p78, %p79
      %p81 = scmp.ne.s32.totalorder %s70, %s73
      %p82 = scmp.eq.s32.totalorder %s16, 1
      %p83 = por %p81, %p82
      %p84 = scmp.ne.s32.totalorder %s73, %s74
      %p85 = scmp.eq.s32.totalorder %s16, 0
      %p86 = por %p84, %p85
      %p87 = scmp.ne.s32.totalorder %s73, %s74
      %p88 = scmp.eq.s32.totalorder %s17, 1
      %p89 = por %p87, %p88
      %p91 = scmp.ne.s32.totalorder %s74, %s90
      %p92 = scmp.eq.s32.totalorder %s17, 0
      %p93 = por %p91, %p92
      %s94 = ssub.s32 %s18, %s37
      %s95 = ssub.s32 %s19, %s33
      %s96 = sor.u32 %s94, %s95
      %p97 = scmp.eq.s32.totalorder %s96, 0
      %s99 = sadd.s32 %s98, 1
      %s100 = scalar_select %p97, %s98, %s99
      %p103 = pneg %p97
      %p104 = scmp.eq.s32.totalorder %s11, 1
      %p105 = por %p103, %p104
      %p106 = scmp.ne.s32.totalorder %s98, %s101
      %p107 = scmp.eq.s32.totalorder %s11, 0
      %p108 = por %p106, %p107
      %p109 = scmp.ne.s32.totalorder %s98, %s101
      %p110 = scmp.eq.s32.totalorder %s16, 1
      %p111 = por %p109, %p110
      %p112 = scmp.ne.s32.totalorder %s101, %s102
      %p113 = scmp.eq.s32.totalorder %s16, 0
      %p114 = por %p112, %p113
      %p115 = scmp.ne.s32.totalorder %s101, %s102
      %p116 = scmp.eq.s32.totalorder %s17, 1
      %p117 = por %p115, %p116
      %p119 = scmp.ne.s32.totalorder %s102, %s118
      %p120 = scmp.eq.s32.totalorder %s17, 0
      %p121 = por %p119, %p120
      %p122 = scmp.le.s32.totalorder 1, %s11
      %p123 = scmp.lt.s32.totalorder %s11, 3
      %p124 = pnand %p122, %p123
      %p125 = pneg %p124
      // Predicated region
      $region9: #{_lambda_.13} parent=5 // pred_check
        _
      $region10: #{_lambda_.13} parent=5 // pred_check_branch
        %127 = sbr.rel (%p124) target = $region12
      $region11: #{_lambda_.13} parent=5 // pred_region
        %s128 = ssub.s32 %s11, 1
        // Predicated region
        $region13: #{_lambda_.13} parent=11 // pred_check
          %p129 = pneg %p58
        $region14: #{_lambda_.13} parent=11 // pred_check_branch
          %131 = sbr.rel (%p129) target = $region16
        $region15: #{_lambda_.13} parent=11 // pred_region
          %s132 = smul.u32 4, %s21
          %s133 = smul.u32 2, %s23
          %p134 = scmp.lt.s32.totalorder %s132, 3
          %s135 = scalar_select %p134, %s132, 3
          %p136 = scmp.lt.s32.totalorder %s133, 1
          %s137 = scalar_select %p136, %s133, 1
          %s138 = smul.addr %s135, 2
          %s139 = sadd.s32 %s137, %s138
          %s140 = smul.addr %s139, 4
          %s141 = scalar_lea.vmem %s0, %s140
          %s142 = smul.u32 4, %s21
          %s143 = smul.u32 2, %s23
        $region16: #{_lambda_.13} parent=11 // pred_fallthru
          _
      $region12: #{_lambda_.13} parent=5 // pred_fallthru
        _
      %p144 = scmp.lt.s32.totalorder %s11, 2
      // Predicated region
      $region17: #{_lambda_.13} parent=5 // pred_check
        %p145 = pneg %p144
      $region18: #{_lambda_.13} parent=5 // pred_check_branch
        %147 = sbr.rel (%p145) target = $region20
      $region19: #{_lambda_.13} parent=5 // pred_region
        // Predicated region
        $region21: #{_lambda_.13} parent=19 // pred_check
          %p148 = pneg %p80
        $region22: #{_lambda_.13} parent=19 // pred_check_branch
          %150 = sbr.rel (%p148) target = $region24
        $region23: #{_lambda_.13} parent=19 // pred_region
          %s151 = sand.u32 %s70, 1
          %s152 = scalar_lea.sflag [#allocation4], %s151
          %s153 = sand.u32 %s70, 1
          %s154 = smul.addr %s153, 512
          %s155 = scalar_lea.vmem [#allocation3], %s154
          %s156 = smul.u32 32, %s20
          %s157 = smul.u32 4, %s19
          %s159 = ssub.s32 8192, 8192
          %160 = vsyncadd %s152, %s159
          %s161 = smul.addr %s156, 8
          %s162 = sadd.s32 %s157, %s161
          %s163 = smul.addr %s162, 64
          %s164 = scalar_lea.hbm %s1, %s163
          %s165 = sshll.u32 %s155, 4
          %s166 = int_to_ptr.vmem [resolvable:$true] %s165
          %171 = dma.hbm_to_vmem [thread:$0]  %s164, 8192, %s166, %s152, 512, 256, 16
        $region24: #{_lambda_.13} parent=19 // pred_fallthru
          _
      $region20: #{_lambda_.13} parent=5 // pred_fallthru
        _
      %p172 = scmp.le.s32.totalorder 1, %s11
      %p173 = scmp.lt.s32.totalorder %s11, 3
      %p174 = pnand %p172, %p173
      %p175 = pneg %p174
      // Predicated region
      $region25: #{_lambda_.13} parent=5 // pred_check
        _
      $region26: #{_lambda_.13} parent=5 // pred_check_branch
        %177 = sbr.rel (%p174) target = $region28
      $region27: #{_lambda_.13} parent=5 // pred_region
        %s178 = ssub.s32 %s11, 1
        %s179 = sand.u32 %s73, 1
        %s180 = scalar_lea.sflag [#allocation4], %s179
        %s181 = sand.u32 %s73, 1
        %s182 = smul.addr %s181, 512
        %s183 = scalar_lea.vmem [#allocation3], %s182
        // Predicated region
        $region29: #{_lambda_.13} parent=27 // pred_check
          %p184 = pneg %p86
        $region30: #{_lambda_.13} parent=27 // pred_check_branch
          %186 = sbr.rel (%p184) target = $region32
        $region31: #{_lambda_.13} parent=27 // pred_region
          %187 = dma.done %s180, 8192
        $region32: #{_lambda_.13} parent=27 // pred_fallthru
          _
        %s188 = smul.u32 4, %s21
        %s189 = smul.u32 2, %s23
        %p190 = scmp.lt.s32.totalorder %s188, 3
        %s191 = scalar_select %p190, %s188, 3
        %p192 = scmp.lt.s32.totalorder %s189, 1
        %s193 = scalar_select %p192, %s189, 1
        %s194 = smul.addr %s191, 2
        %s195 = sadd.s32 %s193, %s194
        %s196 = smul.addr %s195, 4
        %s197 = scalar_lea.vmem %s0, %s196
        %p198 = pneg %p58
        %p199 = pneg %p55
        %s200 = sand.u32 %s73, 1
        %s201 = scalar_lea.sflag [#allocation4], %s200
        %s202 = sand.u32 %s73, 1
        %s203 = smul.addr %s202, 512
        %s204 = scalar_lea.vmem [#allocation3], %s203
        %p205 = pneg %p86
        %p206 = pneg %p83
        %p207 = pneg %p114
        %p208 = pneg %p111
        %s209 = sand.u32 %s101, 1
        %s210 = sand.u32 %s101, 1
        %s211 = smul.addr %s210, 64
        %s212 = scalar_lea.vmem [#allocation5], %s211
        %s213 = smul.u32 4, %s21
        %s214 = smul.u32 2, %s23
        %p215 = scmp.lt.s32.totalorder %s213, 3
        %s216 = scalar_select %p215, %s213, 3
        %p217 = scmp.lt.s32.totalorder %s214, 1
        %s218 = scalar_select %p217, %s214, 1
        %s219 = smul.addr %s216, 2
        %s220 = sadd.s32 %s218, %s219
        %s221 = smul.addr %s220, 4
        %s222 = scalar_lea.vmem %s0, %s221
        %s223 = smul.u32 4, %s21
        %s224 = smul.u32 2, %s23
        %s225 = smul.u32 32, %s23
        %s226 = smul.u32 4, %s22
        %s227 = smul.u32 4, %s21
        %s228 = smul.u32 4, %s22
        %p229 = scmp.eq.s32.totalorder %s23, 0
        // Predicated region
        $region33: #{_lambda_.13} parent=27 // pred_check
          %p230 = pneg %p229
        $region34: #{_lambda_.13} parent=27 // pred_check_branch
          %232 = sbr.rel (%p230) target = $region36
        $region35: #{_lambda_.13} parent=27 // pred_region
          %233 = vst [vmem:[#allocation2] sm:$0xff] 0.0
          %234 = vst [vmem:[#allocation2 + $0x8] sm:$0xff] 0.0
          %235 = vst [vmem:[#allocation2 + $0x10] sm:$0xff] 0.0
          %236 = vst [vmem:[#allocation2 + $0x18] sm:$0xff] 0.0
          %237 = vst [vmem:[#allocation2 + $0x20] sm:$0xff] 0.0
          %238 = vst [vmem:[#allocation2 + $0x28] sm:$0xff] 0.0
          %239 = vst [vmem:[#allocation2 + $0x30] sm:$0xff] 0.0
          %240 = vst [vmem:[#allocation2 + $0x38] sm:$0xff] 0.0
          %241 = vst [vmem:[#allocation2 + $0x40] sm:$0xff] 0.0
          %242 = vst [vmem:[#allocation2 + $0x48] sm:$0xff] 0.0
          %243 = vst [vmem:[#allocation2 + $0x50] sm:$0xff] 0.0
          %244 = vst [vmem:[#allocation2 + $0x58] sm:$0xff] 0.0
          %245 = vst [vmem:[#allocation2 + $0x60] sm:$0xff] 0.0
          %246 = vst [vmem:[#allocation2 + $0x68] sm:$0xff] 0.0
          %247 = vst [vmem:[#allocation2 + $0x70] sm:$0xff] 0.0
          %248 = vst [vmem:[#allocation2 + $0x78] sm:$0xff] 0.0
        $region36: #{_lambda_.13} parent=27 // pred_fallthru
          _
        %v249 = vld [vmem:[#allocation2] sm:$0xff]
        %v250 = vld [vmem:[#allocation2 + $0x8] sm:$0xff]
        %v251 = vld [vmem:[#allocation2 + $0x10] sm:$0xff]
        %v252 = vld [vmem:[#allocation2 + $0x18] sm:$0xff]
        %v253 = vld [vmem:[#allocation2 + $0x20] sm:$0xff]
        %v254 = vld [vmem:[#allocation2 + $0x28] sm:$0xff]
        %v255 = vld [vmem:[#allocation2 + $0x30] sm:$0xff]
        %v256 = vld [vmem:[#allocation2 + $0x38] sm:$0xff]
        %v257 = vld [vmem:[#allocation2 + $0x40] sm:$0xff]
        %v258 = vld [vmem:[#allocation2 + $0x48] sm:$0xff]
        %v259 = vld [vmem:[#allocation2 + $0x50] sm:$0xff]
        %v260 = vld [vmem:[#allocation2 + $0x58] sm:$0xff]
        %v261 = vld [vmem:[#allocation2 + $0x60] sm:$0xff]
        %v262 = vld [vmem:[#allocation2 + $0x68] sm:$0xff]
        %v263 = vld [vmem:[#allocation2 + $0x70] sm:$0xff]
        %v264 = vld [vmem:[#allocation2 + $0x78] sm:$0xff]
        %v265 = vld [vmem:[%s222] sm:$0xff]
        %v266 = vld [vmem:[%s222 + $0x8] sm:$0xff]
        %v267 = vld [vmem:[%s222 + $0x10] sm:$0xff]
        %v268 = vld [vmem:[%s222 + $0x18] sm:$0xff]
        %v269 = vld [vmem:[%s183] sm:$0xff]
        %v270 = vld [vmem:[%s183 + $0x8] sm:$0xff]
        %v271 = vld [vmem:[%s183 + $0x10] sm:$0xff]
        %v272 = vld [vmem:[%s183 + $0x18] sm:$0xff]
        %v273 = vld [vmem:[%s183 + $0x20] sm:$0xff]
        %v274 = vld [vmem:[%s183 + $0x28] sm:$0xff]
        %v275 = vld [vmem:[%s183 + $0x30] sm:$0xff]
        %v276 = vld [vmem:[%s183 + $0x38] sm:$0xff]
        %v277 = vld [vmem:[%s183 + $0x40] sm:$0xff]
        %v278 = vld [vmem:[%s183 + $0x48] sm:$0xff]
        %v279 = vld [vmem:[%s183 + $0x50] sm:$0xff]
        %v280 = vld [vmem:[%s183 + $0x58] sm:$0xff]
        %v281 = vld [vmem:[%s183 + $0x60] sm:$0xff]
        %v282 = vld [vmem:[%s183 + $0x68] sm:$0xff]
        %v283 = vld [vmem:[%s183 + $0x70] sm:$0xff]
        %v284 = vld [vmem:[%s183 + $0x78] sm:$0xff]
        %v285 = vld [vmem:[%s183 + $0x80] sm:$0xff]
        %v286 = vld [vmem:[%s183 + $0x88] sm:$0xff]
        %v287 = vld [vmem:[%s183 + $0x90] sm:$0xff]
        %v288 = vld [vmem:[%s183 + $0x98] sm:$0xff]
        %v289 = vld [vmem:[%s183 + $0xa0] sm:$0xff]
        %v290 = vld [vmem:[%s183 + $0xa8] sm:$0xff]
        %v291 = vld [vmem:[%s183 + $0xb0] sm:$0xff]
        %v292 = vld [vmem:[%s183 + $0xb8] sm:$0xff]
        %v293 = vld [vmem:[%s183 + $0xc0] sm:$0xff]
        %v294 = vld [vmem:[%s183 + $0xc8] sm:$0xff]
        %v295 = vld [vmem:[%s183 + $0xd0] sm:$0xff]
        %v296 = vld [vmem:[%s183 + $0xd8] sm:$0xff]
        %v297 = vld [vmem:[%s183 + $0xe0] sm:$0xff]
        %v298 = vld [vmem:[%s183 + $0xe8] sm:$0xff]
        %v299 = vld [vmem:[%s183 + $0xf0] sm:$0xff]
        %v300 = vld [vmem:[%s183 + $0xf8] sm:$0xff]
        %v301 = vld [vmem:[%s183 + $0x100] sm:$0xff]
        %v302 = vld [vmem:[%s183 + $0x108] sm:$0xff]
        %v303 = vld [vmem:[%s183 + $0x110] sm:$0xff]
        %v304 = vld [vmem:[%s183 + $0x118] sm:$0xff]
        %v305 = vld [vmem:[%s183 + $0x120] sm:$0xff]
        %v306 = vld [vmem:[%s183 + $0x128] sm:$0xff]
        %v307 = vld [vmem:[%s183 + $0x130] sm:$0xff]
        %v308 = vld [vmem:[%s183 + $0x138] sm:$0xff]
        %v309 = vld [vmem:[%s183 + $0x140] sm:$0xff]
        %v310 = vld [vmem:[%s183 + $0x148] sm:$0xff]
        %v311 = vld [vmem:[%s183 + $0x150] sm:$0xff]
        %v312 = vld [vmem:[%s183 + $0x158] sm:$0xff]
        %v313 = vld [vmem:[%s183 + $0x160] sm:$0xff]
        %v314 = vld [vmem:[%s183 + $0x168] sm:$0xff]
        %v315 = vld [vmem:[%s183 + $0x170] sm:$0xff]
        %v316 = vld [vmem:[%s183 + $0x178] sm:$0xff]
        %v317 = vld [vmem:[%s183 + $0x180] sm:$0xff]
        %v318 = vld [vmem:[%s183 + $0x188] sm:$0xff]
        %v319 = vld [vmem:[%s183 + $0x190] sm:$0xff]
        %v320 = vld [vmem:[%s183 + $0x198] sm:$0xff]
        %v321 = vld [vmem:[%s183 + $0x1a0] sm:$0xff]
        %v322 = vld [vmem:[%s183 + $0x1a8] sm:$0xff]
        %v323 = vld [vmem:[%s183 + $0x1b0] sm:$0xff]
        %v324 = vld [vmem:[%s183 + $0x1b8] sm:$0xff]
        %v325 = vld [vmem:[%s183 + $0x1c0] sm:$0xff]
        %v326 = vld [vmem:[%s183 + $0x1c8] sm:$0xff]
        %v327 = vld [vmem:[%s183 + $0x1d0] sm:$0xff]
        %v328 = vld [vmem:[%s183 + $0x1d8] sm:$0xff]
        %v329 = vld [vmem:[%s183 + $0x1e0] sm:$0xff]
        %v330 = vld [vmem:[%s183 + $0x1e8] sm:$0xff]
        %v331 = vld [vmem:[%s183 + $0x1f0] sm:$0xff]
        %v332 = vld [vmem:[%s183 + $0x1f8] sm:$0xff]
        %v337 = vunpack.c.l.b16 %v265
        %v338 = vunpack.c.h.b16 %v265
        %v339 = vunpack.c.l.b16 %v266
        %v340 = vunpack.c.h.b16 %v266
        %v341 = vunpack.c.l.b16 %v267
        %v342 = vunpack.c.h.b16 %v267
        %v343 = vunpack.c.l.b16 %v268
        %v344 = vunpack.c.h.b16 %v268
        %v345 = vpack.c.b16 %v339, %v337
        %v346 = vpack.c.b16 %v340, %v338
        %v347 = vpack.c.b16 %v343, %v341
        %v348 = vpack.c.b16 %v344, %v342
        %v417 = vunpack.c.l.b16 %v269
        %v418 = vunpack.c.h.b16 %v269
        %v419 = vunpack.c.l.b16 %v270
        %v420 = vunpack.c.h.b16 %v270
        %v421 = vunpack.c.l.b16 %v271
        %v422 = vunpack.c.h.b16 %v271
        %v423 = vunpack.c.l.b16 %v272
        %v424 = vunpack.c.h.b16 %v272
        %v425 = vunpack.c.l.b16 %v273
        %v426 = vunpack.c.h.b16 %v273
        %v427 = vunpack.c.l.b16 %v274
        %v428 = vunpack.c.h.b16 %v274
        %v429 = vunpack.c.l.b16 %v275
        %v430 = vunpack.c.h.b16 %v275
        %v431 = vunpack.c.l.b16 %v276
        %v432 = vunpack.c.h.b16 %v276
        %v433 = vunpack.c.l.b16 %v277
        %v434 = vunpack.c.h.b16 %v277
        %v435 = vunpack.c.l.b16 %v278
        %v436 = vunpack.c.h.b16 %v278
        %v437 = vunpack.c.l.b16 %v279
        %v438 = vunpack.c.h.b16 %v279
        %v439 = vunpack.c.l.b16 %v280
        %v440 = vunpack.c.h.b16 %v280
        %v441 = vunpack.c.l.b16 %v281
        %v442 = vunpack.c.h.b16 %v281
        %v443 = vunpack.c.l.b16 %v282
        %v444 = vunpack.c.h.b16 %v282
        %v445 = vunpack.c.l.b16 %v283
        %v446 = vunpack.c.h.b16 %v283
        %v447 = vunpack.c.l.b16 %v284
        %v448 = vunpack.c.h.b16 %v284
        %v449 = vunpack.c.l.b16 %v285
        %v450 = vunpack.c.h.b16 %v285
        %v451 = vunpack.c.l.b16 %v286
        %v452 = vunpack.c.h.b16 %v286
        %v453 = vunpack.c.l.b16 %v287
        %v454 = vunpack.c.h.b16 %v287
        %v455 = vunpack.c.l.b16 %v288
        %v456 = vunpack.c.h.b16 %v288
        %v457 = vunpack.c.l.b16 %v289
        %v458 = vunpack.c.h.b16 %v289
        %v459 = vunpack.c.l.b16 %v290
        %v460 = vunpack.c.h.b16 %v290
        %v461 = vunpack.c.l.b16 %v291
        %v462 = vunpack.c.h.b16 %v291
        %v463 = vunpack.c.l.b16 %v292
        %v464 = vunpack.c.h.b16 %v292
        %v465 = vunpack.c.l.b16 %v293
        %v466 = vunpack.c.h.b16 %v293
        %v467 = vunpack.c.l.b16 %v294
        %v468 = vunpack.c.h.b16 %v294
        %v469 = vunpack.c.l.b16 %v295
        %v470 = vunpack.c.h.b16 %v295
        %v471 = vunpack.c.l.b16 %v296
        %v472 = vunpack.c.h.b16 %v296
        %v473 = vunpack.c.l.b16 %v297
        %v474 = vunpack.c.h.b16 %v297
        %v475 = vunpack.c.l.b16 %v298
        %v476 = vunpack.c.h.b16 %v298
        %v477 = vunpack.c.l.b16 %v299
        %v478 = vunpack.c.h.b16 %v299
        %v479 = vunpack.c.l.b16 %v300
        %v480 = vunpack.c.h.b16 %v300
        %v481 = vunpack.c.l.b16 %v301
        %v482 = vunpack.c.h.b16 %v301
        %v483 = vunpack.c.l.b16 %v302
        %v484 = vunpack.c.h.b16 %v302
        %v485 = vunpack.c.l.b16 %v303
        %v486 = vunpack.c.h.b16 %v303
        %v487 = vunpack.c.l.b16 %v304
        %v488 = vunpack.c.h.b16 %v304
        %v489 = vunpack.c.l.b16 %v305
        %v490 = vunpack.c.h.b16 %v305
        %v491 = vunpack.c.l.b16 %v306
        %v492 = vunpack.c.h.b16 %v306
        %v493 = vunpack.c.l.b16 %v307
        %v494 = vunpack.c.h.b16 %v307
        %v495 = vunpack.c.l.b16 %v308
        %v496 = vunpack.c.h.b16 %v308
        %v497 = vunpack.c.l.b16 %v309
        %v498 = vunpack.c.h.b16 %v309
        %v499 = vunpack.c.l.b16 %v310
        %v500 = vunpack.c.h.b16 %v310
        %v501 = vunpack.c.l.b16 %v311
        %v502 = vunpack.c.h.b16 %v311
        %v503 = vunpack.c.l.b16 %v312
        %v504 = vunpack.c.h.b16 %v312
        %v505 = vunpack.c.l.b16 %v313
        %v506 = vunpack.c.h.b16 %v313
        %v507 = vunpack.c.l.b16 %v314
        %v508 = vunpack.c.h.b16 %v314
        %v509 = vunpack.c.l.b16 %v315
        %v510 = vunpack.c.h.b16 %v315
        %v511 = vunpack.c.l.b16 %v316
        %v512 = vunpack.c.h.b16 %v316
        %v513 = vunpack.c.l.b16 %v317
        %v514 = vunpack.c.h.b16 %v317
        %v515 = vunpack.c.l.b16 %v318
        %v516 = vunpack.c.h.b16 %v318
        %v517 = vunpack.c.l.b16 %v319
        %v518 = vunpack.c.h.b16 %v319
        %v519 = vunpack.c.l.b16 %v320
        %v520 = vunpack.c.h.b16 %v320
        %v521 = vunpack.c.l.b16 %v321
        %v522 = vunpack.c.h.b16 %v321
        %v523 = vunpack.c.l.b16 %v322
        %v524 = vunpack.c.h.b16 %v322
        %v525 = vunpack.c.l.b16 %v323
        %v526 = vunpack.c.h.b16 %v323
        %v527 = vunpack.c.l.b16 %v324
        %v528 = vunpack.c.h.b16 %v324
        %v529 = vunpack.c.l.b16 %v325
        %v530 = vunpack.c.h.b16 %v325
        %v531 = vunpack.c.l.b16 %v326
        %v532 = vunpack.c.h.b16 %v326
        %v533 = vunpack.c.l.b16 %v327
        %v534 = vunpack.c.h.b16 %v327
        %v535 = vunpack.c.l.b16 %v328
        %v536 = vunpack.c.h.b16 %v328
        %v537 = vunpack.c.l.b16 %v329
        %v538 = vunpack.c.h.b16 %v329
        %v539 = vunpack.c.l.b16 %v330
        %v540 = vunpack.c.h.b16 %v330
        %v541 = vunpack.c.l.b16 %v331
        %v542 = vunpack.c.h.b16 %v331
        %v543 = vunpack.c.l.b16 %v332
        %v544 = vunpack.c.h.b16 %v332
        %v545 = vpack.c.b16 %v421, %v417
        %v546 = vpack.c.b16 %v422, %v418
        %v547 = vpack.c.b16 %v423, %v419
        %v548 = vpack.c.b16 %v424, %v420
        %v549 = vpack.c.b16 %v429, %v425
        %v550 = vpack.c.b16 %v430, %v426
        %v551 = vpack.c.b16 %v431, %v427
        %v552 = vpack.c.b16 %v432, %v428
        %v553 = vpack.c.b16 %v437, %v433
        %v554 = vpack.c.b16 %v438, %v434
        %v555 = vpack.c.b16 %v439, %v435
        %v556 = vpack.c.b16 %v440, %v436
        %v557 = vpack.c.b16 %v445, %v441
        %v558 = vpack.c.b16 %v446, %v442
        %v559 = vpack.c.b16 %v447, %v443
        %v560 = vpack.c.b16 %v448, %v444
        %v561 = vpack.c.b16 %v453, %v449
        %v562 = vpack.c.b16 %v454, %v450
        %v563 = vpack.c.b16 %v455, %v451
        %v564 = vpack.c.b16 %v456, %v452
        %v565 = vpack.c.b16 %v461, %v457
        %v566 = vpack.c.b16 %v462, %v458
        %v567 = vpack.c.b16 %v463, %v459
        %v568 = vpack.c.b16 %v464, %v460
        %v569 = vpack.c.b16 %v469, %v465
        %v570 = vpack.c.b16 %v470, %v466
        %v571 = vpack.c.b16 %v471, %v467
        %v572 = vpack.c.b16 %v472, %v468
        %v573 = vpack.c.b16 %v477, %v473
        %v574 = vpack.c.b16 %v478, %v474
        %v575 = vpack.c.b16 %v479, %v475
        %v576 = vpack.c.b16 %v480, %v476
        %v577 = vpack.c.b16 %v485, %v481
        %v578 = vpack.c.b16 %v486, %v482
        %v579 = vpack.c.b16 %v487, %v483
        %v580 = vpack.c.b16 %v488, %v484
        %v581 = vpack.c.b16 %v493, %v489
        %v582 = vpack.c.b16 %v494, %v490
        %v583 = vpack.c.b16 %v495, %v491
        %v584 = vpack.c.b16 %v496, %v492
        %v585 = vpack.c.b16 %v501, %v497
        %v586 = vpack.c.b16 %v502, %v498
        %v587 = vpack.c.b16 %v503, %v499
        %v588 = vpack.c.b16 %v504, %v500
        %v589 = vpack.c.b16 %v509, %v505
        %v590 = vpack.c.b16 %v510, %v506
        %v591 = vpack.c.b16 %v511, %v507
        %v592 = vpack.c.b16 %v512, %v508
        %v593 = vpack.c.b16 %v517, %v513
        %v594 = vpack.c.b16 %v518, %v514
        %v595 = vpack.c.b16 %v519, %v515
        %v596 = vpack.c.b16 %v520, %v516
        %v597 = vpack.c.b16 %v525, %v521
        %v598 = vpack.c.b16 %v526, %v522
        %v599 = vpack.c.b16 %v527, %v523
        %v600 = vpack.c.b16 %v528, %v524
        %v601 = vpack.c.b16 %v533, %v529
        %v602 = vpack.c.b16 %v534, %v530
        %v603 = vpack.c.b16 %v535, %v531
        %v604 = vpack.c.b16 %v536, %v532
        %v605 = vpack.c.b16 %v541, %v537
        %v606 = vpack.c.b16 %v542, %v538
        %v607 = vpack.c.b16 %v543, %v539
        %v608 = vpack.c.b16 %v544, %v540
        %673 = vmatprep.subr.bf16.mxu0 %v546
        %674 = vmatpush1.bf16.msra.mxu0 %v545
        %675 = vmatprep.subr.bf16.mxu0 %v550
        %676 = vmatpush1.bf16.msra.mxu0 %v549
        %677 = vmatprep.subr.bf16.mxu0 %v554
        %678 = vmatpush1.bf16.msra.mxu0 %v553
        %679 = vmatprep.subr.bf16.mxu0 %v558
        %680 = vmatpush1.bf16.msra.mxu0 %v557
        %681 = vmatprep.subr.bf16.mxu0 %v562
        %682 = vmatpush1.bf16.msra.mxu0 %v561
        %683 = vmatprep.subr.bf16.mxu0 %v566
        %684 = vmatpush1.bf16.msra.mxu0 %v565
        %685 = vmatprep.subr.bf16.mxu0 %v570
        %686 = vmatpush1.bf16.msra.mxu0 %v569
        %687 = vmatprep.subr.bf16.mxu0 %v574
        %688 = vmatpush1.bf16.msra.mxu0 %v573
        %689 = vmatprep.subr.bf16.mxu0 %v578
        %690 = vmatpush1.bf16.msra.mxu0 %v577
        %691 = vmatprep.subr.bf16.mxu0 %v582
        %692 = vmatpush1.bf16.msra.mxu0 %v581
        %693 = vmatprep.subr.bf16.mxu0 %v586
        %694 = vmatpush1.bf16.msra.mxu0 %v585
        %695 = vmatprep.subr.bf16.mxu0 %v590
        %696 = vmatpush1.bf16.msra.mxu0 %v589
        %697 = vmatprep.subr.bf16.mxu0 %v594
        %698 = vmatpush1.bf16.msra.mxu0 %v593
        %699 = vmatprep.subr.bf16.mxu0 %v598
        %700 = vmatpush1.bf16.msra.mxu0 %v597
        %701 = vmatprep.subr.bf16.mxu0 %v602
        %702 = vmatpush1.bf16.msra.mxu0 %v601
        %703 = vmatprep.subr.bf16.mxu0 %v606
        %704 = vmatpush1.bf16.msra.mxu0 %v605
        %705 = vmatprep.mubr.bf16.mxu0 %v346
        %706 = vmatmul.mubr.bf16.gmra.mrb[0].mxu0 %v345
        %v707 = vpop.f32.mrb[0].mxu0
        %v708 = vadd.f32 0.0, %v707
        %v709 = vpop.f32.mrb[0].mxu0
        %v710 = vadd.f32 0.0, %v709
        %v711 = vpop.f32.mrb[0].mxu0
        %v712 = vadd.f32 0.0, %v711
        %v713 = vpop.f32.mrb[0].mxu0
        %v714 = vadd.f32 0.0, %v713
        %715 = vmatprep.mubr.bf16.mxu0 %v348
        %716 = vmatmul.mubr.bf16.gmra.mrb[0].mxu0 %v347
        %v717 = vpop.f32.mrb[0].mxu0
        %v718 = vadd.f32 0.0, %v717
        %v719 = vpop.f32.mrb[0].mxu0
        %v720 = vadd.f32 0.0, %v719
        %v721 = vpop.f32.mrb[0].mxu0
        %v722 = vadd.f32 0.0, %v721
        %v723 = vpop.f32.mrb[0].mxu0
        %v724 = vadd.f32 0.0, %v723
        %725 = vdwg.mxu0
        %726 = vmatprep.subr.bf16.mxu0 %v548
        %727 = vmatpush1.bf16.msra.mxu0 %v547
        %728 = vmatprep.subr.bf16.mxu0 %v552
        %729 = vmatpush1.bf16.msra.mxu0 %v551
        %730 = vmatprep.subr.bf16.mxu0 %v556
        %731 = vmatpush1.bf16.msra.mxu0 %v555
        %732 = vmatprep.subr.bf16.mxu0 %v560
        %733 = vmatpush1.bf16.msra.mxu0 %v559
        %734 = vmatprep.subr.bf16.mxu0 %v564
        %735 = vmatpush1.bf16.msra.mxu0 %v563
        %736 = vmatprep.subr.bf16.mxu0 %v568
        %737 = vmatpush1.bf16.msra.mxu0 %v567
        %738 = vmatprep.subr.bf16.mxu0 %v572
        %739 = vmatpush1.bf16.msra.mxu0 %v571
        %740 = vmatprep.subr.bf16.mxu0 %v576
        %741 = vmatpush1.bf16.msra.mxu0 %v575
        %742 = vmatprep.subr.bf16.mxu0 %v580
        %743 = vmatpush1.bf16.msra.mxu0 %v579
        %744 = vmatprep.subr.bf16.mxu0 %v584
        %745 = vmatpush1.bf16.msra.mxu0 %v583
        %746 = vmatprep.subr.bf16.mxu0 %v588
        %747 = vmatpush1.bf16.msra.mxu0 %v587
        %748 = vmatprep.subr.bf16.mxu0 %v592
        %749 = vmatpush1.bf16.msra.mxu0 %v591
        %750 = vmatprep.subr.bf16.mxu0 %v596
        %751 = vmatpush1.bf16.msra.mxu0 %v595
        %752 = vmatprep.subr.bf16.mxu0 %v600
        %753 = vmatpush1.bf16.msra.mxu0 %v599
        %754 = vmatprep.subr.bf16.mxu0 %v604
        %755 = vmatpush1.bf16.msra.mxu0 %v603
        %756 = vmatprep.subr.bf16.mxu0 %v608
        %757 = vmatpush1.bf16.msra.mxu0 %v607
        %758 = vmatprep.mubr.bf16.mxu0 %v346
        %759 = vmatmul.mubr.bf16.gmra.mrb[0].mxu0 %v345
        %v760 = vpop.f32.mrb[0].mxu0
        %v761 = vadd.f32 0.0, %v760
        %v762 = vpop.f32.mrb[0].mxu0
        %v763 = vadd.f32 0.0, %v762
        %v764 = vpop.f32.mrb[0].mxu0
        %v765 = vadd.f32 0.0, %v764
        %v766 = vpop.f32.mrb[0].mxu0
        %v767 = vadd.f32 0.0, %v766
        %768 = vmatprep.mubr.bf16.mxu0 %v348
        %769 = vmatmul.mubr.bf16.gmra.mrb[0].mxu0 %v347
        %v770 = vpop.f32.mrb[0].mxu0
        %v771 = vadd.f32 0.0, %v770
        %v772 = vpop.f32.mrb[0].mxu0
        %v773 = vadd.f32 0.0, %v772
        %v774 = vpop.f32.mrb[0].mxu0
        %v775 = vadd.f32 0.0, %v774
        %v776 = vpop.f32.mrb[0].mxu0
        %v777 = vadd.f32 0.0, %v776
        %778 = vdwg.mxu0
        %v779 = vadd.f32 %v249, %v708
        %v780 = vadd.f32 %v250, %v710
        %v781 = vadd.f32 %v251, %v761
        %v782 = vadd.f32 %v252, %v763
        %v783 = vadd.f32 %v253, %v712
        %v784 = vadd.f32 %v254, %v714
        %v785 = vadd.f32 %v255, %v765
        %v786 = vadd.f32 %v256, %v767
        %v787 = vadd.f32 %v257, %v718
        %v788 = vadd.f32 %v258, %v720
        %v789 = vadd.f32 %v259, %v771
        %v790 = vadd.f32 %v260, %v773
        %v791 = vadd.f32 %v261, %v722
        %v792 = vadd.f32 %v262, %v724
        %v793 = vadd.f32 %v263, %v775
        %v794 = vadd.f32 %v264, %v777
        %795 = vst [vmem:[#allocation2] sm:$0xff] %v779
        %796 = vst [vmem:[#allocation2 + $0x8] sm:$0xff] %v780
        %797 = vst [vmem:[#allocation2 + $0x10] sm:$0xff] %v781
        %798 = vst [vmem:[#allocation2 + $0x18] sm:$0xff] %v782
        %799 = vst [vmem:[#allocation2 + $0x20] sm:$0xff] %v783
        %800 = vst [vmem:[#allocation2 + $0x28] sm:$0xff] %v784
        %801 = vst [vmem:[#allocation2 + $0x30] sm:$0xff] %v785
        %802 = vst [vmem:[#allocation2 + $0x38] sm:$0xff] %v786
        %803 = vst [vmem:[#allocation2 + $0x40] sm:$0xff] %v787
        %804 = vst [vmem:[#allocation2 + $0x48] sm:$0xff] %v788
        %805 = vst [vmem:[#allocation2 + $0x50] sm:$0xff] %v789
        %806 = vst [vmem:[#allocation2 + $0x58] sm:$0xff] %v790
        %807 = vst [vmem:[#allocation2 + $0x60] sm:$0xff] %v791
        %808 = vst [vmem:[#allocation2 + $0x68] sm:$0xff] %v792
        %809 = vst [vmem:[#allocation2 + $0x70] sm:$0xff] %v793
        %810 = vst [vmem:[#allocation2 + $0x78] sm:$0xff] %v794
        // Predicated region
        $region37: #{_lambda_.13} parent=27 // pred_check
          %p811 = pneg %p229
        $region38: #{_lambda_.13} parent=27 // pred_check_branch
          %813 = sbr.rel (%p811) target = $region40
        $region39: #{_lambda_.13} parent=27 // pred_region
          %v814 = vld [vmem:[#allocation2] sm:$0xff]
          %v815 = vld [vmem:[#allocation2 + $0x8] sm:$0xff]
          %v816 = vld [vmem:[#allocation2 + $0x10] sm:$0xff]
          %v817 = vld [vmem:[#allocation2 + $0x18] sm:$0xff]
          %v818 = vld [vmem:[#allocation2 + $0x20] sm:$0xff]
          %v819 = vld [vmem:[#allocation2 + $0x28] sm:$0xff]
          %v820 = vld [vmem:[#allocation2 + $0x30] sm:$0xff]
          %v821 = vld [vmem:[#allocation2 + $0x38] sm:$0xff]
          %v822 = vld [vmem:[#allocation2 + $0x40] sm:$0xff]
          %v823 = vld [vmem:[#allocation2 + $0x48] sm:$0xff]
          %v824 = vld [vmem:[#allocation2 + $0x50] sm:$0xff]
          %v825 = vld [vmem:[#allocation2 + $0x58] sm:$0xff]
          %v826 = vld [vmem:[#allocation2 + $0x60] sm:$0xff]
          %v827 = vld [vmem:[#allocation2 + $0x68] sm:$0xff]
          %v828 = vld [vmem:[#allocation2 + $0x70] sm:$0xff]
          %v829 = vld [vmem:[#allocation2 + $0x78] sm:$0xff]
          %v830 = vpack.c.bf16 %v818, %v814
          %v831 = vpack.c.bf16 %v819, %v815
          %v832 = vpack.c.bf16 %v820, %v816
          %v833 = vpack.c.bf16 %v821, %v817
          %v834 = vpack.c.bf16 %v826, %v822
          %v835 = vpack.c.bf16 %v827, %v823
          %v836 = vpack.c.bf16 %v828, %v824
          %v837 = vpack.c.bf16 %v829, %v825
          %v846 = vunpack.c.l.b16 %v830
          %v847 = vunpack.c.l.b16 %v831
          %v848 = vunpack.c.l.b16 %v832
          %v849 = vunpack.c.l.b16 %v833
          %v850 = vunpack.c.h.b16 %v830
          %v851 = vunpack.c.h.b16 %v831
          %v852 = vunpack.c.h.b16 %v832
          %v853 = vunpack.c.h.b16 %v833
          %v854 = vunpack.c.l.b16 %v834
          %v855 = vunpack.c.l.b16 %v835
          %v856 = vunpack.c.l.b16 %v836
          %v857 = vunpack.c.l.b16 %v837
          %v858 = vunpack.c.h.b16 %v834
          %v859 = vunpack.c.h.b16 %v835
          %v860 = vunpack.c.h.b16 %v836
          %v861 = vunpack.c.h.b16 %v837
          %v862 = vpack.c.b16 %v847, %v846
          %v863 = vpack.c.b16 %v849, %v848
          %v864 = vpack.c.b16 %v851, %v850
          %v865 = vpack.c.b16 %v853, %v852
          %v866 = vpack.c.b16 %v855, %v854
          %v867 = vpack.c.b16 %v857, %v856
          %v868 = vpack.c.b16 %v859, %v858
          %v869 = vpack.c.b16 %v861, %v860
          %878 = vst [vmem:[%s212] sm:$0xff] %v862
          %879 = vst [vmem:[%s212 + $0x8] sm:$0xff] %v863
          %880 = vst [vmem:[%s212 + $0x10] sm:$0xff] %v864
          %881 = vst [vmem:[%s212 + $0x18] sm:$0xff] %v865
          %882 = vst [vmem:[%s212 + $0x20] sm:$0xff] %v866
          %883 = vst [vmem:[%s212 + $0x28] sm:$0xff] %v867
          %884 = vst [vmem:[%s212 + $0x30] sm:$0xff] %v868
          %885 = vst [vmem:[%s212 + $0x38] sm:$0xff] %v869
        $region40: #{_lambda_.13} parent=27 // pred_fallthru
          _
        %s886 = sand.u32 %s101, 1
        %s887 = sand.u32 %s101, 1
        %s888 = smul.addr %s887, 64
        %s889 = scalar_lea.vmem [#allocation5], %s888
        // Predicated region
        $region41: #{_lambda_.13} parent=27 // pred_check
          %p890 = pneg %p111
        $region42: #{_lambda_.13} parent=27 // pred_check_branch
          %892 = sbr.rel (%p890) target = $region44
        $region43: #{_lambda_.13} parent=27 // pred_region
          %s893 = smul.u32 4, %s21
          %s894 = smul.u32 4, %s22
          %s895 = smul.addr %s893, 8
          %s896 = sadd.s32 %s894, %s895
          %s897 = smul.addr %s896, 4
          %s898 = scalar_lea.vmem %s2, %s897
          // Predicated region
          $region45: #{_lambda_.13} parent=43 // pred_check
            _
          $region46: #{_lambda_.13} parent=43 // pred_check_branch
            %900 = sbr.rel (0) target = $region48
          $region47: #{_lambda_.13} parent=43 // pred_region
            // Predicated region
            $region49: #{_lambda_.13} parent=47 // pred_check
              _
            $region50: #{_lambda_.13} parent=47 // pred_check_branch
              %902 = sbr.rel (0) target = $region52
            $region51: #{_lambda_.13} parent=47 // pred_region
              loop: start=0, step=1, limit=1
              $region53: #{_lambda_.13} parent=51 // loop_pre_header
                _
              $region54: #{_lambda_.13} parent=51 // loop_header
                %s904 = sphi 0, %s908
                %p905 = scmp.ge.s32.totalorder %s904, 1
                %s909 = sphi %s889, %s889
                %s910 = sphi %s898, %s898
              $region55: #{_lambda_.13} parent=51 // loop_header_branch
                %907 = sbr.rel (%p905) target = $region59
              $region56: #{_lambda_.13} parent=51 // loop_body
                %v911 = vld [vmem:[%s909] sm:$0xff]
                %912 = vst [vmem:[%s910] sm:$0xff] %v911
                %v913 = vld [vmem:[%s909 + $0x8] sm:$0xff]
                %914 = vst [vmem:[%s910 + $0x8] sm:$0xff] %v913
                %v915 = vld [vmem:[%s909 + $0x10] sm:$0xff]
                %916 = vst [vmem:[%s910 + $0x20] sm:$0xff] %v915
                %v917 = vld [vmem:[%s909 + $0x18] sm:$0xff]
                %918 = vst [vmem:[%s910 + $0x28] sm:$0xff] %v917
                %v919 = vld [vmem:[%s909 + $0x20] sm:$0xff]
                %920 = vst [vmem:[%s910 + $0x40] sm:$0xff] %v919
                %v921 = vld [vmem:[%s909 + $0x28] sm:$0xff]
                %922 = vst [vmem:[%s910 + $0x48] sm:$0xff] %v921
                %v923 = vld [vmem:[%s909 + $0x30] sm:$0xff]
                %924 = vst [vmem:[%s910 + $0x60] sm:$0xff] %v923
                %v925 = vld [vmem:[%s909 + $0x38] sm:$0xff]
                %926 = vst [vmem:[%s910 + $0x68] sm:$0xff] %v925
              $region57: #{_lambda_.13} parent=51 // loop_footer
                %s908 = sadd.s32 1, %s904
              $region58: #{_lambda_.13} parent=51 // loop_footer_branch
                %903 = sbr.rel target = $region54
              $region59: #{_lambda_.13} parent=51 // loop_exit
                _
            $region52: #{_lambda_.13} parent=47 // pred_fallthru
              _
            // Predicated region
            $region60: #{_lambda_.13} parent=47 // pred_check
              _
            $region61: #{_lambda_.13} parent=47 // pred_check_branch
              %928 = sbr.rel target = $region63
            $region62: #{_lambda_.13} parent=47 // pred_region
              _
            $region63: #{_lambda_.13} parent=47 // pred_fallthru
              _
          $region48: #{_lambda_.13} parent=43 // pred_fallthru
            _
          %929 = vnop
        $region44: #{_lambda_.13} parent=27 // pred_fallthru
          _
      $region28: #{_lambda_.13} parent=5 // pred_fallthru
        _
      %p930 = scmp.le.s32.totalorder 2, %s11
      // Predicated region
      $region64: #{_lambda_.13} parent=5 // pred_check
        %p931 = pneg %p930
      $region65: #{_lambda_.13} parent=5 // pred_check_branch
        %933 = sbr.rel (%p931) target = $region67
      $region66: #{_lambda_.13} parent=5 // pred_region
        %s934 = ssub.s32 %s11, 2
        // Predicated region
        $region68: #{_lambda_.13} parent=66 // pred_check
          %p935 = pneg %p117
        $region69: #{_lambda_.13} parent=66 // pred_check_branch
          %937 = sbr.rel (%p935) target = $region71
        $region70: #{_lambda_.13} parent=66 // pred_region
          %s938 = sand.u32 %s102, 1
          %s939 = sand.u32 %s102, 1
          %s940 = smul.addr %s939, 64
          %s941 = scalar_lea.vmem [#allocation5], %s940
        $region71: #{_lambda_.13} parent=66 // pred_fallthru
          _
      $region67: #{_lambda_.13} parent=5 // pred_fallthru
        _
    $region6: #{_lambda_.13} parent=1 // loop_footer
      %s15 = sadd.s32 1, %s11
    $region7: #{_lambda_.13} parent=1 // loop_footer_branch
      %10 = sbr.rel target = $region3
    $region8: #{_lambda_.13} parent=1 // loop_exit
      _
    %942 = vsyncpa [#allocation4], 1
    %s943 = scalar_lea.sflag [#allocation4], 1
    %944 = vsyncpa %s943, 1

// kernel: _lambda_.25
$region0: #{_lambda_.25}
  #allocation0 [shape = 'u32[]', space=smem, size = 0x4, offset = 0x4, fixed_abs, tag = 'smem constant byte address 0x4 - core index']
  #allocation1 [shape = 'u32[144,128]{1,0:T(1,128)}', space=vmem, size = 0x12000, scoped, tag = 'internal scratch']
  %s0 = inlined_call_operand.vmem [shape: bf16[32,256], index: 0, kind: input, shape index: {}]
  %s1 = inlined_call_operand.vmem [shape: f32[1,256], index: 1, kind: input, shape index: {}]
  %s2 = inlined_call_operand.hbm [shape: bf16[32,256], index: 2, kind: output, shape index: {}]
  %s3 = sld [smem:[#allocation0]]
  $region18: #{_lambda_.25} parent=0
    _
  %s5 = ssub.s32 1, %s3
  %s6 = scalar_select 0, %s5, %s3
  $region1: #{_lambda_.25} parent=0
    #allocation2 [shape = 'u8[16384]{0}', space=vmem, size = 0x4000, scoped, tag = 'output window, operand 0, single buffered']
    #allocation3 [shape = 's32[1]{0}', space=sflag, size = 0x4, scoped, tag = 'scoped memory for _lambda_.25']
    %7 = vsyncpa [#allocation3], 0
    // Predicated region
    $region2: #{_lambda_.25} parent=1 // pred_check
      _
    $region3: #{_lambda_.25} parent=1 // pred_check_branch
      %9 = sbr.rel (0) target = $region5
    $region4: #{_lambda_.25} parent=1 // pred_region
      _
    $region5: #{_lambda_.25} parent=1 // pred_fallthru
      _
    // Predicated region
    $region6: #{_lambda_.25} parent=1 // pred_check
      _
    $region7: #{_lambda_.25} parent=1 // pred_check_branch
      %11 = sbr.rel (0) target = $region9
    $region8: #{_lambda_.25} parent=1 // pred_region
      _
    $region9: #{_lambda_.25} parent=1 // pred_fallthru
      _
    %v12 = vld [vmem:[%s0] sm:$0xff]
    %v13 = vld [vmem:[%s0 + $0x8] sm:$0xff]
    %v14 = vld [vmem:[%s0 + $0x10] sm:$0xff]
    %v15 = vld [vmem:[%s0 + $0x18] sm:$0xff]
    %v16 = vunpack.c.l.bf16 %v12
    %v17 = vunpack.c.h.bf16 %v12
    %v18 = vunpack.c.l.bf16 %v13
    %v19 = vunpack.c.h.bf16 %v13
    %v20 = vunpack.c.l.bf16 %v14
    %v21 = vunpack.c.h.bf16 %v14
    %v22 = vunpack.c.l.bf16 %v15
    %v23 = vunpack.c.h.bf16 %v15
    %v24 = vmul.f32 %v16, %v16
    %v25 = vmul.f32 %v17, %v17
    %v26 = vmul.f32 %v18, %v18
    %v27 = vmul.f32 %v19, %v19
    %v28 = vmul.f32 %v20, %v20
    %v29 = vmul.f32 %v21, %v21
    %v30 = vmul.f32 %v22, %v22
    %v31 = vmul.f32 %v23, %v23
    %v32 = vadd.f32 %v24, %v25
    %33 = vadd.xlane.f32.xlu0 %v32
    %v34 = vpop.xlane.xlu0 %33
    %v35 = vadd.f32 %v26, %v27
    %36 = vadd.xlane.f32.xlu0 %v35
    %v37 = vpop.xlane.xlu0 %36
    %v38 = vadd.f32 %v28, %v29
    %39 = vadd.xlane.f32.xlu0 %v38
    %v40 = vpop.xlane.xlu0 %39
    %v41 = vadd.f32 %v30, %v31
    %42 = vadd.xlane.f32.xlu0 %v41
    %v43 = vpop.xlane.xlu0 %42
    %v44 = vrcp.pop 256.0
    %v45 = vmul.f32 %v34, %v44
    %v46 = vmul.f32 %v37, %v44
    %v47 = vmul.f32 %v40, %v44
    %v48 = vmul.f32 %v43, %v44
    %v49 = vadd.f32 %v45, 1e-06
    %v50 = vadd.f32 %v46, 1e-06
    %v51 = vadd.f32 %v47, 1e-06
    %v52 = vadd.f32 %v48, 1e-06
    %v53 = vrsqrt.pop %v49
    %v54 = vmul.f32 %v49, %v53
    %vm55 = vcmp.eq.f32.partialorder %v49, inf
    %v56 = vsel %vm55, %v49, %v54
    %vm57 = vcmp.eq.f32.partialorder %v49, 0.0
    %v58 = vand.u32 %v49, 2147483648
    %v59 = vsel %vm57, %v58, %v56
    %v60 = vrsqrt.pop %v50
    %v61 = vmul.f32 %v50, %v60
    %vm62 = vcmp.eq.f32.partialorder %v50, inf
    %v63 = vsel %vm62, %v50, %v61
    %vm64 = vcmp.eq.f32.partialorder %v50, 0.0
    %v65 = vand.u32 %v50, 2147483648
    %v66 = vsel %vm64, %v65, %v63
    %v67 = vrsqrt.pop %v51
    %v68 = vmul.f32 %v51, %v67
    %vm69 = vcmp.eq.f32.partialorder %v51, inf
    %v70 = vsel %vm69, %v51, %v68
    %vm71 = vcmp.eq.f32.partialorder %v51, 0.0
    %v72 = vand.u32 %v51, 2147483648
    %v73 = vsel %vm71, %v72, %v70
    %v74 = vrsqrt.pop %v52
    %v75 = vmul.f32 %v52, %v74
    %vm76 = vcmp.eq.f32.partialorder %v52, inf
    %v77 = vsel %vm76, %v52, %v75
    %vm78 = vcmp.eq.f32.partialorder %v52, 0.0
    %v79 = vand.u32 %v52, 2147483648
    %v80 = vsel %vm78, %v79, %v77
    %v81 = vmul.f32 %v16, %v59
    %v82 = vmul.f32 %v17, %v59
    %v83 = vmul.f32 %v18, %v66
    %v84 = vmul.f32 %v19, %v66
    %v85 = vmul.f32 %v20, %v73
    %v86 = vmul.f32 %v21, %v73
    %v87 = vmul.f32 %v22, %v80
    %v88 = vmul.f32 %v23, %v80
    %v89 = vld [vmem:[%s1] sm:$0x3]
    %v90 = vadd.f32 %v89, 1.0
    %v92 = vlaneseq
    %v93 = vshrl.u32 %v92, 7
    %v94 = vsub.s32 0, %v93
    %v95 = vrot.slane %v90, %v94
    %v96 = vlaneseq
    %v97 = vshrl.u32 %v96, 7
    %v98 = vsub.s32 1, %v97
    %v99 = vrot.slane %v90, %v98
    %v102 = vmul.f32 %v81, %v95
    %v103 = vmul.f32 %v82, %v99
    %v104 = vmul.f32 %v83, %v95
    %v105 = vmul.f32 %v84, %v99
    %v106 = vmul.f32 %v85, %v95
    %v107 = vmul.f32 %v86, %v99
    %v108 = vmul.f32 %v87, %v95
    %v109 = vmul.f32 %v88, %v99
    %v110 = vpack.c.bf16 %v104, %v102
    %v111 = vpack.c.bf16 %v105, %v103
    %v112 = vpack.c.bf16 %v108, %v106
    %v113 = vpack.c.bf16 %v109, %v107
    %v118 = vunpack.c.l.b16 %v110
    %v119 = vunpack.c.l.b16 %v111
    %v120 = vunpack.c.h.b16 %v110
    %v121 = vunpack.c.h.b16 %v111
    %v122 = vunpack.c.l.b16 %v112
    %v123 = vunpack.c.l.b16 %v113
    %v124 = vunpack.c.h.b16 %v112
    %v125 = vunpack.c.h.b16 %v113
    %v126 = vpack.c.b16 %v119, %v118
    %v127 = vpack.c.b16 %v121, %v120
    %v128 = vpack.c.b16 %v123, %v122
    %v129 = vpack.c.b16 %v125, %v124
    %134 = vst [vmem:[#allocation2] sm:$0xff] %v126
    %135 = vst [vmem:[#allocation2 + $0x8] sm:$0xff] %v127
    %136 = vst [vmem:[#allocation2 + $0x10] sm:$0xff] %v128
    %137 = vst [vmem:[#allocation2 + $0x18] sm:$0xff] %v129
    // Predicated region
    $region10: #{_lambda_.25} parent=1 // pred_check
      _
    $region11: #{_lambda_.25} parent=1 // pred_check_branch
      %139 = sbr.rel (0) target = $region13
    $region12: #{_lambda_.25} parent=1 // pred_region
      %s141 = ssub.s32 512, 512
      %142 = vsyncadd [#allocation3], %s141
      %s143 = sshll.u32 [#allocation2], 4
      %s144 = int_to_ptr.vmem [resolvable:$true] %s143
      %149 = dma.vmem_to_hbm [thread:$0]  %s144, 512, %s2, [#allocation3], 128, 128, 8
    $region13: #{_lambda_.25} parent=1 // pred_fallthru
      _
    // Predicated region
    $region14: #{_lambda_.25} parent=1 // pred_check
      _
    $region15: #{_lambda_.25} parent=1 // pred_check_branch
      %151 = sbr.rel (0) target = $region17
    $region16: #{_lambda_.25} parent=1 // pred_region
      %152 = dma.done [#allocation3], 512
    $region17: #{_lambda_.25} parent=1 // pred_fallthru
      _
    %153 = vsyncpa [#allocation3], 1

// kernel: _lambda_.17
$region0: #{_lambda_.17}
  #allocation0 [shape = 'u32[]', space=smem, size = 0x4, offset = 0x4, fixed_abs, tag = 'smem constant byte address 0x4 - core index']
  #allocation1 [shape = 'u32[144,128]{1,0:T(1,128)}', space=vmem, size = 0x12000, scoped, tag = 'internal scratch']
  #allocation2 [shape = 'f32[32,256]{1,0:T(8,128)}', space=vmem, size = 0x8000, scoped, tag = 'scratch operand']
  #allocation3 [shape = 'f32[32,256]{1,0:T(8,128)}', space=vmem, size = 0x8000, scoped, tag = 'scratch operand']
  %s0 = inlined_call_operand.vmem [shape: bf16[32,256], index: 0, kind: input, shape index: {}]
  %s1 = inlined_call_operand.vmem [shape: bf16[256,512], index: 1, kind: input, shape index: {}]
  %s2 = inlined_call_operand.vmem [shape: bf16[256,512], index: 2, kind: input, shape index: {}]
  %s3 = inlined_call_operand.vmem [shape: bf16[32,512], index: 3, kind: output, shape index: {}]
  %s4 = sld [smem:[#allocation0]]
  $region163: #{_lambda_.17} parent=0
    _
  %s6 = ssub.s32 1, %s4
  %s7 = scalar_select 0, %s6, %s4
  $region1: #{_lambda_.17} parent=0
    #allocation4 [shape = 'u8[262144]{0}', space=vmem, size = 0x40000, scoped, tag = 'input window, operand 1']
    #allocation5 [shape = 'u8[262144]{0}', space=vmem, size = 0x40000, scoped, tag = 'input window, operand 2']
    #allocation6 [shape = 'u8[32768]{0}', space=vmem, size = 0x8000, scoped, tag = 'output window, operand 0']
    loop: start=0, step=1, limit=4
    $region2: #{_lambda_.17} parent=1 // loop_pre_header
      _
    $region3: #{_lambda_.17} parent=1 // loop_header
      %s9 = sphi 0, %s13
      %p10 = scmp.ge.s32.totalorder %s9, 4
      %s16 = sphi 0, %s35
      %s17 = sphi 0, %s31
      %s18 = sphi 0, %s27
      %s19 = sphi 0, %s16
      %s20 = sphi 0, %s17
      %s21 = sphi 0, %s18
      %s22 = sphi 0, %s19
      %s23 = sphi 0, %s20
      %s24 = sphi 0, %s21
      %s40 = sphi 0, %s42
      %s43 = sphi 0, %s40
      %s44 = sphi 0, %s43
      %s60 = sphi 0, %s44
      %s68 = sphi 0, %s70
      %s71 = sphi 0, %s68
      %s72 = sphi 0, %s71
      %s88 = sphi 0, %s72
      %s96 = sphi 0, %s98
      %s99 = sphi 0, %s96
      %s100 = sphi 0, %s99
      %s116 = sphi 0, %s100
      %s124 = sphi 0, %s126
      %s127 = sphi 0, %s124
      %s128 = sphi 0, %s127
      %s144 = sphi 0, %s128
    $region4: #{_lambda_.17} parent=1 // loop_header_branch
      %12 = sbr.rel (%p10) target = $region8
    $region5: #{_lambda_.17} parent=1 // loop_body
      %s14 = ssub.s32 %s9, 1
      %s15 = ssub.s32 %s9, 2
      %s25 = sadd.s32 1, %s18
      %p26 = scmp.ge.s32.totalorder %s25, 1
      %s27 = scalar_select %p26, 0, %s25
      %s28 = sadd.s32 1, %s17
      %s29 = scalar_select %p26, %s28, %s17
      %p30 = scmp.ge.s32.totalorder %s29, 2
      %s31 = scalar_select %p30, 0, %s29
      %s32 = sadd.s32 1, %s16
      %s33 = scalar_select %p30, %s32, %s16
      %p34 = scmp.ge.s32.totalorder %s33, 1
      %s35 = scalar_select %p34, 0, %s33
      %s36 = ssub.s32 %s16, %s35
      %s37 = ssub.s32 %s18, %s27
      %s38 = sor.u32 %s36, %s37
      %p39 = scmp.eq.s32.totalorder %s38, 0
      %s41 = sadd.s32 %s40, 1
      %s42 = scalar_select %p39, %s40, %s41
      %p45 = pneg %p39
      %p46 = scmp.eq.s32.totalorder %s9, 1
      %p47 = por %p45, %p46
      %p48 = scmp.ne.s32.totalorder %s40, %s43
      %p49 = scmp.eq.s32.totalorder %s9, 0
      %p50 = por %p48, %p49
      %p51 = scmp.ne.s32.totalorder %s40, %s43
      %p52 = scmp.eq.s32.totalorder %s14, 1
      %p53 = por %p51, %p52
      %p54 = scmp.ne.s32.totalorder %s43, %s44
      %p55 = scmp.eq.s32.totalorder %s14, 0
      %p56 = por %p54, %p55
      %p57 = scmp.ne.s32.totalorder %s43, %s44
      %p58 = scmp.eq.s32.totalorder %s15, 1
      %p59 = por %p57, %p58
      %p61 = scmp.ne.s32.totalorder %s44, %s60
      %p62 = scmp.eq.s32.totalorder %s15, 0
      %p63 = por %p61, %p62
      %s64 = ssub.s32 %s18, %s27
      %s65 = ssub.s32 %s17, %s31
      %s66 = sor.u32 %s64, %s65
      %p67 = scmp.eq.s32.totalorder %s66, 0
      %s69 = sadd.s32 %s68, 1
      %s70 = scalar_select %p67, %s68, %s69
      %p73 = pneg %p67
      %p74 = scmp.eq.s32.totalorder %s9, 1
      %p75 = por %p73, %p74
      %p76 = scmp.ne.s32.totalorder %s68, %s71
      %p77 = scmp.eq.s32.totalorder %s9, 0
      %p78 = por %p76, %p77
      %p79 = scmp.ne.s32.totalorder %s68, %s71
      %p80 = scmp.eq.s32.totalorder %s14, 1
      %p81 = por %p79, %p80
      %p82 = scmp.ne.s32.totalorder %s71, %s72
      %p83 = scmp.eq.s32.totalorder %s14, 0
      %p84 = por %p82, %p83
      %p85 = scmp.ne.s32.totalorder %s71, %s72
      %p86 = scmp.eq.s32.totalorder %s15, 1
      %p87 = por %p85, %p86
      %p89 = scmp.ne.s32.totalorder %s72, %s88
      %p90 = scmp.eq.s32.totalorder %s15, 0
      %p91 = por %p89, %p90
      %s92 = ssub.s32 %s18, %s27
      %s93 = ssub.s32 %s17, %s31
      %s94 = sor.u32 %s92, %s93
      %p95 = scmp.eq.s32.totalorder %s94, 0
      %s97 = sadd.s32 %s96, 1
      %s98 = scalar_select %p95, %s96, %s97
      %p101 = pneg %p95
      %p102 = scmp.eq.s32.totalorder %s9, 1
      %p103 = por %p101, %p102
      %p104 = scmp.ne.s32.totalorder %s96, %s99
      %p105 = scmp.eq.s32.totalorder %s9, 0
      %p106 = por %p104, %p105
      %p107 = scmp.ne.s32.totalorder %s96, %s99
      %p108 = scmp.eq.s32.totalorder %s14, 1
      %p109 = por %p107, %p108
      %p110 = scmp.ne.s32.totalorder %s99, %s100
      %p111 = scmp.eq.s32.totalorder %s14, 0
      %p112 = por %p110, %p111
      %p113 = scmp.ne.s32.totalorder %s99, %s100
      %p114 = scmp.eq.s32.totalorder %s15, 1
      %p115 = por %p113, %p114
      %p117 = scmp.ne.s32.totalorder %s100, %s116
      %p118 = scmp.eq.s32.totalorder %s15, 0
      %p119 = por %p117, %p118
      %s120 = ssub.s32 %s16, %s35
      %s121 = ssub.s32 %s17, %s31
      %s122 = sor.u32 %s120, %s121
      %p123 = scmp.eq.s32.totalorder %s122, 0
      %s125 = sadd.s32 %s124, 1
      %s126 = scalar_select %p123, %s124, %s125
      %p129 = pneg %p123
      %p130 = scmp.eq.s32.totalorder %s9, 1
      %p131 = por %p129, %p130
      %p132 = scmp.ne.s32.totalorder %s124, %s127
      %p133 = scmp.eq.s32.totalorder %s9, 0
      %p134 = por %p132, %p133
      %p135 = scmp.ne.s32.totalorder %s124, %s127
      %p136 = scmp.eq.s32.totalorder %s14, 1
      %p137 = por %p135, %p136
      %p138 = scmp.ne.s32.totalorder %s127, %s128
      %p139 = scmp.eq.s32.totalorder %s14, 0
      %p140 = por %p138, %p139
      %p141 = scmp.ne.s32.totalorder %s127, %s128
      %p142 = scmp.eq.s32.totalorder %s15, 1
      %p143 = por %p141, %p142
      %p145 = scmp.ne.s32.totalorder %s128, %s144
      %p146 = scmp.eq.s32.totalorder %s15, 0
      %p147 = por %p145, %p146
      %p148 = scmp.le.s32.totalorder 1, %s9
      %p149 = scmp.lt.s32.totalorder %s9, 3
      %p150 = pnand %p148, %p149
      %p151 = pneg %p150
      // Predicated region
      $region9: #{_lambda_.17} parent=5 // pred_check
        _
      $region10: #{_lambda_.17} parent=5 // pred_check_branch
        %153 = sbr.rel (%p150) target = $region12
      $region11: #{_lambda_.17} parent=5 // pred_region
        %s154 = ssub.s32 %s9, 1
        // Predicated region
        $region13: #{_lambda_.17} parent=11 // pred_check
          %p155 = pneg %p56
        $region14: #{_lambda_.17} parent=11 // pred_check_branch
          %157 = sbr.rel (%p155) target = $region16
        $region15: #{_lambda_.17} parent=11 // pred_region
          %s158 = smul.u32 4, %s19
          %s159 = smul.u32 2, %s21
          %p160 = scmp.lt.s32.totalorder %s158, 3
          %s161 = scalar_select %p160, %s158, 3
          %p162 = scmp.lt.s32.totalorder %s159, 1
          %s163 = scalar_select %p162, %s159, 1
          %s164 = smul.addr %s161, 2
          %s165 = sadd.s32 %s163, %s164
          %s166 = smul.addr %s165, 4
          %s167 = scalar_lea.vmem %s0, %s166
          %s168 = smul.u32 4, %s19
          %s169 = smul.u32 2, %s21
        $region16: #{_lambda_.17} parent=11 // pred_fallthru
          _
      $region12: #{_lambda_.17} parent=5 // pred_fallthru
        _
      %p170 = scmp.lt.s32.totalorder %s9, 2
      // Predicated region
      $region17: #{_lambda_.17} parent=5 // pred_check
        %p171 = pneg %p170
      $region18: #{_lambda_.17} parent=5 // pred_check_branch
        %173 = sbr.rel (%p171) target = $region20
      $region19: #{_lambda_.17} parent=5 // pred_region
        // Predicated region
        $region21: #{_lambda_.17} parent=19 // pred_check
          %p174 = pneg %p78
        $region22: #{_lambda_.17} parent=19 // pred_check_branch
          %176 = sbr.rel (%p174) target = $region24
        $region23: #{_lambda_.17} parent=19 // pred_region
          %s177 = sand.u32 %s68, 1
          %s178 = sand.u32 %s68, 1
          %s179 = smul.addr %s178, 256
          %s180 = scalar_lea.vmem [#allocation4], %s179
          %s181 = smul.u32 32, %s18
          %s182 = smul.u32 2, %s17
          %s183 = smul.addr %s181, 4
          %s184 = sadd.s32 %s182, %s183
          %s185 = smul.addr %s184, 4
          %s186 = scalar_lea.vmem %s1, %s185
          // Predicated region
          $region25: #{_lambda_.17} parent=23 // pred_check
            _
          $region26: #{_lambda_.17} parent=23 // pred_check_branch
            %188 = sbr.rel (0) target = $region28
          $region27: #{_lambda_.17} parent=23 // pred_region
            // Predicated region
            $region29: #{_lambda_.17} parent=27 // pred_check
              _
            $region30: #{_lambda_.17} parent=27 // pred_check_branch
              %190 = sbr.rel (0) target = $region32
            $region31: #{_lambda_.17} parent=27 // pred_region
              // Predicated region
              $region44: #{_lambda_.17} parent=31 // pred_check
                _
              $region45: #{_lambda_.17} parent=31 // pred_check_branch
                %267 = sbr.rel (0) target = $region47
              $region46: #{_lambda_.17} parent=31 // pred_region
                loop: start=0, step=1, limit=1
                $region48: #{_lambda_.17} parent=46 // loop_pre_header
                  _
                $region49: #{_lambda_.17} parent=46 // loop_header
                  %s269 = sphi 0, %s273
                  %p270 = scmp.ge.s32.totalorder %s269, 1
                  %s274 = sphi %s186, %s186
                  %s275 = sphi %s180, %s180
                $region50: #{_lambda_.17} parent=46 // loop_header_branch
                  %272 = sbr.rel (%p270) target = $region54
                $region51: #{_lambda_.17} parent=46 // loop_body
                  %v276 = vld [vmem:[%s274] sm:$0xff]
                  %277 = vst [vmem:[%s275] sm:$0xff] %v276
                  %v278 = vld [vmem:[%s274 + $0x10] sm:$0xff]
                  %279 = vst [vmem:[%s275 + $0x8] sm:$0xff] %v278
                  %v280 = vld [vmem:[%s274 + $0x20] sm:$0xff]
                  %281 = vst [vmem:[%s275 + $0x10] sm:$0xff] %v280
                  %v282 = vld [vmem:[%s274 + $0x30] sm:$0xff]
                  %283 = vst [vmem:[%s275 + $0x18] sm:$0xff] %v282
                  %v284 = vld [vmem:[%s274 + $0x40] sm:$0xff]
                  %285 = vst [vmem:[%s275 + $0x20] sm:$0xff] %v284
                  %v286 = vld [vmem:[%s274 + $0x50] sm:$0xff]
                  %287 = vst [vmem:[%s275 + $0x28] sm:$0xff] %v286
                  %v288 = vld [vmem:[%s274 + $0x60] sm:$0xff]
                  %289 = vst [vmem:[%s275 + $0x30] sm:$0xff] %v288
                  %v290 = vld [vmem:[%s274 + $0x70] sm:$0xff]
                  %291 = vst [vmem:[%s275 + $0x38] sm:$0xff] %v290
                  %v292 = vld [vmem:[%s274 + $0x80] sm:$0xff]
                  %293 = vst [vmem:[%s275 + $0x40] sm:$0xff] %v292
                  %v294 = vld [vmem:[%s274 + $0x90] sm:$0xff]
                  %295 = vst [vmem:[%s275 + $0x48] sm:$0xff] %v294
                  %v296 = vld [vmem:[%s274 + $0xa0] sm:$0xff]
                  %297 = vst [vmem:[%s275 + $0x50] sm:$0xff] %v296
                  %v298 = vld [vmem:[%s274 + $0xb0] sm:$0xff]
                  %299 = vst [vmem:[%s275 + $0x58] sm:$0xff] %v298
                  %v300 = vld [vmem:[%s274 + $0xc0] sm:$0xff]
                  %301 = vst [vmem:[%s275 + $0x60] sm:$0xff] %v300
                  %v302 = vld [vmem:[%s274 + $0xd0] sm:$0xff]
                  %303 = vst [vmem:[%s275 + $0x68] sm:$0xff] %v302
                  %v304 = vld [vmem:[%s274 + $0xe0] sm:$0xff]
                  %305 = vst [vmem:[%s275 + $0x70] sm:$0xff] %v304
                  %v306 = vld [vmem:[%s274 + $0xf0] sm:$0xff]
                  %307 = vst [vmem:[%s275 + $0x78] sm:$0xff] %v306
                  %v308 = vld [vmem:[%s274 + $0x100] sm:$0xff]
                  %309 = vst [vmem:[%s275 + $0x80] sm:$0xff] %v308
                  %v310 = vld [vmem:[%s274 + $0x110] sm:$0xff]
                  %311 = vst [vmem:[%s275 + $0x88] sm:$0xff] %v310
                  %v312 = vld [vmem:[%s274 + $0x120] sm:$0xff]
                  %313 = vst [vmem:[%s275 + $0x90] sm:$0xff] %v312
                  %v314 = vld [vmem:[%s274 + $0x130] sm:$0xff]
                  %315 = vst [vmem:[%s275 + $0x98] sm:$0xff] %v314
                  %v316 = vld [vmem:[%s274 + $0x140] sm:$0xff]
                  %317 = vst [vmem:[%s275 + $0xa0] sm:$0xff] %v316
                  %v318 = vld [vmem:[%s274 + $0x150] sm:$0xff]
                  %319 = vst [vmem:[%s275 + $0xa8] sm:$0xff] %v318
                  %v320 = vld [vmem:[%s274 + $0x160] sm:$0xff]
                  %321 = vst [vmem:[%s275 + $0xb0] sm:$0xff] %v320
                  %v322 = vld [vmem:[%s274 + $0x170] sm:$0xff]
                  %323 = vst [vmem:[%s275 + $0xb8] sm:$0xff] %v322
                  %v324 = vld [vmem:[%s274 + $0x180] sm:$0xff]
                  %325 = vst [vmem:[%s275 + $0xc0] sm:$0xff] %v324
                  %v326 = vld [vmem:[%s274 + $0x190] sm:$0xff]
                  %327 = vst [vmem:[%s275 + $0xc8] sm:$0xff] %v326
                  %v328 = vld [vmem:[%s274 + $0x1a0] sm:$0xff]
                  %329 = vst [vmem:[%s275 + $0xd0] sm:$0xff] %v328
                  %v330 = vld [vmem:[%s274 + $0x1b0] sm:$0xff]
                  %331 = vst [vmem:[%s275 + $0xd8] sm:$0xff] %v330
                  %v332 = vld [vmem:[%s274 + $0x1c0] sm:$0xff]
                  %333 = vst [vmem:[%s275 + $0xe0] sm:$0xff] %v332
                  %v334 = vld [vmem:[%s274 + $0x1d0] sm:$0xff]
                  %335 = vst [vmem:[%s275 + $0xe8] sm:$0xff] %v334
                  %v336 = vld [vmem:[%s274 + $0x1e0] sm:$0xff]
                  %337 = vst [vmem:[%s275 + $0xf0] sm:$0xff] %v336
                  %v338 = vld [vmem:[%s274 + $0x1f0] sm:$0xff]
                  %339 = vst [vmem:[%s275 + $0xf8] sm:$0xff] %v338
                $region52: #{_lambda_.17} parent=46 // loop_footer
                  %s273 = sadd.s32 1, %s269
                $region53: #{_lambda_.17} parent=46 // loop_footer_branch
                  %268 = sbr.rel target = $region49
                $region54: #{_lambda_.17} parent=46 // loop_exit
                  _
              $region47: #{_lambda_.17} parent=31 // pred_fallthru
                _
              // Predicated region
              $region55: #{_lambda_.17} parent=31 // pred_check
                _
              $region56: #{_lambda_.17} parent=31 // pred_check_branch
                %341 = sbr.rel target = $region58
              $region57: #{_lambda_.17} parent=31 // pred_region
                _
              $region58: #{_lambda_.17} parent=31 // pred_fallthru
                _
            $region32: #{_lambda_.17} parent=27 // pred_fallthru
              _
            // Predicated region
            $region33: #{_lambda_.17} parent=27 // pred_check
              _
            $region34: #{_lambda_.17} parent=27 // pred_check_branch
              %192 = sbr.rel target = $region36
            $region35: #{_lambda_.17} parent=27 // pred_region
              loop: start=0, step=1, limit=1
              $region37: #{_lambda_.17} parent=35 // loop_pre_header
                _
              $region38: #{_lambda_.17} parent=35 // loop_header
                %s195 = sphi 0, %s199
                %p196 = scmp.ge.s32.totalorder %s195, 1
                %s200 = sphi %s186, %s186
                %s201 = sphi %s180, %s180
              $region39: #{_lambda_.17} parent=35 // loop_header_branch
                %198 = sbr.rel (%p196) target = $region43
              $region40: #{_lambda_.17} parent=35 // loop_body
                %v202 = vld [vmem:[%s200] sm:$0xff]
                %203 = vst [vmem:[%s201] sm:$0xff] %v202
                %v204 = vld [vmem:[%s200 + $0x10] sm:$0xff]
                %205 = vst [vmem:[%s201 + $0x8] sm:$0xff] %v204
                %v206 = vld [vmem:[%s200 + $0x20] sm:$0xff]
                %207 = vst [vmem:[%s201 + $0x10] sm:$0xff] %v206
                %v208 = vld [vmem:[%s200 + $0x30] sm:$0xff]
                %209 = vst [vmem:[%s201 + $0x18] sm:$0xff] %v208
                %v210 = vld [vmem:[%s200 + $0x40] sm:$0xff]
                %211 = vst [vmem:[%s201 + $0x20] sm:$0xff] %v210
                %v212 = vld [vmem:[%s200 + $0x50] sm:$0xff]
                %213 = vst [vmem:[%s201 + $0x28] sm:$0xff] %v212
                %v214 = vld [vmem:[%s200 + $0x60] sm:$0xff]
                %215 = vst [vmem:[%s201 + $0x30] sm:$0xff] %v214
                %v216 = vld [vmem:[%s200 + $0x70] sm:$0xff]
                %217 = vst [vmem:[%s201 + $0x38] sm:$0xff] %v216
                %v218 = vld [vmem:[%s200 + $0x80] sm:$0xff]
                %219 = vst [vmem:[%s201 + $0x40] sm:$0xff] %v218
                %v220 = vld [vmem:[%s200 + $0x90] sm:$0xff]
                %221 = vst [vmem:[%s201 + $0x48] sm:$0xff] %v220
                %v222 = vld [vmem:[%s200 + $0xa0] sm:$0xff]
                %223 = vst [vmem:[%s201 + $0x50] sm:$0xff] %v222
                %v224 = vld [vmem:[%s200 + $0xb0] sm:$0xff]
                %225 = vst [vmem:[%s201 + $0x58] sm:$0xff] %v224
                %v226 = vld [vmem:[%s200 + $0xc0] sm:$0xff]
                %227 = vst [vmem:[%s201 + $0x60] sm:$0xff] %v226
                %v228 = vld [vmem:[%s200 + $0xd0] sm:$0xff]
                %229 = vst [vmem:[%s201 + $0x68] sm:$0xff] %v228
                %v230 = vld [vmem:[%s200 + $0xe0] sm:$0xff]
                %231 = vst [vmem:[%s201 + $0x70] sm:$0xff] %v230
                %v232 = vld [vmem:[%s200 + $0xf0] sm:$0xff]
                %233 = vst [vmem:[%s201 + $0x78] sm:$0xff] %v232
                %v234 = vld [vmem:[%s200 + $0x100] sm:$0xff]
                %235 = vst [vmem:[%s201 + $0x80] sm:$0xff] %v234
                %v236 = vld [vmem:[%s200 + $0x110] sm:$0xff]
                %237 = vst [vmem:[%s201 + $0x88] sm:$0xff] %v236
                %v238 = vld [vmem:[%s200 + $0x120] sm:$0xff]
                %239 = vst [vmem:[%s201 + $0x90] sm:$0xff] %v238
                %v240 = vld [vmem:[%s200 + $0x130] sm:$0xff]
                %241 = vst [vmem:[%s201 + $0x98] sm:$0xff] %v240
                %v242 = vld [vmem:[%s200 + $0x140] sm:$0xff]
                %243 = vst [vmem:[%s201 + $0xa0] sm:$0xff] %v242
                %v244 = vld [vmem:[%s200 + $0x150] sm:$0xff]
                %245 = vst [vmem:[%s201 + $0xa8] sm:$0xff] %v244
                %v246 = vld [vmem:[%s200 + $0x160] sm:$0xff]
                %247 = vst [vmem:[%s201 + $0xb0] sm:$0xff] %v246
                %v248 = vld [vmem:[%s200 + $0x170] sm:$0xff]
                %249 = vst [vmem:[%s201 + $0xb8] sm:$0xff] %v248
                %v250 = vld [vmem:[%s200 + $0x180] sm:$0xff]
                %251 = vst [vmem:[%s201 + $0xc0] sm:$0xff] %v250
                %v252 = vld [vmem:[%s200 + $0x190] sm:$0xff]
                %253 = vst [vmem:[%s201 + $0xc8] sm:$0xff] %v252
                %v254 = vld [vmem:[%s200 + $0x1a0] sm:$0xff]
                %255 = vst [vmem:[%s201 + $0xd0] sm:$0xff] %v254
                %v256 = vld [vmem:[%s200 + $0x1b0] sm:$0xff]
                %257 = vst [vmem:[%s201 + $0xd8] sm:$0xff] %v256
                %v258 = vld [vmem:[%s200 + $0x1c0] sm:$0xff]
                %259 = vst [vmem:[%s201 + $0xe0] sm:$0xff] %v258
                %v260 = vld [vmem:[%s200 + $0x1d0] sm:$0xff]
                %261 = vst [vmem:[%s201 + $0xe8] sm:$0xff] %v260
                %v262 = vld [vmem:[%s200 + $0x1e0] sm:$0xff]
                %263 = vst [vmem:[%s201 + $0xf0] sm:$0xff] %v262
                %v264 = vld [vmem:[%s200 + $0x1f0] sm:$0xff]
                %265 = vst [vmem:[%s201 + $0xf8] sm:$0xff] %v264
              $region41: #{_lambda_.17} parent=35 // loop_footer
                %s199 = sadd.s32 1, %s195
              $region42: #{_lambda_.17} parent=35 // loop_footer_branch
                %194 = sbr.rel target = $region38
              $region43: #{_lambda_.17} parent=35 // loop_exit
                _
            $region36: #{_lambda_.17} parent=27 // pred_fallthru
              _
          $region28: #{_lambda_.17} parent=23 // pred_fallthru
            _
          %342 = vnop
        $region24: #{_lambda_.17} parent=19 // pred_fallthru
          _
        // Predicated region
        $region59: #{_lambda_.17} parent=19 // pred_check
          %p343 = pneg %p106
        $region60: #{_lambda_.17} parent=19 // pred_check_branch
          %345 = sbr.rel (%p343) target = $region62
        $region61: #{_lambda_.17} parent=19 // pred_region
          %s346 = sand.u32 %s96, 1
          %s347 = sand.u32 %s96, 1
          %s348 = smul.addr %s347, 256
          %s349 = scalar_lea.vmem [#allocation5], %s348
          %s350 = smul.u32 32, %s18
          %s351 = smul.u32 2, %s17
          %s352 = smul.addr %s350, 4
          %s353 = sadd.s32 %s351, %s352
          %s354 = smul.addr %s353, 4
          %s355 = scalar_lea.vmem %s2, %s354
          // Predicated region
          $region63: #{_lambda_.17} parent=61 // pred_check
            _
          $region64: #{_lambda_.17} parent=61 // pred_check_branch
            %357 = sbr.rel (0) target = $region66
          $region65: #{_lambda_.17} parent=61 // pred_region
            // Predicated region
            $region67: #{_lambda_.17} parent=65 // pred_check
              _
            $region68: #{_lambda_.17} parent=65 // pred_check_branch
              %359 = sbr.rel (0) target = $region70
            $region69: #{_lambda_.17} parent=65 // pred_region
              // Predicated region
              $region82: #{_lambda_.17} parent=69 // pred_check
                _
              $region83: #{_lambda_.17} parent=69 // pred_check_branch
                %436 = sbr.rel (0) target = $region85
              $region84: #{_lambda_.17} parent=69 // pred_region
                loop: start=0, step=1, limit=1
                $region86: #{_lambda_.17} parent=84 // loop_pre_header
                  _
                $region87: #{_lambda_.17} parent=84 // loop_header
                  %s438 = sphi 0, %s442
                  %p439 = scmp.ge.s32.totalorder %s438, 1
                  %s443 = sphi %s355, %s355
                  %s444 = sphi %s349, %s349
                $region88: #{_lambda_.17} parent=84 // loop_header_branch
                  %441 = sbr.rel (%p439) target = $region92
                $region89: #{_lambda_.17} parent=84 // loop_body
                  %v445 = vld [vmem:[%s443] sm:$0xff]
                  %446 = vst [vmem:[%s444] sm:$0xff] %v445
                  %v447 = vld [vmem:[%s443 + $0x10] sm:$0xff]
                  %448 = vst [vmem:[%s444 + $0x8] sm:$0xff] %v447
                  %v449 = vld [vmem:[%s443 + $0x20] sm:$0xff]
                  %450 = vst [vmem:[%s444 + $0x10] sm:$0xff] %v449
                  %v451 = vld [vmem:[%s443 + $0x30] sm:$0xff]
                  %452 = vst [vmem:[%s444 + $0x18] sm:$0xff] %v451
                  %v453 = vld [vmem:[%s443 + $0x40] sm:$0xff]
                  %454 = vst [vmem:[%s444 + $0x20] sm:$0xff] %v453
                  %v455 = vld [vmem:[%s443 + $0x50] sm:$0xff]
                  %456 = vst [vmem:[%s444 + $0x28] sm:$0xff] %v455
                  %v457 = vld [vmem:[%s443 + $0x60] sm:$0xff]
                  %458 = vst [vmem:[%s444 + $0x30] sm:$0xff] %v457
                  %v459 = vld [vmem:[%s443 + $0x70] sm:$0xff]
                  %460 = vst [vmem:[%s444 + $0x38] sm:$0xff] %v459
                  %v461 = vld [vmem:[%s443 + $0x80] sm:$0xff]
                  %462 = vst [vmem:[%s444 + $0x40] sm:$0xff] %v461
                  %v463 = vld [vmem:[%s443 + $0x90] sm:$0xff]
                  %464 = vst [vmem:[%s444 + $0x48] sm:$0xff] %v463
                  %v465 = vld [vmem:[%s443 + $0xa0] sm:$0xff]
                  %466 = vst [vmem:[%s444 + $0x50] sm:$0xff] %v465
                  %v467 = vld [vmem:[%s443 + $0xb0] sm:$0xff]
                  %468 = vst [vmem:[%s444 + $0x58] sm:$0xff] %v467
                  %v469 = vld [vmem:[%s443 + $0xc0] sm:$0xff]
                  %470 = vst [vmem:[%s444 + $0x60] sm:$0xff] %v469
                  %v471 = vld [vmem:[%s443 + $0xd0] sm:$0xff]
                  %472 = vst [vmem:[%s444 + $0x68] sm:$0xff] %v471
                  %v473 = vld [vmem:[%s443 + $0xe0] sm:$0xff]
                  %474 = vst [vmem:[%s444 + $0x70] sm:$0xff] %v473
                  %v475 = vld [vmem:[%s443 + $0xf0] sm:$0xff]
                  %476 = vst [vmem:[%s444 + $0x78] sm:$0xff] %v475
                  %v477 = vld [vmem:[%s443 + $0x100] sm:$0xff]
                  %478 = vst [vmem:[%s444 + $0x80] sm:$0xff] %v477
                  %v479 = vld [vmem:[%s443 + $0x110] sm:$0xff]
                  %480 = vst [vmem:[%s444 + $0x88] sm:$0xff] %v479
                  %v481 = vld [vmem:[%s443 + $0x120] sm:$0xff]
                  %482 = vst [vmem:[%s444 + $0x90] sm:$0xff] %v481
                  %v483 = vld [vmem:[%s443 + $0x130] sm:$0xff]
                  %484 = vst [vmem:[%s444 + $0x98] sm:$0xff] %v483
                  %v485 = vld [vmem:[%s443 + $0x140] sm:$0xff]
                  %486 = vst [vmem:[%s444 + $0xa0] sm:$0xff] %v485
                  %v487 = vld [vmem:[%s443 + $0x150] sm:$0xff]
                  %488 = vst [vmem:[%s444 + $0xa8] sm:$0xff] %v487
                  %v489 = vld [vmem:[%s443 + $0x160] sm:$0xff]
                  %490 = vst [vmem:[%s444 + $0xb0] sm:$0xff] %v489
                  %v491 = vld [vmem:[%s443 + $0x170] sm:$0xff]
                  %492 = vst [vmem:[%s444 + $0xb8] sm:$0xff] %v491
                  %v493 = vld [vmem:[%s443 + $0x180] sm:$0xff]
                  %494 = vst [vmem:[%s444 + $0xc0] sm:$0xff] %v493
                  %v495 = vld [vmem:[%s443 + $0x190] sm:$0xff]
                  %496 = vst [vmem:[%s444 + $0xc8] sm:$0xff] %v495
                  %v497 = vld [vmem:[%s443 + $0x1a0] sm:$0xff]
                  %498 = vst [vmem:[%s444 + $0xd0] sm:$0xff] %v497
                  %v499 = vld [vmem:[%s443 + $0x1b0] sm:$0xff]
                  %500 = vst [vmem:[%s444 + $0xd8] sm:$0xff] %v499
                  %v501 = vld [vmem:[%s443 + $0x1c0] sm:$0xff]
                  %502 = vst [vmem:[%s444 + $0xe0] sm:$0xff] %v501
                  %v503 = vld [vmem:[%s443 + $0x1d0] sm:$0xff]
                  %504 = vst [vmem:[%s444 + $0xe8] sm:$0xff] %v503
                  %v505 = vld [vmem:[%s443 + $0x1e0] sm:$0xff]
                  %506 = vst [vmem:[%s444 + $0xf0] sm:$0xff] %v505
                  %v507 = vld [vmem:[%s443 + $0x1f0] sm:$0xff]
                  %508 = vst [vmem:[%s444 + $0xf8] sm:$0xff] %v507
                $region90: #{_lambda_.17} parent=84 // loop_footer
                  %s442 = sadd.s32 1, %s438
                $region91: #{_lambda_.17} parent=84 // loop_footer_branch
                  %437 = sbr.rel target = $region87
                $region92: #{_lambda_.17} parent=84 // loop_exit
                  _
              $region85: #{_lambda_.17} parent=69 // pred_fallthru
                _
              // Predicated region
              $region93: #{_lambda_.17} parent=69 // pred_check
                _
              $region94: #{_lambda_.17} parent=69 // pred_check_branch
                %510 = sbr.rel target = $region96
              $region95: #{_lambda_.17} parent=69 // pred_region
                _
              $region96: #{_lambda_.17} parent=69 // pred_fallthru
                _
            $region70: #{_lambda_.17} parent=65 // pred_fallthru
              _
            // Predicated region
            $region71: #{_lambda_.17} parent=65 // pred_check
              _
            $region72: #{_lambda_.17} parent=65 // pred_check_branch
              %361 = sbr.rel target = $region74
            $region73: #{_lambda_.17} parent=65 // pred_region
              loop: start=0, step=1, limit=1
              $region75: #{_lambda_.17} parent=73 // loop_pre_header
                _
              $region76: #{_lambda_.17} parent=73 // loop_header
                %s364 = sphi 0, %s368
                %p365 = scmp.ge.s32.totalorder %s364, 1
                %s369 = sphi %s355, %s355
                %s370 = sphi %s349, %s349
              $region77: #{_lambda_.17} parent=73 // loop_header_branch
                %367 = sbr.rel (%p365) target = $region81
              $region78: #{_lambda_.17} parent=73 // loop_body
                %v371 = vld [vmem:[%s369] sm:$0xff]
                %372 = vst [vmem:[%s370] sm:$0xff] %v371
                %v373 = vld [vmem:[%s369 + $0x10] sm:$0xff]
                %374 = vst [vmem:[%s370 + $0x8] sm:$0xff] %v373
                %v375 = vld [vmem:[%s369 + $0x20] sm:$0xff]
                %376 = vst [vmem:[%s370 + $0x10] sm:$0xff] %v375
                %v377 = vld [vmem:[%s369 + $0x30] sm:$0xff]
                %378 = vst [vmem:[%s370 + $0x18] sm:$0xff] %v377
                %v379 = vld [vmem:[%s369 + $0x40] sm:$0xff]
                %380 = vst [vmem:[%s370 + $0x20] sm:$0xff] %v379
                %v381 = vld [vmem:[%s369 + $0x50] sm:$0xff]
                %382 = vst [vmem:[%s370 + $0x28] sm:$0xff] %v381
                %v383 = vld [vmem:[%s369 + $0x60] sm:$0xff]
                %384 = vst [vmem:[%s370 + $0x30] sm:$0xff] %v383
                %v385 = vld [vmem:[%s369 + $0x70] sm:$0xff]
                %386 = vst [vmem:[%s370 + $0x38] sm:$0xff] %v385
                %v387 = vld [vmem:[%s369 + $0x80] sm:$0xff]
                %388 = vst [vmem:[%s370 + $0x40] sm:$0xff] %v387
                %v389 = vld [vmem:[%s369 + $0x90] sm:$0xff]
                %390 = vst [vmem:[%s370 + $0x48] sm:$0xff] %v389
                %v391 = vld [vmem:[%s369 + $0xa0] sm:$0xff]
                %392 = vst [vmem:[%s370 + $0x50] sm:$0xff] %v391
                %v393 = vld [vmem:[%s369 + $0xb0] sm:$0xff]
                %394 = vst [vmem:[%s370 + $0x58] sm:$0xff] %v393
                %v395 = vld [vmem:[%s369 + $0xc0] sm:$0xff]
                %396 = vst [vmem:[%s370 + $0x60] sm:$0xff] %v395
                %v397 = vld [vmem:[%s369 + $0xd0] sm:$0xff]
                %398 = vst [vmem:[%s370 + $0x68] sm:$0xff] %v397
                %v399 = vld [vmem:[%s369 + $0xe0] sm:$0xff]
                %400 = vst [vmem:[%s370 + $0x70] sm:$0xff] %v399
                %v401 = vld [vmem:[%s369 + $0xf0] sm:$0xff]
                %402 = vst [vmem:[%s370 + $0x78] sm:$0xff] %v401
                %v403 = vld [vmem:[%s369 + $0x100] sm:$0xff]
                %404 = vst [vmem:[%s370 + $0x80] sm:$0xff] %v403
                %v405 = vld [vmem:[%s369 + $0x110] sm:$0xff]
                %406 = vst [vmem:[%s370 + $0x88] sm:$0xff] %v405
                %v407 = vld [vmem:[%s369 + $0x120] sm:$0xff]
                %408 = vst [vmem:[%s370 + $0x90] sm:$0xff] %v407
                %v409 = vld [vmem:[%s369 + $0x130] sm:$0xff]
                %410 = vst [vmem:[%s370 + $0x98] sm:$0xff] %v409
                %v411 = vld [vmem:[%s369 + $0x140] sm:$0xff]
                %412 = vst [vmem:[%s370 + $0xa0] sm:$0xff] %v411
                %v413 = vld [vmem:[%s369 + $0x150] sm:$0xff]
                %414 = vst [vmem:[%s370 + $0xa8] sm:$0xff] %v413
                %v415 = vld [vmem:[%s369 + $0x160] sm:$0xff]
                %416 = vst [vmem:[%s370 + $0xb0] sm:$0xff] %v415
                %v417 = vld [vmem:[%s369 + $0x170] sm:$0xff]
                %418 = vst [vmem:[%s370 + $0xb8] sm:$0xff] %v417
                %v419 = vld [vmem:[%s369 + $0x180] sm:$0xff]
                %420 = vst [vmem:[%s370 + $0xc0] sm:$0xff] %v419
                %v421 = vld [vmem:[%s369 + $0x190] sm:$0xff]
                %422 = vst [vmem:[%s370 + $0xc8] sm:$0xff] %v421
                %v423 = vld [vmem:[%s369 + $0x1a0] sm:$0xff]
                %424 = vst [vmem:[%s370 + $0xd0] sm:$0xff] %v423
                %v425 = vld [vmem:[%s369 + $0x1b0] sm:$0xff]
                %426 = vst [vmem:[%s370 + $0xd8] sm:$0xff] %v425
                %v427 = vld [vmem:[%s369 + $0x1c0] sm:$0xff]
                %428 = vst [vmem:[%s370 + $0xe0] sm:$0xff] %v427
                %v429 = vld [vmem:[%s369 + $0x1d0] sm:$0xff]
                %430 = vst [vmem:[%s370 + $0xe8] sm:$0xff] %v429
                %v431 = vld [vmem:[%s369 + $0x1e0] sm:$0xff]
                %432 = vst [vmem:[%s370 + $0xf0] sm:$0xff] %v431
                %v433 = vld [vmem:[%s369 + $0x1f0] sm:$0xff]
                %434 = vst [vmem:[%s370 + $0xf8] sm:$0xff] %v433
              $region79: #{_lambda_.17} parent=73 // loop_footer
                %s368 = sadd.s32 1, %s364
              $region80: #{_lambda_.17} parent=73 // loop_footer_branch
                %363 = sbr.rel target = $region76
              $region81: #{_lambda_.17} parent=73 // loop_exit
                _
            $region74: #{_lambda_.17} parent=65 // pred_fallthru
              _
          $region66: #{_lambda_.17} parent=61 // pred_fallthru
            _
          %511 = vnop
        $region62: #{_lambda_.17} parent=19 // pred_fallthru
          _
      $region20: #{_lambda_.17} parent=5 // pred_fallthru
        _
      %p512 = scmp.le.s32.totalorder 1, %s9
      %p513 = scmp.lt.s32.totalorder %s9, 3
      %p514 = pnand %p512, %p513
      %p515 = pneg %p514
      // Predicated region
      $region97: #{_lambda_.17} parent=5 // pred_check
        _
      $region98: #{_lambda_.17} parent=5 // pred_check_branch
        %517 = sbr.rel (%p514) target = $region100
      $region99: #{_lambda_.17} parent=5 // pred_region
        %s518 = ssub.s32 %s9, 1
        %s519 = sand.u32 %s71, 1
        %s520 = sand.u32 %s71, 1
        %s521 = smul.addr %s520, 256
        %s522 = scalar_lea.vmem [#allocation4], %s521
        // Predicated region
        $region101: #{_lambda_.17} parent=99 // pred_check
          %p523 = pneg %p84
        $region102: #{_lambda_.17} parent=99 // pred_check_branch
          %525 = sbr.rel (%p523) target = $region104
        $region103: #{_lambda_.17} parent=99 // pred_region
          _
        $region104: #{_lambda_.17} parent=99 // pred_fallthru
          _
        %s526 = sand.u32 %s99, 1
        %s527 = sand.u32 %s99, 1
        %s528 = smul.addr %s527, 256
        %s529 = scalar_lea.vmem [#allocation5], %s528
        // Predicated region
        $region105: #{_lambda_.17} parent=99 // pred_check
          %p530 = pneg %p112
        $region106: #{_lambda_.17} parent=99 // pred_check_branch
          %532 = sbr.rel (%p530) target = $region108
        $region107: #{_lambda_.17} parent=99 // pred_region
          _
        $region108: #{_lambda_.17} parent=99 // pred_fallthru
          _
        %s533 = smul.u32 4, %s19
        %s534 = smul.u32 2, %s21
        %p535 = scmp.lt.s32.totalorder %s533, 3
        %s536 = scalar_select %p535, %s533, 3
        %p537 = scmp.lt.s32.totalorder %s534, 1
        %s538 = scalar_select %p537, %s534, 1
        %s539 = smul.addr %s536, 2
        %s540 = sadd.s32 %s538, %s539
        %s541 = smul.addr %s540, 4
        %s542 = scalar_lea.vmem %s0, %s541
        %p543 = pneg %p56
        %p544 = pneg %p53
        %s545 = sand.u32 %s71, 1
        %s546 = sand.u32 %s71, 1
        %s547 = smul.addr %s546, 256
        %s548 = scalar_lea.vmem [#allocation4], %s547
        %p549 = pneg %p84
        %p550 = pneg %p81
        %s551 = sand.u32 %s99, 1
        %s552 = sand.u32 %s99, 1
        %s553 = smul.addr %s552, 256
        %s554 = scalar_lea.vmem [#allocation5], %s553
        %p555 = pneg %p112
        %p556 = pneg %p109
        %p557 = pneg %p140
        %p558 = pneg %p137
        %s559 = sand.u32 %s127, 1
        %s560 = sand.u32 %s127, 1
        %s561 = smul.addr %s560, 32
        %s562 = scalar_lea.vmem [#allocation6], %s561
        %s563 = smul.u32 4, %s19
        %s564 = smul.u32 2, %s21
        %p565 = scmp.lt.s32.totalorder %s563, 3
        %s566 = scalar_select %p565, %s563, 3
        %p567 = scmp.lt.s32.totalorder %s564, 1
        %s568 = scalar_select %p567, %s564, 1
        %s569 = smul.addr %s566, 2
        %s570 = sadd.s32 %s568, %s569
        %s571 = smul.addr %s570, 4
        %s572 = scalar_lea.vmem %s0, %s571
        %s573 = smul.u32 4, %s19
        %s574 = smul.u32 2, %s21
        %s575 = smul.u32 32, %s21
        %s576 = smul.u32 2, %s20
        %s577 = smul.u32 32, %s21
        %s578 = smul.u32 2, %s20
        %s579 = smul.u32 4, %s19
        %s580 = smul.u32 2, %s20
        %p581 = scmp.eq.s32.totalorder %s21, 0
        // Predicated region
        $region109: #{_lambda_.17} parent=99 // pred_check
          %p582 = pneg %p581
        $region110: #{_lambda_.17} parent=99 // pred_check_branch
          %584 = sbr.rel (%p582) target = $region112
        $region111: #{_lambda_.17} parent=99 // pred_region
          %585 = vst [vmem:[#allocation2] sm:$0xff] 0.0
          %586 = vst [vmem:[#allocation2 + $0x8] sm:$0xff] 0.0
          %587 = vst [vmem:[#allocation2 + $0x10] sm:$0xff] 0.0
          %588 = vst [vmem:[#allocation2 + $0x18] sm:$0xff] 0.0
          %589 = vst [vmem:[#allocation2 + $0x20] sm:$0xff] 0.0
          %590 = vst [vmem:[#allocation2 + $0x28] sm:$0xff] 0.0
          %591 = vst [vmem:[#allocation2 + $0x30] sm:$0xff] 0.0
          %592 = vst [vmem:[#allocation2 + $0x38] sm:$0xff] 0.0
          %593 = vst [vmem:[#allocation3] sm:$0xff] 0.0
          %594 = vst [vmem:[#allocation3 + $0x8] sm:$0xff] 0.0
          %595 = vst [vmem:[#allocation3 + $0x10] sm:$0xff] 0.0
          %596 = vst [vmem:[#allocation3 + $0x18] sm:$0xff] 0.0
          %597 = vst [vmem:[#allocation3 + $0x20] sm:$0xff] 0.0
          %598 = vst [vmem:[#allocation3 + $0x28] sm:$0xff] 0.0
          %599 = vst [vmem:[#allocation3 + $0x30] sm:$0xff] 0.0
          %600 = vst [vmem:[#allocation3 + $0x38] sm:$0xff] 0.0
        $region112: #{_lambda_.17} parent=99 // pred_fallthru
          _
        %v601 = vld [vmem:[%s572] sm:$0xff]
        %v602 = vld [vmem:[%s572 + $0x8] sm:$0xff]
        %v603 = vld [vmem:[%s572 + $0x10] sm:$0xff]
        %v604 = vld [vmem:[%s572 + $0x18] sm:$0xff]
        %v605 = vld [vmem:[#allocation2] sm:$0xff]
        %v606 = vld [vmem:[#allocation2 + $0x8] sm:$0xff]
        %v607 = vld [vmem:[#allocation2 + $0x10] sm:$0xff]
        %v608 = vld [vmem:[#allocation2 + $0x18] sm:$0xff]
        %v609 = vld [vmem:[#allocation2 + $0x20] sm:$0xff]
        %v610 = vld [vmem:[#allocation2 + $0x28] sm:$0xff]
        %v611 = vld [vmem:[#allocation2 + $0x30] sm:$0xff]
        %v612 = vld [vmem:[#allocation2 + $0x38] sm:$0xff]
        %v613 = vld [vmem:[%s522] sm:$0xff]
        %v614 = vld [vmem:[%s522 + $0x8] sm:$0xff]
        %v615 = vld [vmem:[%s522 + $0x10] sm:$0xff]
        %v616 = vld [vmem:[%s522 + $0x18] sm:$0xff]
        %v617 = vld [vmem:[%s522 + $0x20] sm:$0xff]
        %v618 = vld [vmem:[%s522 + $0x28] sm:$0xff]
        %v619 = vld [vmem:[%s522 + $0x30] sm:$0xff]
        %v620 = vld [vmem:[%s522 + $0x38] sm:$0xff]
        %v621 = vld [vmem:[%s522 + $0x40] sm:$0xff]
        %v622 = vld [vmem:[%s522 + $0x48] sm:$0xff]
        %v623 = vld [vmem:[%s522 + $0x50] sm:$0xff]
        %v624 = vld [vmem:[%s522 + $0x58] sm:$0xff]
        %v625 = vld [vmem:[%s522 + $0x60] sm:$0xff]
        %v626 = vld [vmem:[%s522 + $0x68] sm:$0xff]
        %v627 = vld [vmem:[%s522 + $0x70] sm:$0xff]
        %v628 = vld [vmem:[%s522 + $0x78] sm:$0xff]
        %v629 = vld [vmem:[%s522 + $0x80] sm:$0xff]
        %v630 = vld [vmem:[%s522 + $0x88] sm:$0xff]
        %v631 = vld [vmem:[%s522 + $0x90] sm:$0xff]
        %v632 = vld [vmem:[%s522 + $0x98] sm:$0xff]
        %v633 = vld [vmem:[%s522 + $0xa0] sm:$0xff]
        %v634 = vld [vmem:[%s522 + $0xa8] sm:$0xff]
        %v635 = vld [vmem:[%s522 + $0xb0] sm:$0xff]
        %v636 = vld [vmem:[%s522 + $0xb8] sm:$0xff]
        %v637 = vld [vmem:[%s522 + $0xc0] sm:$0xff]
        %v638 = vld [vmem:[%s522 + $0xc8] sm:$0xff]
        %v639 = vld [vmem:[%s522 + $0xd0] sm:$0xff]
        %v640 = vld [vmem:[%s522 + $0xd8] sm:$0xff]
        %v641 = vld [vmem:[%s522 + $0xe0] sm:$0xff]
        %v642 = vld [vmem:[%s522 + $0xe8] sm:$0xff]
        %v643 = vld [vmem:[%s522 + $0xf0] sm:$0xff]
        %v644 = vld [vmem:[%s522 + $0xf8] sm:$0xff]
        %v649 = vunpack.c.l.b16 %v601
        %v650 = vunpack.c.h.b16 %v601
        %v651 = vunpack.c.l.b16 %v602
        %v652 = vunpack.c.h.b16 %v602
        %v653 = vunpack.c.l.b16 %v603
        %v654 = vunpack.c.h.b16 %v603
        %v655 = vunpack.c.l.b16 %v604
        %v656 = vunpack.c.h.b16 %v604
        %v657 = vpack.c.b16 %v651, %v649
        %v658 = vpack.c.b16 %v652, %v650
        %v659 = vpack.c.b16 %v655, %v653
        %v660 = vpack.c.b16 %v656, %v654
        %v697 = vunpack.c.l.b16 %v613
        %v698 = vunpack.c.h.b16 %v613
        %v699 = vunpack.c.l.b16 %v614
        %v700 = vunpack.c.h.b16 %v614
        %v701 = vunpack.c.l.b16 %v615
        %v702 = vunpack.c.h.b16 %v615
        %v703 = vunpack.c.l.b16 %v616
        %v704 = vunpack.c.h.b16 %v616
        %v705 = vunpack.c.l.b16 %v617
        %v706 = vunpack.c.h.b16 %v617
        %v707 = vunpack.c.l.b16 %v618
        %v708 = vunpack.c.h.b16 %v618
        %v709 = vunpack.c.l.b16 %v619
        %v710 = vunpack.c.h.b16 %v619
        %v711 = vunpack.c.l.b16 %v620
        %v712 = vunpack.c.h.b16 %v620
        %v713 = vunpack.c.l.b16 %v621
        %v714 = vunpack.c.h.b16 %v621
        %v715 = vunpack.c.l.b16 %v622
        %v716 = vunpack.c.h.b16 %v622
        %v717 = vunpack.c.l.b16 %v623
        %v718 = vunpack.c.h.b16 %v623
        %v719 = vunpack.c.l.b16 %v624
        %v720 = vunpack.c.h.b16 %v624
        %v721 = vunpack.c.l.b16 %v625
        %v722 = vunpack.c.h.b16 %v625
        %v723 = vunpack.c.l.b16 %v626
        %v724 = vunpack.c.h.b16 %v626
        %v725 = vunpack.c.l.b16 %v627
        %v726 = vunpack.c.h.b16 %v627
        %v727 = vunpack.c.l.b16 %v628
        %v728 = vunpack.c.h.b16 %v628
        %v729 = vunpack.c.l.b16 %v629
        %v730 = vunpack.c.h.b16 %v629
        %v731 = vunpack.c.l.b16 %v630
        %v732 = vunpack.c.h.b16 %v630
        %v733 = vunpack.c.l.b16 %v631
        %v734 = vunpack.c.h.b16 %v631
        %v735 = vunpack.c.l.b16 %v632
        %v736 = vunpack.c.h.b16 %v632
        %v737 = vunpack.c.l.b16 %v633
        %v738 = vunpack.c.h.b16 %v633
        %v739 = vunpack.c.l.b16 %v634
        %v740 = vunpack.c.h.b16 %v634
        %v741 = vunpack.c.l.b16 %v635
        %v742 = vunpack.c.h.b16 %v635
        %v743 = vunpack.c.l.b16 %v636
        %v744 = vunpack.c.h.b16 %v636
        %v745 = vunpack.c.l.b16 %v637
        %v746 = vunpack.c.h.b16 %v637
        %v747 = vunpack.c.l.b16 %v638
        %v748 = vunpack.c.h.b16 %v638
        %v749 = vunpack.c.l.b16 %v639
        %v750 = vunpack.c.h.b16 %v639
        %v751 = vunpack.c.l.b16 %v640
        %v752 = vunpack.c.h.b16 %v640
        %v753 = vunpack.c.l.b16 %v641
        %v754 = vunpack.c.h.b16 %v641
        %v755 = vunpack.c.l.b16 %v642
        %v756 = vunpack.c.h.b16 %v642
        %v757 = vunpack.c.l.b16 %v643
        %v758 = vunpack.c.h.b16 %v643
        %v759 = vunpack.c.l.b16 %v644
        %v760 = vunpack.c.h.b16 %v644
        %v761 = vpack.c.b16 %v699, %v697
        %v762 = vpack.c.b16 %v700, %v698
        %v763 = vpack.c.b16 %v703, %v701
        %v764 = vpack.c.b16 %v704, %v702
        %v765 = vpack.c.b16 %v707, %v705
        %v766 = vpack.c.b16 %v708, %v706
        %v767 = vpack.c.b16 %v711, %v709
        %v768 = vpack.c.b16 %v712, %v710
        %v769 = vpack.c.b16 %v715, %v713
        %v770 = vpack.c.b16 %v716, %v714
        %v771 = vpack.c.b16 %v719, %v717
        %v772 = vpack.c.b16 %v720, %v718
        %v773 = vpack.c.b16 %v723, %v721
        %v774 = vpack.c.b16 %v724, %v722
        %v775 = vpack.c.b16 %v727, %v725
        %v776 = vpack.c.b16 %v728, %v726
        %v777 = vpack.c.b16 %v731, %v729
        %v778 = vpack.c.b16 %v732, %v730
        %v779 = vpack.c.b16 %v735, %v733
        %v780 = vpack.c.b16 %v736, %v734
        %v781 = vpack.c.b16 %v739, %v737
        %v782 = vpack.c.b16 %v740, %v738
        %v783 = vpack.c.b16 %v743, %v741
        %v784 = vpack.c.b16 %v744, %v742
        %v785 = vpack.c.b16 %v747, %v745
        %v786 = vpack.c.b16 %v748, %v746
        %v787 = vpack.c.b16 %v751, %v749
        %v788 = vpack.c.b16 %v752, %v750
        %v789 = vpack.c.b16 %v755, %v753
        %v790 = vpack.c.b16 %v756, %v754
        %v791 = vpack.c.b16 %v759, %v757
        %v792 = vpack.c.b16 %v760, %v758
        %825 = vmatprep.subr.bf16.mxu0 %v762
        %826 = vmatpush1.bf16.msra.mxu0 %v761
        %827 = vmatprep.subr.bf16.mxu0 %v764
        %828 = vmatpush1.bf16.msra.mxu0 %v763
        %829 = vmatprep.subr.bf16.mxu0 %v766
        %830 = vmatpush1.bf16.msra.mxu0 %v765
        %831 = vmatprep.subr.bf16.mxu0 %v768
        %832 = vmatpush1.bf16.msra.mxu0 %v767
        %833 = vmatprep.subr.bf16.mxu0 %v770
        %834 = vmatpush1.bf16.msra.mxu0 %v769
        %835 = vmatprep.subr.bf16.mxu0 %v772
        %836 = vmatpush1.bf16.msra.mxu0 %v771
        %837 = vmatprep.subr.bf16.mxu0 %v774
        %838 = vmatpush1.bf16.msra.mxu0 %v773
        %839 = vmatprep.subr.bf16.mxu0 %v776
        %840 = vmatpush1.bf16.msra.mxu0 %v775
        %841 = vmatprep.subr.bf16.mxu0 %v778
        %842 = vmatpush1.bf16.msra.mxu0 %v777
        %843 = vmatprep.subr.bf16.mxu0 %v780
        %844 = vmatpush1.bf16.msra.mxu0 %v779
        %845 = vmatprep.subr.bf16.mxu0 %v782
        %846 = vmatpush1.bf16.msra.mxu0 %v781
        %847 = vmatprep.subr.bf16.mxu0 %v784
        %848 = vmatpush1.bf16.msra.mxu0 %v783
        %849 = vmatprep.subr.bf16.mxu0 %v786
        %850 = vmatpush1.bf16.msra.mxu0 %v785
        %851 = vmatprep.subr.bf16.mxu0 %v788
        %852 = vmatpush1.bf16.msra.mxu0 %v787
        %853 = vmatprep.subr.bf16.mxu0 %v790
        %854 = vmatpush1.bf16.msra.mxu0 %v789
        %855 = vmatprep.subr.bf16.mxu0 %v792
        %856 = vmatpush1.bf16.msra.mxu0 %v791
        %857 = vmatprep.mubr.bf16.mxu0 %v658
        %858 = vmatmul.mubr.bf16.gmra.mrb[0].mxu0 %v657
        %v859 = vpop.f32.mrb[0].mxu0
        %v860 = vadd.f32 0.0, %v859
        %v861 = vpop.f32.mrb[0].mxu0
        %v862 = vadd.f32 0.0, %v861
        %v863 = vpop.f32.mrb[0].mxu0
        %v864 = vadd.f32 0.0, %v863
        %v865 = vpop.f32.mrb[0].mxu0
        %v866 = vadd.f32 0.0, %v865
        %867 = vmatprep.mubr.bf16.mxu0 %v660
        %868 = vmatmul.mubr.bf16.gmra.mrb[0].mxu0 %v659
        %v869 = vpop.f32.mrb[0].mxu0
        %v870 = vadd.f32 0.0, %v869
        %v871 = vpop.f32.mrb[0].mxu0
        %v872 = vadd.f32 0.0, %v871
        %v873 = vpop.f32.mrb[0].mxu0
        %v874 = vadd.f32 0.0, %v873
        %v875 = vpop.f32.mrb[0].mxu0
        %v876 = vadd.f32 0.0, %v875
        %877 = vdwg.mxu0
        %v878 = vadd.f32 %v605, %v860
        %v879 = vadd.f32 %v606, %v862
        %v880 = vadd.f32 %v607, %v864
        %v881 = vadd.f32 %v608, %v866
        %v882 = vadd.f32 %v609, %v870
        %v883 = vadd.f32 %v610, %v872
        %v884 = vadd.f32 %v611, %v874
        %v885 = vadd.f32 %v612, %v876
        %886 = vst [vmem:[#allocation2] sm:$0xff] %v878
        %887 = vst [vmem:[#allocation2 + $0x8] sm:$0xff] %v879
        %888 = vst [vmem:[#allocation2 + $0x10] sm:$0xff] %v880
        %889 = vst [vmem:[#allocation2 + $0x18] sm:$0xff] %v881
        %890 = vst [vmem:[#allocation2 + $0x20] sm:$0xff] %v882
        %891 = vst [vmem:[#allocation2 + $0x28] sm:$0xff] %v883
        %892 = vst [vmem:[#allocation2 + $0x30] sm:$0xff] %v884
        %893 = vst [vmem:[#allocation2 + $0x38] sm:$0xff] %v885
        %v894 = vld [vmem:[#allocation3] sm:$0xff]
        %v895 = vld [vmem:[#allocation3 + $0x8] sm:$0xff]
        %v896 = vld [vmem:[#allocation3 + $0x10] sm:$0xff]
        %v897 = vld [vmem:[#allocation3 + $0x18] sm:$0xff]
        %v898 = vld [vmem:[#allocation3 + $0x20] sm:$0xff]
        %v899 = vld [vmem:[#allocation3 + $0x28] sm:$0xff]
        %v900 = vld [vmem:[#allocation3 + $0x30] sm:$0xff]
        %v901 = vld [vmem:[#allocation3 + $0x38] sm:$0xff]
        %v902 = vld [vmem:[%s529] sm:$0xff]
        %v903 = vld [vmem:[%s529 + $0x8] sm:$0xff]
        %v904 = vld [vmem:[%s529 + $0x10] sm:$0xff]
        %v905 = vld [vmem:[%s529 + $0x18] sm:$0xff]
        %v906 = vld [vmem:[%s529 + $0x20] sm:$0xff]
        %v907 = vld [vmem:[%s529 + $0x28] sm:$0xff]
        %v908 = vld [vmem:[%s529 + $0x30] sm:$0xff]
        %v909 = vld [vmem:[%s529 + $0x38] sm:$0xff]
        %v910 = vld [vmem:[%s529 + $0x40] sm:$0xff]
        %v911 = vld [vmem:[%s529 + $0x48] sm:$0xff]
        %v912 = vld [vmem:[%s529 + $0x50] sm:$0xff]
        %v913 = vld [vmem:[%s529 + $0x58] sm:$0xff]
        %v914 = vld [vmem:[%s529 + $0x60] sm:$0xff]
        %v915 = vld [vmem:[%s529 + $0x68] sm:$0xff]
        %v916 = vld [vmem:[%s529 + $0x70] sm:$0xff]
        %v917 = vld [vmem:[%s529 + $0x78] sm:$0xff]
        %v918 = vld [vmem:[%s529 + $0x80] sm:$0xff]
        %v919 = vld [vmem:[%s529 + $0x88] sm:$0xff]
        %v920 = vld [vmem:[%s529 + $0x90] sm:$0xff]
        %v921 = vld [vmem:[%s529 + $0x98] sm:$0xff]
        %v922 = vld [vmem:[%s529 + $0xa0] sm:$0xff]
        %v923 = vld [vmem:[%s529 + $0xa8] sm:$0xff]
        %v924 = vld [vmem:[%s529 + $0xb0] sm:$0xff]
        %v925 = vld [vmem:[%s529 + $0xb8] sm:$0xff]
        %v926 = vld [vmem:[%s529 + $0xc0] sm:$0xff]
        %v927 = vld [vmem:[%s529 + $0xc8] sm:$0xff]
        %v928 = vld [vmem:[%s529 + $0xd0] sm:$0xff]
        %v929 = vld [vmem:[%s529 + $0xd8] sm:$0xff]
        %v930 = vld [vmem:[%s529 + $0xe0] sm:$0xff]
        %v931 = vld [vmem:[%s529 + $0xe8] sm:$0xff]
        %v932 = vld [vmem:[%s529 + $0xf0] sm:$0xff]
        %v933 = vld [vmem:[%s529 + $0xf8] sm:$0xff]
        %v966 = vunpack.c.l.b16 %v902
        %v967 = vunpack.c.h.b16 %v902
        %v968 = vunpack.c.l.b16 %v903
        %v969 = vunpack.c.h.b16 %v903
        %v970 = vunpack.c.l.b16 %v904
        %v971 = vunpack.c.h.b16 %v904
        %v972 = vunpack.c.l.b16 %v905
        %v973 = vunpack.c.h.b16 %v905
        %v974 = vunpack.c.l.b16 %v906
        %v975 = vunpack.c.h.b16 %v906
        %v976 = vunpack.c.l.b16 %v907
        %v977 = vunpack.c.h.b16 %v907
        %v978 = vunpack.c.l.b16 %v908
        %v979 = vunpack.c.h.b16 %v908
        %v980 = vunpack.c.l.b16 %v909
        %v981 = vunpack.c.h.b16 %v909
        %v982 = vunpack.c.l.b16 %v910
        %v983 = vunpack.c.h.b16 %v910
        %v984 = vunpack.c.l.b16 %v911
        %v985 = vunpack.c.h.b16 %v911
        %v986 = vunpack.c.l.b16 %v912
        %v987 = vunpack.c.h.b16 %v912
        %v988 = vunpack.c.l.b16 %v913
        %v989 = vunpack.c.h.b16 %v913
        %v990 = vunpack.c.l.b16 %v914
        %v991 = vunpack.c.h.b16 %v914
        %v992 = vunpack.c.l.b16 %v915
        %v993 = vunpack.c.h.b16 %v915
        %v994 = vunpack.c.l.b16 %v916
        %v995 = vunpack.c.h.b16 %v916
        %v996 = vunpack.c.l.b16 %v917
        %v997 = vunpack.c.h.b16 %v917
        %v998 = vunpack.c.l.b16 %v918
        %v999 = vunpack.c.h.b16 %v918
        %v1000 = vunpack.c.l.b16 %v919
        %v1001 = vunpack.c.h.b16 %v919
        %v1002 = vunpack.c.l.b16 %v920
        %v1003 = vunpack.c.h.b16 %v920
        %v1004 = vunpack.c.l.b16 %v921
        %v1005 = vunpack.c.h.b16 %v921
        %v1006 = vunpack.c.l.b16 %v922
        %v1007 = vunpack.c.h.b16 %v922
        %v1008 = vunpack.c.l.b16 %v923
        %v1009 = vunpack.c.h.b16 %v923
        %v1010 = vunpack.c.l.b16 %v924
        %v1011 = vunpack.c.h.b16 %v924
        %v1012 = vunpack.c.l.b16 %v925
        %v1013 = vunpack.c.h.b16 %v925
        %v1014 = vunpack.c.l.b16 %v926
        %v1015 = vunpack.c.h.b16 %v926
        %v1016 = vunpack.c.l.b16 %v927
        %v1017 = vunpack.c.h.b16 %v927
        %v1018 = vunpack.c.l.b16 %v928
        %v1019 = vunpack.c.h.b16 %v928
        %v1020 = vunpack.c.l.b16 %v929
        %v1021 = vunpack.c.h.b16 %v929
        %v1022 = vunpack.c.l.b16 %v930
        %v1023 = vunpack.c.h.b16 %v930
        %v1024 = vunpack.c.l.b16 %v931
        %v1025 = vunpack.c.h.b16 %v931
        %v1026 = vunpack.c.l.b16 %v932
        %v1027 = vunpack.c.h.b16 %v932
        %v1028 = vunpack.c.l.b16 %v933
        %v1029 = vunpack.c.h.b16 %v933
        %v1030 = vpack.c.b16 %v968, %v966
        %v1031 = vpack.c.b16 %v969, %v967
        %v1032 = vpack.c.b16 %v972, %v970
        %v1033 = vpack.c.b16 %v973, %v971
        %v1034 = vpack.c.b16 %v976, %v974
        %v1035 = vpack.c.b16 %v977, %v975
        %v1036 = vpack.c.b16 %v980, %v978
        %v1037 = vpack.c.b16 %v981, %v979
        %v1038 = vpack.c.b16 %v984, %v982
        %v1039 = vpack.c.b16 %v985, %v983
        %v1040 = vpack.c.b16 %v988, %v986
        %v1041 = vpack.c.b16 %v989, %v987
        %v1042 = vpack.c.b16 %v992, %v990
        %v1043 = vpack.c.b16 %v993, %v991
        %v1044 = vpack.c.b16 %v996, %v994
        %v1045 = vpack.c.b16 %v997, %v995
        %v1046 = vpack.c.b16 %v1000, %v998
        %v1047 = vpack.c.b16 %v1001, %v999
        %v1048 = vpack.c.b16 %v1004, %v1002
        %v1049 = vpack.c.b16 %v1005, %v1003
        %v1050 = vpack.c.b16 %v1008, %v1006
        %v1051 = vpack.c.b16 %v1009, %v1007
        %v1052 = vpack.c.b16 %v1012, %v1010
        %v1053 = vpack.c.b16 %v1013, %v1011
        %v1054 = vpack.c.b16 %v1016, %v1014
        %v1055 = vpack.c.b16 %v1017, %v1015
        %v1056 = vpack.c.b16 %v1020, %v1018
        %v1057 = vpack.c.b16 %v1021, %v1019
        %v1058 = vpack.c.b16 %v1024, %v1022
        %v1059 = vpack.c.b16 %v1025, %v1023
        %v1060 = vpack.c.b16 %v1028, %v1026
        %v1061 = vpack.c.b16 %v1029, %v1027
        %1094 = vmatprep.subr.bf16.mxu0 %v1031
        %1095 = vmatpush1.bf16.msra.mxu0 %v1030
        %1096 = vmatprep.subr.bf16.mxu0 %v1033
        %1097 = vmatpush1.bf16.msra.mxu0 %v1032
        %1098 = vmatprep.subr.bf16.mxu0 %v1035
        %1099 = vmatpush1.bf16.msra.mxu0 %v1034
        %1100 = vmatprep.subr.bf16.mxu0 %v1037
        %1101 = vmatpush1.bf16.msra.mxu0 %v1036
        %1102 = vmatprep.subr.bf16.mxu0 %v1039
        %1103 = vmatpush1.bf16.msra.mxu0 %v1038
        %1104 = vmatprep.subr.bf16.mxu0 %v1041
        %1105 = vmatpush1.bf16.msra.mxu0 %v1040
        %1106 = vmatprep.subr.bf16.mxu0 %v1043
        %1107 = vmatpush1.bf16.msra.mxu0 %v1042
        %1108 = vmatprep.subr.bf16.mxu0 %v1045
        %1109 = vmatpush1.bf16.msra.mxu0 %v1044
        %1110 = vmatprep.subr.bf16.mxu0 %v1047
        %1111 = vmatpush1.bf16.msra.mxu0 %v1046
        %1112 = vmatprep.subr.bf16.mxu0 %v1049
        %1113 = vmatpush1.bf16.msra.mxu0 %v1048
        %1114 = vmatprep.subr.bf16.mxu0 %v1051
        %1115 = vmatpush1.bf16.msra.mxu0 %v1050
        %1116 = vmatprep.subr.bf16.mxu0 %v1053
        %1117 = vmatpush1.bf16.msra.mxu0 %v1052
        %1118 = vmatprep.subr.bf16.mxu0 %v1055
        %1119 = vmatpush1.bf16.msra.mxu0 %v1054
        %1120 = vmatprep.subr.bf16.mxu0 %v1057
        %1121 = vmatpush1.bf16.msra.mxu0 %v1056
        %1122 = vmatprep.subr.bf16.mxu0 %v1059
        %1123 = vmatpush1.bf16.msra.mxu0 %v1058
        %1124 = vmatprep.subr.bf16.mxu0 %v1061
        %1125 = vmatpush1.bf16.msra.mxu0 %v1060
        %1126 = vmatprep.mubr.bf16.mxu0 %v658
        %1127 = vmatmul.mubr.bf16.gmra.mrb[0].mxu0 %v657
        %v1128 = vpop.f32.mrb[0].mxu0
        %v1129 = vadd.f32 0.0, %v1128
        %v1130 = vpop.f32.mrb[0].mxu0
        %v1131 = vadd.f32 0.0, %v1130
        %v1132 = vpop.f32.mrb[0].mxu0
        %v1133 = vadd.f32 0.0, %v1132
        %v1134 = vpop.f32.mrb[0].mxu0
        %v1135 = vadd.f32 0.0, %v1134
        %1136 = vmatprep.mubr.bf16.mxu0 %v660
        %1137 = vmatmul.mubr.bf16.gmra.mrb[0].mxu0 %v659
        %v1138 = vpop.f32.mrb[0].mxu0
        %v1139 = vadd.f32 0.0, %v1138
        %v1140 = vpop.f32.mrb[0].mxu0
        %v1141 = vadd.f32 0.0, %v1140
        %v1142 = vpop.f32.mrb[0].mxu0
        %v1143 = vadd.f32 0.0, %v1142
        %v1144 = vpop.f32.mrb[0].mxu0
        %v1145 = vadd.f32 0.0, %v1144
        %1146 = vdwg.mxu0
        %v1147 = vadd.f32 %v894, %v1129
        %v1148 = vadd.f32 %v895, %v1131
        %v1149 = vadd.f32 %v896, %v1133
        %v1150 = vadd.f32 %v897, %v1135
        %v1151 = vadd.f32 %v898, %v1139
        %v1152 = vadd.f32 %v899, %v1141
        %v1153 = vadd.f32 %v900, %v1143
        %v1154 = vadd.f32 %v901, %v1145
        %1155 = vst [vmem:[#allocation3] sm:$0xff] %v1147
        %1156 = vst [vmem:[#allocation3 + $0x8] sm:$0xff] %v1148
        %1157 = vst [vmem:[#allocation3 + $0x10] sm:$0xff] %v1149
        %1158 = vst [vmem:[#allocation3 + $0x18] sm:$0xff] %v1150
        %1159 = vst [vmem:[#allocation3 + $0x20] sm:$0xff] %v1151
        %1160 = vst [vmem:[#allocation3 + $0x28] sm:$0xff] %v1152
        %1161 = vst [vmem:[#allocation3 + $0x30] sm:$0xff] %v1153
        %1162 = vst [vmem:[#allocation3 + $0x38] sm:$0xff] %v1154
        // Predicated region
        $region113: #{_lambda_.17} parent=99 // pred_check
          %p1163 = pneg %p581
        $region114: #{_lambda_.17} parent=99 // pred_check_branch
          %1165 = sbr.rel (%p1163) target = $region116
        $region115: #{_lambda_.17} parent=99 // pred_region
          %v1166 = vld [vmem:[#allocation2] sm:$0xff]
          %v1167 = vld [vmem:[#allocation2 + $0x8] sm:$0xff]
          %v1168 = vld [vmem:[#allocation2 + $0x10] sm:$0xff]
          %v1169 = vld [vmem:[#allocation2 + $0x18] sm:$0xff]
          %v1170 = vld [vmem:[#allocation2 + $0x20] sm:$0xff]
          %v1171 = vld [vmem:[#allocation2 + $0x28] sm:$0xff]
          %v1172 = vld [vmem:[#allocation2 + $0x30] sm:$0xff]
          %v1173 = vld [vmem:[#allocation2 + $0x38] sm:$0xff]
          %v1174 = vmul.f32 %v1166, 0.5
          %v1175 = vmul.f32 %v1167, 0.5
          %v1176 = vmul.f32 %v1168, 0.5
          %v1177 = vmul.f32 %v1169, 0.5
          %v1178 = vmul.f32 %v1170, 0.5
          %v1179 = vmul.f32 %v1171, 0.5
          %v1180 = vmul.f32 %v1172, 0.5
          %v1181 = vmul.f32 %v1173, 0.5
          %v1182 = vmul.f32 %v1166, 0.70710677
          %v1183 = vmul.f32 %v1167, 0.70710677
          %v1184 = vmul.f32 %v1168, 0.70710677
          %v1185 = vmul.f32 %v1169, 0.70710677
          %v1186 = vmul.f32 %v1170, 0.70710677
          %v1187 = vmul.f32 %v1171, 0.70710677
          %v1188 = vmul.f32 %v1172, 0.70710677
          %v1189 = vmul.f32 %v1173, 0.70710677
          %v1190 = vmax.f32 %v1182, -4.0
          %v1191 = vmax.f32 %v1183, -4.0
          %v1192 = vmax.f32 %v1184, -4.0
          %v1193 = vmax.f32 %v1185, -4.0
          %v1194 = vmax.f32 %v1186, -4.0
          %v1195 = vmax.f32 %v1187, -4.0
          %v1196 = vmax.f32 %v1188, -4.0
          %v1197 = vmax.f32 %v1189, -4.0
          %v1198 = vmin.f32 %v1190, 4.0
          %v1199 = vmin.f32 %v1191, 4.0
          %v1200 = vmin.f32 %v1192, 4.0
          %v1201 = vmin.f32 %v1193, 4.0
          %v1202 = vmin.f32 %v1194, 4.0
          %v1203 = vmin.f32 %v1195, 4.0
          %v1204 = vmin.f32 %v1196, 4.0
          %v1205 = vmin.f32 %v1197, 4.0
          %v1206 = vmul.f32 %v1198, %v1198
          %v1207 = vmul.f32 %v1199, %v1199
          %v1208 = vmul.f32 %v1200, %v1200
          %v1209 = vmul.f32 %v1201, %v1201
          %v1210 = vmul.f32 %v1202, %v1202
          %v1211 = vmul.f32 %v1203, %v1203
          %v1212 = vmul.f32 %v1204, %v1204
          %v1213 = vmul.f32 %v1205, %v1205
          %v1214 = vmul.f32 %v1206, -2.7261424e-10
          %v1215 = vmul.f32 %v1207, -2.7261424e-10
          %v1216 = vmul.f32 %v1208, -2.7261424e-10
          %v1217 = vmul.f32 %v1209, -2.7261424e-10
          %v1218 = vmul.f32 %v1210, -2.7261424e-10
          %v1219 = vmul.f32 %v1211, -2.7261424e-10
          %v1220 = vmul.f32 %v1212, -2.7261424e-10
          %v1221 = vmul.f32 %v1213, -2.7261424e-10
          %v1222 = vadd.f32 %v1214, 2.7706815e-08
          %v1223 = vadd.f32 %v1215, 2.7706815e-08
          %v1224 = vadd.f32 %v1216, 2.7706815e-08
          %v1225 = vadd.f32 %v1217, 2.7706815e-08
          %v1226 = vadd.f32 %v1218, 2.7706815e-08
          %v1227 = vadd.f32 %v1219, 2.7706815e-08
          %v1228 = vadd.f32 %v1220, 2.7706815e-08
          %v1229 = vadd.f32 %v1221, 2.7706815e-08
          %v1230 = vmul.f32 %v1222, %v1206
          %v1231 = vmul.f32 %v1223, %v1207
          %v1232 = vmul.f32 %v1224, %v1208
          %v1233 = vmul.f32 %v1225, %v1209
          %v1234 = vmul.f32 %v1226, %v1210
          %v1235 = vmul.f32 %v1227, %v1211
          %v1236 = vmul.f32 %v1228, %v1212
          %v1237 = vmul.f32 %v1229, %v1213
          %v1238 = vadd.f32 %v1230, -2.101024e-06
          %v1239 = vadd.f32 %v1231, -2.101024e-06
          %v1240 = vadd.f32 %v1232, -2.101024e-06
          %v1241 = vadd.f32 %v1233, -2.101024e-06
          %v1242 = vadd.f32 %v1234, -2.101024e-06
          %v1243 = vadd.f32 %v1235, -2.101024e-06
          %v1244 = vadd.f32 %v1236, -2.101024e-06
          %v1245 = vadd.f32 %v1237, -2.101024e-06
          %v1246 = vmul.f32 %v1238, %v1206
          %v1247 = vmul.f32 %v1239, %v1207
          %v1248 = vmul.f32 %v1240, %v1208
          %v1249 = vmul.f32 %v1241, %v1209
          %v1250 = vmul.f32 %v1242, %v1210
          %v1251 = vmul.f32 %v1243, %v1211
          %v1252 = vmul.f32 %v1244, %v1212
          %v1253 = vmul.f32 %v1245, %v1213
          %v1254 = vadd.f32 %v1246, -5.6925062e-05
          %v1255 = vadd.f32 %v1247, -5.6925062e-05
          %v1256 = vadd.f32 %v1248, -5.6925062e-05
          %v1257 = vadd.f32 %v1249, -5.6925062e-05
          %v1258 = vadd.f32 %v1250, -5.6925062e-05
          %v1259 = vadd.f32 %v1251, -5.6925062e-05
          %v1260 = vadd.f32 %v1252, -5.6925062e-05
          %v1261 = vadd.f32 %v1253, -5.6925062e-05
          %v1262 = vmul.f32 %v1254, %v1206
          %v1263 = vmul.f32 %v1255, %v1207
          %v1264 = vmul.f32 %v1256, %v1208
          %v1265 = vmul.f32 %v1257, %v1209
          %v1266 = vmul.f32 %v1258, %v1210
          %v1267 = vmul.f32 %v1259, %v1211
          %v1268 = vmul.f32 %v1260, %v1212
          %v1269 = vmul.f32 %v1261, %v1213
          %v1270 = vadd.f32 %v1262, -0.00073499064
          %v1271 = vadd.f32 %v1263, -0.00073499064
          %v1272 = vadd.f32 %v1264, -0.00073499064
          %v1273 = vadd.f32 %v1265, -0.00073499064
          %v1274 = vadd.f32 %v1266, -0.00073499064
          %v1275 = vadd.f32 %v1267, -0.00073499064
          %v1276 = vadd.f32 %v1268, -0.00073499064
          %v1277 = vadd.f32 %v1269, -0.00073499064
          %v1278 = vmul.f32 %v1270, %v1206
          %v1279 = vmul.f32 %v1271, %v1207
          %v1280 = vmul.f32 %v1272, %v1208
          %v1281 = vmul.f32 %v1273, %v1209
          %v1282 = vmul.f32 %v1274, %v1210
          %v1283 = vmul.f32 %v1275, %v1211
          %v1284 = vmul.f32 %v1276, %v1212
          %v1285 = vmul.f32 %v1277, %v1213
          %v1286 = vadd.f32 %v1278, -0.0029546
          %v1287 = vadd.f32 %v1279, -0.0029546
          %v1288 = vadd.f32 %v1280, -0.0029546
          %v1289 = vadd.f32 %v1281, -0.0029546
          %v1290 = vadd.f32 %v1282, -0.0029546
          %v1291 = vadd.f32 %v1283, -0.0029546
          %v1292 = vadd.f32 %v1284, -0.0029546
          %v1293 = vadd.f32 %v1285, -0.0029546
          %v1294 = vmul.f32 %v1286, %v1206
          %v1295 = vmul.f32 %v1287, %v1207
          %v1296 = vmul.f32 %v1288, %v1208
          %v1297 = vmul.f32 %v1289, %v1209
          %v1298 = vmul.f32 %v1290, %v1210
          %v1299 = vmul.f32 %v1291, %v1211
          %v1300 = vmul.f32 %v1292, %v1212
          %v1301 = vmul.f32 %v1293, %v1213
          %v1302 = vadd.f32 %v1294, -0.016096033
          %v1303 = vadd.f32 %v1295, -0.016096033
          %v1304 = vadd.f32 %v1296, -0.016096033
          %v1305 = vadd.f32 %v1297, -0.016096033
          %v1306 = vadd.f32 %v1298, -0.016096033
          %v1307 = vadd.f32 %v1299, -0.016096033
          %v1308 = vadd.f32 %v1300, -0.016096033
          %v1309 = vadd.f32 %v1301, -0.016096033
          %v1310 = vmul.f32 %v1302, %v1198
          %v1311 = vmul.f32 %v1303, %v1199
          %v1312 = vmul.f32 %v1304, %v1200
          %v1313 = vmul.f32 %v1305, %v1201
          %v1314 = vmul.f32 %v1306, %v1202
          %v1315 = vmul.f32 %v1307, %v1203
          %v1316 = vmul.f32 %v1308, %v1204
          %v1317 = vmul.f32 %v1309, %v1205
          %v1318 = vmul.f32 %v1206, -1.45660715e-05
          %v1319 = vmul.f32 %v1207, -1.45660715e-05
          %v1320 = vmul.f32 %v1208, -1.45660715e-05
          %v1321 = vmul.f32 %v1209, -1.45660715e-05
          %v1322 = vmul.f32 %v1210, -1.45660715e-05
          %v1323 = vmul.f32 %v1211, -1.45660715e-05
          %v1324 = vmul.f32 %v1212, -1.45660715e-05
          %v1325 = vmul.f32 %v1213, -1.45660715e-05
          %v1326 = vadd.f32 %v1318, -0.00021337405
          %v1327 = vadd.f32 %v1319, -0.00021337405
          %v1328 = vadd.f32 %v1320, -0.00021337405
          %v1329 = vadd.f32 %v1321, -0.00021337405
          %v1330 = vadd.f32 %v1322, -0.00021337405
          %v1331 = vadd.f32 %v1323, -0.00021337405
          %v1332 = vadd.f32 %v1324, -0.00021337405
          %v1333 = vadd.f32 %v1325, -0.00021337405
          %v1334 = vmul.f32 %v1326, %v1206
          %v1335 = vmul.f32 %v1327, %v1207
          %v1336 = vmul.f32 %v1328, %v1208
          %v1337 = vmul.f32 %v1329, %v1209
          %v1338 = vmul.f32 %v1330, %v1210
          %v1339 = vmul.f32 %v1331, %v1211
          %v1340 = vmul.f32 %v1332, %v1212
          %v1341 = vmul.f32 %v1333, %v1213
          %v1342 = vadd.f32 %v1334, -0.001682827
          %v1343 = vadd.f32 %v1335, -0.001682827
          %v1344 = vadd.f32 %v1336, -0.001682827
          %v1345 = vadd.f32 %v1337, -0.001682827
          %v1346 = vadd.f32 %v1338, -0.001682827
          %v1347 = vadd.f32 %v1339, -0.001682827
          %v1348 = vadd.f32 %v1340, -0.001682827
          %v1349 = vadd.f32 %v1341, -0.001682827
          %v1350 = vmul.f32 %v1342, %v1206
          %v1351 = vmul.f32 %v1343, %v1207
          %v1352 = vmul.f32 %v1344, %v1208
          %v1353 = vmul.f32 %v1345, %v1209
          %v1354 = vmul.f32 %v1346, %v1210
          %v1355 = vmul.f32 %v1347, %v1211
          %v1356 = vmul.f32 %v1348, %v1212
          %v1357 = vmul.f32 %v1349, %v1213
          %v1358 = vadd.f32 %v1350, -0.0073733293
          %v1359 = vadd.f32 %v1351, -0.0073733293
          %v1360 = vadd.f32 %v1352, -0.0073733293
          %v1361 = vadd.f32 %v1353, -0.0073733293
          %v1362 = vadd.f32 %v1354, -0.0073733293
          %v1363 = vadd.f32 %v1355, -0.0073733293
          %v1364 = vadd.f32 %v1356, -0.0073733293
          %v1365 = vadd.f32 %v1357, -0.0073733293
          %v1366 = vmul.f32 %v1358, %v1206
          %v1367 = vmul.f32 %v1359, %v1207
          %v1368 = vmul.f32 %v1360, %v1208
          %v1369 = vmul.f32 %v1361, %v1209
          %v1370 = vmul.f32 %v1362, %v1210
          %v1371 = vmul.f32 %v1363, %v1211
          %v1372 = vmul.f32 %v1364, %v1212
          %v1373 = vmul.f32 %v1365, %v1213
          %v1374 = vadd.f32 %v1366, -0.014264739
          %v1375 = vadd.f32 %v1367, -0.014264739
          %v1376 = vadd.f32 %v1368, -0.014264739
          %v1377 = vadd.f32 %v1369, -0.014264739
          %v1378 = vadd.f32 %v1370, -0.014264739
          %v1379 = vadd.f32 %v1371, -0.014264739
          %v1380 = vadd.f32 %v1372, -0.014264739
          %v1381 = vadd.f32 %v1373, -0.014264739
          %v1382 = vrcp.pop %v1374
          %v1383 = vmul.f32 %v1310, %v1382
          %v1384 = vrcp.pop %v1375
          %v1385 = vmul.f32 %v1311, %v1384
          %v1386 = vrcp.pop %v1376
          %v1387 = vmul.f32 %v1312, %v1386
          %v1388 = vrcp.pop %v1377
          %v1389 = vmul.f32 %v1313, %v1388
          %v1390 = vrcp.pop %v1378
          %v1391 = vmul.f32 %v1314, %v1390
          %v1392 = vrcp.pop %v1379
          %v1393 = vmul.f32 %v1315, %v1392
          %v1394 = vrcp.pop %v1380
          %v1395 = vmul.f32 %v1316, %v1394
          %v1396 = vrcp.pop %v1381
          %v1397 = vmul.f32 %v1317, %v1396
          %v1398 = vadd.f32 %v1383, 1.0
          %v1399 = vadd.f32 %v1385, 1.0
          %v1400 = vadd.f32 %v1387, 1.0
          %v1401 = vadd.f32 %v1389, 1.0
          %v1402 = vadd.f32 %v1391, 1.0
          %v1403 = vadd.f32 %v1393, 1.0
          %v1404 = vadd.f32 %v1395, 1.0
          %v1405 = vadd.f32 %v1397, 1.0
          %v1406 = vmul.f32 %v1174, %v1398
          %v1407 = vmul.f32 %v1175, %v1399
          %v1408 = vmul.f32 %v1176, %v1400
          %v1409 = vmul.f32 %v1177, %v1401
          %v1410 = vmul.f32 %v1178, %v1402
          %v1411 = vmul.f32 %v1179, %v1403
          %v1412 = vmul.f32 %v1180, %v1404
          %v1413 = vmul.f32 %v1181, %v1405
          %v1414 = vld [vmem:[#allocation3] sm:$0xff]
          %v1415 = vld [vmem:[#allocation3 + $0x8] sm:$0xff]
          %v1416 = vld [vmem:[#allocation3 + $0x10] sm:$0xff]
          %v1417 = vld [vmem:[#allocation3 + $0x18] sm:$0xff]
          %v1418 = vld [vmem:[#allocation3 + $0x20] sm:$0xff]
          %v1419 = vld [vmem:[#allocation3 + $0x28] sm:$0xff]
          %v1420 = vld [vmem:[#allocation3 + $0x30] sm:$0xff]
          %v1421 = vld [vmem:[#allocation3 + $0x38] sm:$0xff]
          %v1422 = vmul.f32 %v1406, %v1414
          %v1423 = vmul.f32 %v1407, %v1415
          %v1424 = vmul.f32 %v1408, %v1416
          %v1425 = vmul.f32 %v1409, %v1417
          %v1426 = vmul.f32 %v1410, %v1418
          %v1427 = vmul.f32 %v1411, %v1419
          %v1428 = vmul.f32 %v1412, %v1420
          %v1429 = vmul.f32 %v1413, %v1421
          %v1430 = vpack.c.bf16 %v1424, %v1422
          %v1431 = vpack.c.bf16 %v1425, %v1423
          %v1432 = vpack.c.bf16 %v1428, %v1426
          %v1433 = vpack.c.bf16 %v1429, %v1427
          %v1438 = vunpack.c.l.b16 %v1430
          %v1439 = vunpack.c.l.b16 %v1431
          %v1440 = vunpack.c.h.b16 %v1430
          %v1441 = vunpack.c.h.b16 %v1431
          %v1442 = vunpack.c.l.b16 %v1432
          %v1443 = vunpack.c.l.b16 %v1433
          %v1444 = vunpack.c.h.b16 %v1432
          %v1445 = vunpack.c.h.b16 %v1433
          %v1446 = vpack.c.b16 %v1439, %v1438
          %v1447 = vpack.c.b16 %v1441, %v1440
          %v1448 = vpack.c.b16 %v1443, %v1442
          %v1449 = vpack.c.b16 %v1445, %v1444
          %1454 = vst [vmem:[%s562] sm:$0xff] %v1446
          %1455 = vst [vmem:[%s562 + $0x8] sm:$0xff] %v1447
          %1456 = vst [vmem:[%s562 + $0x10] sm:$0xff] %v1448
          %1457 = vst [vmem:[%s562 + $0x18] sm:$0xff] %v1449
        $region116: #{_lambda_.17} parent=99 // pred_fallthru
          _
        %s1458 = sand.u32 %s127, 1
        %s1459 = sand.u32 %s127, 1
        %s1460 = smul.addr %s1459, 32
        %s1461 = scalar_lea.vmem [#allocation6], %s1460
        // Predicated region
        $region117: #{_lambda_.17} parent=99 // pred_check
          %p1462 = pneg %p137
        $region118: #{_lambda_.17} parent=99 // pred_check_branch
          %1464 = sbr.rel (%p1462) target = $region120
        $region119: #{_lambda_.17} parent=99 // pred_region
          %s1465 = smul.u32 4, %s19
          %s1466 = smul.u32 2, %s20
          %s1467 = smul.addr %s1465, 4
          %s1468 = sadd.s32 %s1466, %s1467
          %s1469 = smul.addr %s1468, 4
          %s1470 = scalar_lea.vmem %s3, %s1469
          // Predicated region
          $region121: #{_lambda_.17} parent=119 // pred_check
            _
          $region122: #{_lambda_.17} parent=119 // pred_check_branch
            %1472 = sbr.rel (0) target = $region124
          $region123: #{_lambda_.17} parent=119 // pred_region
            // Predicated region
            $region125: #{_lambda_.17} parent=123 // pred_check
              _
            $region126: #{_lambda_.17} parent=123 // pred_check_branch
              %1474 = sbr.rel (0) target = $region128
            $region127: #{_lambda_.17} parent=123 // pred_region
              // Predicated region
              $region140: #{_lambda_.17} parent=127 // pred_check
                _
              $region141: #{_lambda_.17} parent=127 // pred_check_branch
                %1495 = sbr.rel (0) target = $region143
              $region142: #{_lambda_.17} parent=127 // pred_region
                loop: start=0, step=1, limit=1
                $region144: #{_lambda_.17} parent=142 // loop_pre_header
                  _
                $region145: #{_lambda_.17} parent=142 // loop_header
                  %s1497 = sphi 0, %s1501
                  %p1498 = scmp.ge.s32.totalorder %s1497, 1
                  %s1502 = sphi %s1461, %s1461
                  %s1503 = sphi %s1470, %s1470
                $region146: #{_lambda_.17} parent=142 // loop_header_branch
                  %1500 = sbr.rel (%p1498) target = $region150
                $region147: #{_lambda_.17} parent=142 // loop_body
                  %v1504 = vld [vmem:[%s1502] sm:$0xff]
                  %1505 = vst [vmem:[%s1503] sm:$0xff] %v1504
                  %v1506 = vld [vmem:[%s1502 + $0x8] sm:$0xff]
                  %1507 = vst [vmem:[%s1503 + $0x10] sm:$0xff] %v1506
                  %v1508 = vld [vmem:[%s1502 + $0x10] sm:$0xff]
                  %1509 = vst [vmem:[%s1503 + $0x20] sm:$0xff] %v1508
                  %v1510 = vld [vmem:[%s1502 + $0x18] sm:$0xff]
                  %1511 = vst [vmem:[%s1503 + $0x30] sm:$0xff] %v1510
                $region148: #{_lambda_.17} parent=142 // loop_footer
                  %s1501 = sadd.s32 1, %s1497
                $region149: #{_lambda_.17} parent=142 // loop_footer_branch
                  %1496 = sbr.rel target = $region145
                $region150: #{_lambda_.17} parent=142 // loop_exit
                  _
              $region143: #{_lambda_.17} parent=127 // pred_fallthru
                _
              // Predicated region
              $region151: #{_lambda_.17} parent=127 // pred_check
                _
              $region152: #{_lambda_.17} parent=127 // pred_check_branch
                %1513 = sbr.rel target = $region154
              $region153: #{_lambda_.17} parent=127 // pred_region
                _
              $region154: #{_lambda_.17} parent=127 // pred_fallthru
                _
            $region128: #{_lambda_.17} parent=123 // pred_fallthru
              _
            // Predicated region
            $region129: #{_lambda_.17} parent=123 // pred_check
              _
            $region130: #{_lambda_.17} parent=123 // pred_check_branch
              %1476 = sbr.rel target = $region132
            $region131: #{_lambda_.17} parent=123 // pred_region
              loop: start=0, step=1, limit=1
              $region133: #{_lambda_.17} parent=131 // loop_pre_header
                _
              $region134: #{_lambda_.17} parent=131 // loop_header
                %s1479 = sphi 0, %s1483
                %p1480 = scmp.ge.s32.totalorder %s1479, 1
                %s1484 = sphi %s1461, %s1461
                %s1485 = sphi %s1470, %s1470
              $region135: #{_lambda_.17} parent=131 // loop_header_branch
                %1482 = sbr.rel (%p1480) target = $region139
              $region136: #{_lambda_.17} parent=131 // loop_body
                %v1486 = vld [vmem:[%s1484] sm:$0xff]
                %1487 = vst [vmem:[%s1485] sm:$0xff] %v1486
                %v1488 = vld [vmem:[%s1484 + $0x8] sm:$0xff]
                %1489 = vst [vmem:[%s1485 + $0x10] sm:$0xff] %v1488
                %v1490 = vld [vmem:[%s1484 + $0x10] sm:$0xff]
                %1491 = vst [vmem:[%s1485 + $0x20] sm:$0xff] %v1490
                %v1492 = vld [vmem:[%s1484 + $0x18] sm:$0xff]
                %1493 = vst [vmem:[%s1485 + $0x30] sm:$0xff] %v1492
              $region137: #{_lambda_.17} parent=131 // loop_footer
                %s1483 = sadd.s32 1, %s1479
              $region138: #{_lambda_.17} parent=131 // loop_footer_branch
                %1478 = sbr.rel target = $region134
              $region139: #{_lambda_.17} parent=131 // loop_exit
                _
            $region132: #{_lambda_.17} parent=123 // pred_fallthru
              _
          $region124: #{_lambda_.17} parent=119 // pred_fallthru
            _
          %1514 = vnop
        $region120: #{_lambda_.17} parent=99 // pred_fallthru
          _
      $region100: #{_lambda_.17} parent=5 // pred_fallthru
        _
      %p1515 = scmp.le.s32.totalorder 2, %s9
      // Predicated region
      $region155: #{_lambda_.17} parent=5 // pred_check
        %p1516 = pneg %p1515
      $region156: #{_lambda_.17} parent=5 // pred_check_branch
        %1518 = sbr.rel (%p1516) target = $region158
      $region157: #{_lambda_.17} parent=5 // pred_region
        %s1519 = ssub.s32 %s9, 2
        // Predicated region
        $region159: #{_lambda_.17} parent=157 // pred_check
          %p1520 = pneg %p143
        $region160: #{_lambda_.17} parent=157 // pred_check_branch
          %1522 = sbr.rel (%p1520) target = $region162
        $region161: #{_lambda_.17} parent=157 // pred_region
          %s1523 = sand.u32 %s128, 1
          %s1524 = sand.u32 %s128, 1
          %s1525 = smul.addr %s1524, 32
          %s1526 = scalar_lea.vmem [#allocation6], %s1525
        $region162: #{_lambda_.17} parent=157 // pred_fallthru
          _
      $region158: #{_lambda_.17} parent=5 // pred_fallthru
        _
    $region6: #{_lambda_.17} parent=1 // loop_footer
      %s13 = sadd.s32 1, %s9
    $region7: #{_lambda_.17} parent=1 // loop_footer_branch
      %8 = sbr.rel target = $region3
    $region8: #{_lambda_.17} parent=1 // loop_exit
      _

// kernel: _lambda_.18
$region0: #{_lambda_.18}
  #allocation0 [shape = 'u32[]', space=smem, size = 0x4, offset = 0x4, fixed_abs, tag = 'smem constant byte address 0x4 - core index']
  #allocation1 [shape = 'u32[144,128]{1,0:T(1,128)}', space=vmem, size = 0x12000, scoped, tag = 'internal scratch']
  #allocation2 [shape = 'f32[32,128]{1,0:T(8,128)}', space=vmem, size = 0x4000, scoped, tag = 'scratch operand']
  %s0 = inlined_call_operand.vmem [shape: bf16[32,512], index: 0, kind: input, shape index: {}]
  %s1 = inlined_call_operand.vmem [shape: bf16[512,256], index: 1, kind: input, shape index: {}]
  %s2 = inlined_call_operand.vmem [shape: bf16[32,256], index: 2, kind: input, shape index: {}]
  %s3 = inlined_call_operand.vmem [shape: bf16[32,256], index: 3, kind: output, shape index: {}]
  %s4 = sld [smem:[#allocation0]]
  $region172: #{_lambda_.18} parent=0
    _
  %s6 = ssub.s32 1, %s4
  %s7 = scalar_select 0, %s6, %s4
  $region1: #{_lambda_.18} parent=0
    #allocation3 [shape = 'u8[262144]{0}', space=vmem, size = 0x40000, scoped, tag = 'input window, operand 1']
    #allocation4 [shape = 'u8[16384]{0}', space=vmem, size = 0x4000, scoped, tag = 'input window, operand 2']
    #allocation5 [shape = 'u8[16384]{0}', space=vmem, size = 0x4000, scoped, tag = 'output window, operand 0']
    loop: start=0, step=1, limit=4
    $region2: #{_lambda_.18} parent=1 // loop_pre_header
      _
    $region3: #{_lambda_.18} parent=1 // loop_header
      %s9 = sphi 0, %s13
      %p10 = scmp.ge.s32.totalorder %s9, 4
      %s16 = sphi 0, %s35
      %s17 = sphi 0, %s31
      %s18 = sphi 0, %s27
      %s19 = sphi 0, %s16
      %s20 = sphi 0, %s17
      %s21 = sphi 0, %s18
      %s22 = sphi 0, %s19
      %s23 = sphi 0, %s20
      %s24 = sphi 0, %s21
      %s40 = sphi 0, %s42
      %s43 = sphi 0, %s40
      %s44 = sphi 0, %s43
      %s60 = sphi 0, %s44
      %s68 = sphi 0, %s70
      %s71 = sphi 0, %s68
      %s72 = sphi 0, %s71
      %s88 = sphi 0, %s72
      %s96 = sphi 0, %s98
      %s99 = sphi 0, %s96
      %s100 = sphi 0, %s99
      %s116 = sphi 0, %s100
      %s124 = sphi 0, %s126
      %s127 = sphi 0, %s124
      %s128 = sphi 0, %s127
      %s144 = sphi 0, %s128
    $region4: #{_lambda_.18} parent=1 // loop_header_branch
      %12 = sbr.rel (%p10) target = $region8
    $region5: #{_lambda_.18} parent=1 // loop_body
      %s14 = ssub.s32 %s9, 1
      %s15 = ssub.s32 %s9, 2
      %s25 = sadd.s32 1, %s18
      %p26 = scmp.ge.s32.totalorder %s25, 1
      %s27 = scalar_select %p26, 0, %s25
      %s28 = sadd.s32 1, %s17
      %s29 = scalar_select %p26, %s28, %s17
      %p30 = scmp.ge.s32.totalorder %s29, 2
      %s31 = scalar_select %p30, 0, %s29
      %s32 = sadd.s32 1, %s16
      %s33 = scalar_select %p30, %s32, %s16
      %p34 = scmp.ge.s32.totalorder %s33, 1
      %s35 = scalar_select %p34, 0, %s33
      %s36 = ssub.s32 %s16, %s35
      %s37 = ssub.s32 %s18, %s27
      %s38 = sor.u32 %s36, %s37
      %p39 = scmp.eq.s32.totalorder %s38, 0
      %s41 = sadd.s32 %s40, 1
      %s42 = scalar_select %p39, %s40, %s41
      %p45 = pneg %p39
      %p46 = scmp.eq.s32.totalorder %s9, 1
      %p47 = por %p45, %p46
      %p48 = scmp.ne.s32.totalorder %s40, %s43
      %p49 = scmp.eq.s32.totalorder %s9, 0
      %p50 = por %p48, %p49
      %p51 = scmp.ne.s32.totalorder %s40, %s43
      %p52 = scmp.eq.s32.totalorder %s14, 1
      %p53 = por %p51, %p52
      %p54 = scmp.ne.s32.totalorder %s43, %s44
      %p55 = scmp.eq.s32.totalorder %s14, 0
      %p56 = por %p54, %p55
      %p57 = scmp.ne.s32.totalorder %s43, %s44
      %p58 = scmp.eq.s32.totalorder %s15, 1
      %p59 = por %p57, %p58
      %p61 = scmp.ne.s32.totalorder %s44, %s60
      %p62 = scmp.eq.s32.totalorder %s15, 0
      %p63 = por %p61, %p62
      %s64 = ssub.s32 %s18, %s27
      %s65 = ssub.s32 %s17, %s31
      %s66 = sor.u32 %s64, %s65
      %p67 = scmp.eq.s32.totalorder %s66, 0
      %s69 = sadd.s32 %s68, 1
      %s70 = scalar_select %p67, %s68, %s69
      %p73 = pneg %p67
      %p74 = scmp.eq.s32.totalorder %s9, 1
      %p75 = por %p73, %p74
      %p76 = scmp.ne.s32.totalorder %s68, %s71
      %p77 = scmp.eq.s32.totalorder %s9, 0
      %p78 = por %p76, %p77
      %p79 = scmp.ne.s32.totalorder %s68, %s71
      %p80 = scmp.eq.s32.totalorder %s14, 1
      %p81 = por %p79, %p80
      %p82 = scmp.ne.s32.totalorder %s71, %s72
      %p83 = scmp.eq.s32.totalorder %s14, 0
      %p84 = por %p82, %p83
      %p85 = scmp.ne.s32.totalorder %s71, %s72
      %p86 = scmp.eq.s32.totalorder %s15, 1
      %p87 = por %p85, %p86
      %p89 = scmp.ne.s32.totalorder %s72, %s88
      %p90 = scmp.eq.s32.totalorder %s15, 0
      %p91 = por %p89, %p90
      %s92 = ssub.s32 %s16, %s35
      %s93 = ssub.s32 %s17, %s31
      %s94 = sor.u32 %s92, %s93
      %p95 = scmp.eq.s32.totalorder %s94, 0
      %s97 = sadd.s32 %s96, 1
      %s98 = scalar_select %p95, %s96, %s97
      %p101 = pneg %p95
      %p102 = scmp.eq.s32.totalorder %s9, 1
      %p103 = por %p101, %p102
      %p104 = scmp.ne.s32.totalorder %s96, %s99
      %p105 = scmp.eq.s32.totalorder %s9, 0
      %p106 = por %p104, %p105
      %p107 = scmp.ne.s32.totalorder %s96, %s99
      %p108 = scmp.eq.s32.totalorder %s14, 1
      %p109 = por %p107, %p108
      %p110 = scmp.ne.s32.totalorder %s99, %s100
      %p111 = scmp.eq.s32.totalorder %s14, 0
      %p112 = por %p110, %p111
      %p113 = scmp.ne.s32.totalorder %s99, %s100
      %p114 = scmp.eq.s32.totalorder %s15, 1
      %p115 = por %p113, %p114
      %p117 = scmp.ne.s32.totalorder %s100, %s116
      %p118 = scmp.eq.s32.totalorder %s15, 0
      %p119 = por %p117, %p118
      %s120 = ssub.s32 %s16, %s35
      %s121 = ssub.s32 %s17, %s31
      %s122 = sor.u32 %s120, %s121
      %p123 = scmp.eq.s32.totalorder %s122, 0
      %s125 = sadd.s32 %s124, 1
      %s126 = scalar_select %p123, %s124, %s125
      %p129 = pneg %p123
      %p130 = scmp.eq.s32.totalorder %s9, 1
      %p131 = por %p129, %p130
      %p132 = scmp.ne.s32.totalorder %s124, %s127
      %p133 = scmp.eq.s32.totalorder %s9, 0
      %p134 = por %p132, %p133
      %p135 = scmp.ne.s32.totalorder %s124, %s127
      %p136 = scmp.eq.s32.totalorder %s14, 1
      %p137 = por %p135, %p136
      %p138 = scmp.ne.s32.totalorder %s127, %s128
      %p139 = scmp.eq.s32.totalorder %s14, 0
      %p140 = por %p138, %p139
      %p141 = scmp.ne.s32.totalorder %s127, %s128
      %p142 = scmp.eq.s32.totalorder %s15, 1
      %p143 = por %p141, %p142
      %p145 = scmp.ne.s32.totalorder %s128, %s144
      %p146 = scmp.eq.s32.totalorder %s15, 0
      %p147 = por %p145, %p146
      %p148 = scmp.le.s32.totalorder 1, %s9
      %p149 = scmp.lt.s32.totalorder %s9, 3
      %p150 = pnand %p148, %p149
      %p151 = pneg %p150
      // Predicated region
      $region9: #{_lambda_.18} parent=5 // pred_check
        _
      $region10: #{_lambda_.18} parent=5 // pred_check_branch
        %153 = sbr.rel (%p150) target = $region12
      $region11: #{_lambda_.18} parent=5 // pred_region
        %s154 = ssub.s32 %s9, 1
        // Predicated region
        $region13: #{_lambda_.18} parent=11 // pred_check
          %p155 = pneg %p56
        $region14: #{_lambda_.18} parent=11 // pred_check_branch
          %157 = sbr.rel (%p155) target = $region16
        $region15: #{_lambda_.18} parent=11 // pred_region
          %s158 = smul.u32 4, %s19
          %s159 = smul.u32 4, %s21
          %p160 = scmp.lt.s32.totalorder %s158, 3
          %s161 = scalar_select %p160, %s158, 3
          %p162 = scmp.lt.s32.totalorder %s159, 3
          %s163 = scalar_select %p162, %s159, 3
          %s164 = smul.addr %s161, 4
          %s165 = sadd.s32 %s163, %s164
          %s166 = smul.addr %s165, 4
          %s167 = scalar_lea.vmem %s0, %s166
          %s168 = smul.u32 4, %s19
          %s169 = smul.u32 4, %s21
        $region16: #{_lambda_.18} parent=11 // pred_fallthru
          _
      $region12: #{_lambda_.18} parent=5 // pred_fallthru
        _
      %p170 = scmp.lt.s32.totalorder %s9, 2
      // Predicated region
      $region17: #{_lambda_.18} parent=5 // pred_check
        %p171 = pneg %p170
      $region18: #{_lambda_.18} parent=5 // pred_check_branch
        %173 = sbr.rel (%p171) target = $region20
      $region19: #{_lambda_.18} parent=5 // pred_region
        // Predicated region
        $region21: #{_lambda_.18} parent=19 // pred_check
          %p174 = pneg %p78
        $region22: #{_lambda_.18} parent=19 // pred_check_branch
          %176 = sbr.rel (%p174) target = $region24
        $region23: #{_lambda_.18} parent=19 // pred_region
          %s177 = sand.u32 %s68, 1
          %s178 = sand.u32 %s68, 1
          %s179 = smul.addr %s178, 256
          %s180 = scalar_lea.vmem [#allocation3], %s179
          %s181 = smul.u32 64, %s18
          %s182 = smul.addr %s181, 2
          %s183 = sadd.s32 %s17, %s182
          %s184 = smul.addr %s183, 4
          %s185 = scalar_lea.vmem %s1, %s184
          // Predicated region
          $region25: #{_lambda_.18} parent=23 // pred_check
            _
          $region26: #{_lambda_.18} parent=23 // pred_check_branch
            %187 = sbr.rel (0) target = $region28
          $region27: #{_lambda_.18} parent=23 // pred_region
            // Predicated region
            $region29: #{_lambda_.18} parent=27 // pred_check
              _
            $region30: #{_lambda_.18} parent=27 // pred_check_branch
              %189 = sbr.rel target = $region32
            $region31: #{_lambda_.18} parent=27 // pred_region
              // Predicated region
              $region44: #{_lambda_.18} parent=31 // pred_check
                _
              $region45: #{_lambda_.18} parent=31 // pred_check_branch
                %330 = sbr.rel (0) target = $region47
              $region46: #{_lambda_.18} parent=31 // pred_region
                loop: start=0, step=1, limit=1
                $region48: #{_lambda_.18} parent=46 // loop_pre_header
                  _
                $region49: #{_lambda_.18} parent=46 // loop_header
                  %s332 = sphi 0, %s336
                  %p333 = scmp.ge.s32.totalorder %s332, 1
                  %s337 = sphi %s185, %s185
                  %s338 = sphi %s180, %s180
                $region50: #{_lambda_.18} parent=46 // loop_header_branch
                  %335 = sbr.rel (%p333) target = $region54
                $region51: #{_lambda_.18} parent=46 // loop_body
                  _
                $region52: #{_lambda_.18} parent=46 // loop_footer
                  %s336 = sadd.s32 1, %s332
                $region53: #{_lambda_.18} parent=46 // loop_footer_branch
                  %331 = sbr.rel target = $region49
                $region54: #{_lambda_.18} parent=46 // loop_exit
                  _
                loop: start=0, step=1, limit=1
                $region55: #{_lambda_.18} parent=46 // loop_pre_header
                  _
                $region56: #{_lambda_.18} parent=46 // loop_header
                  %s341 = sphi 0, %s345
                  %p342 = scmp.ge.s32.totalorder %s341, 1
                  %s346 = sphi %s185, %s185
                  %s347 = sphi %s180, %s180
                $region57: #{_lambda_.18} parent=46 // loop_header_branch
                  %344 = sbr.rel (%p342) target = $region61
                $region58: #{_lambda_.18} parent=46 // loop_body
                  %v348 = vld [vmem:[%s346] sm:$0xf]
                  %349 = vst [vmem:[%s347] sm:$0xf] %v348
                  %v350 = vld [vmem:[%s346 + $0x8] sm:$0xf]
                  %351 = vst [vmem:[%s347 + $0x4] sm:$0xf] %v350
                  %v352 = vld [vmem:[%s346 + $0x10] sm:$0xf]
                  %353 = vst [vmem:[%s347 + $0x8] sm:$0xf] %v352
                  %v354 = vld [vmem:[%s346 + $0x18] sm:$0xf]
                  %355 = vst [vmem:[%s347 + $0xc] sm:$0xf] %v354
                  %v356 = vld [vmem:[%s346 + $0x20] sm:$0xf]
                  %357 = vst [vmem:[%s347 + $0x10] sm:$0xf] %v356
                  %v358 = vld [vmem:[%s346 + $0x28] sm:$0xf]
                  %359 = vst [vmem:[%s347 + $0x14] sm:$0xf] %v358
                  %v360 = vld [vmem:[%s346 + $0x30] sm:$0xf]
                  %361 = vst [vmem:[%s347 + $0x18] sm:$0xf] %v360
                  %v362 = vld [vmem:[%s346 + $0x38] sm:$0xf]
                  %363 = vst [vmem:[%s347 + $0x1c] sm:$0xf] %v362
                  %v364 = vld [vmem:[%s346 + $0x40] sm:$0xf]
                  %365 = vst [vmem:[%s347 + $0x20] sm:$0xf] %v364
                  %v366 = vld [vmem:[%s346 + $0x48] sm:$0xf]
                  %367 = vst [vmem:[%s347 + $0x24] sm:$0xf] %v366
                  %v368 = vld [vmem:[%s346 + $0x50] sm:$0xf]
                  %369 = vst [vmem:[%s347 + $0x28] sm:$0xf] %v368
                  %v370 = vld [vmem:[%s346 + $0x58] sm:$0xf]
                  %371 = vst [vmem:[%s347 + $0x2c] sm:$0xf] %v370
                  %v372 = vld [vmem:[%s346 + $0x60] sm:$0xf]
                  %373 = vst [vmem:[%s347 + $0x30] sm:$0xf] %v372
                  %v374 = vld [vmem:[%s346 + $0x68] sm:$0xf]
                  %375 = vst [vmem:[%s347 + $0x34] sm:$0xf] %v374
                  %v376 = vld [vmem:[%s346 + $0x70] sm:$0xf]
                  %377 = vst [vmem:[%s347 + $0x38] sm:$0xf] %v376
                  %v378 = vld [vmem:[%s346 + $0x78] sm:$0xf]
                  %379 = vst [vmem:[%s347 + $0x3c] sm:$0xf] %v378
                  %v380 = vld [vmem:[%s346 + $0x80] sm:$0xf]
                  %381 = vst [vmem:[%s347 + $0x40] sm:$0xf] %v380
                  %v382 = vld [vmem:[%s346 + $0x88] sm:$0xf]
                  %383 = vst [vmem:[%s347 + $0x44] sm:$0xf] %v382
                  %v384 = vld [vmem:[%s346 + $0x90] sm:$0xf]
                  %385 = vst [vmem:[%s347 + $0x48] sm:$0xf] %v384
                  %v386 = vld [vmem:[%s346 + $0x98] sm:$0xf]
                  %387 = vst [vmem:[%s347 + $0x4c] sm:$0xf] %v386
                  %v388 = vld [vmem:[%s346 + $0xa0] sm:$0xf]
                  %389 = vst [vmem:[%s347 + $0x50] sm:$0xf] %v388
                  %v390 = vld [vmem:[%s346 + $0xa8] sm:$0xf]
                  %391 = vst [vmem:[%s347 + $0x54] sm:$0xf] %v390
                  %v392 = vld [vmem:[%s346 + $0xb0] sm:$0xf]
                  %393 = vst [vmem:[%s347 + $0x58] sm:$0xf] %v392
                  %v394 = vld [vmem:[%s346 + $0xb8] sm:$0xf]
                  %395 = vst [vmem:[%s347 + $0x5c] sm:$0xf] %v394
                  %v396 = vld [vmem:[%s346 + $0xc0] sm:$0xf]
                  %397 = vst [vmem:[%s347 + $0x60] sm:$0xf] %v396
                  %v398 = vld [vmem:[%s346 + $0xc8] sm:$0xf]
                  %399 = vst [vmem:[%s347 + $0x64] sm:$0xf] %v398
                  %v400 = vld [vmem:[%s346 + $0xd0] sm:$0xf]
                  %401 = vst [vmem:[%s347 + $0x68] sm:$0xf] %v400
                  %v402 = vld [vmem:[%s346 + $0xd8] sm:$0xf]
                  %403 = vst [vmem:[%s347 + $0x6c] sm:$0xf] %v402
                  %v404 = vld [vmem:[%s346 + $0xe0] sm:$0xf]
                  %405 = vst [vmem:[%s347 + $0x70] sm:$0xf] %v404
                  %v406 = vld [vmem:[%s346 + $0xe8] sm:$0xf]
                  %407 = vst [vmem:[%s347 + $0x74] sm:$0xf] %v406
                  %v408 = vld [vmem:[%s346 + $0xf0] sm:$0xf]
                  %409 = vst [vmem:[%s347 + $0x78] sm:$0xf] %v408
                  %v410 = vld [vmem:[%s346 + $0xf8] sm:$0xf]
                  %411 = vst [vmem:[%s347 + $0x7c] sm:$0xf] %v410
                  %v412 = vld [vmem:[%s346 + $0x100] sm:$0xf]
                  %413 = vst [vmem:[%s347 + $0x80] sm:$0xf] %v412
                  %v414 = vld [vmem:[%s346 + $0x108] sm:$0xf]
                  %415 = vst [vmem:[%s347 + $0x84] sm:$0xf] %v414
                  %v416 = vld [vmem:[%s346 + $0x110] sm:$0xf]
                  %417 = vst [vmem:[%s347 + $0x88] sm:$0xf] %v416
                  %v418 = vld [vmem:[%s346 + $0x118] sm:$0xf]
                  %419 = vst [vmem:[%s347 + $0x8c] sm:$0xf] %v418
                  %v420 = vld [vmem:[%s346 + $0x120] sm:$0xf]
                  %421 = vst [vmem:[%s347 + $0x90] sm:$0xf] %v420
                  %v422 = vld [vmem:[%s346 + $0x128] sm:$0xf]
                  %423 = vst [vmem:[%s347 + $0x94] sm:$0xf] %v422
                  %v424 = vld [vmem:[%s346 + $0x130] sm:$0xf]
                  %425 = vst [vmem:[%s347 + $0x98] sm:$0xf] %v424
                  %v426 = vld [vmem:[%s346 + $0x138] sm:$0xf]
                  %427 = vst [vmem:[%s347 + $0x9c] sm:$0xf] %v426
                  %v428 = vld [vmem:[%s346 + $0x140] sm:$0xf]
                  %429 = vst [vmem:[%s347 + $0xa0] sm:$0xf] %v428
                  %v430 = vld [vmem:[%s346 + $0x148] sm:$0xf]
                  %431 = vst [vmem:[%s347 + $0xa4] sm:$0xf] %v430
                  %v432 = vld [vmem:[%s346 + $0x150] sm:$0xf]
                  %433 = vst [vmem:[%s347 + $0xa8] sm:$0xf] %v432
                  %v434 = vld [vmem:[%s346 + $0x158] sm:$0xf]
                  %435 = vst [vmem:[%s347 + $0xac] sm:$0xf] %v434
                  %v436 = vld [vmem:[%s346 + $0x160] sm:$0xf]
                  %437 = vst [vmem:[%s347 + $0xb0] sm:$0xf] %v436
                  %v438 = vld [vmem:[%s346 + $0x168] sm:$0xf]
                  %439 = vst [vmem:[%s347 + $0xb4] sm:$0xf] %v438
                  %v440 = vld [vmem:[%s346 + $0x170] sm:$0xf]
                  %441 = vst [vmem:[%s347 + $0xb8] sm:$0xf] %v440
                  %v442 = vld [vmem:[%s346 + $0x178] sm:$0xf]
                  %443 = vst [vmem:[%s347 + $0xbc] sm:$0xf] %v442
                  %v444 = vld [vmem:[%s346 + $0x180] sm:$0xf]
                  %445 = vst [vmem:[%s347 + $0xc0] sm:$0xf] %v444
                  %v446 = vld [vmem:[%s346 + $0x188] sm:$0xf]
                  %447 = vst [vmem:[%s347 + $0xc4] sm:$0xf] %v446
                  %v448 = vld [vmem:[%s346 + $0x190] sm:$0xf]
                  %449 = vst [vmem:[%s347 + $0xc8] sm:$0xf] %v448
                  %v450 = vld [vmem:[%s346 + $0x198] sm:$0xf]
                  %451 = vst [vmem:[%s347 + $0xcc] sm:$0xf] %v450
                  %v452 = vld [vmem:[%s346 + $0x1a0] sm:$0xf]
                  %453 = vst [vmem:[%s347 + $0xd0] sm:$0xf] %v452
                  %v454 = vld [vmem:[%s346 + $0x1a8] sm:$0xf]
                  %455 = vst [vmem:[%s347 + $0xd4] sm:$0xf] %v454
                  %v456 = vld [vmem:[%s346 + $0x1b0] sm:$0xf]
                  %457 = vst [vmem:[%s347 + $0xd8] sm:$0xf] %v456
                  %v458 = vld [vmem:[%s346 + $0x1b8] sm:$0xf]
                  %459 = vst [vmem:[%s347 + $0xdc] sm:$0xf] %v458
                  %v460 = vld [vmem:[%s346 + $0x1c0] sm:$0xf]
                  %461 = vst [vmem:[%s347 + $0xe0] sm:$0xf] %v460
                  %v462 = vld [vmem:[%s346 + $0x1c8] sm:$0xf]
                  %463 = vst [vmem:[%s347 + $0xe4] sm:$0xf] %v462
                  %v464 = vld [vmem:[%s346 + $0x1d0] sm:$0xf]
                  %465 = vst [vmem:[%s347 + $0xe8] sm:$0xf] %v464
                  %v466 = vld [vmem:[%s346 + $0x1d8] sm:$0xf]
                  %467 = vst [vmem:[%s347 + $0xec] sm:$0xf] %v466
                  %v468 = vld [vmem:[%s346 + $0x1e0] sm:$0xf]
                  %469 = vst [vmem:[%s347 + $0xf0] sm:$0xf] %v468
                  %v470 = vld [vmem:[%s346 + $0x1e8] sm:$0xf]
                  %471 = vst [vmem:[%s347 + $0xf4] sm:$0xf] %v470
                  %v472 = vld [vmem:[%s346 + $0x1f0] sm:$0xf]
                  %473 = vst [vmem:[%s347 + $0xf8] sm:$0xf] %v472
                  %v474 = vld [vmem:[%s346 + $0x1f8] sm:$0xf]
                  %475 = vst [vmem:[%s347 + $0xfc] sm:$0xf] %v474
                $region59: #{_lambda_.18} parent=46 // loop_footer
                  %s345 = sadd.s32 1, %s341
                $region60: #{_lambda_.18} parent=46 // loop_footer_branch
                  %340 = sbr.rel target = $region56
                $region61: #{_lambda_.18} parent=46 // loop_exit
                  _
              $region47: #{_lambda_.18} parent=31 // pred_fallthru
                _
            $region32: #{_lambda_.18} parent=27 // pred_fallthru
              _
            // Predicated region
            $region33: #{_lambda_.18} parent=27 // pred_check
              _
            $region34: #{_lambda_.18} parent=27 // pred_check_branch
              %191 = sbr.rel (0) target = $region36
            $region35: #{_lambda_.18} parent=27 // pred_region
              loop: start=0, step=1, limit=1
              $region37: #{_lambda_.18} parent=35 // loop_pre_header
                _
              $region38: #{_lambda_.18} parent=35 // loop_header
                %s194 = sphi 0, %s198
                %p195 = scmp.ge.s32.totalorder %s194, 1
                %s199 = sphi %s185, %s185
                %s200 = sphi %s180, %s180
              $region39: #{_lambda_.18} parent=35 // loop_header_branch
                %197 = sbr.rel (%p195) target = $region43
              $region40: #{_lambda_.18} parent=35 // loop_body
                %v201 = vld [vmem:[%s199] sm:$0xf]
                %202 = vst [vmem:[%s200] sm:$0xf] %v201
                %v203 = vld [vmem:[%s199 + $0x8] sm:$0xf]
                %204 = vst [vmem:[%s200 + $0x4] sm:$0xf] %v203
                %v205 = vld [vmem:[%s199 + $0x10] sm:$0xf]
                %206 = vst [vmem:[%s200 + $0x8] sm:$0xf] %v205
                %v207 = vld [vmem:[%s199 + $0x18] sm:$0xf]
                %208 = vst [vmem:[%s200 + $0xc] sm:$0xf] %v207
                %v209 = vld [vmem:[%s199 + $0x20] sm:$0xf]
                %210 = vst [vmem:[%s200 + $0x10] sm:$0xf] %v209
                %v211 = vld [vmem:[%s199 + $0x28] sm:$0xf]
                %212 = vst [vmem:[%s200 + $0x14] sm:$0xf] %v211
                %v213 = vld [vmem:[%s199 + $0x30] sm:$0xf]
                %214 = vst [vmem:[%s200 + $0x18] sm:$0xf] %v213
                %v215 = vld [vmem:[%s199 + $0x38] sm:$0xf]
                %216 = vst [vmem:[%s200 + $0x1c] sm:$0xf] %v215
                %v217 = vld [vmem:[%s199 + $0x40] sm:$0xf]
                %218 = vst [vmem:[%s200 + $0x20] sm:$0xf] %v217
                %v219 = vld [vmem:[%s199 + $0x48] sm:$0xf]
                %220 = vst [vmem:[%s200 + $0x24] sm:$0xf] %v219
                %v221 = vld [vmem:[%s199 + $0x50] sm:$0xf]
                %222 = vst [vmem:[%s200 + $0x28] sm:$0xf] %v221
                %v223 = vld [vmem:[%s199 + $0x58] sm:$0xf]
                %224 = vst [vmem:[%s200 + $0x2c] sm:$0xf] %v223
                %v225 = vld [vmem:[%s199 + $0x60] sm:$0xf]
                %226 = vst [vmem:[%s200 + $0x30] sm:$0xf] %v225
                %v227 = vld [vmem:[%s199 + $0x68] sm:$0xf]
                %228 = vst [vmem:[%s200 + $0x34] sm:$0xf] %v227
                %v229 = vld [vmem:[%s199 + $0x70] sm:$0xf]
                %230 = vst [vmem:[%s200 + $0x38] sm:$0xf] %v229
                %v231 = vld [vmem:[%s199 + $0x78] sm:$0xf]
                %232 = vst [vmem:[%s200 + $0x3c] sm:$0xf] %v231
                %v233 = vld [vmem:[%s199 + $0x80] sm:$0xf]
                %234 = vst [vmem:[%s200 + $0x40] sm:$0xf] %v233
                %v235 = vld [vmem:[%s199 + $0x88] sm:$0xf]
                %236 = vst [vmem:[%s200 + $0x44] sm:$0xf] %v235
                %v237 = vld [vmem:[%s199 + $0x90] sm:$0xf]
                %238 = vst [vmem:[%s200 + $0x48] sm:$0xf] %v237
                %v239 = vld [vmem:[%s199 + $0x98] sm:$0xf]
                %240 = vst [vmem:[%s200 + $0x4c] sm:$0xf] %v239
                %v241 = vld [vmem:[%s199 + $0xa0] sm:$0xf]
                %242 = vst [vmem:[%s200 + $0x50] sm:$0xf] %v241
                %v243 = vld [vmem:[%s199 + $0xa8] sm:$0xf]
                %244 = vst [vmem:[%s200 + $0x54] sm:$0xf] %v243
                %v245 = vld [vmem:[%s199 + $0xb0] sm:$0xf]
                %246 = vst [vmem:[%s200 + $0x58] sm:$0xf] %v245
                %v247 = vld [vmem:[%s199 + $0xb8] sm:$0xf]
                %248 = vst [vmem:[%s200 + $0x5c] sm:$0xf] %v247
                %v249 = vld [vmem:[%s199 + $0xc0] sm:$0xf]
                %250 = vst [vmem:[%s200 + $0x60] sm:$0xf] %v249
                %v251 = vld [vmem:[%s199 + $0xc8] sm:$0xf]
                %252 = vst [vmem:[%s200 + $0x64] sm:$0xf] %v251
                %v253 = vld [vmem:[%s199 + $0xd0] sm:$0xf]
                %254 = vst [vmem:[%s200 + $0x68] sm:$0xf] %v253
                %v255 = vld [vmem:[%s199 + $0xd8] sm:$0xf]
                %256 = vst [vmem:[%s200 + $0x6c] sm:$0xf] %v255
                %v257 = vld [vmem:[%s199 + $0xe0] sm:$0xf]
                %258 = vst [vmem:[%s200 + $0x70] sm:$0xf] %v257
                %v259 = vld [vmem:[%s199 + $0xe8] sm:$0xf]
                %260 = vst [vmem:[%s200 + $0x74] sm:$0xf] %v259
                %v261 = vld [vmem:[%s199 + $0xf0] sm:$0xf]
                %262 = vst [vmem:[%s200 + $0x78] sm:$0xf] %v261
                %v263 = vld [vmem:[%s199 + $0xf8] sm:$0xf]
                %264 = vst [vmem:[%s200 + $0x7c] sm:$0xf] %v263
                %v265 = vld [vmem:[%s199 + $0x100] sm:$0xf]
                %266 = vst [vmem:[%s200 + $0x80] sm:$0xf] %v265
                %v267 = vld [vmem:[%s199 + $0x108] sm:$0xf]
                %268 = vst [vmem:[%s200 + $0x84] sm:$0xf] %v267
                %v269 = vld [vmem:[%s199 + $0x110] sm:$0xf]
                %270 = vst [vmem:[%s200 + $0x88] sm:$0xf] %v269
                %v271 = vld [vmem:[%s199 + $0x118] sm:$0xf]
                %272 = vst [vmem:[%s200 + $0x8c] sm:$0xf] %v271
                %v273 = vld [vmem:[%s199 + $0x120] sm:$0xf]
                %274 = vst [vmem:[%s200 + $0x90] sm:$0xf] %v273
                %v275 = vld [vmem:[%s199 + $0x128] sm:$0xf]
                %276 = vst [vmem:[%s200 + $0x94] sm:$0xf] %v275
                %v277 = vld [vmem:[%s199 + $0x130] sm:$0xf]
                %278 = vst [vmem:[%s200 + $0x98] sm:$0xf] %v277
                %v279 = vld [vmem:[%s199 + $0x138] sm:$0xf]
                %280 = vst [vmem:[%s200 + $0x9c] sm:$0xf] %v279
                %v281 = vld [vmem:[%s199 + $0x140] sm:$0xf]
                %282 = vst [vmem:[%s200 + $0xa0] sm:$0xf] %v281
                %v283 = vld [vmem:[%s199 + $0x148] sm:$0xf]
                %284 = vst [vmem:[%s200 + $0xa4] sm:$0xf] %v283
                %v285 = vld [vmem:[%s199 + $0x150] sm:$0xf]
                %286 = vst [vmem:[%s200 + $0xa8] sm:$0xf] %v285
                %v287 = vld [vmem:[%s199 + $0x158] sm:$0xf]
                %288 = vst [vmem:[%s200 + $0xac] sm:$0xf] %v287
                %v289 = vld [vmem:[%s199 + $0x160] sm:$0xf]
                %290 = vst [vmem:[%s200 + $0xb0] sm:$0xf] %v289
                %v291 = vld [vmem:[%s199 + $0x168] sm:$0xf]
                %292 = vst [vmem:[%s200 + $0xb4] sm:$0xf] %v291
                %v293 = vld [vmem:[%s199 + $0x170] sm:$0xf]
                %294 = vst [vmem:[%s200 + $0xb8] sm:$0xf] %v293
                %v295 = vld [vmem:[%s199 + $0x178] sm:$0xf]
                %296 = vst [vmem:[%s200 + $0xbc] sm:$0xf] %v295
                %v297 = vld [vmem:[%s199 + $0x180] sm:$0xf]
                %298 = vst [vmem:[%s200 + $0xc0] sm:$0xf] %v297
                %v299 = vld [vmem:[%s199 + $0x188] sm:$0xf]
                %300 = vst [vmem:[%s200 + $0xc4] sm:$0xf] %v299
                %v301 = vld [vmem:[%s199 + $0x190] sm:$0xf]
                %302 = vst [vmem:[%s200 + $0xc8] sm:$0xf] %v301
                %v303 = vld [vmem:[%s199 + $0x198] sm:$0xf]
                %304 = vst [vmem:[%s200 + $0xcc] sm:$0xf] %v303
                %v305 = vld [vmem:[%s199 + $0x1a0] sm:$0xf]
                %306 = vst [vmem:[%s200 + $0xd0] sm:$0xf] %v305
                %v307 = vld [vmem:[%s199 + $0x1a8] sm:$0xf]
                %308 = vst [vmem:[%s200 + $0xd4] sm:$0xf] %v307
                %v309 = vld [vmem:[%s199 + $0x1b0] sm:$0xf]
                %310 = vst [vmem:[%s200 + $0xd8] sm:$0xf] %v309
                %v311 = vld [vmem:[%s199 + $0x1b8] sm:$0xf]
                %312 = vst [vmem:[%s200 + $0xdc] sm:$0xf] %v311
                %v313 = vld [vmem:[%s199 + $0x1c0] sm:$0xf]
                %314 = vst [vmem:[%s200 + $0xe0] sm:$0xf] %v313
                %v315 = vld [vmem:[%s199 + $0x1c8] sm:$0xf]
                %316 = vst [vmem:[%s200 + $0xe4] sm:$0xf] %v315
                %v317 = vld [vmem:[%s199 + $0x1d0] sm:$0xf]
                %318 = vst [vmem:[%s200 + $0xe8] sm:$0xf] %v317
                %v319 = vld [vmem:[%s199 + $0x1d8] sm:$0xf]
                %320 = vst [vmem:[%s200 + $0xec] sm:$0xf] %v319
                %v321 = vld [vmem:[%s199 + $0x1e0] sm:$0xf]
                %322 = vst [vmem:[%s200 + $0xf0] sm:$0xf] %v321
                %v323 = vld [vmem:[%s199 + $0x1e8] sm:$0xf]
                %324 = vst [vmem:[%s200 + $0xf4] sm:$0xf] %v323
                %v325 = vld [vmem:[%s199 + $0x1f0] sm:$0xf]
                %326 = vst [vmem:[%s200 + $0xf8] sm:$0xf] %v325
                %v327 = vld [vmem:[%s199 + $0x1f8] sm:$0xf]
                %328 = vst [vmem:[%s200 + $0xfc] sm:$0xf] %v327
              $region41: #{_lambda_.18} parent=35 // loop_footer
                %s198 = sadd.s32 1, %s194
              $region42: #{_lambda_.18} parent=35 // loop_footer_branch
                %193 = sbr.rel target = $region38
              $region43: #{_lambda_.18} parent=35 // loop_exit
                _
            $region36: #{_lambda_.18} parent=27 // pred_fallthru
              _
          $region28: #{_lambda_.18} parent=23 // pred_fallthru
            _
          %476 = vnop
        $region24: #{_lambda_.18} parent=19 // pred_fallthru
          _
        // Predicated region
        $region62: #{_lambda_.18} parent=19 // pred_check
          %p477 = pneg %p106
        $region63: #{_lambda_.18} parent=19 // pred_check_branch
          %479 = sbr.rel (%p477) target = $region65
        $region64: #{_lambda_.18} parent=19 // pred_region
          %s480 = sand.u32 %s96, 1
          %s481 = sand.u32 %s96, 1
          %s482 = smul.addr %s481, 16
          %s483 = scalar_lea.vmem [#allocation4], %s482
          %s484 = smul.u32 4, %s16
          %s485 = smul.addr %s484, 2
          %s486 = sadd.s32 %s17, %s485
          %s487 = smul.addr %s486, 4
          %s488 = scalar_lea.vmem %s2, %s487
          // Predicated region
          $region66: #{_lambda_.18} parent=64 // pred_check
            _
          $region67: #{_lambda_.18} parent=64 // pred_check_branch
            %490 = sbr.rel (0) target = $region69
          $region68: #{_lambda_.18} parent=64 // pred_region
            // Predicated region
            $region70: #{_lambda_.18} parent=68 // pred_check
              _
            $region71: #{_lambda_.18} parent=68 // pred_check_branch
              %492 = sbr.rel target = $region73
            $region72: #{_lambda_.18} parent=68 // pred_region
              // Predicated region
              $region85: #{_lambda_.18} parent=72 // pred_check
                _
              $region86: #{_lambda_.18} parent=72 // pred_check_branch
                %513 = sbr.rel (0) target = $region88
              $region87: #{_lambda_.18} parent=72 // pred_region
                loop: start=0, step=1, limit=1
                $region89: #{_lambda_.18} parent=87 // loop_pre_header
                  _
                $region90: #{_lambda_.18} parent=87 // loop_header
                  %s515 = sphi 0, %s519
                  %p516 = scmp.ge.s32.totalorder %s515, 1
                  %s520 = sphi %s488, %s488
                  %s521 = sphi %s483, %s483
                $region91: #{_lambda_.18} parent=87 // loop_header_branch
                  %518 = sbr.rel (%p516) target = $region95
                $region92: #{_lambda_.18} parent=87 // loop_body
                  _
                $region93: #{_lambda_.18} parent=87 // loop_footer
                  %s519 = sadd.s32 1, %s515
                $region94: #{_lambda_.18} parent=87 // loop_footer_branch
                  %514 = sbr.rel target = $region90
                $region95: #{_lambda_.18} parent=87 // loop_exit
                  _
                loop: start=0, step=1, limit=1
                $region96: #{_lambda_.18} parent=87 // loop_pre_header
                  _
                $region97: #{_lambda_.18} parent=87 // loop_header
                  %s524 = sphi 0, %s528
                  %p525 = scmp.ge.s32.totalorder %s524, 1
                  %s529 = sphi %s488, %s488
                  %s530 = sphi %s483, %s483
                $region98: #{_lambda_.18} parent=87 // loop_header_branch
                  %527 = sbr.rel (%p525) target = $region102
                $region99: #{_lambda_.18} parent=87 // loop_body
                  %v531 = vld [vmem:[%s529] sm:$0xf]
                  %532 = vst [vmem:[%s530] sm:$0xf] %v531
                  %v533 = vld [vmem:[%s529 + $0x8] sm:$0xf]
                  %534 = vst [vmem:[%s530 + $0x4] sm:$0xf] %v533
                  %v535 = vld [vmem:[%s529 + $0x10] sm:$0xf]
                  %536 = vst [vmem:[%s530 + $0x8] sm:$0xf] %v535
                  %v537 = vld [vmem:[%s529 + $0x18] sm:$0xf]
                  %538 = vst [vmem:[%s530 + $0xc] sm:$0xf] %v537
                $region100: #{_lambda_.18} parent=87 // loop_footer
                  %s528 = sadd.s32 1, %s524
                $region101: #{_lambda_.18} parent=87 // loop_footer_branch
                  %523 = sbr.rel target = $region97
                $region102: #{_lambda_.18} parent=87 // loop_exit
                  _
              $region88: #{_lambda_.18} parent=72 // pred_fallthru
                _
            $region73: #{_lambda_.18} parent=68 // pred_fallthru
              _
            // Predicated region
            $region74: #{_lambda_.18} parent=68 // pred_check
              _
            $region75: #{_lambda_.18} parent=68 // pred_check_branch
              %494 = sbr.rel (0) target = $region77
            $region76: #{_lambda_.18} parent=68 // pred_region
              loop: start=0, step=1, limit=1
              $region78: #{_lambda_.18} parent=76 // loop_pre_header
                _
              $region79: #{_lambda_.18} parent=76 // loop_header
                %s497 = sphi 0, %s501
                %p498 = scmp.ge.s32.totalorder %s497, 1
                %s502 = sphi %s488, %s488
                %s503 = sphi %s483, %s483
              $region80: #{_lambda_.18} parent=76 // loop_header_branch
                %500 = sbr.rel (%p498) target = $region84
              $region81: #{_lambda_.18} parent=76 // loop_body
                %v504 = vld [vmem:[%s502] sm:$0xf]
                %505 = vst [vmem:[%s503] sm:$0xf] %v504
                %v506 = vld [vmem:[%s502 + $0x8] sm:$0xf]
                %507 = vst [vmem:[%s503 + $0x4] sm:$0xf] %v506
                %v508 = vld [vmem:[%s502 + $0x10] sm:$0xf]
                %509 = vst [vmem:[%s503 + $0x8] sm:$0xf] %v508
                %v510 = vld [vmem:[%s502 + $0x18] sm:$0xf]
                %511 = vst [vmem:[%s503 + $0xc] sm:$0xf] %v510
              $region82: #{_lambda_.18} parent=76 // loop_footer
                %s501 = sadd.s32 1, %s497
              $region83: #{_lambda_.18} parent=76 // loop_footer_branch
                %496 = sbr.rel target = $region79
              $region84: #{_lambda_.18} parent=76 // loop_exit
                _
            $region77: #{_lambda_.18} parent=68 // pred_fallthru
              _
          $region69: #{_lambda_.18} parent=64 // pred_fallthru
            _
          %539 = vnop
        $region65: #{_lambda_.18} parent=19 // pred_fallthru
          _
      $region20: #{_lambda_.18} parent=5 // pred_fallthru
        _
      %p540 = scmp.le.s32.totalorder 1, %s9
      %p541 = scmp.lt.s32.totalorder %s9, 3
      %p542 = pnand %p540, %p541
      %p543 = pneg %p542
      // Predicated region
      $region103: #{_lambda_.18} parent=5 // pred_check
        _
      $region104: #{_lambda_.18} parent=5 // pred_check_branch
        %545 = sbr.rel (%p542) target = $region106
      $region105: #{_lambda_.18} parent=5 // pred_region
        %s546 = ssub.s32 %s9, 1
        %s547 = sand.u32 %s71, 1
        %s548 = sand.u32 %s71, 1
        %s549 = smul.addr %s548, 256
        %s550 = scalar_lea.vmem [#allocation3], %s549
        // Predicated region
        $region107: #{_lambda_.18} parent=105 // pred_check
          %p551 = pneg %p84
        $region108: #{_lambda_.18} parent=105 // pred_check_branch
          %553 = sbr.rel (%p551) target = $region110
        $region109: #{_lambda_.18} parent=105 // pred_region
          _
        $region110: #{_lambda_.18} parent=105 // pred_fallthru
          _
        %s554 = sand.u32 %s99, 1
        %s555 = sand.u32 %s99, 1
        %s556 = smul.addr %s555, 16
        %s557 = scalar_lea.vmem [#allocation4], %s556
        // Predicated region
        $region111: #{_lambda_.18} parent=105 // pred_check
          %p558 = pneg %p112
        $region112: #{_lambda_.18} parent=105 // pred_check_branch
          %560 = sbr.rel (%p558) target = $region114
        $region113: #{_lambda_.18} parent=105 // pred_region
          _
        $region114: #{_lambda_.18} parent=105 // pred_fallthru
          _
        %s561 = smul.u32 4, %s19
        %s562 = smul.u32 4, %s21
        %p563 = scmp.lt.s32.totalorder %s561, 3
        %s564 = scalar_select %p563, %s561, 3
        %p565 = scmp.lt.s32.totalorder %s562, 3
        %s566 = scalar_select %p565, %s562, 3
        %s567 = smul.addr %s564, 4
        %s568 = sadd.s32 %s566, %s567
        %s569 = smul.addr %s568, 4
        %s570 = scalar_lea.vmem %s0, %s569
        %p571 = pneg %p56
        %p572 = pneg %p53
        %s573 = sand.u32 %s71, 1
        %s574 = sand.u32 %s71, 1
        %s575 = smul.addr %s574, 256
        %s576 = scalar_lea.vmem [#allocation3], %s575
        %p577 = pneg %p84
        %p578 = pneg %p81
        %s579 = sand.u32 %s99, 1
        %s580 = sand.u32 %s99, 1
        %s581 = smul.addr %s580, 16
        %s582 = scalar_lea.vmem [#allocation4], %s581
        %p583 = pneg %p112
        %p584 = pneg %p109
        %p585 = pneg %p140
        %p586 = pneg %p137
        %s587 = sand.u32 %s127, 1
        %s588 = sand.u32 %s127, 1
        %s589 = smul.addr %s588, 16
        %s590 = scalar_lea.vmem [#allocation5], %s589
        %s591 = smul.u32 4, %s19
        %s592 = smul.u32 4, %s21
        %p593 = scmp.lt.s32.totalorder %s591, 3
        %s594 = scalar_select %p593, %s591, 3
        %p595 = scmp.lt.s32.totalorder %s592, 3
        %s596 = scalar_select %p595, %s592, 3
        %s597 = smul.addr %s594, 4
        %s598 = sadd.s32 %s596, %s597
        %s599 = smul.addr %s598, 4
        %s600 = scalar_lea.vmem %s0, %s599
        %s601 = smul.u32 4, %s19
        %s602 = smul.u32 4, %s21
        %s603 = smul.u32 64, %s21
        %s604 = smul.u32 4, %s19
        %s605 = smul.u32 4, %s19
        %p607 = scmp.eq.s32.totalorder %s21, 0
        // Predicated region
        $region115: #{_lambda_.18} parent=105 // pred_check
          %p608 = pneg %p607
        $region116: #{_lambda_.18} parent=105 // pred_check_branch
          %610 = sbr.rel (%p608) target = $region118
        $region117: #{_lambda_.18} parent=105 // pred_region
          %611 = vst [vmem:[#allocation2] sm:$0xff] 0.0
          %612 = vst [vmem:[#allocation2 + $0x8] sm:$0xff] 0.0
          %613 = vst [vmem:[#allocation2 + $0x10] sm:$0xff] 0.0
          %614 = vst [vmem:[#allocation2 + $0x18] sm:$0xff] 0.0
        $region118: #{_lambda_.18} parent=105 // pred_fallthru
          _
        %v615 = vld [vmem:[#allocation2] sm:$0xff]
        %v616 = vld [vmem:[#allocation2 + $0x8] sm:$0xff]
        %v617 = vld [vmem:[#allocation2 + $0x10] sm:$0xff]
        %v618 = vld [vmem:[#allocation2 + $0x18] sm:$0xff]
        %v619 = vld [vmem:[%s600] sm:$0xff]
        %v620 = vld [vmem:[%s600 + $0x8] sm:$0xff]
        %v621 = vld [vmem:[%s600 + $0x10] sm:$0xff]
        %v622 = vld [vmem:[%s600 + $0x18] sm:$0xff]
        %v623 = vld [vmem:[%s600 + $0x20] sm:$0xff]
        %v624 = vld [vmem:[%s600 + $0x28] sm:$0xff]
        %v625 = vld [vmem:[%s600 + $0x30] sm:$0xff]
        %v626 = vld [vmem:[%s600 + $0x38] sm:$0xff]
        %v627 = vld [vmem:[%s550] sm:$0xf]
        %v628 = vld [vmem:[%s550 + $0x4] sm:$0xf]
        %v629 = vld [vmem:[%s550 + $0x8] sm:$0xf]
        %v630 = vld [vmem:[%s550 + $0xc] sm:$0xf]
        %v631 = vld [vmem:[%s550 + $0x10] sm:$0xf]
        %v632 = vld [vmem:[%s550 + $0x14] sm:$0xf]
        %v633 = vld [vmem:[%s550 + $0x18] sm:$0xf]
        %v634 = vld [vmem:[%s550 + $0x1c] sm:$0xf]
        %v635 = vld [vmem:[%s550 + $0x20] sm:$0xf]
        %v636 = vld [vmem:[%s550 + $0x24] sm:$0xf]
        %v637 = vld [vmem:[%s550 + $0x28] sm:$0xf]
        %v638 = vld [vmem:[%s550 + $0x2c] sm:$0xf]
        %v639 = vld [vmem:[%s550 + $0x30] sm:$0xf]
        %v640 = vld [vmem:[%s550 + $0x34] sm:$0xf]
        %v641 = vld [vmem:[%s550 + $0x38] sm:$0xf]
        %v642 = vld [vmem:[%s550 + $0x3c] sm:$0xf]
        %v643 = vld [vmem:[%s550 + $0x40] sm:$0xf]
        %v644 = vld [vmem:[%s550 + $0x44] sm:$0xf]
        %v645 = vld [vmem:[%s550 + $0x48] sm:$0xf]
        %v646 = vld [vmem:[%s550 + $0x4c] sm:$0xf]
        %v647 = vld [vmem:[%s550 + $0x50] sm:$0xf]
        %v648 = vld [vmem:[%s550 + $0x54] sm:$0xf]
        %v649 = vld [vmem:[%s550 + $0x58] sm:$0xf]
        %v650 = vld [vmem:[%s550 + $0x5c] sm:$0xf]
        %v651 = vld [vmem:[%s550 + $0x60] sm:$0xf]
        %v652 = vld [vmem:[%s550 + $0x64] sm:$0xf]
        %v653 = vld [vmem:[%s550 + $0x68] sm:$0xf]
        %v654 = vld [vmem:[%s550 + $0x6c] sm:$0xf]
        %v655 = vld [vmem:[%s550 + $0x70] sm:$0xf]
        %v656 = vld [vmem:[%s550 + $0x74] sm:$0xf]
        %v657 = vld [vmem:[%s550 + $0x78] sm:$0xf]
        %v658 = vld [vmem:[%s550 + $0x7c] sm:$0xf]
        %v659 = vld [vmem:[%s550 + $0x80] sm:$0xf]
        %v660 = vld [vmem:[%s550 + $0x84] sm:$0xf]
        %v661 = vld [vmem:[%s550 + $0x88] sm:$0xf]
        %v662 = vld [vmem:[%s550 + $0x8c] sm:$0xf]
        %v663 = vld [vmem:[%s550 + $0x90] sm:$0xf]
        %v664 = vld [vmem:[%s550 + $0x94] sm:$0xf]
        %v665 = vld [vmem:[%s550 + $0x98] sm:$0xf]
        %v666 = vld [vmem:[%s550 + $0x9c] sm:$0xf]
        %v667 = vld [vmem:[%s550 + $0xa0] sm:$0xf]
        %v668 = vld [vmem:[%s550 + $0xa4] sm:$0xf]
        %v669 = vld [vmem:[%s550 + $0xa8] sm:$0xf]
        %v670 = vld [vmem:[%s550 + $0xac] sm:$0xf]
        %v671 = vld [vmem:[%s550 + $0xb0] sm:$0xf]
        %v672 = vld [vmem:[%s550 + $0xb4] sm:$0xf]
        %v673 = vld [vmem:[%s550 + $0xb8] sm:$0xf]
        %v674 = vld [vmem:[%s550 + $0xbc] sm:$0xf]
        %v675 = vld [vmem:[%s550 + $0xc0] sm:$0xf]
        %v676 = vld [vmem:[%s550 + $0xc4] sm:$0xf]
        %v677 = vld [vmem:[%s550 + $0xc8] sm:$0xf]
        %v678 = vld [vmem:[%s550 + $0xcc] sm:$0xf]
        %v679 = vld [vmem:[%s550 + $0xd0] sm:$0xf]
        %v680 = vld [vmem:[%s550 + $0xd4] sm:$0xf]
        %v681 = vld [vmem:[%s550 + $0xd8] sm:$0xf]
        %v682 = vld [vmem:[%s550 + $0xdc] sm:$0xf]
        %v683 = vld [vmem:[%s550 + $0xe0] sm:$0xf]
        %v684 = vld [vmem:[%s550 + $0xe4] sm:$0xf]
        %v685 = vld [vmem:[%s550 + $0xe8] sm:$0xf]
        %v686 = vld [vmem:[%s550 + $0xec] sm:$0xf]
        %v687 = vld [vmem:[%s550 + $0xf0] sm:$0xf]
        %v688 = vld [vmem:[%s550 + $0xf4] sm:$0xf]
        %v689 = vld [vmem:[%s550 + $0xf8] sm:$0xf]
        %v690 = vld [vmem:[%s550 + $0xfc] sm:$0xf]
        %v699 = vunpack.c.l.b16 %v619
        %v700 = vunpack.c.h.b16 %v619
        %v701 = vunpack.c.l.b16 %v620
        %v702 = vunpack.c.h.b16 %v620
        %v703 = vunpack.c.l.b16 %v621
        %v704 = vunpack.c.h.b16 %v621
        %v705 = vunpack.c.l.b16 %v622
        %v706 = vunpack.c.h.b16 %v622
        %v707 = vunpack.c.l.b16 %v623
        %v708 = vunpack.c.h.b16 %v623
        %v709 = vunpack.c.l.b16 %v624
        %v710 = vunpack.c.h.b16 %v624
        %v711 = vunpack.c.l.b16 %v625
        %v712 = vunpack.c.h.b16 %v625
        %v713 = vunpack.c.l.b16 %v626
        %v714 = vunpack.c.h.b16 %v626
        %v715 = vpack.c.b16 %v703, %v699
        %v716 = vpack.c.b16 %v704, %v700
        %v717 = vpack.c.b16 %v705, %v701
        %v718 = vpack.c.b16 %v706, %v702
        %v719 = vpack.c.b16 %v711, %v707
        %v720 = vpack.c.b16 %v712, %v708
        %v721 = vpack.c.b16 %v713, %v709
        %v722 = vpack.c.b16 %v714, %v710
        %v795 = vunpack.c.l.b16 %v627
        %v796 = vunpack.c.l.b16 %v628
        %v797 = vunpack.c.l.b16 %v629
        %v798 = vunpack.c.l.b16 %v630
        %v799 = vunpack.c.l.b16 %v631
        %v800 = vunpack.c.l.b16 %v632
        %v801 = vunpack.c.l.b16 %v633
        %v802 = vunpack.c.l.b16 %v634
        %v803 = vunpack.c.l.b16 %v635
        %v804 = vunpack.c.l.b16 %v636
        %v805 = vunpack.c.l.b16 %v637
        %v806 = vunpack.c.l.b16 %v638
        %v807 = vunpack.c.l.b16 %v639
        %v808 = vunpack.c.l.b16 %v640
        %v809 = vunpack.c.l.b16 %v641
        %v810 = vunpack.c.l.b16 %v642
        %v811 = vunpack.c.l.b16 %v643
        %v812 = vunpack.c.l.b16 %v644
        %v813 = vunpack.c.l.b16 %v645
        %v814 = vunpack.c.l.b16 %v646
        %v815 = vunpack.c.l.b16 %v647
        %v816 = vunpack.c.l.b16 %v648
        %v817 = vunpack.c.l.b16 %v649
        %v818 = vunpack.c.l.b16 %v650
        %v819 = vunpack.c.l.b16 %v651
        %v820 = vunpack.c.l.b16 %v652
        %v821 = vunpack.c.l.b16 %v653
        %v822 = vunpack.c.l.b16 %v654
        %v823 = vunpack.c.l.b16 %v655
        %v824 = vunpack.c.l.b16 %v656
        %v825 = vunpack.c.l.b16 %v657
        %v826 = vunpack.c.l.b16 %v658
        %v827 = vunpack.c.l.b16 %v659
        %v828 = vunpack.c.l.b16 %v660
        %v829 = vunpack.c.l.b16 %v661
        %v830 = vunpack.c.l.b16 %v662
        %v831 = vunpack.c.l.b16 %v663
        %v832 = vunpack.c.l.b16 %v664
        %v833 = vunpack.c.l.b16 %v665
        %v834 = vunpack.c.l.b16 %v666
        %v835 = vunpack.c.l.b16 %v667
        %v836 = vunpack.c.l.b16 %v668
        %v837 = vunpack.c.l.b16 %v669
        %v838 = vunpack.c.l.b16 %v670
        %v839 = vunpack.c.l.b16 %v671
        %v840 = vunpack.c.l.b16 %v672
        %v841 = vunpack.c.l.b16 %v673
        %v842 = vunpack.c.l.b16 %v674
        %v843 = vunpack.c.l.b16 %v675
        %v844 = vunpack.c.l.b16 %v676
        %v845 = vunpack.c.l.b16 %v677
        %v846 = vunpack.c.l.b16 %v678
        %v847 = vunpack.c.l.b16 %v679
        %v848 = vunpack.c.l.b16 %v680
        %v849 = vunpack.c.l.b16 %v681
        %v850 = vunpack.c.l.b16 %v682
        %v851 = vunpack.c.l.b16 %v683
        %v852 = vunpack.c.l.b16 %v684
        %v853 = vunpack.c.l.b16 %v685
        %v854 = vunpack.c.l.b16 %v686
        %v855 = vunpack.c.l.b16 %v687
        %v856 = vunpack.c.l.b16 %v688
        %v857 = vunpack.c.l.b16 %v689
        %v858 = vunpack.c.l.b16 %v690
        %v859 = vpack.c.b16 %v796, %v795
        %v860 = vpack.c.b16 %v798, %v797
        %v861 = vpack.c.b16 %v800, %v799
        %v862 = vpack.c.b16 %v802, %v801
        %v863 = vpack.c.b16 %v804, %v803
        %v864 = vpack.c.b16 %v806, %v805
        %v865 = vpack.c.b16 %v808, %v807
        %v866 = vpack.c.b16 %v810, %v809
        %v867 = vpack.c.b16 %v812, %v811
        %v868 = vpack.c.b16 %v814, %v813
        %v869 = vpack.c.b16 %v816, %v815
        %v870 = vpack.c.b16 %v818, %v817
        %v871 = vpack.c.b16 %v820, %v819
        %v872 = vpack.c.b16 %v822, %v821
        %v873 = vpack.c.b16 %v824, %v823
        %v874 = vpack.c.b16 %v826, %v825
        %v875 = vpack.c.b16 %v828, %v827
        %v876 = vpack.c.b16 %v830, %v829
        %v877 = vpack.c.b16 %v832, %v831
        %v878 = vpack.c.b16 %v834, %v833
        %v879 = vpack.c.b16 %v836, %v835
        %v880 = vpack.c.b16 %v838, %v837
        %v881 = vpack.c.b16 %v840, %v839
        %v882 = vpack.c.b16 %v842, %v841
        %v883 = vpack.c.b16 %v844, %v843
        %v884 = vpack.c.b16 %v846, %v845
        %v885 = vpack.c.b16 %v848, %v847
        %v886 = vpack.c.b16 %v850, %v849
        %v887 = vpack.c.b16 %v852, %v851
        %v888 = vpack.c.b16 %v854, %v853
        %v889 = vpack.c.b16 %v856, %v855
        %v890 = vpack.c.b16 %v858, %v857
        %923 = vmatprep.subr.bf16.mxu0 0
        %924 = vmatpush1.bf16.msra.mxu0 %v859
        %925 = vmatprep.subr.bf16.mxu0 0
        %926 = vmatpush1.bf16.msra.mxu0 %v860
        %927 = vmatprep.subr.bf16.mxu0 0
        %928 = vmatpush1.bf16.msra.mxu0 %v861
        %929 = vmatprep.subr.bf16.mxu0 0
        %930 = vmatpush1.bf16.msra.mxu0 %v862
        %931 = vmatprep.subr.bf16.mxu0 0
        %932 = vmatpush1.bf16.msra.mxu0 %v863
        %933 = vmatprep.subr.bf16.mxu0 0
        %934 = vmatpush1.bf16.msra.mxu0 %v864
        %935 = vmatprep.subr.bf16.mxu0 0
        %936 = vmatpush1.bf16.msra.mxu0 %v865
        %937 = vmatprep.subr.bf16.mxu0 0
        %938 = vmatpush1.bf16.msra.mxu0 %v866
        %939 = vmatprep.subr.bf16.mxu0 0
        %940 = vmatpush1.bf16.msra.mxu0 %v867
        %941 = vmatprep.subr.bf16.mxu0 0
        %942 = vmatpush1.bf16.msra.mxu0 %v868
        %943 = vmatprep.subr.bf16.mxu0 0
        %944 = vmatpush1.bf16.msra.mxu0 %v869
        %945 = vmatprep.subr.bf16.mxu0 0
        %946 = vmatpush1.bf16.msra.mxu0 %v870
        %947 = vmatprep.subr.bf16.mxu0 0
        %948 = vmatpush1.bf16.msra.mxu0 %v871
        %949 = vmatprep.subr.bf16.mxu0 0
        %950 = vmatpush1.bf16.msra.mxu0 %v872
        %951 = vmatprep.subr.bf16.mxu0 0
        %952 = vmatpush1.bf16.msra.mxu0 %v873
        %953 = vmatprep.subr.bf16.mxu0 0
        %954 = vmatpush1.bf16.msra.mxu0 %v874
        %955 = vmatprep.mubr.bf16.mxu0 %v716
        %956 = vmatmul.mubr.bf16.gmra.mrb[0].mxu0 %v715
        %v957 = vpop.f32.mrb[0].mxu0
        %v958 = vadd.f32 0.0, %v957
        %v959 = vpop.f32.mrb[0].mxu0
        %v960 = vpop.f32.mrb[0].mxu0
        %v961 = vadd.f32 0.0, %v960
        %v962 = vpop.f32.mrb[0].mxu0
        %963 = vmatprep.mubr.bf16.mxu0 %v720
        %964 = vmatmul.mubr.bf16.gmra.mrb[0].mxu0 %v719
        %v965 = vpop.f32.mrb[0].mxu0
        %v966 = vadd.f32 0.0, %v965
        %v967 = vpop.f32.mrb[0].mxu0
        %v968 = vpop.f32.mrb[0].mxu0
        %v969 = vadd.f32 0.0, %v968
        %v970 = vpop.f32.mrb[0].mxu0
        %971 = vdwg.mxu0
        %972 = vmatprep.subr.bf16.mxu0 0
        %973 = vmatpush1.bf16.msra.mxu0 %v875
        %974 = vmatprep.subr.bf16.mxu0 0
        %975 = vmatpush1.bf16.msra.mxu0 %v876
        %976 = vmatprep.subr.bf16.mxu0 0
        %977 = vmatpush1.bf16.msra.mxu0 %v877
        %978 = vmatprep.subr.bf16.mxu0 0
        %979 = vmatpush1.bf16.msra.mxu0 %v878
        %980 = vmatprep.subr.bf16.mxu0 0
        %981 = vmatpush1.bf16.msra.mxu0 %v879
        %982 = vmatprep.subr.bf16.mxu0 0
        %983 = vmatpush1.bf16.msra.mxu0 %v880
        %984 = vmatprep.subr.bf16.mxu0 0
        %985 = vmatpush1.bf16.msra.mxu0 %v881
        %986 = vmatprep.subr.bf16.mxu0 0
        %987 = vmatpush1.bf16.msra.mxu0 %v882
        %988 = vmatprep.subr.bf16.mxu0 0
        %989 = vmatpush1.bf16.msra.mxu0 %v883
        %990 = vmatprep.subr.bf16.mxu0 0
        %991 = vmatpush1.bf16.msra.mxu0 %v884
        %992 = vmatprep.subr.bf16.mxu0 0
        %993 = vmatpush1.bf16.msra.mxu0 %v885
        %994 = vmatprep.subr.bf16.mxu0 0
        %995 = vmatpush1.bf16.msra.mxu0 %v886
        %996 = vmatprep.subr.bf16.mxu0 0
        %997 = vmatpush1.bf16.msra.mxu0 %v887
        %998 = vmatprep.subr.bf16.mxu0 0
        %999 = vmatpush1.bf16.msra.mxu0 %v888
        %1000 = vmatprep.subr.bf16.mxu0 0
        %1001 = vmatpush1.bf16.msra.mxu0 %v889
        %1002 = vmatprep.subr.bf16.mxu0 0
        %1003 = vmatpush1.bf16.msra.mxu0 %v890
        %1004 = vmatprep.mubr.bf16.mxu0 %v718
        %1005 = vmatmul.mubr.bf16.gmra.mrb[0].mxu0 %v717
        %v1006 = vpop.f32.mrb[0].mxu0
        %v1007 = vadd.f32 %v958, %v1006
        %v1008 = vpop.f32.mrb[0].mxu0
        %v1009 = vpop.f32.mrb[0].mxu0
        %v1010 = vadd.f32 %v961, %v1009
        %v1011 = vpop.f32.mrb[0].mxu0
        %1012 = vmatprep.mubr.bf16.mxu0 %v722
        %1013 = vmatmul.mubr.bf16.gmra.mrb[0].mxu0 %v721
        %v1014 = vpop.f32.mrb[0].mxu0
        %v1015 = vadd.f32 %v966, %v1014
        %v1016 = vpop.f32.mrb[0].mxu0
        %v1017 = vpop.f32.mrb[0].mxu0
        %v1018 = vadd.f32 %v969, %v1017
        %v1019 = vpop.f32.mrb[0].mxu0
        %1020 = vdwg.mxu0
        %v1021 = vadd.f32 %v615, %v1007
        %v1022 = vadd.f32 %v616, %v1010
        %v1023 = vadd.f32 %v617, %v1015
        %v1024 = vadd.f32 %v618, %v1018
        %1025 = vst [vmem:[#allocation2] sm:$0xff] %v1021
        %1026 = vst [vmem:[#allocation2 + $0x8] sm:$0xff] %v1022
        %1027 = vst [vmem:[#allocation2 + $0x10] sm:$0xff] %v1023
        %1028 = vst [vmem:[#allocation2 + $0x18] sm:$0xff] %v1024
        // Predicated region
        $region119: #{_lambda_.18} parent=105 // pred_check
          %p1029 = pneg %p607
        $region120: #{_lambda_.18} parent=105 // pred_check_branch
          %1031 = sbr.rel (%p1029) target = $region122
        $region121: #{_lambda_.18} parent=105 // pred_region
          %v1032 = vld [vmem:[#allocation2] sm:$0xff]
          %v1033 = vld [vmem:[#allocation2 + $0x8] sm:$0xff]
          %v1034 = vld [vmem:[#allocation2 + $0x10] sm:$0xff]
          %v1035 = vld [vmem:[#allocation2 + $0x18] sm:$0xff]
          %v1036 = vld [vmem:[%s557] sm:$0xf]
          %v1037 = vld [vmem:[%s557 + $0x4] sm:$0xf]
          %v1038 = vld [vmem:[%s557 + $0x8] sm:$0xf]
          %v1039 = vld [vmem:[%s557 + $0xc] sm:$0xf]
          %v1040 = vunpack.c.l.bf16 %v1036
          %v1041 = vunpack.c.l.bf16 %v1037
          %v1042 = vunpack.c.l.bf16 %v1038
          %v1043 = vunpack.c.l.bf16 %v1039
          %v1044 = vadd.f32 %v1032, %v1040
          %v1045 = vadd.f32 %v1033, %v1041
          %v1046 = vadd.f32 %v1034, %v1042
          %v1047 = vadd.f32 %v1035, %v1043
          %v1048 = vpack.c.bf16 %v1045, %v1044
          %v1049 = vpack.c.bf16 %v1047, %v1046
          %v1052 = vunpack.c.l.b16 %v1048
          %v1053 = vunpack.c.h.b16 %v1048
          %v1054 = vunpack.c.l.b16 %v1049
          %v1055 = vunpack.c.h.b16 %v1049
          %v1056 = vpack.c.b16 %v1052, %v1052
          %v1057 = vpack.c.b16 %v1053, %v1053
          %v1058 = vpack.c.b16 %v1054, %v1054
          %v1059 = vpack.c.b16 %v1055, %v1055
          %1064 = vst [vmem:[%s590] sm:$0xf] %v1056
          %1065 = vst [vmem:[%s590 + $0x4] sm:$0xf] %v1057
          %1066 = vst [vmem:[%s590 + $0x8] sm:$0xf] %v1058
          %1067 = vst [vmem:[%s590 + $0xc] sm:$0xf] %v1059
        $region122: #{_lambda_.18} parent=105 // pred_fallthru
          _
        %s1068 = sand.u32 %s127, 1
        %s1069 = sand.u32 %s127, 1
        %s1070 = smul.addr %s1069, 16
        %s1071 = scalar_lea.vmem [#allocation5], %s1070
        // Predicated region
        $region123: #{_lambda_.18} parent=105 // pred_check
          %p1072 = pneg %p137
        $region124: #{_lambda_.18} parent=105 // pred_check_branch
          %1074 = sbr.rel (%p1072) target = $region126
        $region125: #{_lambda_.18} parent=105 // pred_region
          %s1075 = smul.u32 4, %s19
          %s1076 = smul.addr %s1075, 2
          %s1077 = sadd.s32 %s20, %s1076
          %s1078 = smul.addr %s1077, 4
          %s1079 = scalar_lea.vmem %s3, %s1078
          // Predicated region
          $region127: #{_lambda_.18} parent=125 // pred_check
            _
          $region128: #{_lambda_.18} parent=125 // pred_check_branch
            %1081 = sbr.rel (0) target = $region130
          $region129: #{_lambda_.18} parent=125 // pred_region
            // Predicated region
            $region131: #{_lambda_.18} parent=129 // pred_check
              _
            $region132: #{_lambda_.18} parent=129 // pred_check_branch
              %1083 = sbr.rel target = $region134
            $region133: #{_lambda_.18} parent=129 // pred_region
              // Predicated region
              $region146: #{_lambda_.18} parent=133 // pred_check
                _
              $region147: #{_lambda_.18} parent=133 // pred_check_branch
                %1104 = sbr.rel (0) target = $region149
              $region148: #{_lambda_.18} parent=133 // pred_region
                loop: start=0, step=1, limit=1
                $region150: #{_lambda_.18} parent=148 // loop_pre_header
                  _
                $region151: #{_lambda_.18} parent=148 // loop_header
                  %s1106 = sphi 0, %s1110
                  %p1107 = scmp.ge.s32.totalorder %s1106, 1
                  %s1111 = sphi %s1071, %s1071
                  %s1112 = sphi %s1079, %s1079
                $region152: #{_lambda_.18} parent=148 // loop_header_branch
                  %1109 = sbr.rel (%p1107) target = $region156
                $region153: #{_lambda_.18} parent=148 // loop_body
                  _
                $region154: #{_lambda_.18} parent=148 // loop_footer
                  %s1110 = sadd.s32 1, %s1106
                $region155: #{_lambda_.18} parent=148 // loop_footer_branch
                  %1105 = sbr.rel target = $region151
                $region156: #{_lambda_.18} parent=148 // loop_exit
                  _
                loop: start=0, step=1, limit=1
                $region157: #{_lambda_.18} parent=148 // loop_pre_header
                  _
                $region158: #{_lambda_.18} parent=148 // loop_header
                  %s1115 = sphi 0, %s1119
                  %p1116 = scmp.ge.s32.totalorder %s1115, 1
                  %s1120 = sphi %s1071, %s1071
                  %s1121 = sphi %s1079, %s1079
                $region159: #{_lambda_.18} parent=148 // loop_header_branch
                  %1118 = sbr.rel (%p1116) target = $region163
                $region160: #{_lambda_.18} parent=148 // loop_body
                  %v1122 = vld [vmem:[%s1120] sm:$0xf]
                  %1123 = vst [vmem:[%s1121] sm:$0xf] %v1122
                  %v1124 = vld [vmem:[%s1120 + $0x4] sm:$0xf]
                  %1125 = vst [vmem:[%s1121 + $0x8] sm:$0xf] %v1124
                  %v1126 = vld [vmem:[%s1120 + $0x8] sm:$0xf]
                  %1127 = vst [vmem:[%s1121 + $0x10] sm:$0xf] %v1126
                  %v1128 = vld [vmem:[%s1120 + $0xc] sm:$0xf]
                  %1129 = vst [vmem:[%s1121 + $0x18] sm:$0xf] %v1128
                $region161: #{_lambda_.18} parent=148 // loop_footer
                  %s1119 = sadd.s32 1, %s1115
                $region162: #{_lambda_.18} parent=148 // loop_footer_branch
                  %1114 = sbr.rel target = $region158
                $region163: #{_lambda_.18} parent=148 // loop_exit
                  _
              $region149: #{_lambda_.18} parent=133 // pred_fallthru
                _
            $region134: #{_lambda_.18} parent=129 // pred_fallthru
              _
            // Predicated region
            $region135: #{_lambda_.18} parent=129 // pred_check
              _
            $region136: #{_lambda_.18} parent=129 // pred_check_branch
              %1085 = sbr.rel (0) target = $region138
            $region137: #{_lambda_.18} parent=129 // pred_region
              loop: start=0, step=1, limit=1
              $region139: #{_lambda_.18} parent=137 // loop_pre_header
                _
              $region140: #{_lambda_.18} parent=137 // loop_header
                %s1088 = sphi 0, %s1092
                %p1089 = scmp.ge.s32.totalorder %s1088, 1
                %s1093 = sphi %s1071, %s1071
                %s1094 = sphi %s1079, %s1079
              $region141: #{_lambda_.18} parent=137 // loop_header_branch
                %1091 = sbr.rel (%p1089) target = $region145
              $region142: #{_lambda_.18} parent=137 // loop_body
                %v1095 = vld [vmem:[%s1093] sm:$0xf]
                %1096 = vst [vmem:[%s1094] sm:$0xf] %v1095
                %v1097 = vld [vmem:[%s1093 + $0x4] sm:$0xf]
                %1098 = vst [vmem:[%s1094 + $0x8] sm:$0xf] %v1097
                %v1099 = vld [vmem:[%s1093 + $0x8] sm:$0xf]
                %1100 = vst [vmem:[%s1094 + $0x10] sm:$0xf] %v1099
                %v1101 = vld [vmem:[%s1093 + $0xc] sm:$0xf]
                %1102 = vst [vmem:[%s1094 + $0x18] sm:$0xf] %v1101
              $region143: #{_lambda_.18} parent=137 // loop_footer
                %s1092 = sadd.s32 1, %s1088
              $region144: #{_lambda_.18} parent=137 // loop_footer_branch
                %1087 = sbr.rel target = $region140
              $region145: #{_lambda_.18} parent=137 // loop_exit
                _
            $region138: #{_lambda_.18} parent=129 // pred_fallthru
              _
          $region130: #{_lambda_.18} parent=125 // pred_fallthru
            _
          %1130 = vnop
        $region126: #{_lambda_.18} parent=105 // pred_fallthru
          _
      $region106: #{_lambda_.18} parent=5 // pred_fallthru
        _
      %p1131 = scmp.le.s32.totalorder 2, %s9
      // Predicated region
      $region164: #{_lambda_.18} parent=5 // pred_check
        %p1132 = pneg %p1131
      $region165: #{_lambda_.18} parent=5 // pred_check_branch
        %1134 = sbr.rel (%p1132) target = $region167
      $region166: #{_lambda_.18} parent=5 // pred_region
        %s1135 = ssub.s32 %s9, 2
        // Predicated region
        $region168: #{_lambda_.18} parent=166 // pred_check
          %p1136 = pneg %p143
        $region169: #{_lambda_.18} parent=166 // pred_check_branch
          %1138 = sbr.rel (%p1136) target = $region171
        $region170: #{_lambda_.18} parent=166 // pred_region
          %s1139 = sand.u32 %s128, 1
          %s1140 = sand.u32 %s128, 1
          %s1141 = smul.addr %s1140, 16
          %s1142 = scalar_lea.vmem [#allocation5], %s1141
        $region171: #{_lambda_.18} parent=166 // pred_fallthru
          _
      $region167: #{_lambda_.18} parent=5 // pred_fallthru
        _
    $region6: #{_lambda_.18} parent=1 // loop_footer
      %s13 = sadd.s32 1, %s9
    $region7: #{_lambda_.18} parent=1 // loop_footer_branch
      %8 = sbr.rel target = $region3
    $region8: #{_lambda_.18} parent=1 // loop_exit
      _

// kernel: _lambda_.19
$region0: #{_lambda_.19}
  #allocation0 [shape = 'u32[]', space=smem, size = 0x4, offset = 0x4, fixed_abs, tag = 'smem constant byte address 0x4 - core index']
  #allocation1 [shape = 'u32[144,128]{1,0:T(1,128)}', space=vmem, size = 0x12000, scoped, tag = 'internal scratch']
  #allocation2 [shape = 'f32[32,512]{1,0:T(8,128)}', space=vmem, size = 0x10000, scoped, tag = 'scratch operand']
  %s0 = inlined_call_operand.vmem [shape: bf16[32,256], index: 0, kind: input, shape index: {}]
  %s1 = inlined_call_operand.vmem [shape: bf16[256,1024], index: 1, kind: input, shape index: {}]
  %s2 = inlined_call_operand.vmem [shape: bf16[32,1024], index: 2, kind: output, shape index: {}]
  %s3 = sld [smem:[#allocation0]]
  $region91: #{_lambda_.19} parent=0
    _
  %s5 = ssub.s32 1, %s3
  %s6 = scalar_select 0, %s5, %s3
  $region1: #{_lambda_.19} parent=0
    #allocation3 [shape = 'u8[524288]{0}', space=vmem, size = 0x80000, scoped, tag = 'input window, operand 1']
    #allocation4 [shape = 'u8[65536]{0}', space=vmem, size = 0x10000, scoped, tag = 'output window, operand 0']
    loop: start=0, step=1, limit=4
    $region2: #{_lambda_.19} parent=1 // loop_pre_header
      _
    $region3: #{_lambda_.19} parent=1 // loop_header
      %s8 = sphi 0, %s12
      %p9 = scmp.ge.s32.totalorder %s8, 4
      %s15 = sphi 0, %s34
      %s16 = sphi 0, %s30
      %s17 = sphi 0, %s26
      %s18 = sphi 0, %s15
      %s19 = sphi 0, %s16
      %s20 = sphi 0, %s17
      %s21 = sphi 0, %s18
      %s22 = sphi 0, %s19
      %s23 = sphi 0, %s20
      %s39 = sphi 0, %s41
      %s42 = sphi 0, %s39
      %s43 = sphi 0, %s42
      %s59 = sphi 0, %s43
      %s67 = sphi 0, %s69
      %s70 = sphi 0, %s67
      %s71 = sphi 0, %s70
      %s87 = sphi 0, %s71
      %s95 = sphi 0, %s97
      %s98 = sphi 0, %s95
      %s99 = sphi 0, %s98
      %s115 = sphi 0, %s99
    $region4: #{_lambda_.19} parent=1 // loop_header_branch
      %11 = sbr.rel (%p9) target = $region8
    $region5: #{_lambda_.19} parent=1 // loop_body
      %s13 = ssub.s32 %s8, 1
      %s14 = ssub.s32 %s8, 2
      %s24 = sadd.s32 1, %s17
      %p25 = scmp.ge.s32.totalorder %s24, 1
      %s26 = scalar_select %p25, 0, %s24
      %s27 = sadd.s32 1, %s16
      %s28 = scalar_select %p25, %s27, %s16
      %p29 = scmp.ge.s32.totalorder %s28, 2
      %s30 = scalar_select %p29, 0, %s28
      %s31 = sadd.s32 1, %s15
      %s32 = scalar_select %p29, %s31, %s15
      %p33 = scmp.ge.s32.totalorder %s32, 1
      %s34 = scalar_select %p33, 0, %s32
      %s35 = ssub.s32 %s15, %s34
      %s36 = ssub.s32 %s17, %s26
      %s37 = sor.u32 %s35, %s36
      %p38 = scmp.eq.s32.totalorder %s37, 0
      %s40 = sadd.s32 %s39, 1
      %s41 = scalar_select %p38, %s39, %s40
      %p44 = pneg %p38
      %p45 = scmp.eq.s32.totalorder %s8, 1
      %p46 = por %p44, %p45
      %p47 = scmp.ne.s32.totalorder %s39, %s42
      %p48 = scmp.eq.s32.totalorder %s8, 0
      %p49 = por %p47, %p48
      %p50 = scmp.ne.s32.totalorder %s39, %s42
      %p51 = scmp.eq.s32.totalorder %s13, 1
      %p52 = por %p50, %p51
      %p53 = scmp.ne.s32.totalorder %s42, %s43
      %p54 = scmp.eq.s32.totalorder %s13, 0
      %p55 = por %p53, %p54
      %p56 = scmp.ne.s32.totalorder %s42, %s43
      %p57 = scmp.eq.s32.totalorder %s14, 1
      %p58 = por %p56, %p57
      %p60 = scmp.ne.s32.totalorder %s43, %s59
      %p61 = scmp.eq.s32.totalorder %s14, 0
      %p62 = por %p60, %p61
      %s63 = ssub.s32 %s17, %s26
      %s64 = ssub.s32 %s16, %s30
      %s65 = sor.u32 %s63, %s64
      %p66 = scmp.eq.s32.totalorder %s65, 0
      %s68 = sadd.s32 %s67, 1
      %s69 = scalar_select %p66, %s67, %s68
      %p72 = pneg %p66
      %p73 = scmp.eq.s32.totalorder %s8, 1
      %p74 = por %p72, %p73
      %p75 = scmp.ne.s32.totalorder %s67, %s70
      %p76 = scmp.eq.s32.totalorder %s8, 0
      %p77 = por %p75, %p76
      %p78 = scmp.ne.s32.totalorder %s67, %s70
      %p79 = scmp.eq.s32.totalorder %s13, 1
      %p80 = por %p78, %p79
      %p81 = scmp.ne.s32.totalorder %s70, %s71
      %p82 = scmp.eq.s32.totalorder %s13, 0
      %p83 = por %p81, %p82
      %p84 = scmp.ne.s32.totalorder %s70, %s71
      %p85 = scmp.eq.s32.totalorder %s14, 1
      %p86 = por %p84, %p85
      %p88 = scmp.ne.s32.totalorder %s71, %s87
      %p89 = scmp.eq.s32.totalorder %s14, 0
      %p90 = por %p88, %p89
      %s91 = ssub.s32 %s15, %s34
      %s92 = ssub.s32 %s16, %s30
      %s93 = sor.u32 %s91, %s92
      %p94 = scmp.eq.s32.totalorder %s93, 0
      %s96 = sadd.s32 %s95, 1
      %s97 = scalar_select %p94, %s95, %s96
      %p100 = pneg %p94
      %p101 = scmp.eq.s32.totalorder %s8, 1
      %p102 = por %p100, %p101
      %p103 = scmp.ne.s32.totalorder %s95, %s98
      %p104 = scmp.eq.s32.totalorder %s8, 0
      %p105 = por %p103, %p104
      %p106 = scmp.ne.s32.totalorder %s95, %s98
      %p107 = scmp.eq.s32.totalorder %s13, 1
      %p108 = por %p106, %p107
      %p109 = scmp.ne.s32.totalorder %s98, %s99
      %p110 = scmp.eq.s32.totalorder %s13, 0
      %p111 = por %p109, %p110
      %p112 = scmp.ne.s32.totalorder %s98, %s99
      %p113 = scmp.eq.s32.totalorder %s14, 1
      %p114 = por %p112, %p113
      %p116 = scmp.ne.s32.totalorder %s99, %s115
      %p117 = scmp.eq.s32.totalorder %s14, 0
      %p118 = por %p116, %p117
      %p119 = scmp.le.s32.totalorder 1, %s8
      %p120 = scmp.lt.s32.totalorder %s8, 3
      %p121 = pnand %p119, %p120
      %p122 = pneg %p121
      // Predicated region
      $region9: #{_lambda_.19} parent=5 // pred_check
        _
      $region10: #{_lambda_.19} parent=5 // pred_check_branch
        %124 = sbr.rel (%p121) target = $region12
      $region11: #{_lambda_.19} parent=5 // pred_region
        %s125 = ssub.s32 %s8, 1
        // Predicated region
        $region13: #{_lambda_.19} parent=11 // pred_check
          %p126 = pneg %p55
        $region14: #{_lambda_.19} parent=11 // pred_check_branch
          %128 = sbr.rel (%p126) target = $region16
        $region15: #{_lambda_.19} parent=11 // pred_region
          %s129 = smul.u32 4, %s18
          %s130 = smul.u32 2, %s20
          %p131 = scmp.lt.s32.totalorder %s129, 3
          %s132 = scalar_select %p131, %s129, 3
          %p133 = scmp.lt.s32.totalorder %s130, 1
          %s134 = scalar_select %p133, %s130, 1
          %s135 = smul.addr %s132, 2
          %s136 = sadd.s32 %s134, %s135
          %s137 = smul.addr %s136, 4
          %s138 = scalar_lea.vmem %s0, %s137
          %s139 = smul.u32 4, %s18
          %s140 = smul.u32 2, %s20
        $region16: #{_lambda_.19} parent=11 // pred_fallthru
          _
      $region12: #{_lambda_.19} parent=5 // pred_fallthru
        _
      %p141 = scmp.lt.s32.totalorder %s8, 2
      // Predicated region
      $region17: #{_lambda_.19} parent=5 // pred_check
        %p142 = pneg %p141
      $region18: #{_lambda_.19} parent=5 // pred_check_branch
        %144 = sbr.rel (%p142) target = $region20
      $region19: #{_lambda_.19} parent=5 // pred_region
        // Predicated region
        $region21: #{_lambda_.19} parent=19 // pred_check
          %p145 = pneg %p77
        $region22: #{_lambda_.19} parent=19 // pred_check_branch
          %147 = sbr.rel (%p145) target = $region24
        $region23: #{_lambda_.19} parent=19 // pred_region
          %s148 = sand.u32 %s67, 1
          %s149 = sand.u32 %s67, 1
          %s150 = smul.addr %s149, 512
          %s151 = scalar_lea.vmem [#allocation3], %s150
          %s152 = smul.u32 32, %s17
          %s153 = smul.u32 4, %s16
          %s154 = smul.addr %s152, 8
          %s155 = sadd.s32 %s153, %s154
          %s156 = smul.addr %s155, 4
          %s157 = scalar_lea.vmem %s1, %s156
          // Predicated region
          $region25: #{_lambda_.19} parent=23 // pred_check
            _
          $region26: #{_lambda_.19} parent=23 // pred_check_branch
            %159 = sbr.rel (0) target = $region28
          $region27: #{_lambda_.19} parent=23 // pred_region
            // Predicated region
            $region29: #{_lambda_.19} parent=27 // pred_check
              _
            $region30: #{_lambda_.19} parent=27 // pred_check_branch
              %161 = sbr.rel (0) target = $region32
            $region31: #{_lambda_.19} parent=27 // pred_region
              loop: start=0, step=1, limit=1
              $region33: #{_lambda_.19} parent=31 // loop_pre_header
                _
              $region34: #{_lambda_.19} parent=31 // loop_header
                %s163 = sphi 0, %s167
                %p164 = scmp.ge.s32.totalorder %s163, 1
                %s168 = sphi %s157, %s157
                %s169 = sphi %s151, %s151
              $region35: #{_lambda_.19} parent=31 // loop_header_branch
                %166 = sbr.rel (%p164) target = $region39
              $region36: #{_lambda_.19} parent=31 // loop_body
                %v170 = vld [vmem:[%s168] sm:$0xff]
                %171 = vst [vmem:[%s169] sm:$0xff] %v170
                %v172 = vld [vmem:[%s168 + $0x8] sm:$0xff]
                %173 = vst [vmem:[%s169 + $0x8] sm:$0xff] %v172
                %v174 = vld [vmem:[%s168 + $0x20] sm:$0xff]
                %175 = vst [vmem:[%s169 + $0x10] sm:$0xff] %v174
                %v176 = vld [vmem:[%s168 + $0x28] sm:$0xff]
                %177 = vst [vmem:[%s169 + $0x18] sm:$0xff] %v176
                %v178 = vld [vmem:[%s168 + $0x40] sm:$0xff]
                %179 = vst [vmem:[%s169 + $0x20] sm:$0xff] %v178
                %v180 = vld [vmem:[%s168 + $0x48] sm:$0xff]
                %181 = vst [vmem:[%s169 + $0x28] sm:$0xff] %v180
                %v182 = vld [vmem:[%s168 + $0x60] sm:$0xff]
                %183 = vst [vmem:[%s169 + $0x30] sm:$0xff] %v182
                %v184 = vld [vmem:[%s168 + $0x68] sm:$0xff]
                %185 = vst [vmem:[%s169 + $0x38] sm:$0xff] %v184
                %v186 = vld [vmem:[%s168 + $0x80] sm:$0xff]
                %187 = vst [vmem:[%s169 + $0x40] sm:$0xff] %v186
                %v188 = vld [vmem:[%s168 + $0x88] sm:$0xff]
                %189 = vst [vmem:[%s169 + $0x48] sm:$0xff] %v188
                %v190 = vld [vmem:[%s168 + $0xa0] sm:$0xff]
                %191 = vst [vmem:[%s169 + $0x50] sm:$0xff] %v190
                %v192 = vld [vmem:[%s168 + $0xa8] sm:$0xff]
                %193 = vst [vmem:[%s169 + $0x58] sm:$0xff] %v192
                %v194 = vld [vmem:[%s168 + $0xc0] sm:$0xff]
                %195 = vst [vmem:[%s169 + $0x60] sm:$0xff] %v194
                %v196 = vld [vmem:[%s168 + $0xc8] sm:$0xff]
                %197 = vst [vmem:[%s169 + $0x68] sm:$0xff] %v196
                %v198 = vld [vmem:[%s168 + $0xe0] sm:$0xff]
                %199 = vst [vmem:[%s169 + $0x70] sm:$0xff] %v198
                %v200 = vld [vmem:[%s168 + $0xe8] sm:$0xff]
                %201 = vst [vmem:[%s169 + $0x78] sm:$0xff] %v200
                %v202 = vld [vmem:[%s168 + $0x100] sm:$0xff]
                %203 = vst [vmem:[%s169 + $0x80] sm:$0xff] %v202
                %v204 = vld [vmem:[%s168 + $0x108] sm:$0xff]
                %205 = vst [vmem:[%s169 + $0x88] sm:$0xff] %v204
                %v206 = vld [vmem:[%s168 + $0x120] sm:$0xff]
                %207 = vst [vmem:[%s169 + $0x90] sm:$0xff] %v206
                %v208 = vld [vmem:[%s168 + $0x128] sm:$0xff]
                %209 = vst [vmem:[%s169 + $0x98] sm:$0xff] %v208
                %v210 = vld [vmem:[%s168 + $0x140] sm:$0xff]
                %211 = vst [vmem:[%s169 + $0xa0] sm:$0xff] %v210
                %v212 = vld [vmem:[%s168 + $0x148] sm:$0xff]
                %213 = vst [vmem:[%s169 + $0xa8] sm:$0xff] %v212
                %v214 = vld [vmem:[%s168 + $0x160] sm:$0xff]
                %215 = vst [vmem:[%s169 + $0xb0] sm:$0xff] %v214
                %v216 = vld [vmem:[%s168 + $0x168] sm:$0xff]
                %217 = vst [vmem:[%s169 + $0xb8] sm:$0xff] %v216
                %v218 = vld [vmem:[%s168 + $0x180] sm:$0xff]
                %219 = vst [vmem:[%s169 + $0xc0] sm:$0xff] %v218
                %v220 = vld [vmem:[%s168 + $0x188] sm:$0xff]
                %221 = vst [vmem:[%s169 + $0xc8] sm:$0xff] %v220
                %v222 = vld [vmem:[%s168 + $0x1a0] sm:$0xff]
                %223 = vst [vmem:[%s169 + $0xd0] sm:$0xff] %v222
                %v224 = vld [vmem:[%s168 + $0x1a8] sm:$0xff]
                %225 = vst [vmem:[%s169 + $0xd8] sm:$0xff] %v224
                %v226 = vld [vmem:[%s168 + $0x1c0] sm:$0xff]
                %227 = vst [vmem:[%s169 + $0xe0] sm:$0xff] %v226
                %v228 = vld [vmem:[%s168 + $0x1c8] sm:$0xff]
                %229 = vst [vmem:[%s169 + $0xe8] sm:$0xff] %v228
                %v230 = vld [vmem:[%s168 + $0x1e0] sm:$0xff]
                %231 = vst [vmem:[%s169 + $0xf0] sm:$0xff] %v230
                %v232 = vld [vmem:[%s168 + $0x1e8] sm:$0xff]
                %233 = vst [vmem:[%s169 + $0xf8] sm:$0xff] %v232
                %v234 = vld [vmem:[%s168 + $0x200] sm:$0xff]
                %235 = vst [vmem:[%s169 + $0x100] sm:$0xff] %v234
                %v236 = vld [vmem:[%s168 + $0x208] sm:$0xff]
                %237 = vst [vmem:[%s169 + $0x108] sm:$0xff] %v236
                %v238 = vld [vmem:[%s168 + $0x220] sm:$0xff]
                %239 = vst [vmem:[%s169 + $0x110] sm:$0xff] %v238
                %v240 = vld [vmem:[%s168 + $0x228] sm:$0xff]
                %241 = vst [vmem:[%s169 + $0x118] sm:$0xff] %v240
                %v242 = vld [vmem:[%s168 + $0x240] sm:$0xff]
                %243 = vst [vmem:[%s169 + $0x120] sm:$0xff] %v242
                %v244 = vld [vmem:[%s168 + $0x248] sm:$0xff]
                %245 = vst [vmem:[%s169 + $0x128] sm:$0xff] %v244
                %v246 = vld [vmem:[%s168 + $0x260] sm:$0xff]
                %247 = vst [vmem:[%s169 + $0x130] sm:$0xff] %v246
                %v248 = vld [vmem:[%s168 + $0x268] sm:$0xff]
                %249 = vst [vmem:[%s169 + $0x138] sm:$0xff] %v248
                %v250 = vld [vmem:[%s168 + $0x280] sm:$0xff]
                %251 = vst [vmem:[%s169 + $0x140] sm:$0xff] %v250
                %v252 = vld [vmem:[%s168 + $0x288] sm:$0xff]
                %253 = vst [vmem:[%s169 + $0x148] sm:$0xff] %v252
                %v254 = vld [vmem:[%s168 + $0x2a0] sm:$0xff]
                %255 = vst [vmem:[%s169 + $0x150] sm:$0xff] %v254
                %v256 = vld [vmem:[%s168 + $0x2a8] sm:$0xff]
                %257 = vst [vmem:[%s169 + $0x158] sm:$0xff] %v256
                %v258 = vld [vmem:[%s168 + $0x2c0] sm:$0xff]
                %259 = vst [vmem:[%s169 + $0x160] sm:$0xff] %v258
                %v260 = vld [vmem:[%s168 + $0x2c8] sm:$0xff]
                %261 = vst [vmem:[%s169 + $0x168] sm:$0xff] %v260
                %v262 = vld [vmem:[%s168 + $0x2e0] sm:$0xff]
                %263 = vst [vmem:[%s169 + $0x170] sm:$0xff] %v262
                %v264 = vld [vmem:[%s168 + $0x2e8] sm:$0xff]
                %265 = vst [vmem:[%s169 + $0x178] sm:$0xff] %v264
                %v266 = vld [vmem:[%s168 + $0x300] sm:$0xff]
                %267 = vst [vmem:[%s169 + $0x180] sm:$0xff] %v266
                %v268 = vld [vmem:[%s168 + $0x308] sm:$0xff]
                %269 = vst [vmem:[%s169 + $0x188] sm:$0xff] %v268
                %v270 = vld [vmem:[%s168 + $0x320] sm:$0xff]
                %271 = vst [vmem:[%s169 + $0x190] sm:$0xff] %v270
                %v272 = vld [vmem:[%s168 + $0x328] sm:$0xff]
                %273 = vst [vmem:[%s169 + $0x198] sm:$0xff] %v272
                %v274 = vld [vmem:[%s168 + $0x340] sm:$0xff]
                %275 = vst [vmem:[%s169 + $0x1a0] sm:$0xff] %v274
                %v276 = vld [vmem:[%s168 + $0x348] sm:$0xff]
                %277 = vst [vmem:[%s169 + $0x1a8] sm:$0xff] %v276
                %v278 = vld [vmem:[%s168 + $0x360] sm:$0xff]
                %279 = vst [vmem:[%s169 + $0x1b0] sm:$0xff] %v278
                %v280 = vld [vmem:[%s168 + $0x368] sm:$0xff]
                %281 = vst [vmem:[%s169 + $0x1b8] sm:$0xff] %v280
                %v282 = vld [vmem:[%s168 + $0x380] sm:$0xff]
                %283 = vst [vmem:[%s169 + $0x1c0] sm:$0xff] %v282
                %v284 = vld [vmem:[%s168 + $0x388] sm:$0xff]
                %285 = vst [vmem:[%s169 + $0x1c8] sm:$0xff] %v284
                %v286 = vld [vmem:[%s168 + $0x3a0] sm:$0xff]
                %287 = vst [vmem:[%s169 + $0x1d0] sm:$0xff] %v286
                %v288 = vld [vmem:[%s168 + $0x3a8] sm:$0xff]
                %289 = vst [vmem:[%s169 + $0x1d8] sm:$0xff] %v288
                %v290 = vld [vmem:[%s168 + $0x3c0] sm:$0xff]
                %291 = vst [vmem:[%s169 + $0x1e0] sm:$0xff] %v290
                %v292 = vld [vmem:[%s168 + $0x3c8] sm:$0xff]
                %293 = vst [vmem:[%s169 + $0x1e8] sm:$0xff] %v292
                %v294 = vld [vmem:[%s168 + $0x3e0] sm:$0xff]
                %295 = vst [vmem:[%s169 + $0x1f0] sm:$0xff] %v294
                %v296 = vld [vmem:[%s168 + $0x3e8] sm:$0xff]
                %297 = vst [vmem:[%s169 + $0x1f8] sm:$0xff] %v296
              $region37: #{_lambda_.19} parent=31 // loop_footer
                %s167 = sadd.s32 1, %s163
              $region38: #{_lambda_.19} parent=31 // loop_footer_branch
                %162 = sbr.rel target = $region34
              $region39: #{_lambda_.19} parent=31 // loop_exit
                _
            $region32: #{_lambda_.19} parent=27 // pred_fallthru
              _
            // Predicated region
            $region40: #{_lambda_.19} parent=27 // pred_check
              _
            $region41: #{_lambda_.19} parent=27 // pred_check_branch
              %299 = sbr.rel target = $region43
            $region42: #{_lambda_.19} parent=27 // pred_region
              _
            $region43: #{_lambda_.19} parent=27 // pred_fallthru
              _
          $region28: #{_lambda_.19} parent=23 // pred_fallthru
            _
          %300 = vnop
        $region24: #{_lambda_.19} parent=19 // pred_fallthru
          _
      $region20: #{_lambda_.19} parent=5 // pred_fallthru
        _
      %p301 = scmp.le.s32.totalorder 1, %s8
      %p302 = scmp.lt.s32.totalorder %s8, 3
      %p303 = pnand %p301, %p302
      %p304 = pneg %p303
      // Predicated region
      $region44: #{_lambda_.19} parent=5 // pred_check
        _
      $region45: #{_lambda_.19} parent=5 // pred_check_branch
        %306 = sbr.rel (%p303) target = $region47
      $region46: #{_lambda_.19} parent=5 // pred_region
        %s307 = ssub.s32 %s8, 1
        %s308 = sand.u32 %s70, 1
        %s309 = sand.u32 %s70, 1
        %s310 = smul.addr %s309, 512
        %s311 = scalar_lea.vmem [#allocation3], %s310
        // Predicated region
        $region48: #{_lambda_.19} parent=46 // pred_check
          %p312 = pneg %p83
        $region49: #{_lambda_.19} parent=46 // pred_check_branch
          %314 = sbr.rel (%p312) target = $region51
        $region50: #{_lambda_.19} parent=46 // pred_region
          _
        $region51: #{_lambda_.19} parent=46 // pred_fallthru
          _
        %s315 = smul.u32 4, %s18
        %s316 = smul.u32 2, %s20
        %p317 = scmp.lt.s32.totalorder %s315, 3
        %s318 = scalar_select %p317, %s315, 3
        %p319 = scmp.lt.s32.totalorder %s316, 1
        %s320 = scalar_select %p319, %s316, 1
        %s321 = smul.addr %s318, 2
        %s322 = sadd.s32 %s320, %s321
        %s323 = smul.addr %s322, 4
        %s324 = scalar_lea.vmem %s0, %s323
        %p325 = pneg %p55
        %p326 = pneg %p52
        %s327 = sand.u32 %s70, 1
        %s328 = sand.u32 %s70, 1
        %s329 = smul.addr %s328, 512
        %s330 = scalar_lea.vmem [#allocation3], %s329
        %p331 = pneg %p83
        %p332 = pneg %p80
        %p333 = pneg %p111
        %p334 = pneg %p108
        %s335 = sand.u32 %s98, 1
        %s336 = sand.u32 %s98, 1
        %s337 = smul.addr %s336, 64
        %s338 = scalar_lea.vmem [#allocation4], %s337
        %s339 = smul.u32 4, %s18
        %s340 = smul.u32 2, %s20
        %p341 = scmp.lt.s32.totalorder %s339, 3
        %s342 = scalar_select %p341, %s339, 3
        %p343 = scmp.lt.s32.totalorder %s340, 1
        %s344 = scalar_select %p343, %s340, 1
        %s345 = smul.addr %s342, 2
        %s346 = sadd.s32 %s344, %s345
        %s347 = smul.addr %s346, 4
        %s348 = scalar_lea.vmem %s0, %s347
        %s349 = smul.u32 4, %s18
        %s350 = smul.u32 2, %s20
        %s351 = smul.u32 32, %s20
        %s352 = smul.u32 4, %s19
        %s353 = smul.u32 4, %s18
        %s354 = smul.u32 4, %s19
        %p355 = scmp.eq.s32.totalorder %s20, 0
        // Predicated region
        $region52: #{_lambda_.19} parent=46 // pred_check
          %p356 = pneg %p355
        $region53: #{_lambda_.19} parent=46 // pred_check_branch
          %358 = sbr.rel (%p356) target = $region55
        $region54: #{_lambda_.19} parent=46 // pred_region
          %359 = vst [vmem:[#allocation2] sm:$0xff] 0.0
          %360 = vst [vmem:[#allocation2 + $0x8] sm:$0xff] 0.0
          %361 = vst [vmem:[#allocation2 + $0x10] sm:$0xff] 0.0
          %362 = vst [vmem:[#allocation2 + $0x18] sm:$0xff] 0.0
          %363 = vst [vmem:[#allocation2 + $0x20] sm:$0xff] 0.0
          %364 = vst [vmem:[#allocation2 + $0x28] sm:$0xff] 0.0
          %365 = vst [vmem:[#allocation2 + $0x30] sm:$0xff] 0.0
          %366 = vst [vmem:[#allocation2 + $0x38] sm:$0xff] 0.0
          %367 = vst [vmem:[#allocation2 + $0x40] sm:$0xff] 0.0
          %368 = vst [vmem:[#allocation2 + $0x48] sm:$0xff] 0.0
          %369 = vst [vmem:[#allocation2 + $0x50] sm:$0xff] 0.0
          %370 = vst [vmem:[#allocation2 + $0x58] sm:$0xff] 0.0
          %371 = vst [vmem:[#allocation2 + $0x60] sm:$0xff] 0.0
          %372 = vst [vmem:[#allocation2 + $0x68] sm:$0xff] 0.0
          %373 = vst [vmem:[#allocation2 + $0x70] sm:$0xff] 0.0
          %374 = vst [vmem:[#allocation2 + $0x78] sm:$0xff] 0.0
        $region55: #{_lambda_.19} parent=46 // pred_fallthru
          _
        %v375 = vld [vmem:[#allocation2] sm:$0xff]
        %v376 = vld [vmem:[#allocation2 + $0x8] sm:$0xff]
        %v377 = vld [vmem:[#allocation2 + $0x10] sm:$0xff]
        %v378 = vld [vmem:[#allocation2 + $0x18] sm:$0xff]
        %v379 = vld [vmem:[#allocation2 + $0x20] sm:$0xff]
        %v380 = vld [vmem:[#allocation2 + $0x28] sm:$0xff]
        %v381 = vld [vmem:[#allocation2 + $0x30] sm:$0xff]
        %v382 = vld [vmem:[#allocation2 + $0x38] sm:$0xff]
        %v383 = vld [vmem:[#allocation2 + $0x40] sm:$0xff]
        %v384 = vld [vmem:[#allocation2 + $0x48] sm:$0xff]
        %v385 = vld [vmem:[#allocation2 + $0x50] sm:$0xff]
        %v386 = vld [vmem:[#allocation2 + $0x58] sm:$0xff]
        %v387 = vld [vmem:[#allocation2 + $0x60] sm:$0xff]
        %v388 = vld [vmem:[#allocation2 + $0x68] sm:$0xff]
        %v389 = vld [vmem:[#allocation2 + $0x70] sm:$0xff]
        %v390 = vld [vmem:[#allocation2 + $0x78] sm:$0xff]
        %v391 = vld [vmem:[%s348] sm:$0xff]
        %v392 = vld [vmem:[%s348 + $0x8] sm:$0xff]
        %v393 = vld [vmem:[%s348 + $0x10] sm:$0xff]
        %v394 = vld [vmem:[%s348 + $0x18] sm:$0xff]
        %v395 = vld [vmem:[%s311] sm:$0xff]
        %v396 = vld [vmem:[%s311 + $0x8] sm:$0xff]
        %v397 = vld [vmem:[%s311 + $0x10] sm:$0xff]
        %v398 = vld [vmem:[%s311 + $0x18] sm:$0xff]
        %v399 = vld [vmem:[%s311 + $0x20] sm:$0xff]
        %v400 = vld [vmem:[%s311 + $0x28] sm:$0xff]
        %v401 = vld [vmem:[%s311 + $0x30] sm:$0xff]
        %v402 = vld [vmem:[%s311 + $0x38] sm:$0xff]
        %v403 = vld [vmem:[%s311 + $0x40] sm:$0xff]
        %v404 = vld [vmem:[%s311 + $0x48] sm:$0xff]
        %v405 = vld [vmem:[%s311 + $0x50] sm:$0xff]
        %v406 = vld [vmem:[%s311 + $0x58] sm:$0xff]
        %v407 = vld [vmem:[%s311 + $0x60] sm:$0xff]
        %v408 = vld [vmem:[%s311 + $0x68] sm:$0xff]
        %v409 = vld [vmem:[%s311 + $0x70] sm:$0xff]
        %v410 = vld [vmem:[%s311 + $0x78] sm:$0xff]
        %v411 = vld [vmem:[%s311 + $0x80] sm:$0xff]
        %v412 = vld [vmem:[%s311 + $0x88] sm:$0xff]
        %v413 = vld [vmem:[%s311 + $0x90] sm:$0xff]
        %v414 = vld [vmem:[%s311 + $0x98] sm:$0xff]
        %v415 = vld [vmem:[%s311 + $0xa0] sm:$0xff]
        %v416 = vld [vmem:[%s311 + $0xa8] sm:$0xff]
        %v417 = vld [vmem:[%s311 + $0xb0] sm:$0xff]
        %v418 = vld [vmem:[%s311 + $0xb8] sm:$0xff]
        %v419 = vld [vmem:[%s311 + $0xc0] sm:$0xff]
        %v420 = vld [vmem:[%s311 + $0xc8] sm:$0xff]
        %v421 = vld [vmem:[%s311 + $0xd0] sm:$0xff]
        %v422 = vld [vmem:[%s311 + $0xd8] sm:$0xff]
        %v423 = vld [vmem:[%s311 + $0xe0] sm:$0xff]
        %v424 = vld [vmem:[%s311 + $0xe8] sm:$0xff]
        %v425 = vld [vmem:[%s311 + $0xf0] sm:$0xff]
        %v426 = vld [vmem:[%s311 + $0xf8] sm:$0xff]
        %v427 = vld [vmem:[%s311 + $0x100] sm:$0xff]
        %v428 = vld [vmem:[%s311 + $0x108] sm:$0xff]
        %v429 = vld [vmem:[%s311 + $0x110] sm:$0xff]
        %v430 = vld [vmem:[%s311 + $0x118] sm:$0xff]
        %v431 = vld [vmem:[%s311 + $0x120] sm:$0xff]
        %v432 = vld [vmem:[%s311 + $0x128] sm:$0xff]
        %v433 = vld [vmem:[%s311 + $0x130] sm:$0xff]
        %v434 = vld [vmem:[%s311 + $0x138] sm:$0xff]
        %v435 = vld [vmem:[%s311 + $0x140] sm:$0xff]
        %v436 = vld [vmem:[%s311 + $0x148] sm:$0xff]
        %v437 = vld [vmem:[%s311 + $0x150] sm:$0xff]
        %v438 = vld [vmem:[%s311 + $0x158] sm:$0xff]
        %v439 = vld [vmem:[%s311 + $0x160] sm:$0xff]
        %v440 = vld [vmem:[%s311 + $0x168] sm:$0xff]
        %v441 = vld [vmem:[%s311 + $0x170] sm:$0xff]
        %v442 = vld [vmem:[%s311 + $0x178] sm:$0xff]
        %v443 = vld [vmem:[%s311 + $0x180] sm:$0xff]
        %v444 = vld [vmem:[%s311 + $0x188] sm:$0xff]
        %v445 = vld [vmem:[%s311 + $0x190] sm:$0xff]
        %v446 = vld [vmem:[%s311 + $0x198] sm:$0xff]
        %v447 = vld [vmem:[%s311 + $0x1a0] sm:$0xff]
        %v448 = vld [vmem:[%s311 + $0x1a8] sm:$0xff]
        %v449 = vld [vmem:[%s311 + $0x1b0] sm:$0xff]
        %v450 = vld [vmem:[%s311 + $0x1b8] sm:$0xff]
        %v451 = vld [vmem:[%s311 + $0x1c0] sm:$0xff]
        %v452 = vld [vmem:[%s311 + $0x1c8] sm:$0xff]
        %v453 = vld [vmem:[%s311 + $0x1d0] sm:$0xff]
        %v454 = vld [vmem:[%s311 + $0x1d8] sm:$0xff]
        %v455 = vld [vmem:[%s311 + $0x1e0] sm:$0xff]
        %v456 = vld [vmem:[%s311 + $0x1e8] sm:$0xff]
        %v457 = vld [vmem:[%s311 + $0x1f0] sm:$0xff]
        %v458 = vld [vmem:[%s311 + $0x1f8] sm:$0xff]
        %v463 = vunpack.c.l.b16 %v391
        %v464 = vunpack.c.h.b16 %v391
        %v465 = vunpack.c.l.b16 %v392
        %v466 = vunpack.c.h.b16 %v392
        %v467 = vunpack.c.l.b16 %v393
        %v468 = vunpack.c.h.b16 %v393
        %v469 = vunpack.c.l.b16 %v394
        %v470 = vunpack.c.h.b16 %v394
        %v471 = vpack.c.b16 %v465, %v463
        %v472 = vpack.c.b16 %v466, %v464
        %v473 = vpack.c.b16 %v469, %v467
        %v474 = vpack.c.b16 %v470, %v468
        %v543 = vunpack.c.l.b16 %v395
        %v544 = vunpack.c.h.b16 %v395
        %v545 = vunpack.c.l.b16 %v396
        %v546 = vunpack.c.h.b16 %v396
        %v547 = vunpack.c.l.b16 %v397
        %v548 = vunpack.c.h.b16 %v397
        %v549 = vunpack.c.l.b16 %v398
        %v550 = vunpack.c.h.b16 %v398
        %v551 = vunpack.c.l.b16 %v399
        %v552 = vunpack.c.h.b16 %v399
        %v553 = vunpack.c.l.b16 %v400
        %v554 = vunpack.c.h.b16 %v400
        %v555 = vunpack.c.l.b16 %v401
        %v556 = vunpack.c.h.b16 %v401
        %v557 = vunpack.c.l.b16 %v402
        %v558 = vunpack.c.h.b16 %v402
        %v559 = vunpack.c.l.b16 %v403
        %v560 = vunpack.c.h.b16 %v403
        %v561 = vunpack.c.l.b16 %v404
        %v562 = vunpack.c.h.b16 %v404
        %v563 = vunpack.c.l.b16 %v405
        %v564 = vunpack.c.h.b16 %v405
        %v565 = vunpack.c.l.b16 %v406
        %v566 = vunpack.c.h.b16 %v406
        %v567 = vunpack.c.l.b16 %v407
        %v568 = vunpack.c.h.b16 %v407
        %v569 = vunpack.c.l.b16 %v408
        %v570 = vunpack.c.h.b16 %v408
        %v571 = vunpack.c.l.b16 %v409
        %v572 = vunpack.c.h.b16 %v409
        %v573 = vunpack.c.l.b16 %v410
        %v574 = vunpack.c.h.b16 %v410
        %v575 = vunpack.c.l.b16 %v411
        %v576 = vunpack.c.h.b16 %v411
        %v577 = vunpack.c.l.b16 %v412
        %v578 = vunpack.c.h.b16 %v412
        %v579 = vunpack.c.l.b16 %v413
        %v580 = vunpack.c.h.b16 %v413
        %v581 = vunpack.c.l.b16 %v414
        %v582 = vunpack.c.h.b16 %v414
        %v583 = vunpack.c.l.b16 %v415
        %v584 = vunpack.c.h.b16 %v415
        %v585 = vunpack.c.l.b16 %v416
        %v586 = vunpack.c.h.b16 %v416
        %v587 = vunpack.c.l.b16 %v417
        %v588 = vunpack.c.h.b16 %v417
        %v589 = vunpack.c.l.b16 %v418
        %v590 = vunpack.c.h.b16 %v418
        %v591 = vunpack.c.l.b16 %v419
        %v592 = vunpack.c.h.b16 %v419
        %v593 = vunpack.c.l.b16 %v420
        %v594 = vunpack.c.h.b16 %v420
        %v595 = vunpack.c.l.b16 %v421
        %v596 = vunpack.c.h.b16 %v421
        %v597 = vunpack.c.l.b16 %v422
        %v598 = vunpack.c.h.b16 %v422
        %v599 = vunpack.c.l.b16 %v423
        %v600 = vunpack.c.h.b16 %v423
        %v601 = vunpack.c.l.b16 %v424
        %v602 = vunpack.c.h.b16 %v424
        %v603 = vunpack.c.l.b16 %v425
        %v604 = vunpack.c.h.b16 %v425
        %v605 = vunpack.c.l.b16 %v426
        %v606 = vunpack.c.h.b16 %v426
        %v607 = vunpack.c.l.b16 %v427
        %v608 = vunpack.c.h.b16 %v427
        %v609 = vunpack.c.l.b16 %v428
        %v610 = vunpack.c.h.b16 %v428
        %v611 = vunpack.c.l.b16 %v429
        %v612 = vunpack.c.h.b16 %v429
        %v613 = vunpack.c.l.b16 %v430
        %v614 = vunpack.c.h.b16 %v430
        %v615 = vunpack.c.l.b16 %v431
        %v616 = vunpack.c.h.b16 %v431
        %v617 = vunpack.c.l.b16 %v432
        %v618 = vunpack.c.h.b16 %v432
        %v619 = vunpack.c.l.b16 %v433
        %v620 = vunpack.c.h.b16 %v433
        %v621 = vunpack.c.l.b16 %v434
        %v622 = vunpack.c.h.b16 %v434
        %v623 = vunpack.c.l.b16 %v435
        %v624 = vunpack.c.h.b16 %v435
        %v625 = vunpack.c.l.b16 %v436
        %v626 = vunpack.c.h.b16 %v436
        %v627 = vunpack.c.l.b16 %v437
        %v628 = vunpack.c.h.b16 %v437
        %v629 = vunpack.c.l.b16 %v438
        %v630 = vunpack.c.h.b16 %v438
        %v631 = vunpack.c.l.b16 %v439
        %v632 = vunpack.c.h.b16 %v439
        %v633 = vunpack.c.l.b16 %v440
        %v634 = vunpack.c.h.b16 %v440
        %v635 = vunpack.c.l.b16 %v441
        %v636 = vunpack.c.h.b16 %v441
        %v637 = vunpack.c.l.b16 %v442
        %v638 = vunpack.c.h.b16 %v442
        %v639 = vunpack.c.l.b16 %v443
        %v640 = vunpack.c.h.b16 %v443
        %v641 = vunpack.c.l.b16 %v444
        %v642 = vunpack.c.h.b16 %v444
        %v643 = vunpack.c.l.b16 %v445
        %v644 = vunpack.c.h.b16 %v445
        %v645 = vunpack.c.l.b16 %v446
        %v646 = vunpack.c.h.b16 %v446
        %v647 = vunpack.c.l.b16 %v447
        %v648 = vunpack.c.h.b16 %v447
        %v649 = vunpack.c.l.b16 %v448
        %v650 = vunpack.c.h.b16 %v448
        %v651 = vunpack.c.l.b16 %v449
        %v652 = vunpack.c.h.b16 %v449
        %v653 = vunpack.c.l.b16 %v450
        %v654 = vunpack.c.h.b16 %v450
        %v655 = vunpack.c.l.b16 %v451
        %v656 = vunpack.c.h.b16 %v451
        %v657 = vunpack.c.l.b16 %v452
        %v658 = vunpack.c.h.b16 %v452
        %v659 = vunpack.c.l.b16 %v453
        %v660 = vunpack.c.h.b16 %v453
        %v661 = vunpack.c.l.b16 %v454
        %v662 = vunpack.c.h.b16 %v454
        %v663 = vunpack.c.l.b16 %v455
        %v664 = vunpack.c.h.b16 %v455
        %v665 = vunpack.c.l.b16 %v456
        %v666 = vunpack.c.h.b16 %v456
        %v667 = vunpack.c.l.b16 %v457
        %v668 = vunpack.c.h.b16 %v457
        %v669 = vunpack.c.l.b16 %v458
        %v670 = vunpack.c.h.b16 %v458
        %v671 = vpack.c.b16 %v547, %v543
        %v672 = vpack.c.b16 %v548, %v544
        %v673 = vpack.c.b16 %v549, %v545
        %v674 = vpack.c.b16 %v550, %v546
        %v675 = vpack.c.b16 %v555, %v551
        %v676 = vpack.c.b16 %v556, %v552
        %v677 = vpack.c.b16 %v557, %v553
        %v678 = vpack.c.b16 %v558, %v554
        %v679 = vpack.c.b16 %v563, %v559
        %v680 = vpack.c.b16 %v564, %v560
        %v681 = vpack.c.b16 %v565, %v561
        %v682 = vpack.c.b16 %v566, %v562
        %v683 = vpack.c.b16 %v571, %v567
        %v684 = vpack.c.b16 %v572, %v568
        %v685 = vpack.c.b16 %v573, %v569
        %v686 = vpack.c.b16 %v574, %v570
        %v687 = vpack.c.b16 %v579, %v575
        %v688 = vpack.c.b16 %v580, %v576
        %v689 = vpack.c.b16 %v581, %v577
        %v690 = vpack.c.b16 %v582, %v578
        %v691 = vpack.c.b16 %v587, %v583
        %v692 = vpack.c.b16 %v588, %v584
        %v693 = vpack.c.b16 %v589, %v585
        %v694 = vpack.c.b16 %v590, %v586
        %v695 = vpack.c.b16 %v595, %v591
        %v696 = vpack.c.b16 %v596, %v592
        %v697 = vpack.c.b16 %v597, %v593
        %v698 = vpack.c.b16 %v598, %v594
        %v699 = vpack.c.b16 %v603, %v599
        %v700 = vpack.c.b16 %v604, %v600
        %v701 = vpack.c.b16 %v605, %v601
        %v702 = vpack.c.b16 %v606, %v602
        %v703 = vpack.c.b16 %v611, %v607
        %v704 = vpack.c.b16 %v612, %v608
        %v705 = vpack.c.b16 %v613, %v609
        %v706 = vpack.c.b16 %v614, %v610
        %v707 = vpack.c.b16 %v619, %v615
        %v708 = vpack.c.b16 %v620, %v616
        %v709 = vpack.c.b16 %v621, %v617
        %v710 = vpack.c.b16 %v622, %v618
        %v711 = vpack.c.b16 %v627, %v623
        %v712 = vpack.c.b16 %v628, %v624
        %v713 = vpack.c.b16 %v629, %v625
        %v714 = vpack.c.b16 %v630, %v626
        %v715 = vpack.c.b16 %v635, %v631
        %v716 = vpack.c.b16 %v636, %v632
        %v717 = vpack.c.b16 %v637, %v633
        %v718 = vpack.c.b16 %v638, %v634
        %v719 = vpack.c.b16 %v643, %v639
        %v720 = vpack.c.b16 %v644, %v640
        %v721 = vpack.c.b16 %v645, %v641
        %v722 = vpack.c.b16 %v646, %v642
        %v723 = vpack.c.b16 %v651, %v647
        %v724 = vpack.c.b16 %v652, %v648
        %v725 = vpack.c.b16 %v653, %v649
        %v726 = vpack.c.b16 %v654, %v650
        %v727 = vpack.c.b16 %v659, %v655
        %v728 = vpack.c.b16 %v660, %v656
        %v729 = vpack.c.b16 %v661, %v657
        %v730 = vpack.c.b16 %v662, %v658
        %v731 = vpack.c.b16 %v667, %v663
        %v732 = vpack.c.b16 %v668, %v664
        %v733 = vpack.c.b16 %v669, %v665
        %v734 = vpack.c.b16 %v670, %v666
        %799 = vmatprep.subr.bf16.mxu0 %v672
        %800 = vmatpush1.bf16.msra.mxu0 %v671
        %801 = vmatprep.subr.bf16.mxu0 %v676
        %802 = vmatpush1.bf16.msra.mxu0 %v675
        %803 = vmatprep.subr.bf16.mxu0 %v680
        %804 = vmatpush1.bf16.msra.mxu0 %v679
        %805 = vmatprep.subr.bf16.mxu0 %v684
        %806 = vmatpush1.bf16.msra.mxu0 %v683
        %807 = vmatprep.subr.bf16.mxu0 %v688
        %808 = vmatpush1.bf16.msra.mxu0 %v687
        %809 = vmatprep.subr.bf16.mxu0 %v692
        %810 = vmatpush1.bf16.msra.mxu0 %v691
        %811 = vmatprep.subr.bf16.mxu0 %v696
        %812 = vmatpush1.bf16.msra.mxu0 %v695
        %813 = vmatprep.subr.bf16.mxu0 %v700
        %814 = vmatpush1.bf16.msra.mxu0 %v699
        %815 = vmatprep.subr.bf16.mxu0 %v704
        %816 = vmatpush1.bf16.msra.mxu0 %v703
        %817 = vmatprep.subr.bf16.mxu0 %v708
        %818 = vmatpush1.bf16.msra.mxu0 %v707
        %819 = vmatprep.subr.bf16.mxu0 %v712
        %820 = vmatpush1.bf16.msra.mxu0 %v711
        %821 = vmatprep.subr.bf16.mxu0 %v716
        %822 = vmatpush1.bf16.msra.mxu0 %v715
        %823 = vmatprep.subr.bf16.mxu0 %v720
        %824 = vmatpush1.bf16.msra.mxu0 %v719
        %825 = vmatprep.subr.bf16.mxu0 %v724
        %826 = vmatpush1.bf16.msra.mxu0 %v723
        %827 = vmatprep.subr.bf16.mxu0 %v728
        %828 = vmatpush1.bf16.msra.mxu0 %v727
        %829 = vmatprep.subr.bf16.mxu0 %v732
        %830 = vmatpush1.bf16.msra.mxu0 %v731
        %831 = vmatprep.mubr.bf16.mxu0 %v472
        %832 = vmatmul.mubr.bf16.gmra.mrb[0].mxu0 %v471
        %v833 = vpop.f32.mrb[0].mxu0
        %v834 = vadd.f32 0.0, %v833
        %v835 = vpop.f32.mrb[0].mxu0
        %v836 = vadd.f32 0.0, %v835
        %v837 = vpop.f32.mrb[0].mxu0
        %v838 = vadd.f32 0.0, %v837
        %v839 = vpop.f32.mrb[0].mxu0
        %v840 = vadd.f32 0.0, %v839
        %841 = vmatprep.mubr.bf16.mxu0 %v474
        %842 = vmatmul.mubr.bf16.gmra.mrb[0].mxu0 %v473
        %v843 = vpop.f32.mrb[0].mxu0
        %v844 = vadd.f32 0.0, %v843
        %v845 = vpop.f32.mrb[0].mxu0
        %v846 = vadd.f32 0.0, %v845
        %v847 = vpop.f32.mrb[0].mxu0
        %v848 = vadd.f32 0.0, %v847
        %v849 = vpop.f32.mrb[0].mxu0
        %v850 = vadd.f32 0.0, %v849
        %851 = vdwg.mxu0
        %852 = vmatprep.subr.bf16.mxu0 %v674
        %853 = vmatpush1.bf16.msra.mxu0 %v673
        %854 = vmatprep.subr.bf16.mxu0 %v678
        %855 = vmatpush1.bf16.msra.mxu0 %v677
        %856 = vmatprep.subr.bf16.mxu0 %v682
        %857 = vmatpush1.bf16.msra.mxu0 %v681
        %858 = vmatprep.subr.bf16.mxu0 %v686
        %859 = vmatpush1.bf16.msra.mxu0 %v685
        %860 = vmatprep.subr.bf16.mxu0 %v690
        %861 = vmatpush1.bf16.msra.mxu0 %v689
        %862 = vmatprep.subr.bf16.mxu0 %v694
        %863 = vmatpush1.bf16.msra.mxu0 %v693
        %864 = vmatprep.subr.bf16.mxu0 %v698
        %865 = vmatpush1.bf16.msra.mxu0 %v697
        %866 = vmatprep.subr.bf16.mxu0 %v702
        %867 = vmatpush1.bf16.msra.mxu0 %v701
        %868 = vmatprep.subr.bf16.mxu0 %v706
        %869 = vmatpush1.bf16.msra.mxu0 %v705
        %870 = vmatprep.subr.bf16.mxu0 %v710
        %871 = vmatpush1.bf16.msra.mxu0 %v709
        %872 = vmatprep.subr.bf16.mxu0 %v714
        %873 = vmatpush1.bf16.msra.mxu0 %v713
        %874 = vmatprep.subr.bf16.mxu0 %v718
        %875 = vmatpush1.bf16.msra.mxu0 %v717
        %876 = vmatprep.subr.bf16.mxu0 %v722
        %877 = vmatpush1.bf16.msra.mxu0 %v721
        %878 = vmatprep.subr.bf16.mxu0 %v726
        %879 = vmatpush1.bf16.msra.mxu0 %v725
        %880 = vmatprep.subr.bf16.mxu0 %v730
        %881 = vmatpush1.bf16.msra.mxu0 %v729
        %882 = vmatprep.subr.bf16.mxu0 %v734
        %883 = vmatpush1.bf16.msra.mxu0 %v733
        %884 = vmatprep.mubr.bf16.mxu0 %v472
        %885 = vmatmul.mubr.bf16.gmra.mrb[0].mxu0 %v471
        %v886 = vpop.f32.mrb[0].mxu0
        %v887 = vadd.f32 0.0, %v886
        %v888 = vpop.f32.mrb[0].mxu0
        %v889 = vadd.f32 0.0, %v888
        %v890 = vpop.f32.mrb[0].mxu0
        %v891 = vadd.f32 0.0, %v890
        %v892 = vpop.f32.mrb[0].mxu0
        %v893 = vadd.f32 0.0, %v892
        %894 = vmatprep.mubr.bf16.mxu0 %v474
        %895 = vmatmul.mubr.bf16.gmra.mrb[0].mxu0 %v473
        %v896 = vpop.f32.mrb[0].mxu0
        %v897 = vadd.f32 0.0, %v896
        %v898 = vpop.f32.mrb[0].mxu0
        %v899 = vadd.f32 0.0, %v898
        %v900 = vpop.f32.mrb[0].mxu0
        %v901 = vadd.f32 0.0, %v900
        %v902 = vpop.f32.mrb[0].mxu0
        %v903 = vadd.f32 0.0, %v902
        %904 = vdwg.mxu0
        %v905 = vadd.f32 %v375, %v834
        %v906 = vadd.f32 %v376, %v836
        %v907 = vadd.f32 %v377, %v887
        %v908 = vadd.f32 %v378, %v889
        %v909 = vadd.f32 %v379, %v838
        %v910 = vadd.f32 %v380, %v840
        %v911 = vadd.f32 %v381, %v891
        %v912 = vadd.f32 %v382, %v893
        %v913 = vadd.f32 %v383, %v844
        %v914 = vadd.f32 %v384, %v846
        %v915 = vadd.f32 %v385, %v897
        %v916 = vadd.f32 %v386, %v899
        %v917 = vadd.f32 %v387, %v848
        %v918 = vadd.f32 %v388, %v850
        %v919 = vadd.f32 %v389, %v901
        %v920 = vadd.f32 %v390, %v903
        %921 = vst [vmem:[#allocation2] sm:$0xff] %v905
        %922 = vst [vmem:[#allocation2 + $0x8] sm:$0xff] %v906
        %923 = vst [vmem:[#allocation2 + $0x10] sm:$0xff] %v907
        %924 = vst [vmem:[#allocation2 + $0x18] sm:$0xff] %v908
        %925 = vst [vmem:[#allocation2 + $0x20] sm:$0xff] %v909
        %926 = vst [vmem:[#allocation2 + $0x28] sm:$0xff] %v910
        %927 = vst [vmem:[#allocation2 + $0x30] sm:$0xff] %v911
        %928 = vst [vmem:[#allocation2 + $0x38] sm:$0xff] %v912
        %929 = vst [vmem:[#allocation2 + $0x40] sm:$0xff] %v913
        %930 = vst [vmem:[#allocation2 + $0x48] sm:$0xff] %v914
        %931 = vst [vmem:[#allocation2 + $0x50] sm:$0xff] %v915
        %932 = vst [vmem:[#allocation2 + $0x58] sm:$0xff] %v916
        %933 = vst [vmem:[#allocation2 + $0x60] sm:$0xff] %v917
        %934 = vst [vmem:[#allocation2 + $0x68] sm:$0xff] %v918
        %935 = vst [vmem:[#allocation2 + $0x70] sm:$0xff] %v919
        %936 = vst [vmem:[#allocation2 + $0x78] sm:$0xff] %v920
        // Predicated region
        $region56: #{_lambda_.19} parent=46 // pred_check
          %p937 = pneg %p355
        $region57: #{_lambda_.19} parent=46 // pred_check_branch
          %939 = sbr.rel (%p937) target = $region59
        $region58: #{_lambda_.19} parent=46 // pred_region
          %v940 = vld [vmem:[#allocation2] sm:$0xff]
          %v941 = vld [vmem:[#allocation2 + $0x8] sm:$0xff]
          %v942 = vld [vmem:[#allocation2 + $0x10] sm:$0xff]
          %v943 = vld [vmem:[#allocation2 + $0x18] sm:$0xff]
          %v944 = vld [vmem:[#allocation2 + $0x20] sm:$0xff]
          %v945 = vld [vmem:[#allocation2 + $0x28] sm:$0xff]
          %v946 = vld [vmem:[#allocation2 + $0x30] sm:$0xff]
          %v947 = vld [vmem:[#allocation2 + $0x38] sm:$0xff]
          %v948 = vld [vmem:[#allocation2 + $0x40] sm:$0xff]
          %v949 = vld [vmem:[#allocation2 + $0x48] sm:$0xff]
          %v950 = vld [vmem:[#allocation2 + $0x50] sm:$0xff]
          %v951 = vld [vmem:[#allocation2 + $0x58] sm:$0xff]
          %v952 = vld [vmem:[#allocation2 + $0x60] sm:$0xff]
          %v953 = vld [vmem:[#allocation2 + $0x68] sm:$0xff]
          %v954 = vld [vmem:[#allocation2 + $0x70] sm:$0xff]
          %v955 = vld [vmem:[#allocation2 + $0x78] sm:$0xff]
          %v956 = vpack.c.bf16 %v944, %v940
          %v957 = vpack.c.bf16 %v945, %v941
          %v958 = vpack.c.bf16 %v946, %v942
          %v959 = vpack.c.bf16 %v947, %v943
          %v960 = vpack.c.bf16 %v952, %v948
          %v961 = vpack.c.bf16 %v953, %v949
          %v962 = vpack.c.bf16 %v954, %v950
          %v963 = vpack.c.bf16 %v955, %v951
          %v972 = vunpack.c.l.b16 %v956
          %v973 = vunpack.c.l.b16 %v957
          %v974 = vunpack.c.l.b16 %v958
          %v975 = vunpack.c.l.b16 %v959
          %v976 = vunpack.c.h.b16 %v956
          %v977 = vunpack.c.h.b16 %v957
          %v978 = vunpack.c.h.b16 %v958
          %v979 = vunpack.c.h.b16 %v959
          %v980 = vunpack.c.l.b16 %v960
          %v981 = vunpack.c.l.b16 %v961
          %v982 = vunpack.c.l.b16 %v962
          %v983 = vunpack.c.l.b16 %v963
          %v984 = vunpack.c.h.b16 %v960
          %v985 = vunpack.c.h.b16 %v961
          %v986 = vunpack.c.h.b16 %v962
          %v987 = vunpack.c.h.b16 %v963
          %v988 = vpack.c.b16 %v973, %v972
          %v989 = vpack.c.b16 %v975, %v974
          %v990 = vpack.c.b16 %v977, %v976
          %v991 = vpack.c.b16 %v979, %v978
          %v992 = vpack.c.b16 %v981, %v980
          %v993 = vpack.c.b16 %v983, %v982
          %v994 = vpack.c.b16 %v985, %v984
          %v995 = vpack.c.b16 %v987, %v986
          %1004 = vst [vmem:[%s338] sm:$0xff] %v988
          %1005 = vst [vmem:[%s338 + $0x8] sm:$0xff] %v989
          %1006 = vst [vmem:[%s338 + $0x10] sm:$0xff] %v990
          %1007 = vst [vmem:[%s338 + $0x18] sm:$0xff] %v991
          %1008 = vst [vmem:[%s338 + $0x20] sm:$0xff] %v992
          %1009 = vst [vmem:[%s338 + $0x28] sm:$0xff] %v993
          %1010 = vst [vmem:[%s338 + $0x30] sm:$0xff] %v994
          %1011 = vst [vmem:[%s338 + $0x38] sm:$0xff] %v995
        $region59: #{_lambda_.19} parent=46 // pred_fallthru
          _
        %s1012 = sand.u32 %s98, 1
        %s1013 = sand.u32 %s98, 1
        %s1014 = smul.addr %s1013, 64
        %s1015 = scalar_lea.vmem [#allocation4], %s1014
        // Predicated region
        $region60: #{_lambda_.19} parent=46 // pred_check
          %p1016 = pneg %p108
        $region61: #{_lambda_.19} parent=46 // pred_check_branch
          %1018 = sbr.rel (%p1016) target = $region63
        $region62: #{_lambda_.19} parent=46 // pred_region
          %s1019 = smul.u32 4, %s18
          %s1020 = smul.u32 4, %s19
          %s1021 = smul.addr %s1019, 8
          %s1022 = sadd.s32 %s1020, %s1021
          %s1023 = smul.addr %s1022, 4
          %s1024 = scalar_lea.vmem %s2, %s1023
          // Predicated region
          $region64: #{_lambda_.19} parent=62 // pred_check
            _
          $region65: #{_lambda_.19} parent=62 // pred_check_branch
            %1026 = sbr.rel (0) target = $region67
          $region66: #{_lambda_.19} parent=62 // pred_region
            // Predicated region
            $region68: #{_lambda_.19} parent=66 // pred_check
              _
            $region69: #{_lambda_.19} parent=66 // pred_check_branch
              %1028 = sbr.rel (0) target = $region71
            $region70: #{_lambda_.19} parent=66 // pred_region
              loop: start=0, step=1, limit=1
              $region72: #{_lambda_.19} parent=70 // loop_pre_header
                _
              $region73: #{_lambda_.19} parent=70 // loop_header
                %s1030 = sphi 0, %s1034
                %p1031 = scmp.ge.s32.totalorder %s1030, 1
                %s1035 = sphi %s1015, %s1015
                %s1036 = sphi %s1024, %s1024
              $region74: #{_lambda_.19} parent=70 // loop_header_branch
                %1033 = sbr.rel (%p1031) target = $region78
              $region75: #{_lambda_.19} parent=70 // loop_body
                %v1037 = vld [vmem:[%s1035] sm:$0xff]
                %1038 = vst [vmem:[%s1036] sm:$0xff] %v1037
                %v1039 = vld [vmem:[%s1035 + $0x8] sm:$0xff]
                %1040 = vst [vmem:[%s1036 + $0x8] sm:$0xff] %v1039
                %v1041 = vld [vmem:[%s1035 + $0x10] sm:$0xff]
                %1042 = vst [vmem:[%s1036 + $0x20] sm:$0xff] %v1041
                %v1043 = vld [vmem:[%s1035 + $0x18] sm:$0xff]
                %1044 = vst [vmem:[%s1036 + $0x28] sm:$0xff] %v1043
                %v1045 = vld [vmem:[%s1035 + $0x20] sm:$0xff]
                %1046 = vst [vmem:[%s1036 + $0x40] sm:$0xff] %v1045
                %v1047 = vld [vmem:[%s1035 + $0x28] sm:$0xff]
                %1048 = vst [vmem:[%s1036 + $0x48] sm:$0xff] %v1047
                %v1049 = vld [vmem:[%s1035 + $0x30] sm:$0xff]
                %1050 = vst [vmem:[%s1036 + $0x60] sm:$0xff] %v1049
                %v1051 = vld [vmem:[%s1035 + $0x38] sm:$0xff]
                %1052 = vst [vmem:[%s1036 + $0x68] sm:$0xff] %v1051
              $region76: #{_lambda_.19} parent=70 // loop_footer
                %s1034 = sadd.s32 1, %s1030
              $region77: #{_lambda_.19} parent=70 // loop_footer_branch
                %1029 = sbr.rel target = $region73
              $region78: #{_lambda_.19} parent=70 // loop_exit
                _
            $region71: #{_lambda_.19} parent=66 // pred_fallthru
              _
            // Predicated region
            $region79: #{_lambda_.19} parent=66 // pred_check
              _
            $region80: #{_lambda_.19} parent=66 // pred_check_branch
              %1054 = sbr.rel target = $region82
            $region81: #{_lambda_.19} parent=66 // pred_region
              _
            $region82: #{_lambda_.19} parent=66 // pred_fallthru
              _
          $region67: #{_lambda_.19} parent=62 // pred_fallthru
            _
          %1055 = vnop
        $region63: #{_lambda_.19} parent=46 // pred_fallthru
          _
      $region47: #{_lambda_.19} parent=5 // pred_fallthru
        _
      %p1056 = scmp.le.s32.totalorder 2, %s8
      // Predicated region
      $region83: #{_lambda_.19} parent=5 // pred_check
        %p1057 = pneg %p1056
      $region84: #{_lambda_.19} parent=5 // pred_check_branch
        %1059 = sbr.rel (%p1057) target = $region86
      $region85: #{_lambda_.19} parent=5 // pred_region
        %s1060 = ssub.s32 %s8, 2
        // Predicated region
        $region87: #{_lambda_.19} parent=85 // pred_check
          %p1061 = pneg %p114
        $region88: #{_lambda_.19} parent=85 // pred_check_branch
          %1063 = sbr.rel (%p1061) target = $region90
        $region89: #{_lambda_.19} parent=85 // pred_region
          %s1064 = sand.u32 %s99, 1
          %s1065 = sand.u32 %s99, 1
          %s1066 = smul.addr %s1065, 64
          %s1067 = scalar_lea.vmem [#allocation4], %s1066
        $region90: #{_lambda_.19} parent=85 // pred_fallthru
          _
      $region86: #{_lambda_.19} parent=5 // pred_fallthru
        _
    $region6: #{_lambda_.19} parent=1 // loop_footer
      %s12 = sadd.s32 1, %s8
    $region7: #{_lambda_.19} parent=1 // loop_footer_branch
      %7 = sbr.rel target = $region3
    $region8: #{_lambda_.19} parent=1 // loop_exit
      _

</llo_original>
